<compile_context>
chip_gen: v5e
topology: v5e:2x2
jax: 0.10.0
libtpu: 0.0.40
codegen_flags: <defaults>
</compile_context>

<pallas_src>
import functools

import jax
import jax.numpy as jnp
from jax.experimental import pallas as pl
from jax.experimental.pallas import tpu as pltpu


# --------------------------------------------------------------------------------------
# Fused matmul:  out = [relu]((x @ w) * scale + shift)     (1x1 conv -> BN [-> ReLU])
# --------------------------------------------------------------------------------------
def matmul_affine(x, w, scale, shift, *, relu=True, out_dtype=jnp.bfloat16):
    M, K = map(int, x.shape)
    N = int(w.shape[1])
    Mp = -(-M // 128) * 128                       # pad M to a lane/sublane-friendly size
    xp = jnp.pad(x, ((0, Mp - M), (0, 0))) if Mp != M else x
    tm = 256 if Mp % 256 == 0 else 128
    tn = next((t for t in (256, 128) if N % t == 0), N)
    tk = next((t for t in (512, 256, 128) if K % t == 0), K)

    def kernel(x_ref, w_ref, sc_ref, sh_ref, o_ref, acc_ref):
        @pl.when(pl.program_id(2) == 0)
        def _():
            acc_ref[...] = jnp.zeros_like(acc_ref)

        acc_ref[...] += jnp.dot(x_ref[...], w_ref[...],
                                preferred_element_type=jnp.float32)

        @pl.when(pl.program_id(2) == pl.num_programs(2) - 1)
        def _():
            y = acc_ref[...] * sc_ref[...] + sh_ref[...]
            if relu:
                y = jnp.maximum(y, 0.0)
            o_ref[...] = y.astype(o_ref.dtype)

    out = pl.pallas_call(
        kernel,
        out_shape=jax.ShapeDtypeStruct((Mp, N), out_dtype),
        grid_spec=pltpu.PrefetchScalarGridSpec(
            num_scalar_prefetch=0,
            grid=(Mp // tm, N // tn, K // tk),
            in_specs=[
                pl.BlockSpec((tm, tk), lambda i, j, k: (i, k)),
                pl.BlockSpec((tk, tn), lambda i, j, k: (k, j)),
                pl.BlockSpec((1, tn), lambda i, j, k: (0, j)),
                pl.BlockSpec((1, tn), lambda i, j, k: (0, j)),
            ],
            out_specs=pl.BlockSpec((tm, tn), lambda i, j, k: (i, j)),
            scratch_shapes=[pltpu.VMEM((tm, tn), jnp.float32)],
        ),
        compiler_params=pltpu.CompilerParams(
            dimension_semantics=("parallel", "parallel", "arbitrary"),
            vmem_limit_bytes=32 * 1024 * 1024),
    )(xp.astype(jnp.bfloat16), w, scale, shift)
    return out[:M] if Mp != M else out


# --------------------------------------------------------------------------------------
# Row-tiled fused 3x3 'same' conv over the channel-concat of several inputs.
#   per-input prologue : None | ("affine_relu", scale, shift)
#   epilogue           : ReLU -> BN affine        (custom_conv_layer ordering)
# grid = (B, H//th); each step reads a th-row block + two 1-row halo blocks per input,
# stages the prologue-transformed, zero-padded window into a single channel-concatenated
# VMEM scratch, and runs 9 shifted bf16 dots with K = sum(C_in), f32 accumulation.
# --------------------------------------------------------------------------------------
def _pick_th(H, W):
    divisors = [d for d in range(1, H + 1) if H % d == 0]
    fit = [d for d in divisors if d * W <= 2048]
    th = max(fit) if fit else 1
    if th == H and H > 1:            # keep >= 2 row blocks for pipelining / dual-TC use
        smaller = [d for d in divisors if d < H]
        if smaller:
            th = max(smaller)
    return th


def conv3x3_fused(inputs, weight, prologues, out_scale, out_shift, *,
                  out_dtype=jnp.bfloat16):
    n = len(inputs)
    B, H, W, _ = map(int, inputs[0].shape)
    cins = [int(x.shape[-1]) for x in inputs]
    Ct = sum(cins)
    Cout = int(weight.shape[-1])

    modes, aff = [], []
    for pr in prologues:
        if pr is None:
            modes.append("none")
        elif pr[0] == "affine_relu":
            modes.append("affine_relu")
            aff += [pr[1], pr[2]]
        else:
            raise ValueError(pr)
    n_aff = sum(m == "affine_relu" for m in modes)

    offs, o = [], 0
    for c in cins:
        offs.append(o)
        o += c

    th = _pick_th(H, W)
    nrb = H // th
    LPAD = 8                          # sublane-aligned left pad for the window interior
    WW = W + LPAD + 1                 # LPAD zero cols | W interior cols | 1 zero col

    def kernel(*args):
        pos = 0
        xrefs = []
        for _ in range(n):
            xrefs.append(args[pos:pos + 3])
            pos += 3
        w_ref = args[pos]; pos += 1
        aff_refs = args[pos:pos + 2 * n_aff]; pos += 2 * n_aff
        osc_ref = args[pos]
        osh_ref = args[pos + 1]
        o_ref = args[pos + 2]
        win = args[pos + 3]

        r = pl.program_id(1)
        last = pl.num_programs(1) - 1

        # zero-pad columns (cheap per-step stores; keeps both grid axes 'parallel')
        win[:, 0:LPAD, :] = jnp.zeros((th + 2, LPAD, Ct), jnp.bfloat16)
        win[:, LPAD + W:WW, :] = jnp.zeros((th + 2, 1, Ct), jnp.bfloat16)

        # stage prologue-transformed rows: th interior rows + 1-row halo on each side
        # TODO(synk): for 'none'-mode inputs the staging is a pure VMEM copy; feed those
        # taps straight from the input blocks (masking the W border) to skip it.
        ai = 0
        for i in range(n):
            main_ref, top_ref, bot_ref = xrefs[i]
            co, ci = offs[i], cins[i]
            if modes[i] == "affine_relu":
                sc = aff_refs[2 * ai][...].reshape(1, 1, ci)
                sh = aff_refs[2 * ai + 1][...].reshape(1, 1, ci)
                ai += 1

                def tf(v, sc=sc, sh=sh):
                    return jnp.maximum(v.astype(jnp.float32) * sc + sh,
                                       0.0).astype(jnp.bfloat16)
            else:
                def tf(v):
                    return v.astype(jnp.bfloat16)

            win[1:th + 1, LPAD:LPAD + W, co:co + ci] = tf(main_ref[0])
            win[0:1, LPAD:LPAD + W, co:co + ci] = tf(top_ref[0])
            win[th + 1:th + 2, LPAD:LPAD + W, co:co + ci] = tf(bot_ref[0])

        zrow = jnp.zeros((1, WW, Ct), jnp.bfloat16)

        @pl.when(r == 0)
        def _():
            win[0:1, :, :] = zrow

        @pl.when(r == last)
        def _():
            win[th + 1:th + 2, :, :] = zrow

        # 9 shifted dots, K = total concatenated channels, f32 accumulation
        acc = jnp.zeros((th * W, Cout), jnp.float32)
        for kh in range(3):
            for kw in range(3):
                patch = win[kh:kh + th, LPAD - 1 + kw:LPAD - 1 + kw + W, :]
                acc = acc + jnp.dot(patch.reshape(th * W, Ct), w_ref[kh * 3 + kw],
                                    preferred_element_type=jnp.float32)
        y = jnp.maximum(acc, 0.0) * osc_ref[...] + osh_ref[...]   # conv -> ReLU -> BN
        o_ref[0] = y.reshape(th, W, Cout).astype(o_ref.dtype)

    in_specs = []
    for c in cins:
        in_specs += [
            pl.BlockSpec((1, th, W, c), lambda b, rr: (b, rr, 0, 0)),
            pl.BlockSpec((1, 1, W, c),
                         lambda b, rr: (b, jnp.maximum(rr * th - 1, 0), 0, 0)),
            pl.BlockSpec((1, 1, W, c),
                         lambda b, rr: (b, jnp.minimum(rr * th + th, H - 1), 0, 0)),
        ]
    in_specs.append(pl.BlockSpec((9, Ct, Cout), lambda b, rr: (0, 0, 0)))
    for a in aff:
        in_specs.append(pl.BlockSpec((1, int(a.shape[1])), lambda b, rr: (0, 0)))
    in_specs += [pl.BlockSpec((1, Cout), lambda b, rr: (0, 0)),
                 pl.BlockSpec((1, Cout), lambda b, rr: (0, 0))]

    call = pl.pallas_call(
        kernel,
        out_shape=jax.ShapeDtypeStruct((B, H, W, Cout), out_dtype),
        grid_spec=pltpu.PrefetchScalarGridSpec(
            num_scalar_prefetch=0,
            grid=(B, nrb),
            in_specs=in_specs,
            out_specs=pl.BlockSpec((1, th, W, Cout), lambda b, rr: (b, rr, 0, 0)),
            scratch_shapes=[pltpu.VMEM((th + 2, WW, Ct), jnp.bfloat16)],
        ),
        compiler_params=pltpu.CompilerParams(
            dimension_semantics=("parallel", "parallel"),
            vmem_limit_bytes=36 * 1024 * 1024),
    )

    args = []
    for x in inputs:
        xb = x.astype(jnp.bfloat16)
        args += [xb, xb, xb]
    args += [weight] + aff + [out_scale, out_shift]
    return call(*args)


# --------------------------------------------------------------------------------------
# fastai SelfAttention, channels-last.  x: (B, N, C);  out = gamma * attn + x.
# Global value / "f" projections are precomputed outside (lane-dense fused matmul) and
# fed as h (B, N, C) and fT (B, C8, N); the kernel is query-block tiled and both grid
# axes are 'parallel' (no per-batch scratch caching).
# --------------------------------------------------------------------------------------
def self_attention(x_nc, fT, h, wk, gamma, *, out_dtype=jnp.bfloat16):
    B, N, C = map(int, x_nc.shape)
    C8 = int(wk.shape[1])
    tq = next((t for t in (128, 64, 32, 16, 8) if N % t == 0), N)
    nq = N // tq

    def kernel(x_ref, fT_ref, h_ref, wk_ref, g_ref, o_ref):
        xq = x_ref[0]                                                   # (tq, C) bf16
        qp = jnp.dot(xq, wk_ref[...], preferred_element_type=jnp.float32)   # (tq, C8)
        # logits[j, i] = <f_i, key(x_j)>; torch softmax(dim=1) == softmax over i (last axis)
        logits = jnp.dot(qp.astype(jnp.bfloat16), fT_ref[0],
                         preferred_element_type=jnp.float32)            # (tq, N)
        m = jnp.max(logits, axis=-1, keepdims=True)
        e = jnp.exp(logits - m)
        beta = e * pl.reciprocal(jnp.sum(e, axis=-1, keepdims=True), approx=False)
        o = jnp.dot(beta.astype(jnp.bfloat16), h_ref[0],
                    preferred_element_type=jnp.float32)                 # (tq, C)
        o_ref[0] = (g_ref[0] * o + xq.astype(jnp.float32)).astype(o_ref.dtype)

    return pl.pallas_call(
        kernel,
        out_shape=jax.ShapeDtypeStruct((B, N, C), out_dtype),
        grid_spec=pltpu.PrefetchScalarGridSpec(
            num_scalar_prefetch=0,
            grid=(B, nq),
            in_specs=[
                pl.BlockSpec((1, tq, C), lambda b, q: (b, q, 0)),
                pl.BlockSpec((1, C8, N), lambda b, q: (b, 0, 0)),
                pl.BlockSpec((1, N, C), lambda b, q: (b, 0, 0)),
                pl.BlockSpec((C, C8), lambda b, q: (0, 0)),
                pl.BlockSpec(memory_space=pltpu.MemorySpace.SMEM),
            ],
            out_specs=pl.BlockSpec((1, tq, C), lambda b, q: (b, q, 0)),
        ),
        compiler_params=pltpu.CompilerParams(
            dimension_semantics=("parallel", "parallel"),
            vmem_limit_bytes=32 * 1024 * 1024),
    )(x_nc.astype(jnp.bfloat16), fT.astype(jnp.bfloat16), h.astype(jnp.bfloat16),
      wk, gamma)


# --------------------------------------------------------------------------------------
# UnetBlockDeep forward (JAX glue around the Pallas kernels)
# --------------------------------------------------------------------------------------
def unet_block_deep_forward(p, up_in_nchw, s_nchw):
    up = jnp.transpose(up_in_nchw, (0, 2, 3, 1))      # NHWC
    s = jnp.transpose(s_nchw, (0, 2, 3, 1))
    B, H0, W0, Cin = map(int, up.shape)
    Bs, Hs, Ws, Cs = map(int, s.shape)
    up_c = p["up_out"]

    # ---- shuf: 1x1 conv -> BN -> ReLU (fused bf16 Pallas matmul) ----
    y = matmul_affine(up.reshape(B * H0 * W0, Cin), p["shuf_w"],
                      p["shuf_scale"], p["shuf_shift"], relu=True)
    # PixelShuffle(2): output channels were pre-permuted to (i, j, c) order at build
    # time, so the shuffle is a contiguous interleave of up_c-sized vectors.
    # TODO(synk): fold the shuffle + blur into the conv1 input pipeline to remove this
    # XLA materialization of the up branch entirely.
    y = y.reshape(B, H0, W0, 2, 2, up_c)
    shuffled = jnp.transpose(y, (0, 1, 3, 2, 4, 5)).reshape(B, 2 * H0, 2 * W0, up_c)

    if p["blur"]:
        # ReplicationPad2d((1,0,1,0)) + AvgPool2d(2, stride=1); XLA fuses this with the
        # shuffle transpose above, so it costs no extra HBM round trip.
        pd = jnp.pad(shuffled, ((0, 0), (1, 0), (1, 0), (0, 0)), mode="edge")
        shuffled = 0.25 * (pd[:, :-1, :-1] + pd[:, 1:, :-1]
                           + pd[:, :-1, 1:] + pd[:, 1:, 1:])

    if (2 * H0, 2 * W0) != (Hs, Ws):
        # Rare path: nearest resize with PyTorch floor-index mapping.
        hi = (jnp.arange(Hs) * (2 * H0)) // Hs
        wi = (jnp.arange(Ws) * (2 * W0)) // Ws
        shuffled = shuffled[:, hi][:, :, wi]

    # ---- conv1: relu(cat([up, bn(s)])) -> 3x3 conv -> ReLU -> BN (one row-tiled kernel;
    #      the outer relu on the up branch is a no-op since it is an average of ReLUs) ----
    c1 = conv3x3_fused(
        [shuffled, s], p["conv1_w"],
        [None, ("affine_relu", p["s_scale"], p["s_shift"])],
        p["conv1_scale"], p["conv1_shift"])

    # ---- conv2: 3x3 conv -> ReLU -> BN ----
    # TODO(synk): fuse conv1 -> conv2 per row stripe to avoid the c1 HBM round trip.
    c2 = conv3x3_fused([c1], p["conv2_w"], [None], p["conv2_scale"], p["conv2_shift"])

    # ---- optional SelfAttention (channels-last Pallas kernel) ----
    if "sa_wvq" in p:
        Bc, Hc, Wc, Cc = map(int, c2.shape)
        N = Hc * Wc
        x_nc = c2.reshape(Bc, N, Cc)
        # Global value/query projections as one lane-dense Pallas matmul, hoisted out of
        # the attention kernel so both SA grid axes stay 'parallel'.
        ones = jnp.ones((1, int(p["sa_wvq"].shape[1])), jnp.float32)
        zeros = jnp.zeros((1, int(p["sa_wvq"].shape[1])), jnp.float32)
        proj = matmul_affine(x_nc.reshape(Bc * N, Cc), p["sa_wvq"], ones, zeros,
                             relu=False)
        proj = proj.reshape(Bc, N, -1)
        h = proj[..., :Cc]                                   # (B, N, C)   value proj
        fT = jnp.transpose(proj[..., Cc:], (0, 2, 1))        # (B, C8, N)  "f" proj, pre-T
        x_nc = self_attention(x_nc, fT, h, p["sa_wk"], p["sa_gamma"])
        c2 = x_nc.reshape(Bc, Hc, Wc, Cc)

    return jnp.transpose(c2, (0, 3, 1, 2)).astype(jnp.float32)


# --------------------------------------------------------------------------------------
# Deterministic synthetic parameters (shapes follow UnetBlockDeep.__init__ exactly)
# --------------------------------------------------------------------------------------
def _kaiming(key, shape):
    fan_in = 1
    for d in shape[1:]:
        fan_in *= d
    return (jnp.sqrt(2.0 / fan_in) * jax.random.normal(key, shape)).astype(jnp.float32)


def _bn_affine(key, c, eps=1e-5):
    k1, k2, k3, k4 = jax.random.split(key, 4)
    gamma = 1.0 + 0.1 * jax.random.normal(k1, (c,))
    beta = 0.1 * jax.random.normal(k2, (c,))
    mean = 0.1 * jax.random.normal(k3, (c,))
    var = 1.0 + 0.5 * jax.random.uniform(k4, (c,))
    scale = gamma / jnp.sqrt(var + eps)
    shift = beta - mean * scale
    return (scale.reshape(1, c).astype(jnp.float32),
            shift.reshape(1, c).astype(jnp.float32))


def build_unet_block_deep_params(key, up_in_c, x_in_c, *, final_div=True, blur=False,
                                 self_attention_flag=False, nf_factor=1.5):
    up_out = up_in_c // 2
    ni = up_out + x_in_c
    nf = int((ni if final_div else ni // 2) * nf_factor)
    keys = jax.random.split(key, 10)

    p = {"blur": blur, "up_out": up_out, "nf": nf}
    # shuf conv: PyTorch weight (4*up_out, up_in_c, 1, 1), bias-free -> matrix (Cin, Cout);
    # permute output channels from c*4+i*2+j to (i*2+j)*up_out+c so the pixel shuffle is a
    # contiguous (i, j, c) interleave in the wrapper.
    w1 = _kaiming(keys[0], (up_out * 4, up_in_c, 1, 1))
    w1m = jnp.transpose(w1[:, :, 0, 0], (1, 0))                    # (Cin, 4*up_out)
    p["shuf_w"] = w1m.reshape(up_in_c, up_out, 4).transpose(0, 2, 1).reshape(
        up_in_c, up_out * 4).astype(jnp.bfloat16)
    sc, sh = _bn_affine(keys[1], up_out * 4)
    p["shuf_scale"] = sc.reshape(up_out, 4).T.reshape(1, -1)
    p["shuf_shift"] = sh.reshape(up_out, 4).T.reshape(1, -1)
    # shortcut BN
    p["s_scale"], p["s_shift"] = _bn_affine(keys[2], x_in_c)
    # conv1: (nf, ni, 3, 3) -> per-tap (9, ni, nf); channel order matches cat([up, s])
    wc1 = _kaiming(keys[3], (nf, ni, 3, 3))
    p["conv1_w"] = jnp.transpose(wc1, (2, 3, 1, 0)).reshape(9, ni, nf).astype(jnp.bfloat16)
    p["conv1_scale"], p["conv1_shift"] = _bn_affine(keys[4], nf)
    # conv2: (nf, nf, 3, 3)
    wc2 = _kaiming(keys[5], (nf, nf, 3, 3))
    p["conv2_w"] = jnp.transpose(wc2, (2, 3, 1, 0)).reshape(9, nf, nf).astype(jnp.bfloat16)
    p["conv2_scale"], p["conv2_shift"] = _bn_affine(keys[6], nf)
    if self_attention_flag:
        wq = jnp.transpose(_kaiming(keys[7], (nf // 8, nf, 1))[:, :, 0], (1, 0))  # (C, C8)
        wk = jnp.transpose(_kaiming(keys[8], (nf // 8, nf, 1))[:, :, 0], (1, 0))  # (C, C8)
        wv = jnp.transpose(_kaiming(keys[9], (nf, nf, 1))[:, :, 0], (1, 0))       # (C, C)
        p["sa_wk"] = wk.astype(jnp.bfloat16)
        p["sa_wvq"] = jnp.concatenate([wv, wq], axis=1).astype(jnp.bfloat16)      # (C, C+C8)
        p["sa_gamma"] = jnp.zeros((1,), jnp.float32)   # torch: gamma initialized to 0
    return p


# --------------------------------------------------------------------------------------
if __name__ == "__main__":
    key = jax.random.PRNGKey(0)
    kp, ku, ks = jax.random.split(key, 3)

    # Small config: up_in_c=64, x_in_c=32, blur + self-attention, nf_factor=2.0 -> nf=128.
    up_in_c, x_in_c = 64, 32
    params = build_unet_block_deep_params(kp, up_in_c, x_in_c, final_div=True, blur=True,
                                          self_attention_flag=True, nf_factor=2.0)

    # Inputs (NCHW, matching PyTorch).
    up_in = jax.random.normal(ku, (2, up_in_c, 8, 8), jnp.float32)
    s = jax.random.normal(ks, (2, x_in_c, 16, 16), jnp.float32)

    fwd = jax.jit(functools.partial(unet_block_deep_forward, params))
    out = jax.block_until_ready(fwd(up_in, s))

    assert out.shape == (2, params["nf"], 16, 16), out.shape
    assert bool(jnp.all(jnp.isfinite(out)))
    print("KERNEL_OK")
</pallas_src>

<mosaic_0001>
module attributes {stable_mosaic.version = 11 : i64} {
  func.func @kernel(%arg0: i32, %arg1: i32, %arg2: i32, %arg3: memref<128x64xbf16, #tpu.memory_space<vmem>>, %arg4: memref<64x128xbf16, #tpu.memory_space<vmem>>, %arg5: memref<1x128xf32, #tpu.memory_space<vmem>>, %arg6: memref<1x128xf32, #tpu.memory_space<vmem>>, %arg7: memref<128x128xbf16, #tpu.memory_space<vmem>>, %arg8: memref<128x128xf32, #tpu.memory_space<vmem>>) attributes {dimension_semantics = [#tpu.dimension_semantics<parallel>, #tpu.dimension_semantics<parallel>, #tpu.dimension_semantics<arbitrary>], iteration_bounds = array<i64: 1, 1, 1>, scalar_prefetch = 0 : i64, scratch_operands = 1 : i64, tpu.core_type = #tpu.core_type<tc>, window_params = [{transform_indices = @transform_0, window_bounds = array<i64: 128, 64>}, {transform_indices = @transform_1, window_bounds = array<i64: 64, 128>}, {transform_indices = @transform_2, window_bounds = array<i64: 1, 128>}, {transform_indices = @transform_3, window_bounds = array<i64: 1, 128>}, {transform_indices = @transform_4, window_bounds = array<i64: 128, 128>}]} {
    %c0_i32 = arith.constant 0 : i32
    %0 = arith.cmpi eq, %arg2, %c0_i32 : i32
    %1 = arith.extui %0 : i1 to i32
    %c0_i32_0 = arith.constant 0 : i32
    %2 = arith.cmpi ne, %1, %c0_i32_0 : i32
    scf.if %2 {
      %cst_10 = arith.constant 0.000000e+00 : f32
      %12 = vector.broadcast %cst_10 : f32 to vector<128x128xf32>
      %c0_11 = arith.constant 0 : index
      %c0_12 = arith.constant 0 : index
      %13 = vector.load %arg8[%c0_11, %c0_12] : memref<128x128xf32, #tpu.memory_space<vmem>>, vector<128x128xf32>
      tpu.vector_store %arg8[%c0_11, %c0_12], %12 {strides = array<i32>} : memref<128x128xf32, #tpu.memory_space<vmem>>, vector<128x128xf32>,
    } else {
    }
    %c0 = arith.constant 0 : index
    %c0_1 = arith.constant 0 : index
    %3 = vector.load %arg8[%c0, %c0_1] : memref<128x128xf32, #tpu.memory_space<vmem>>, vector<128x128xf32>
    %c0_2 = arith.constant 0 : index
    %c0_3 = arith.constant 0 : index
    %4 = vector.load %arg3[%c0_2, %c0_3] : memref<128x64xbf16, #tpu.memory_space<vmem>>, vector<128x64xbf16>
    %c0_4 = arith.constant 0 : index
    %c0_5 = arith.constant 0 : index
    %5 = vector.load %arg4[%c0_4, %c0_5] : memref<64x128xbf16, #tpu.memory_space<vmem>>, vector<64x128xbf16>
    %cst = arith.constant dense<0.000000e+00> : vector<128x128xf32>
    %6 = tpu.matmul %4, %5, %cst {dimension_numbers = #tpu.dot_dimension_numbers<[1], [0], [0], [1], [0, 0, 1, 1], [], []>} : vector<128x64xbf16>, vector<64x128xbf16>, vector<128x128xf32> -> vector<128x128xf32>
    %7 = arith.addf %3, %6 : vector<128x128xf32>
    %c0_6 = arith.constant 0 : index
    %c0_7 = arith.constant 0 : index
    %8 = vector.load %arg8[%c0_6, %c0_7] : memref<128x128xf32, #tpu.memory_space<vmem>>, vector<128x128xf32>
    tpu.vector_store %arg8[%c0_6, %c0_7], %7 {strides = array<i32>} : memref<128x128xf32, #tpu.memory_space<vmem>>, vector<128x128xf32>,
    %c0_i32_8 = arith.constant 0 : i32
    %9 = arith.cmpi eq, %arg2, %c0_i32_8 : i32
    %10 = arith.extui %9 : i1 to i32
    %c0_i32_9 = arith.constant 0 : i32
    %11 = arith.cmpi ne, %10, %c0_i32_9 : i32
    scf.if %11 {
      %c0_10 = arith.constant 0 : index
      %c0_11 = arith.constant 0 : index
      %12 = vector.load %arg8[%c0_10, %c0_11] : memref<128x128xf32, #tpu.memory_space<vmem>>, vector<128x128xf32>
      %c0_12 = arith.constant 0 : index
      %c0_13 = arith.constant 0 : index
      %13 = vector.load %arg5[%c0_12, %c0_13] : memref<1x128xf32, #tpu.memory_space<vmem>>, vector<1x128xf32>
      %14 = vector.broadcast %13 : vector<1x128xf32> to vector<128x128xf32>
      %15 = arith.mulf %12, %14 : vector<128x128xf32>
      %c0_14 = arith.constant 0 : index
      %c0_15 = arith.constant 0 : index
      %16 = vector.load %arg6[%c0_14, %c0_15] : memref<1x128xf32, #tpu.memory_space<vmem>>, vector<1x128xf32>
      %17 = vector.broadcast %16 : vector<1x128xf32> to vector<128x128xf32>
      %18 = arith.addf %15, %17 : vector<128x128xf32>
      %cst_16 = arith.constant 0.000000e+00 : f32
      %19 = vector.broadcast %cst_16 : f32 to vector<128x128xf32>
      %20 = arith.maximumf %18, %19 : vector<128x128xf32>
      %21 = arith.truncf %20 : vector<128x128xf32> to vector<128x128xbf16>
      %c0_17 = arith.constant 0 : index
      %c0_18 = arith.constant 0 : index
      %22 = vector.load %arg7[%c0_17, %c0_18] : memref<128x128xbf16, #tpu.memory_space<vmem>>, vector<128x128xbf16>
      tpu.vector_store %arg7[%c0_17, %c0_18], %21 {strides = array<i32>} : memref<128x128xbf16, #tpu.memory_space<vmem>>, vector<128x128xbf16>,
    } else {
    }
    return
  }
  func.func @transform_0(%arg0: i32, %arg1: i32, %arg2: i32) -> (i32, i32) {
    %c0_i32 = arith.constant 0 : i32
    return %arg0, %arg2 : i32, i32
  }
  func.func @transform_1(%arg0: i32, %arg1: i32, %arg2: i32) -> (i32, i32) {
    %c0_i32 = arith.constant 0 : i32
    return %arg2, %arg1 : i32, i32
  }
  func.func @transform_2(%arg0: i32, %arg1: i32, %arg2: i32) -> (i32, i32) {
    %c0_i32 = arith.constant 0 : i32
    %c0_i32_0 = arith.constant 0 : i32
    return %c0_i32, %arg1 : i32, i32
  }
  func.func @transform_3(%arg0: i32, %arg1: i32, %arg2: i32) -> (i32, i32) {
    %c0_i32 = arith.constant 0 : i32
    %c0_i32_0 = arith.constant 0 : i32
    return %c0_i32, %arg1 : i32, i32
  }
  func.func @transform_4(%arg0: i32, %arg1: i32, %arg2: i32) -> (i32, i32) {
    %c0_i32 = arith.constant 0 : i32
    return %arg0, %arg1 : i32, i32
  }
}

module attributes {stable_mosaic.version = 11 : i64} {
  func.func @kernel(%arg0: i32, %arg1: i32, %arg2: memref<1x8x16x32xbf16, #tpu.memory_space<vmem>>, %arg3: memref<1x1x16x32xbf16, #tpu.memory_space<vmem>>, %arg4: memref<1x1x16x32xbf16, #tpu.memory_space<vmem>>, %arg5: memref<1x8x16x32xbf16, #tpu.memory_space<vmem>>, %arg6: memref<1x1x16x32xbf16, #tpu.memory_space<vmem>>, %arg7: memref<1x1x16x32xbf16, #tpu.memory_space<vmem>>, %arg8: memref<9x64x128xbf16, #tpu.memory_space<vmem>>, %arg9: memref<1x32xf32, #tpu.memory_space<vmem>>, %arg10: memref<1x32xf32, #tpu.memory_space<vmem>>, %arg11: memref<1x128xf32, #tpu.memory_space<vmem>>, %arg12: memref<1x128xf32, #tpu.memory_space<vmem>>, %arg13: memref<1x8x16x128xbf16, #tpu.memory_space<vmem>>, %arg14: memref<10x25x64xbf16, #tpu.memory_space<vmem>>) attributes {dimension_semantics = [#tpu.dimension_semantics<parallel>, #tpu.dimension_semantics<parallel>], iteration_bounds = array<i64: 2, 2>, scalar_prefetch = 0 : i64, scratch_operands = 1 : i64, tpu.core_type = #tpu.core_type<tc>, window_params = [{transform_indices = @transform_0, window_bounds = array<i64: 1, 8, 16, 32>}, {transform_indices = @transform_1, window_bounds = array<i64: 1, 1, 16, 32>}, {transform_indices = @transform_2, window_bounds = array<i64: 1, 1, 16, 32>}, {transform_indices = @transform_3, window_bounds = array<i64: 1, 8, 16, 32>}, {transform_indices = @transform_4, window_bounds = array<i64: 1, 1, 16, 32>}, {transform_indices = @transform_5, window_bounds = array<i64: 1, 1, 16, 32>}, {pipeline_mode = #tpu.pipeline_mode<synchronous>, transform_indices = @transform_6, window_bounds = array<i64: 9, 64, 128>}, {pipeline_mode = #tpu.pipeline_mode<synchronous>, transform_indices = @transform_7, window_bounds = array<i64: 1, 32>}, {pipeline_mode = #tpu.pipeline_mode<synchronous>, transform_indices = @transform_8, window_bounds = array<i64: 1, 32>}, {pipeline_mode = #tpu.pipeline_mode<synchronous>, transform_indices = @transform_9, window_bounds = array<i64: 1, 128>}, {pipeline_mode = #tpu.pipeline_mode<synchronous>, transform_indices = @transform_10, window_bounds = array<i64: 1, 128>}, {transform_indices = @transform_11, window_bounds = array<i64: 1, 8, 16, 128>}]} {
    %cst = arith.constant 0.000000e+00 : bf16
    %0 = vector.broadcast %cst : bf16 to vector<10x8x64xbf16>
    %c0 = arith.constant 0 : index
    %c0_0 = arith.constant 0 : index
    %c0_1 = arith.constant 0 : index
    %1 = vector.load %arg14[%c0, %c0_0, %c0_1] : memref<10x25x64xbf16, #tpu.memory_space<vmem>>, vector<10x8x64xbf16>
    tpu.vector_store %arg14[%c0, %c0_0, %c0_1], %0 {strides = array<i32>} : memref<10x25x64xbf16, #tpu.memory_space<vmem>>, vector<10x8x64xbf16>,
    %cst_2 = arith.constant 0.000000e+00 : bf16
    %2 = vector.broadcast %cst_2 : bf16 to vector<10x1x64xbf16>
    %c0_3 = arith.constant 0 : index
    %c24 = arith.constant 24 : index
    %c0_4 = arith.constant 0 : index
    %3 = vector.load %arg14[%c0_3, %c24, %c0_4] : memref<10x25x64xbf16, #tpu.memory_space<vmem>>, vector<10x1x64xbf16>
    tpu.vector_store %arg14[%c0_3, %c24, %c0_4], %2 {strides = array<i32>} : memref<10x25x64xbf16, #tpu.memory_space<vmem>>, vector<10x1x64xbf16>,
    %c0_5 = arith.constant 0 : index
    %c0_6 = arith.constant 0 : index
    %c0_7 = arith.constant 0 : index
    %c0_8 = arith.constant 0 : index
    %4 = vector.load %arg2[%c0_5, %c0_6, %c0_7, %c0_8] : memref<1x8x16x32xbf16, #tpu.memory_space<vmem>>, vector<1x8x16x32xbf16>
    %5 = vector.shape_cast %4 : vector<1x8x16x32xbf16> to vector<8x16x32xbf16>
    %c1 = arith.constant 1 : index
    %c8 = arith.constant 8 : index
    %c0_9 = arith.constant 0 : index
    %6 = vector.load %arg14[%c1, %c8, %c0_9] : memref<10x25x64xbf16, #tpu.memory_space<vmem>>, vector<8x16x32xbf16>
    tpu.vector_store %arg14[%c1, %c8, %c0_9], %5 {strides = array<i32>} : memref<10x25x64xbf16, #tpu.memory_space<vmem>>, vector<8x16x32xbf16>,
    %c0_10 = arith.constant 0 : index
    %c0_11 = arith.constant 0 : index
    %c0_12 = arith.constant 0 : index
    %c0_13 = arith.constant 0 : index
    %7 = vector.load %arg3[%c0_10, %c0_11, %c0_12, %c0_13] : memref<1x1x16x32xbf16, #tpu.memory_space<vmem>>, vector<1x1x16x32xbf16>
    %8 = vector.shape_cast %7 : vector<1x1x16x32xbf16> to vector<1x16x32xbf16>
    %c0_14 = arith.constant 0 : index
    %c8_15 = arith.constant 8 : index
    %c0_16 = arith.constant 0 : index
    %9 = vector.load %arg14[%c0_14, %c8_15, %c0_16] : memref<10x25x64xbf16, #tpu.memory_space<vmem>>, vector<1x16x32xbf16>
    tpu.vector_store %arg14[%c0_14, %c8_15, %c0_16], %8 {strides = array<i32>} : memref<10x25x64xbf16, #tpu.memory_space<vmem>>, vector<1x16x32xbf16>,
    %c0_17 = arith.constant 0 : index
    %c0_18 = arith.constant 0 : index
    %c0_19 = arith.constant 0 : index
    %c0_20 = arith.constant 0 : index
    %10 = vector.load %arg4[%c0_17, %c0_18, %c0_19, %c0_20] : memref<1x1x16x32xbf16, #tpu.memory_space<vmem>>, vector<1x1x16x32xbf16>
    %11 = vector.shape_cast %10 : vector<1x1x16x32xbf16> to vector<1x16x32xbf16>
    %c9 = arith.constant 9 : index
    %c8_21 = arith.constant 8 : index
    %c0_22 = arith.constant 0 : index
    %12 = vector.load %arg14[%c9, %c8_21, %c0_22] : memref<10x25x64xbf16, #tpu.memory_space<vmem>>, vector<1x16x32xbf16>
    tpu.vector_store %arg14[%c9, %c8_21, %c0_22], %11 {strides = array<i32>} : memref<10x25x64xbf16, #tpu.memory_space<vmem>>, vector<1x16x32xbf16>,
    %c0_23 = arith.constant 0 : index
    %c0_24 = arith.constant 0 : index
    %13 = vector.load %arg9[%c0_23, %c0_24] : memref<1x32xf32, #tpu.memory_space<vmem>>, vector<1x32xf32>
    %14 = vector.shape_cast %13 : vector<1x32xf32> to vector<1x1x32xf32>
    %c0_25 = arith.constant 0 : index
    %c0_26 = arith.constant 0 : index
    %15 = vector.load %arg10[%c0_25, %c0_26] : memref<1x32xf32, #tpu.memory_space<vmem>>, vector<1x32xf32>
    %16 = vector.shape_cast %15 : vector<1x32xf32> to vector<1x1x32xf32>
    %c0_27 = arith.constant 0 : index
    %c0_28 = arith.constant 0 : index
    %c0_29 = arith.constant 0 : index
    %c0_30 = arith.constant 0 : index
    %17 = vector.load %arg5[%c0_27, %c0_28, %c0_29, %c0_30] : memref<1x8x16x32xbf16, #tpu.memory_space<vmem>>, vector<1x8x16x32xbf16>
    %18 = vector.shape_cast %17 : vector<1x8x16x32xbf16> to vector<8x16x32xbf16>
    %19 = arith.extf %18 : vector<8x16x32xbf16> to vector<8x16x32xf32>
    %20 = vector.broadcast %14 : vector<1x1x32xf32> to vector<8x16x32xf32>
    %21 = arith.mulf %19, %20 : vector<8x16x32xf32>
    %22 = vector.broadcast %16 : vector<1x1x32xf32> to vector<8x16x32xf32>
    %23 = arith.addf %21, %22 : vector<8x16x32xf32>
    %cst_31 = arith.constant 0.000000e+00 : f32
    %24 = vector.broadcast %cst_31 : f32 to vector<8x16x32xf32>
    %25 = arith.maximumf %23, %24 : vector<8x16x32xf32>
    %26 = arith.truncf %25 : vector<8x16x32xf32> to vector<8x16x32xbf16>
    %c1_32 = arith.constant 1 : index
    %c8_33 = arith.constant 8 : index
    %c32 = arith.constant 32 : index
    %27 = vector.load %arg14[%c1_32, %c8_33, %c32] : memref<10x25x64xbf16, #tpu.memory_space<vmem>>, vector<8x16x32xbf16>
    tpu.vector_store %arg14[%c1_32, %c8_33, %c32], %26 {strides = array<i32>} : memref<10x25x64xbf16, #tpu.memory_space<vmem>>, vector<8x16x32xbf16>,
    %c0_34 = arith.constant 0 : index
    %c0_35 = arith.constant 0 : index
    %c0_36 = arith.constant 0 : index
    %c0_37 = arith.constant 0 : index
    %28 = vector.load %arg6[%c0_34, %c0_35, %c0_36, %c0_37] : memref<1x1x16x32xbf16, #tpu.memory_space<vmem>>, vector<1x1x16x32xbf16>
    %29 = vector.shape_cast %28 : vector<1x1x16x32xbf16> to vector<1x16x32xbf16>
    %30 = arith.extf %29 : vector<1x16x32xbf16> to vector<1x16x32xf32>
    %31 = vector.broadcast %14 : vector<1x1x32xf32> to vector<1x16x32xf32>
    %32 = arith.mulf %30, %31 : vector<1x16x32xf32>
    %33 = vector.broadcast %16 : vector<1x1x32xf32> to vector<1x16x32xf32>
    %34 = arith.addf %32, %33 : vector<1x16x32xf32>
    %cst_38 = arith.constant 0.000000e+00 : f32
    %35 = vector.broadcast %cst_38 : f32 to vector<1x16x32xf32>
    %36 = arith.maximumf %34, %35 : vector<1x16x32xf32>
    %37 = arith.truncf %36 : vector<1x16x32xf32> to vector<1x16x32xbf16>
    %c0_39 = arith.constant 0 : index
    %c8_40 = arith.constant 8 : index
    %c32_41 = arith.constant 32 : index
    %38 = vector.load %arg14[%c0_39, %c8_40, %c32_41] : memref<10x25x64xbf16, #tpu.memory_space<vmem>>, vector<1x16x32xbf16>
    tpu.vector_store %arg14[%c0_39, %c8_40, %c32_41], %37 {strides = array<i32>} : memref<10x25x64xbf16, #tpu.memory_space<vmem>>, vector<1x16x32xbf16>,
    %c0_42 = arith.constant 0 : index
    %c0_43 = arith.constant 0 : index
    %c0_44 = arith.constant 0 : index
    %c0_45 = arith.constant 0 : index
    %39 = vector.load %arg7[%c0_42, %c0_43, %c0_44, %c0_45] : memref<1x1x16x32xbf16, #tpu.memory_space<vmem>>, vector<1x1x16x32xbf16>
    %40 = vector.shape_cast %39 : vector<1x1x16x32xbf16> to vector<1x16x32xbf16>
    %41 = arith.extf %40 : vector<1x16x32xbf16> to vector<1x16x32xf32>
    %42 = vector.broadcast %14 : vector<1x1x32xf32> to vector<1x16x32xf32>
    %43 = arith.mulf %41, %42 : vector<1x16x32xf32>
    %44 = vector.broadcast %16 : vector<1x1x32xf32> to vector<1x16x32xf32>
    %45 = arith.addf %43, %44 : vector<1x16x32xf32>
    %cst_46 = arith.constant 0.000000e+00 : f32
    %46 = vector.broadcast %cst_46 : f32 to vector<1x16x32xf32>
    %47 = arith.maximumf %45, %46 : vector<1x16x32xf32>
    %48 = arith.truncf %47 : vector<1x16x32xf32> to vector<1x16x32xbf16>
    %c9_47 = arith.constant 9 : index
    %c8_48 = arith.constant 8 : index
    %c32_49 = arith.constant 32 : index
    %49 = vector.load %arg14[%c9_47, %c8_48, %c32_49] : memref<10x25x64xbf16, #tpu.memory_space<vmem>>, vector<1x16x32xbf16>
    tpu.vector_store %arg14[%c9_47, %c8_48, %c32_49], %48 {strides = array<i32>} : memref<10x25x64xbf16, #tpu.memory_space<vmem>>, vector<1x16x32xbf16>,
    %cst_50 = arith.constant 0.000000e+00 : bf16
    %50 = vector.broadcast %cst_50 : bf16 to vector<1x25x64xbf16>
    %c0_i32 = arith.constant 0 : i32
    %51 = arith.cmpi eq, %arg1, %c0_i32 : i32
    %52 = arith.extui %51 : i1 to i32
    %c0_i32_51 = arith.constant 0 : i32
    %53 = arith.cmpi ne, %52, %c0_i32_51 : i32
    scf.if %53 {
      %c0_120 = arith.constant 0 : index
      %c0_121 = arith.constant 0 : index
      %c0_122 = arith.constant 0 : index
      %125 = vector.load %arg14[%c0_120, %c0_121, %c0_122] : memref<10x25x64xbf16, #tpu.memory_space<vmem>>, vector<1x25x64xbf16>
      tpu.vector_store %arg14[%c0_120, %c0_121, %c0_122], %50 {strides = array<i32>} : memref<10x25x64xbf16, #tpu.memory_space<vmem>>, vector<1x25x64xbf16>,
    } else {
    }
    %c1_i32 = arith.constant 1 : i32
    %54 = arith.cmpi eq, %arg1, %c1_i32 : i32
    %55 = arith.extui %54 : i1 to i32
    %c0_i32_52 = arith.constant 0 : i32
    %56 = arith.cmpi ne, %55, %c0_i32_52 : i32
    scf.if %56 {
      %c9_120 = arith.constant 9 : index
      %c0_121 = arith.constant 0 : index
      %c0_122 = arith.constant 0 : index
      %125 = vector.load %arg14[%c9_120, %c0_121, %c0_122] : memref<10x25x64xbf16, #tpu.memory_space<vmem>>, vector<1x25x64xbf16>
      tpu.vector_store %arg14[%c9_120, %c0_121, %c0_122], %50 {strides = array<i32>} : memref<10x25x64xbf16, #tpu.memory_space<vmem>>, vector<1x25x64xbf16>,
    } else {
    }
    %cst_53 = arith.constant 0.000000e+00 : f32
    %57 = vector.broadcast %cst_53 : f32 to vector<128x128xf32>
    %c0_54 = arith.constant 0 : index
    %c7 = arith.constant 7 : index
    %c0_55 = arith.constant 0 : index
    %58 = vector.load %arg14[%c0_54, %c7, %c0_55] : memref<10x25x64xbf16, #tpu.memory_space<vmem>>, vector<8x16x64xbf16>
    %59 = vector.shape_cast %58 : vector<8x16x64xbf16> to vector<128x64xbf16>
    %c0_56 = arith.constant 0 : index
    %c0_57 = arith.constant 0 : index
    %c0_58 = arith.constant 0 : index
    %60 = vector.load %arg8[%c0_56, %c0_57, %c0_58] : memref<9x64x128xbf16, #tpu.memory_space<vmem>>, vector<1x64x128xbf16>
    %61 = vector.shape_cast %60 : vector<1x64x128xbf16> to vector<64x128xbf16>
    %cst_59 = arith.constant dense<0.000000e+00> : vector<128x128xf32>
    %62 = tpu.matmul %59, %61, %cst_59 {dimension_numbers = #tpu.dot_dimension_numbers<[1], [0], [0], [1], [0, 0, 1, 1], [], []>} : vector<128x64xbf16>, vector<64x128xbf16>, vector<128x128xf32> -> vector<128x128xf32>
    %63 = arith.addf %57, %62 : vector<128x128xf32>
    %c0_60 = arith.constant 0 : index
    %c8_61 = arith.constant 8 : index
    %c0_62 = arith.constant 0 : index
    %64 = vector.load %arg14[%c0_60, %c8_61, %c0_62] : memref<10x25x64xbf16, #tpu.memory_space<vmem>>, vector<8x16x64xbf16>
    %65 = vector.shape_cast %64 : vector<8x16x64xbf16> to vector<128x64xbf16>
    %c1_63 = arith.constant 1 : index
    %c0_64 = arith.constant 0 : index
    %c0_65 = arith.constant 0 : index
    %66 = vector.load %arg8[%c1_63, %c0_64, %c0_65] : memref<9x64x128xbf16, #tpu.memory_space<vmem>>, vector<1x64x128xbf16>
    %67 = vector.shape_cast %66 : vector<1x64x128xbf16> to vector<64x128xbf16>
    %cst_66 = arith.constant dense<0.000000e+00> : vector<128x128xf32>
    %68 = tpu.matmul %65, %67, %cst_66 {dimension_numbers = #tpu.dot_dimension_numbers<[1], [0], [0], [1], [0, 0, 1, 1], [], []>} : vector<128x64xbf16>, vector<64x128xbf16>, vector<128x128xf32> -> vector<128x128xf32>
    %69 = arith.addf %63, %68 : vector<128x128xf32>
    %c0_67 = arith.constant 0 : index
    %c9_68 = arith.constant 9 : index
    %c0_69 = arith.constant 0 : index
    %70 = vector.load %arg14[%c0_67, %c9_68, %c0_69] : memref<10x25x64xbf16, #tpu.memory_space<vmem>>, vector<8x16x64xbf16>
    %71 = vector.shape_cast %70 : vector<8x16x64xbf16> to vector<128x64xbf16>
    %c2 = arith.constant 2 : index
    %c0_70 = arith.constant 0 : index
    %c0_71 = arith.constant 0 : index
    %72 = vector.load %arg8[%c2, %c0_70, %c0_71] : memref<9x64x128xbf16, #tpu.memory_space<vmem>>, vector<1x64x128xbf16>
    %73 = vector.shape_cast %72 : vector<1x64x128xbf16> to vector<64x128xbf16>
    %cst_72 = arith.constant dense<0.000000e+00> : vector<128x128xf32>
    %74 = tpu.matmul %71, %73, %cst_72 {dimension_numbers = #tpu.dot_dimension_numbers<[1], [0], [0], [1], [0, 0, 1, 1], [], []>} : vector<128x64xbf16>, vector<64x128xbf16>, vector<128x128xf32> -> vector<128x128xf32>
    %75 = arith.addf %69, %74 : vector<128x128xf32>
    %c1_73 = arith.constant 1 : index
    %c7_74 = arith.constant 7 : index
    %c0_75 = arith.constant 0 : index
    %76 = vector.load %arg14[%c1_73, %c7_74, %c0_75] : memref<10x25x64xbf16, #tpu.memory_space<vmem>>, vector<8x16x64xbf16>
    %77 = vector.shape_cast %76 : vector<8x16x64xbf16> to vector<128x64xbf16>
    %c3 = arith.constant 3 : index
    %c0_76 = arith.constant 0 : index
    %c0_77 = arith.constant 0 : index
    %78 = vector.load %arg8[%c3, %c0_76, %c0_77] : memref<9x64x128xbf16, #tpu.memory_space<vmem>>, vector<1x64x128xbf16>
    %79 = vector.shape_cast %78 : vector<1x64x128xbf16> to vector<64x128xbf16>
    %cst_78 = arith.constant dense<0.000000e+00> : vector<128x128xf32>
    %80 = tpu.matmul %77, %79, %cst_78 {dimension_numbers = #tpu.dot_dimension_numbers<[1], [0], [0], [1], [0, 0, 1, 1], [], []>} : vector<128x64xbf16>, vector<64x128xbf16>, vector<128x128xf32> -> vector<128x128xf32>
    %81 = arith.addf %75, %80 : vector<128x128xf32>
    %c1_79 = arith.constant 1 : index
    %c8_80 = arith.constant 8 : index
    %c0_81 = arith.constant 0 : index
    %82 = vector.load %arg14[%c1_79, %c8_80, %c0_81] : memref<10x25x64xbf16, #tpu.memory_space<vmem>>, vector<8x16x64xbf16>
    %83 = vector.shape_cast %82 : vector<8x16x64xbf16> to vector<128x64xbf16>
    %c4 = arith.constant 4 : index
    %c0_82 = arith.constant 0 : index
    %c0_83 = arith.constant 0 : index
    %84 = vector.load %arg8[%c4, %c0_82, %c0_83] : memref<9x64x128xbf16, #tpu.memory_space<vmem>>, vector<1x64x128xbf16>
    %85 = vector.shape_cast %84 : vector<1x64x128xbf16> to vector<64x128xbf16>
    %cst_84 = arith.constant dense<0.000000e+00> : vector<128x128xf32>
    %86 = tpu.matmul %83, %85, %cst_84 {dimension_numbers = #tpu.dot_dimension_numbers<[1], [0], [0], [1], [0, 0, 1, 1], [], []>} : vector<128x64xbf16>, vector<64x128xbf16>, vector<128x128xf32> -> vector<128x128xf32>
    %87 = arith.addf %81, %86 : vector<128x128xf32>
    %c1_85 = arith.constant 1 : index
    %c9_86 = arith.constant 9 : index
    %c0_87 = arith.constant 0 : index
    %88 = vector.load %arg14[%c1_85, %c9_86, %c0_87] : memref<10x25x64xbf16, #tpu.memory_space<vmem>>, vector<8x16x64xbf16>
    %89 = vector.shape_cast %88 : vector<8x16x64xbf16> to vector<128x64xbf16>
    %c5 = arith.constant 5 : index
    %c0_88 = arith.constant 0 : index
    %c0_89 = arith.constant 0 : index
    %90 = vector.load %arg8[%c5, %c0_88, %c0_89] : memref<9x64x128xbf16, #tpu.memory_space<vmem>>, vector<1x64x128xbf16>
    %91 = vector.shape_cast %90 : vector<1x64x128xbf16> to vector<64x128xbf16>
    %cst_90 = arith.constant dense<0.000000e+00> : vector<128x128xf32>
    %92 = tpu.matmul %89, %91, %cst_90 {dimension_numbers = #tpu.dot_dimension_numbers<[1], [0], [0], [1], [0, 0, 1, 1], [], []>} : vector<128x64xbf16>, vector<64x128xbf16>, vector<128x128xf32> -> vector<128x128xf32>
    %93 = arith.addf %87, %92 : vector<128x128xf32>
    %c2_91 = arith.constant 2 : index
    %c7_92 = arith.constant 7 : index
    %c0_93 = arith.constant 0 : index
    %94 = vector.load %arg14[%c2_91, %c7_92, %c0_93] : memref<10x25x64xbf16, #tpu.memory_space<vmem>>, vector<8x16x64xbf16>
    %95 = vector.shape_cast %94 : vector<8x16x64xbf16> to vector<128x64xbf16>
    %c6 = arith.constant 6 : index
    %c0_94 = arith.constant 0 : index
    %c0_95 = arith.constant 0 : index
    %96 = vector.load %arg8[%c6, %c0_94, %c0_95] : memref<9x64x128xbf16, #tpu.memory_space<vmem>>, vector<1x64x128xbf16>
    %97 = vector.shape_cast %96 : vector<1x64x128xbf16> to vector<64x128xbf16>
    %cst_96 = arith.constant dense<0.000000e+00> : vector<128x128xf32>
    %98 = tpu.matmul %95, %97, %cst_96 {dimension_numbers = #tpu.dot_dimension_numbers<[1], [0], [0], [1], [0, 0, 1, 1], [], []>} : vector<128x64xbf16>, vector<64x128xbf16>, vector<128x128xf32> -> vector<128x128xf32>
    %99 = arith.addf %93, %98 : vector<128x128xf32>
    %c2_97 = arith.constant 2 : index
    %c8_98 = arith.constant 8 : index
    %c0_99 = arith.constant 0 : index
    %100 = vector.load %arg14[%c2_97, %c8_98, %c0_99] : memref<10x25x64xbf16, #tpu.memory_space<vmem>>, vector<8x16x64xbf16>
    %101 = vector.shape_cast %100 : vector<8x16x64xbf16> to vector<128x64xbf16>
    %c7_100 = arith.constant 7 : index
    %c0_101 = arith.constant 0 : index
    %c0_102 = arith.constant 0 : index
    %102 = vector.load %arg8[%c7_100, %c0_101, %c0_102] : memref<9x64x128xbf16, #tpu.memory_space<vmem>>, vector<1x64x128xbf16>
    %103 = vector.shape_cast %102 : vector<1x64x128xbf16> to vector<64x128xbf16>
    %cst_103 = arith.constant dense<0.000000e+00> : vector<128x128xf32>
    %104 = tpu.matmul %101, %103, %cst_103 {dimension_numbers = #tpu.dot_dimension_numbers<[1], [0], [0], [1], [0, 0, 1, 1], [], []>} : vector<128x64xbf16>, vector<64x128xbf16>, vector<128x128xf32> -> vector<128x128xf32>
    %105 = arith.addf %99, %104 : vector<128x128xf32>
    %c2_104 = arith.constant 2 : index
    %c9_105 = arith.constant 9 : index
    %c0_106 = arith.constant 0 : index
    %106 = vector.load %arg14[%c2_104, %c9_105, %c0_106] : memref<10x25x64xbf16, #tpu.memory_space<vmem>>, vector<8x16x64xbf16>
    %107 = vector.shape_cast %106 : vector<8x16x64xbf16> to vector<128x64xbf16>
    %c8_107 = arith.constant 8 : index
    %c0_108 = arith.constant 0 : index
    %c0_109 = arith.constant 0 : index
    %108 = vector.load %arg8[%c8_107, %c0_108, %c0_109] : memref<9x64x128xbf16, #tpu.memory_space<vmem>>, vector<1x64x128xbf16>
    %109 = vector.shape_cast %108 : vector<1x64x128xbf16> to vector<64x128xbf16>
    %cst_110 = arith.constant dense<0.000000e+00> : vector<128x128xf32>
    %110 = tpu.matmul %107, %109, %cst_110 {dimension_numbers = #tpu.dot_dimension_numbers<[1], [0], [0], [1], [0, 0, 1, 1], [], []>} : vector<128x64xbf16>, vector<64x128xbf16>, vector<128x128xf32> -> vector<128x128xf32>
    %111 = arith.addf %105, %110 : vector<128x128xf32>
    %cst_111 = arith.constant 0.000000e+00 : f32
    %112 = vector.broadcast %cst_111 : f32 to vector<128x128xf32>
    %113 = arith.maximumf %111, %112 : vector<128x128xf32>
    %c0_112 = arith.constant 0 : index
    %c0_113 = arith.constant 0 : index
    %114 = vector.load %arg11[%c0_112, %c0_113] : memref<1x128xf32, #tpu.memory_space<vmem>>, vector<1x128xf32>
    %115 = vector.broadcast %114 : vector<1x128xf32> to vector<128x128xf32>
    %116 = arith.mulf %113, %115 : vector<128x128xf32>
    %c0_114 = arith.constant 0 : index
    %c0_115 = arith.constant 0 : index
    %117 = vector.load %arg12[%c0_114, %c0_115] : memref<1x128xf32, #tpu.memory_space<vmem>>, vector<1x128xf32>
    %118 = vector.broadcast %117 : vector<1x128xf32> to vector<128x128xf32>
    %119 = arith.addf %116, %118 : vector<128x128xf32>
    %120 = vector.shape_cast %119 : vector<128x128xf32> to vector<8x16x128xf32>
    %121 = arith.truncf %120 : vector<8x16x128xf32> to vector<8x16x128xbf16>
    %c0_116 = arith.constant 0 : index
    %c0_117 = arith.constant 0 : index
    %c0_118 = arith.constant 0 : index
    %c0_119 = arith.constant 0 : index
    %122 = vector.load %arg13[%c0_116, %c0_117, %c0_118, %c0_119] : memref<1x8x16x128xbf16, #tpu.memory_space<vmem>>, vector<1x8x16x128xbf16>
    %123 = vector.shape_cast %122 : vector<1x8x16x128xbf16> to vector<8x16x128xbf16>
    %124 = vector.shape_cast %121 : vector<8x16x128xbf16> to vector<1x8x16x128xbf16>
    tpu.vector_store %arg13[%c0_116, %c0_117, %c0_118, %c0_119], %124 {strides = array<i32>} : memref<1x8x16x128xbf16, #tpu.memory_space<vmem>>, vector<1x8x16x128xbf16>,
    return
  }
  func.func @transform_0(%arg0: i32, %arg1: i32) -> (i32, i32, i32, i32) {
    %c0_i32 = arith.constant 0 : i32
    %c0_i32_0 = arith.constant 0 : i32
    %c0_i32_1 = arith.constant 0 : i32
    return %arg0, %arg1, %c0_i32, %c0_i32_0 : i32, i32, i32, i32
  }
  func.func @transform_1(%arg0: i32, %arg1: i32) -> (i32, i32, i32, i32) {
    %c8_i32 = arith.constant 8 : i32
    %0 = arith.muli %arg1, %c8_i32 : i32
    %c1_i32 = arith.constant 1 : i32
    %1 = arith.subi %0, %c1_i32 : i32
    %c0_i32 = arith.constant 0 : i32
    %2 = arith.maxsi %1, %c0_i32 : i32
    %c0_i32_0 = arith.constant 0 : i32
    %c0_i32_1 = arith.constant 0 : i32
    %c0_i32_2 = arith.constant 0 : i32
    return %arg0, %2, %c0_i32_0, %c0_i32_1 : i32, i32, i32, i32
  }
  func.func @transform_2(%arg0: i32, %arg1: i32) -> (i32, i32, i32, i32) {
    %c8_i32 = arith.constant 8 : i32
    %0 = arith.muli %arg1, %c8_i32 : i32
    %c8_i32_0 = arith.constant 8 : i32
    %1 = arith.addi %0, %c8_i32_0 : i32
    %c15_i32 = arith.constant 15 : i32
    %2 = arith.minsi %1, %c15_i32 : i32
    %c0_i32 = arith.constant 0 : i32
    %c0_i32_1 = arith.constant 0 : i32
    %c0_i32_2 = arith.constant 0 : i32
    return %arg0, %2, %c0_i32, %c0_i32_1 : i32, i32, i32, i32
  }
  func.func @transform_3(%arg0: i32, %arg1: i32) -> (i32, i32, i32, i32) {
    %c0_i32 = arith.constant 0 : i32
    %c0_i32_0 = arith.constant 0 : i32
    %c0_i32_1 = arith.constant 0 : i32
    return %arg0, %arg1, %c0_i32, %c0_i32_0 : i32, i32, i32, i32
  }
  func.func @transform_4(%arg0: i32, %arg1: i32) -> (i32, i32, i32, i32) {
    %c8_i32 = arith.constant 8 : i32
    %0 = arith.muli %arg1, %c8_i32 : i32
    %c1_i32 = arith.constant 1 : i32
    %1 = arith.subi %0, %c1_i32 : i32
    %c0_i32 = arith.constant 0 : i32
    %2 = arith.maxsi %1, %c0_i32 : i32
    %c0_i32_0 = arith.constant 0 : i32
    %c0_i32_1 = arith.constant 0 : i32
    %c0_i32_2 = arith.constant 0 : i32
    return %arg0, %2, %c0_i32_0, %c0_i32_1 : i32, i32, i32, i32
  }
  func.func @transform_5(%arg0: i32, %arg1: i32) -> (i32, i32, i32, i32) {
    %c8_i32 = arith.constant 8 : i32
    %0 = arith.muli %arg1, %c8_i32 : i32
    %c8_i32_0 = arith.constant 8 : i32
    %1 = arith.addi %0, %c8_i32_0 : i32
    %c15_i32 = arith.constant 15 : i32
    %2 = arith.minsi %1, %c15_i32 : i32
    %c0_i32 = arith.constant 0 : i32
    %c0_i32_1 = arith.constant 0 : i32
    %c0_i32_2 = arith.constant 0 : i32
    return %arg0, %2, %c0_i32, %c0_i32_1 : i32, i32, i32, i32
  }
  func.func @transform_6(%arg0: i32, %arg1: i32) -> (i32, i32, i32) {
    %c0_i32 = arith.constant 0 : i32
    %c0_i32_0 = arith.constant 0 : i32
    %c0_i32_1 = arith.constant 0 : i32
    %c0_i32_2 = arith.constant 0 : i32
    return %c0_i32, %c0_i32_0, %c0_i32_1 : i32, i32, i32
  }
  func.func @transform_7(%arg0: i32, %arg1: i32) -> (i32, i32) {
    %c0_i32 = arith.constant 0 : i32
    %c0_i32_0 = arith.constant 0 : i32
    %c0_i32_1 = arith.constant 0 : i32
    return %c0_i32, %c0_i32_0 : i32, i32
  }
  func.func @transform_8(%arg0: i32, %arg1: i32) -> (i32, i32) {
    %c0_i32 = arith.constant 0 : i32
    %c0_i32_0 = arith.constant 0 : i32
    %c0_i32_1 = arith.constant 0 : i32
    return %c0_i32, %c0_i32_0 : i32, i32
  }
  func.func @transform_9(%arg0: i32, %arg1: i32) -> (i32, i32) {
    %c0_i32 = arith.constant 0 : i32
    %c0_i32_0 = arith.constant 0 : i32
    %c0_i32_1 = arith.constant 0 : i32
    return %c0_i32, %c0_i32_0 : i32, i32
  }
  func.func @transform_10(%arg0: i32, %arg1: i32) -> (i32, i32) {
    %c0_i32 = arith.constant 0 : i32
    %c0_i32_0 = arith.constant 0 : i32
    %c0_i32_1 = arith.constant 0 : i32
    return %c0_i32, %c0_i32_0 : i32, i32
  }
  func.func @transform_11(%arg0: i32, %arg1: i32) -> (i32, i32, i32, i32) {
    %c0_i32 = arith.constant 0 : i32
    %c0_i32_0 = arith.constant 0 : i32
    %c0_i32_1 = arith.constant 0 : i32
    return %arg0, %arg1, %c0_i32, %c0_i32_0 : i32, i32, i32, i32
  }
}

module attributes {stable_mosaic.version = 11 : i64} {
  func.func @kernel(%arg0: i32, %arg1: i32, %arg2: memref<1x8x16x128xbf16, #tpu.memory_space<vmem>>, %arg3: memref<1x1x16x128xbf16, #tpu.memory_space<vmem>>, %arg4: memref<1x1x16x128xbf16, #tpu.memory_space<vmem>>, %arg5: memref<9x128x128xbf16, #tpu.memory_space<vmem>>, %arg6: memref<1x128xf32, #tpu.memory_space<vmem>>, %arg7: memref<1x128xf32, #tpu.memory_space<vmem>>, %arg8: memref<1x8x16x128xbf16, #tpu.memory_space<vmem>>, %arg9: memref<10x25x128xbf16, #tpu.memory_space<vmem>>) attributes {dimension_semantics = [#tpu.dimension_semantics<parallel>, #tpu.dimension_semantics<parallel>], iteration_bounds = array<i64: 2, 2>, scalar_prefetch = 0 : i64, scratch_operands = 1 : i64, tpu.core_type = #tpu.core_type<tc>, window_params = [{transform_indices = @transform_0, window_bounds = array<i64: 1, 8, 16, 128>}, {transform_indices = @transform_1, window_bounds = array<i64: 1, 1, 16, 128>}, {transform_indices = @transform_2, window_bounds = array<i64: 1, 1, 16, 128>}, {pipeline_mode = #tpu.pipeline_mode<synchronous>, transform_indices = @transform_3, window_bounds = array<i64: 9, 128, 128>}, {pipeline_mode = #tpu.pipeline_mode<synchronous>, transform_indices = @transform_4, window_bounds = array<i64: 1, 128>}, {pipeline_mode = #tpu.pipeline_mode<synchronous>, transform_indices = @transform_5, window_bounds = array<i64: 1, 128>}, {transform_indices = @transform_6, window_bounds = array<i64: 1, 8, 16, 128>}]} {
    %cst = arith.constant 0.000000e+00 : bf16
    %0 = vector.broadcast %cst : bf16 to vector<10x8x128xbf16>
    %c0 = arith.constant 0 : index
    %c0_0 = arith.constant 0 : index
    %c0_1 = arith.constant 0 : index
    %1 = vector.load %arg9[%c0, %c0_0, %c0_1] : memref<10x25x128xbf16, #tpu.memory_space<vmem>>, vector<10x8x128xbf16>
    tpu.vector_store %arg9[%c0, %c0_0, %c0_1], %0 {strides = array<i32>} : memref<10x25x128xbf16, #tpu.memory_space<vmem>>, vector<10x8x128xbf16>,
    %cst_2 = arith.constant 0.000000e+00 : bf16
    %2 = vector.broadcast %cst_2 : bf16 to vector<10x1x128xbf16>
    %c0_3 = arith.constant 0 : index
    %c24 = arith.constant 24 : index
    %c0_4 = arith.constant 0 : index
    %3 = vector.load %arg9[%c0_3, %c24, %c0_4] : memref<10x25x128xbf16, #tpu.memory_space<vmem>>, vector<10x1x128xbf16>
    tpu.vector_store %arg9[%c0_3, %c24, %c0_4], %2 {strides = array<i32>} : memref<10x25x128xbf16, #tpu.memory_space<vmem>>, vector<10x1x128xbf16>,
    %c0_5 = arith.constant 0 : index
    %c0_6 = arith.constant 0 : index
    %c0_7 = arith.constant 0 : index
    %c0_8 = arith.constant 0 : index
    %4 = vector.load %arg2[%c0_5, %c0_6, %c0_7, %c0_8] : memref<1x8x16x128xbf16, #tpu.memory_space<vmem>>, vector<1x8x16x128xbf16>
    %5 = vector.shape_cast %4 : vector<1x8x16x128xbf16> to vector<8x16x128xbf16>
    %c1 = arith.constant 1 : index
    %c8 = arith.constant 8 : index
    %c0_9 = arith.constant 0 : index
    %6 = vector.load %arg9[%c1, %c8, %c0_9] : memref<10x25x128xbf16, #tpu.memory_space<vmem>>, vector<8x16x128xbf16>
    tpu.vector_store %arg9[%c1, %c8, %c0_9], %5 {strides = array<i32>} : memref<10x25x128xbf16, #tpu.memory_space<vmem>>, vector<8x16x128xbf16>,
    %c0_10 = arith.constant 0 : index
    %c0_11 = arith.constant 0 : index
    %c0_12 = arith.constant 0 : index
    %c0_13 = arith.constant 0 : index
    %7 = vector.load %arg3[%c0_10, %c0_11, %c0_12, %c0_13] : memref<1x1x16x128xbf16, #tpu.memory_space<vmem>>, vector<1x1x16x128xbf16>
    %8 = vector.shape_cast %7 : vector<1x1x16x128xbf16> to vector<1x16x128xbf16>
    %c0_14 = arith.constant 0 : index
    %c8_15 = arith.constant 8 : index
    %c0_16 = arith.constant 0 : index
    %9 = vector.load %arg9[%c0_14, %c8_15, %c0_16] : memref<10x25x128xbf16, #tpu.memory_space<vmem>>, vector<1x16x128xbf16>
    tpu.vector_store %arg9[%c0_14, %c8_15, %c0_16], %8 {strides = array<i32>} : memref<10x25x128xbf16, #tpu.memory_space<vmem>>, vector<1x16x128xbf16>,
    %c0_17 = arith.constant 0 : index
    %c0_18 = arith.constant 0 : index
    %c0_19 = arith.constant 0 : index
    %c0_20 = arith.constant 0 : index
    %10 = vector.load %arg4[%c0_17, %c0_18, %c0_19, %c0_20] : memref<1x1x16x128xbf16, #tpu.memory_space<vmem>>, vector<1x1x16x128xbf16>
    %11 = vector.shape_cast %10 : vector<1x1x16x128xbf16> to vector<1x16x128xbf16>
    %c9 = arith.constant 9 : index
    %c8_21 = arith.constant 8 : index
    %c0_22 = arith.constant 0 : index
    %12 = vector.load %arg9[%c9, %c8_21, %c0_22] : memref<10x25x128xbf16, #tpu.memory_space<vmem>>, vector<1x16x128xbf16>
    tpu.vector_store %arg9[%c9, %c8_21, %c0_22], %11 {strides = array<i32>} : memref<10x25x128xbf16, #tpu.memory_space<vmem>>, vector<1x16x128xbf16>,
    %cst_23 = arith.constant 0.000000e+00 : bf16
    %13 = vector.broadcast %cst_23 : bf16 to vector<1x25x128xbf16>
    %c0_i32 = arith.constant 0 : i32
    %14 = arith.cmpi eq, %arg1, %c0_i32 : i32
    %15 = arith.extui %14 : i1 to i32
    %c0_i32_24 = arith.constant 0 : i32
    %16 = arith.cmpi ne, %15, %c0_i32_24 : i32
    scf.if %16 {
      %c0_93 = arith.constant 0 : index
      %c0_94 = arith.constant 0 : index
      %c0_95 = arith.constant 0 : index
      %88 = vector.load %arg9[%c0_93, %c0_94, %c0_95] : memref<10x25x128xbf16, #tpu.memory_space<vmem>>, vector<1x25x128xbf16>
      tpu.vector_store %arg9[%c0_93, %c0_94, %c0_95], %13 {strides = array<i32>} : memref<10x25x128xbf16, #tpu.memory_space<vmem>>, vector<1x25x128xbf16>,
    } else {
    }
    %c1_i32 = arith.constant 1 : i32
    %17 = arith.cmpi eq, %arg1, %c1_i32 : i32
    %18 = arith.extui %17 : i1 to i32
    %c0_i32_25 = arith.constant 0 : i32
    %19 = arith.cmpi ne, %18, %c0_i32_25 : i32
    scf.if %19 {
      %c9_93 = arith.constant 9 : index
      %c0_94 = arith.constant 0 : index
      %c0_95 = arith.constant 0 : index
      %88 = vector.load %arg9[%c9_93, %c0_94, %c0_95] : memref<10x25x128xbf16, #tpu.memory_space<vmem>>, vector<1x25x128xbf16>
      tpu.vector_store %arg9[%c9_93, %c0_94, %c0_95], %13 {strides = array<i32>} : memref<10x25x128xbf16, #tpu.memory_space<vmem>>, vector<1x25x128xbf16>,
    } else {
    }
    %cst_26 = arith.constant 0.000000e+00 : f32
    %20 = vector.broadcast %cst_26 : f32 to vector<128x128xf32>
    %c0_27 = arith.constant 0 : index
    %c7 = arith.constant 7 : index
    %c0_28 = arith.constant 0 : index
    %21 = vector.load %arg9[%c0_27, %c7, %c0_28] : memref<10x25x128xbf16, #tpu.memory_space<vmem>>, vector<8x16x128xbf16>
    %22 = vector.shape_cast %21 : vector<8x16x128xbf16> to vector<128x128xbf16>
    %c0_29 = arith.constant 0 : index
    %c0_30 = arith.constant 0 : index
    %c0_31 = arith.constant 0 : index
    %23 = vector.load %arg5[%c0_29, %c0_30, %c0_31] : memref<9x128x128xbf16, #tpu.memory_space<vmem>>, vector<1x128x128xbf16>
    %24 = vector.shape_cast %23 : vector<1x128x128xbf16> to vector<128x128xbf16>
    %cst_32 = arith.constant dense<0.000000e+00> : vector<128x128xf32>
    %25 = tpu.matmul %22, %24, %cst_32 {dimension_numbers = #tpu.dot_dimension_numbers<[1], [0], [0], [1], [0, 0, 1, 1], [], []>} : vector<128x128xbf16>, vector<128x128xbf16>, vector<128x128xf32> -> vector<128x128xf32>
    %26 = arith.addf %20, %25 : vector<128x128xf32>
    %c0_33 = arith.constant 0 : index
    %c8_34 = arith.constant 8 : index
    %c0_35 = arith.constant 0 : index
    %27 = vector.load %arg9[%c0_33, %c8_34, %c0_35] : memref<10x25x128xbf16, #tpu.memory_space<vmem>>, vector<8x16x128xbf16>
    %28 = vector.shape_cast %27 : vector<8x16x128xbf16> to vector<128x128xbf16>
    %c1_36 = arith.constant 1 : index
    %c0_37 = arith.constant 0 : index
    %c0_38 = arith.constant 0 : index
    %29 = vector.load %arg5[%c1_36, %c0_37, %c0_38] : memref<9x128x128xbf16, #tpu.memory_space<vmem>>, vector<1x128x128xbf16>
    %30 = vector.shape_cast %29 : vector<1x128x128xbf16> to vector<128x128xbf16>
    %cst_39 = arith.constant dense<0.000000e+00> : vector<128x128xf32>
    %31 = tpu.matmul %28, %30, %cst_39 {dimension_numbers = #tpu.dot_dimension_numbers<[1], [0], [0], [1], [0, 0, 1, 1], [], []>} : vector<128x128xbf16>, vector<128x128xbf16>, vector<128x128xf32> -> vector<128x128xf32>
    %32 = arith.addf %26, %31 : vector<128x128xf32>
    %c0_40 = arith.constant 0 : index
    %c9_41 = arith.constant 9 : index
    %c0_42 = arith.constant 0 : index
    %33 = vector.load %arg9[%c0_40, %c9_41, %c0_42] : memref<10x25x128xbf16, #tpu.memory_space<vmem>>, vector<8x16x128xbf16>
    %34 = vector.shape_cast %33 : vector<8x16x128xbf16> to vector<128x128xbf16>
    %c2 = arith.constant 2 : index
    %c0_43 = arith.constant 0 : index
    %c0_44 = arith.constant 0 : index
    %35 = vector.load %arg5[%c2, %c0_43, %c0_44] : memref<9x128x128xbf16, #tpu.memory_space<vmem>>, vector<1x128x128xbf16>
    %36 = vector.shape_cast %35 : vector<1x128x128xbf16> to vector<128x128xbf16>
    %cst_45 = arith.constant dense<0.000000e+00> : vector<128x128xf32>
    %37 = tpu.matmul %34, %36, %cst_45 {dimension_numbers = #tpu.dot_dimension_numbers<[1], [0], [0], [1], [0, 0, 1, 1], [], []>} : vector<128x128xbf16>, vector<128x128xbf16>, vector<128x128xf32> -> vector<128x128xf32>
    %38 = arith.addf %32, %37 : vector<128x128xf32>
    %c1_46 = arith.constant 1 : index
    %c7_47 = arith.constant 7 : index
    %c0_48 = arith.constant 0 : index
    %39 = vector.load %arg9[%c1_46, %c7_47, %c0_48] : memref<10x25x128xbf16, #tpu.memory_space<vmem>>, vector<8x16x128xbf16>
    %40 = vector.shape_cast %39 : vector<8x16x128xbf16> to vector<128x128xbf16>
    %c3 = arith.constant 3 : index
    %c0_49 = arith.constant 0 : index
    %c0_50 = arith.constant 0 : index
    %41 = vector.load %arg5[%c3, %c0_49, %c0_50] : memref<9x128x128xbf16, #tpu.memory_space<vmem>>, vector<1x128x128xbf16>
    %42 = vector.shape_cast %41 : vector<1x128x128xbf16> to vector<128x128xbf16>
    %cst_51 = arith.constant dense<0.000000e+00> : vector<128x128xf32>
    %43 = tpu.matmul %40, %42, %cst_51 {dimension_numbers = #tpu.dot_dimension_numbers<[1], [0], [0], [1], [0, 0, 1, 1], [], []>} : vector<128x128xbf16>, vector<128x128xbf16>, vector<128x128xf32> -> vector<128x128xf32>
    %44 = arith.addf %38, %43 : vector<128x128xf32>
    %c1_52 = arith.constant 1 : index
    %c8_53 = arith.constant 8 : index
    %c0_54 = arith.constant 0 : index
    %45 = vector.load %arg9[%c1_52, %c8_53, %c0_54] : memref<10x25x128xbf16, #tpu.memory_space<vmem>>, vector<8x16x128xbf16>
    %46 = vector.shape_cast %45 : vector<8x16x128xbf16> to vector<128x128xbf16>
    %c4 = arith.constant 4 : index
    %c0_55 = arith.constant 0 : index
    %c0_56 = arith.constant 0 : index
    %47 = vector.load %arg5[%c4, %c0_55, %c0_56] : memref<9x128x128xbf16, #tpu.memory_space<vmem>>, vector<1x128x128xbf16>
    %48 = vector.shape_cast %47 : vector<1x128x128xbf16> to vector<128x128xbf16>
    %cst_57 = arith.constant dense<0.000000e+00> : vector<128x128xf32>
    %49 = tpu.matmul %46, %48, %cst_57 {dimension_numbers = #tpu.dot_dimension_numbers<[1], [0], [0], [1], [0, 0, 1, 1], [], []>} : vector<128x128xbf16>, vector<128x128xbf16>, vector<128x128xf32> -> vector<128x128xf32>
    %50 = arith.addf %44, %49 : vector<128x128xf32>
    %c1_58 = arith.constant 1 : index
    %c9_59 = arith.constant 9 : index
    %c0_60 = arith.constant 0 : index
    %51 = vector.load %arg9[%c1_58, %c9_59, %c0_60] : memref<10x25x128xbf16, #tpu.memory_space<vmem>>, vector<8x16x128xbf16>
    %52 = vector.shape_cast %51 : vector<8x16x128xbf16> to vector<128x128xbf16>
    %c5 = arith.constant 5 : index
    %c0_61 = arith.constant 0 : index
    %c0_62 = arith.constant 0 : index
    %53 = vector.load %arg5[%c5, %c0_61, %c0_62] : memref<9x128x128xbf16, #tpu.memory_space<vmem>>, vector<1x128x128xbf16>
    %54 = vector.shape_cast %53 : vector<1x128x128xbf16> to vector<128x128xbf16>
    %cst_63 = arith.constant dense<0.000000e+00> : vector<128x128xf32>
    %55 = tpu.matmul %52, %54, %cst_63 {dimension_numbers = #tpu.dot_dimension_numbers<[1], [0], [0], [1], [0, 0, 1, 1], [], []>} : vector<128x128xbf16>, vector<128x128xbf16>, vector<128x128xf32> -> vector<128x128xf32>
    %56 = arith.addf %50, %55 : vector<128x128xf32>
    %c2_64 = arith.constant 2 : index
    %c7_65 = arith.constant 7 : index
    %c0_66 = arith.constant 0 : index
    %57 = vector.load %arg9[%c2_64, %c7_65, %c0_66] : memref<10x25x128xbf16, #tpu.memory_space<vmem>>, vector<8x16x128xbf16>
    %58 = vector.shape_cast %57 : vector<8x16x128xbf16> to vector<128x128xbf16>
    %c6 = arith.constant 6 : index
    %c0_67 = arith.constant 0 : index
    %c0_68 = arith.constant 0 : index
    %59 = vector.load %arg5[%c6, %c0_67, %c0_68] : memref<9x128x128xbf16, #tpu.memory_space<vmem>>, vector<1x128x128xbf16>
    %60 = vector.shape_cast %59 : vector<1x128x128xbf16> to vector<128x128xbf16>
    %cst_69 = arith.constant dense<0.000000e+00> : vector<128x128xf32>
    %61 = tpu.matmul %58, %60, %cst_69 {dimension_numbers = #tpu.dot_dimension_numbers<[1], [0], [0], [1], [0, 0, 1, 1], [], []>} : vector<128x128xbf16>, vector<128x128xbf16>, vector<128x128xf32> -> vector<128x128xf32>
    %62 = arith.addf %56, %61 : vector<128x128xf32>
    %c2_70 = arith.constant 2 : index
    %c8_71 = arith.constant 8 : index
    %c0_72 = arith.constant 0 : index
    %63 = vector.load %arg9[%c2_70, %c8_71, %c0_72] : memref<10x25x128xbf16, #tpu.memory_space<vmem>>, vector<8x16x128xbf16>
    %64 = vector.shape_cast %63 : vector<8x16x128xbf16> to vector<128x128xbf16>
    %c7_73 = arith.constant 7 : index
    %c0_74 = arith.constant 0 : index
    %c0_75 = arith.constant 0 : index
    %65 = vector.load %arg5[%c7_73, %c0_74, %c0_75] : memref<9x128x128xbf16, #tpu.memory_space<vmem>>, vector<1x128x128xbf16>
    %66 = vector.shape_cast %65 : vector<1x128x128xbf16> to vector<128x128xbf16>
    %cst_76 = arith.constant dense<0.000000e+00> : vector<128x128xf32>
    %67 = tpu.matmul %64, %66, %cst_76 {dimension_numbers = #tpu.dot_dimension_numbers<[1], [0], [0], [1], [0, 0, 1, 1], [], []>} : vector<128x128xbf16>, vector<128x128xbf16>, vector<128x128xf32> -> vector<128x128xf32>
    %68 = arith.addf %62, %67 : vector<128x128xf32>
    %c2_77 = arith.constant 2 : index
    %c9_78 = arith.constant 9 : index
    %c0_79 = arith.constant 0 : index
    %69 = vector.load %arg9[%c2_77, %c9_78, %c0_79] : memref<10x25x128xbf16, #tpu.memory_space<vmem>>, vector<8x16x128xbf16>
    %70 = vector.shape_cast %69 : vector<8x16x128xbf16> to vector<128x128xbf16>
    %c8_80 = arith.constant 8 : index
    %c0_81 = arith.constant 0 : index
    %c0_82 = arith.constant 0 : index
    %71 = vector.load %arg5[%c8_80, %c0_81, %c0_82] : memref<9x128x128xbf16, #tpu.memory_space<vmem>>, vector<1x128x128xbf16>
    %72 = vector.shape_cast %71 : vector<1x128x128xbf16> to vector<128x128xbf16>
    %cst_83 = arith.constant dense<0.000000e+00> : vector<128x128xf32>
    %73 = tpu.matmul %70, %72, %cst_83 {dimension_numbers = #tpu.dot_dimension_numbers<[1], [0], [0], [1], [0, 0, 1, 1], [], []>} : vector<128x128xbf16>, vector<128x128xbf16>, vector<128x128xf32> -> vector<128x128xf32>
    %74 = arith.addf %68, %73 : vector<128x128xf32>
    %cst_84 = arith.constant 0.000000e+00 : f32
    %75 = vector.broadcast %cst_84 : f32 to vector<128x128xf32>
    %76 = arith.maximumf %74, %75 : vector<128x128xf32>
    %c0_85 = arith.constant 0 : index
    %c0_86 = arith.constant 0 : index
    %77 = vector.load %arg6[%c0_85, %c0_86] : memref<1x128xf32, #tpu.memory_space<vmem>>, vector<1x128xf32>
    %78 = vector.broadcast %77 : vector<1x128xf32> to vector<128x128xf32>
    %79 = arith.mulf %76, %78 : vector<128x128xf32>
    %c0_87 = arith.constant 0 : index
    %c0_88 = arith.constant 0 : index
    %80 = vector.load %arg7[%c0_87, %c0_88] : memref<1x128xf32, #tpu.memory_space<vmem>>, vector<1x128xf32>
    %81 = vector.broadcast %80 : vector<1x128xf32> to vector<128x128xf32>
    %82 = arith.addf %79, %81 : vector<128x128xf32>
    %83 = vector.shape_cast %82 : vector<128x128xf32> to vector<8x16x128xf32>
    %84 = arith.truncf %83 : vector<8x16x128xf32> to vector<8x16x128xbf16>
    %c0_89 = arith.constant 0 : index
    %c0_90 = arith.constant 0 : index
    %c0_91 = arith.constant 0 : index
    %c0_92 = arith.constant 0 : index
    %85 = vector.load %arg8[%c0_89, %c0_90, %c0_91, %c0_92] : memref<1x8x16x128xbf16, #tpu.memory_space<vmem>>, vector<1x8x16x128xbf16>
    %86 = vector.shape_cast %85 : vector<1x8x16x128xbf16> to vector<8x16x128xbf16>
    %87 = vector.shape_cast %84 : vector<8x16x128xbf16> to vector<1x8x16x128xbf16>
    tpu.vector_store %arg8[%c0_89, %c0_90, %c0_91, %c0_92], %87 {strides = array<i32>} : memref<1x8x16x128xbf16, #tpu.memory_space<vmem>>, vector<1x8x16x128xbf16>,
    return
  }
  func.func @transform_0(%arg0: i32, %arg1: i32) -> (i32, i32, i32, i32) {
    %c0_i32 = arith.constant 0 : i32
    %c0_i32_0 = arith.constant 0 : i32
    %c0_i32_1 = arith.constant 0 : i32
    return %arg0, %arg1, %c0_i32, %c0_i32_0 : i32, i32, i32, i32
  }
  func.func @transform_1(%arg0: i32, %arg1: i32) -> (i32, i32, i32, i32) {
    %c8_i32 = arith.constant 8 : i32
    %0 = arith.muli %arg1, %c8_i32 : i32
    %c1_i32 = arith.constant 1 : i32
    %1 = arith.subi %0, %c1_i32 : i32
    %c0_i32 = arith.constant 0 : i32
    %2 = arith.maxsi %1, %c0_i32 : i32
    %c0_i32_0 = arith.constant 0 : i32
    %c0_i32_1 = arith.constant 0 : i32
    %c0_i32_2 = arith.constant 0 : i32
    return %arg0, %2, %c0_i32_0, %c0_i32_1 : i32, i32, i32, i32
  }
  func.func @transform_2(%arg0: i32, %arg1: i32) -> (i32, i32, i32, i32) {
    %c8_i32 = arith.constant 8 : i32
    %0 = arith.muli %arg1, %c8_i32 : i32
    %c8_i32_0 = arith.constant 8 : i32
    %1 = arith.addi %0, %c8_i32_0 : i32
    %c15_i32 = arith.constant 15 : i32
    %2 = arith.minsi %1, %c15_i32 : i32
    %c0_i32 = arith.constant 0 : i32
    %c0_i32_1 = arith.constant 0 : i32
    %c0_i32_2 = arith.constant 0 : i32
    return %arg0, %2, %c0_i32, %c0_i32_1 : i32, i32, i32, i32
  }
  func.func @transform_3(%arg0: i32, %arg1: i32) -> (i32, i32, i32) {
    %c0_i32 = arith.constant 0 : i32
    %c0_i32_0 = arith.constant 0 : i32
    %c0_i32_1 = arith.constant 0 : i32
    %c0_i32_2 = arith.constant 0 : i32
    return %c0_i32, %c0_i32_0, %c0_i32_1 : i32, i32, i32
  }
  func.func @transform_4(%arg0: i32, %arg1: i32) -> (i32, i32) {
    %c0_i32 = arith.constant 0 : i32
    %c0_i32_0 = arith.constant 0 : i32
    %c0_i32_1 = arith.constant 0 : i32
    return %c0_i32, %c0_i32_0 : i32, i32
  }
  func.func @transform_5(%arg0: i32, %arg1: i32) -> (i32, i32) {
    %c0_i32 = arith.constant 0 : i32
    %c0_i32_0 = arith.constant 0 : i32
    %c0_i32_1 = arith.constant 0 : i32
    return %c0_i32, %c0_i32_0 : i32, i32
  }
  func.func @transform_6(%arg0: i32, %arg1: i32) -> (i32, i32, i32, i32) {
    %c0_i32 = arith.constant 0 : i32
    %c0_i32_0 = arith.constant 0 : i32
    %c0_i32_1 = arith.constant 0 : i32
    return %arg0, %arg1, %c0_i32, %c0_i32_0 : i32, i32, i32, i32
  }
}

module attributes {stable_mosaic.version = 11 : i64} {
  func.func @kernel(%arg0: i32, %arg1: i32, %arg2: i32, %arg3: memref<256x128xbf16, #tpu.memory_space<vmem>>, %arg4: memref<128x144xbf16, #tpu.memory_space<vmem>>, %arg5: memref<1x144xf32, #tpu.memory_space<vmem>>, %arg6: memref<1x144xf32, #tpu.memory_space<vmem>>, %arg7: memref<256x144xbf16, #tpu.memory_space<vmem>>, %arg8: memref<256x144xf32, #tpu.memory_space<vmem>>) attributes {dimension_semantics = [#tpu.dimension_semantics<parallel>, #tpu.dimension_semantics<parallel>, #tpu.dimension_semantics<arbitrary>], iteration_bounds = array<i64: 2, 1, 1>, scalar_prefetch = 0 : i64, scratch_operands = 1 : i64, tpu.core_type = #tpu.core_type<tc>, window_params = [{transform_indices = @transform_0, window_bounds = array<i64: 256, 128>}, {transform_indices = @transform_1, window_bounds = array<i64: 128, 144>}, {transform_indices = @transform_2, window_bounds = array<i64: 1, 144>}, {transform_indices = @transform_3, window_bounds = array<i64: 1, 144>}, {transform_indices = @transform_4, window_bounds = array<i64: 256, 144>}]} {
    %c0_i32 = arith.constant 0 : i32
    %0 = arith.cmpi eq, %arg2, %c0_i32 : i32
    %1 = arith.extui %0 : i1 to i32
    %c0_i32_0 = arith.constant 0 : i32
    %2 = arith.cmpi ne, %1, %c0_i32_0 : i32
    scf.if %2 {
      %cst_10 = arith.constant 0.000000e+00 : f32
      %12 = vector.broadcast %cst_10 : f32 to vector<256x144xf32>
      %c0_11 = arith.constant 0 : index
      %c0_12 = arith.constant 0 : index
      %13 = vector.load %arg8[%c0_11, %c0_12] : memref<256x144xf32, #tpu.memory_space<vmem>>, vector<256x144xf32>
      tpu.vector_store %arg8[%c0_11, %c0_12], %12 {strides = array<i32>} : memref<256x144xf32, #tpu.memory_space<vmem>>, vector<256x144xf32>,
    } else {
    }
    %c0 = arith.constant 0 : index
    %c0_1 = arith.constant 0 : index
    %3 = vector.load %arg8[%c0, %c0_1] : memref<256x144xf32, #tpu.memory_space<vmem>>, vector<256x144xf32>
    %c0_2 = arith.constant 0 : index
    %c0_3 = arith.constant 0 : index
    %4 = vector.load %arg3[%c0_2, %c0_3] : memref<256x128xbf16, #tpu.memory_space<vmem>>, vector<256x128xbf16>
    %c0_4 = arith.constant 0 : index
    %c0_5 = arith.constant 0 : index
    %5 = vector.load %arg4[%c0_4, %c0_5] : memref<128x144xbf16, #tpu.memory_space<vmem>>, vector<128x144xbf16>
    %cst = arith.constant dense<0.000000e+00> : vector<256x144xf32>
    %6 = tpu.matmul %4, %5, %cst {dimension_numbers = #tpu.dot_dimension_numbers<[1], [0], [0], [1], [0, 0, 1, 1], [], []>} : vector<256x128xbf16>, vector<128x144xbf16>, vector<256x144xf32> -> vector<256x144xf32>
    %7 = arith.addf %3, %6 : vector<256x144xf32>
    %c0_6 = arith.constant 0 : index
    %c0_7 = arith.constant 0 : index
    %8 = vector.load %arg8[%c0_6, %c0_7] : memref<256x144xf32, #tpu.memory_space<vmem>>, vector<256x144xf32>
    tpu.vector_store %arg8[%c0_6, %c0_7], %7 {strides = array<i32>} : memref<256x144xf32, #tpu.memory_space<vmem>>, vector<256x144xf32>,
    %c0_i32_8 = arith.constant 0 : i32
    %9 = arith.cmpi eq, %arg2, %c0_i32_8 : i32
    %10 = arith.extui %9 : i1 to i32
    %c0_i32_9 = arith.constant 0 : i32
    %11 = arith.cmpi ne, %10, %c0_i32_9 : i32
    scf.if %11 {
      %c0_10 = arith.constant 0 : index
      %c0_11 = arith.constant 0 : index
      %12 = vector.load %arg8[%c0_10, %c0_11] : memref<256x144xf32, #tpu.memory_space<vmem>>, vector<256x144xf32>
      %c0_12 = arith.constant 0 : index
      %c0_13 = arith.constant 0 : index
      %13 = vector.load %arg5[%c0_12, %c0_13] : memref<1x144xf32, #tpu.memory_space<vmem>>, vector<1x144xf32>
      %14 = vector.broadcast %13 : vector<1x144xf32> to vector<256x144xf32>
      %15 = arith.mulf %12, %14 : vector<256x144xf32>
      %c0_14 = arith.constant 0 : index
      %c0_15 = arith.constant 0 : index
      %16 = vector.load %arg6[%c0_14, %c0_15] : memref<1x144xf32, #tpu.memory_space<vmem>>, vector<1x144xf32>
      %17 = vector.broadcast %16 : vector<1x144xf32> to vector<256x144xf32>
      %18 = arith.addf %15, %17 : vector<256x144xf32>
      %19 = arith.truncf %18 : vector<256x144xf32> to vector<256x144xbf16>
      %c0_16 = arith.constant 0 : index
      %c0_17 = arith.constant 0 : index
      %20 = vector.load %arg7[%c0_16, %c0_17] : memref<256x144xbf16, #tpu.memory_space<vmem>>, vector<256x144xbf16>
      tpu.vector_store %arg7[%c0_16, %c0_17], %19 {strides = array<i32>} : memref<256x144xbf16, #tpu.memory_space<vmem>>, vector<256x144xbf16>,
    } else {
    }
    return
  }
  func.func @transform_0(%arg0: i32, %arg1: i32, %arg2: i32) -> (i32, i32) {
    %c0_i32 = arith.constant 0 : i32
    return %arg0, %arg2 : i32, i32
  }
  func.func @transform_1(%arg0: i32, %arg1: i32, %arg2: i32) -> (i32, i32) {
    %c0_i32 = arith.constant 0 : i32
    return %arg2, %arg1 : i32, i32
  }
  func.func @transform_2(%arg0: i32, %arg1: i32, %arg2: i32) -> (i32, i32) {
    %c0_i32 = arith.constant 0 : i32
    %c0_i32_0 = arith.constant 0 : i32
    return %c0_i32, %arg1 : i32, i32
  }
  func.func @transform_3(%arg0: i32, %arg1: i32, %arg2: i32) -> (i32, i32) {
    %c0_i32 = arith.constant 0 : i32
    %c0_i32_0 = arith.constant 0 : i32
    return %c0_i32, %arg1 : i32, i32
  }
  func.func @transform_4(%arg0: i32, %arg1: i32, %arg2: i32) -> (i32, i32) {
    %c0_i32 = arith.constant 0 : i32
    return %arg0, %arg1 : i32, i32
  }
}

module attributes {stable_mosaic.version = 11 : i64} {
  func.func @kernel(%arg0: i32, %arg1: i32, %arg2: memref<1x128x128xbf16, #tpu.memory_space<vmem>>, %arg3: memref<1x16x256xbf16, #tpu.memory_space<vmem>>, %arg4: memref<1x256x128xbf16, #tpu.memory_space<vmem>>, %arg5: memref<128x16xbf16, #tpu.memory_space<vmem>>, %arg6: memref<1xf32, #tpu.memory_space<smem>>, %arg7: memref<1x128x128xbf16, #tpu.memory_space<vmem>>) attributes {dimension_semantics = [#tpu.dimension_semantics<parallel>, #tpu.dimension_semantics<parallel>], iteration_bounds = array<i64: 2, 2>, scalar_prefetch = 0 : i64, scratch_operands = 0 : i64, tpu.core_type = #tpu.core_type<tc>, window_params = [{transform_indices = @transform_0, window_bounds = array<i64: 1, 128, 128>}, {transform_indices = @transform_1, window_bounds = array<i64: 1, 16, 256>}, {transform_indices = @transform_2, window_bounds = array<i64: 1, 256, 128>}, {pipeline_mode = #tpu.pipeline_mode<synchronous>, transform_indices = @transform_3, window_bounds = array<i64: 128, 16>}, {transform_indices = @transform_4, window_bounds = array<i64: 1>}, {transform_indices = @transform_5, window_bounds = array<i64: 1, 128, 128>}]} {
    %c0 = arith.constant 0 : index
    %c0_0 = arith.constant 0 : index
    %c0_1 = arith.constant 0 : index
    %0 = vector.load %arg2[%c0, %c0_0, %c0_1] : memref<1x128x128xbf16, #tpu.memory_space<vmem>>, vector<1x128x128xbf16>
    %1 = vector.shape_cast %0 : vector<1x128x128xbf16> to vector<128x128xbf16>
    %c0_2 = arith.constant 0 : index
    %c0_3 = arith.constant 0 : index
    %2 = vector.load %arg5[%c0_2, %c0_3] : memref<128x16xbf16, #tpu.memory_space<vmem>>, vector<128x16xbf16>
    %cst = arith.constant dense<0.000000e+00> : vector<128x16xf32>
    %3 = tpu.matmul %1, %2, %cst {dimension_numbers = #tpu.dot_dimension_numbers<[1], [0], [0], [1], [0, 0, 1, 1], [], []>} : vector<128x128xbf16>, vector<128x16xbf16>, vector<128x16xf32> -> vector<128x16xf32>
    %4 = arith.truncf %3 : vector<128x16xf32> to vector<128x16xbf16>
    %c0_4 = arith.constant 0 : index
    %c0_5 = arith.constant 0 : index
    %c0_6 = arith.constant 0 : index
    %5 = vector.load %arg3[%c0_4, %c0_5, %c0_6] : memref<1x16x256xbf16, #tpu.memory_space<vmem>>, vector<1x16x256xbf16>
    %6 = vector.shape_cast %5 : vector<1x16x256xbf16> to vector<16x256xbf16>
    %cst_7 = arith.constant dense<0.000000e+00> : vector<128x256xf32>
    %7 = tpu.matmul %4, %6, %cst_7 {dimension_numbers = #tpu.dot_dimension_numbers<[1], [0], [0], [1], [0, 0, 1, 1], [], []>} : vector<128x16xbf16>, vector<16x256xbf16>, vector<128x256xf32> -> vector<128x256xf32>
    %cst_8 = arith.constant dense<0xFF800000> : vector<128xf32>
    %8 = vector.multi_reduction <maximumf>, %7, %cst_8 [1] : vector<128x256xf32> to vector<128xf32>
    %9 = vector.shape_cast %8 : vector<128xf32> to vector<128x1xf32>
    %10 = vector.broadcast %9 : vector<128x1xf32> to vector<128x256xf32>
    %11 = arith.subf %7, %10 : vector<128x256xf32>
    %12 = math.exp %11 : vector<128x256xf32>
    %cst_9 = arith.constant dense<0.000000e+00> : vector<128xf32>
    %13 = vector.multi_reduction <add>, %12, %cst_9 [1] : vector<128x256xf32> to vector<128xf32>
    %14 = vector.shape_cast %13 : vector<128xf32> to vector<128x1xf32>
    %15 = tpu.reciprocal %14 : vector<128x1xf32> -> vector<128x1xf32>
    %16 = vector.broadcast %15 : vector<128x1xf32> to vector<128x256xf32>
    %17 = arith.mulf %12, %16 : vector<128x256xf32>
    %18 = arith.truncf %17 : vector<128x256xf32> to vector<128x256xbf16>
    %c0_10 = arith.constant 0 : index
    %c0_11 = arith.constant 0 : index
    %c0_12 = arith.constant 0 : index
    %19 = vector.load %arg4[%c0_10, %c0_11, %c0_12] : memref<1x256x128xbf16, #tpu.memory_space<vmem>>, vector<1x256x128xbf16>
    %20 = vector.shape_cast %19 : vector<1x256x128xbf16> to vector<256x128xbf16>
    %cst_13 = arith.constant dense<0.000000e+00> : vector<128x128xf32>
    %21 = tpu.matmul %18, %20, %cst_13 {dimension_numbers = #tpu.dot_dimension_numbers<[1], [0], [0], [1], [0, 0, 1, 1], [], []>} : vector<128x256xbf16>, vector<256x128xbf16>, vector<128x128xf32> -> vector<128x128xf32>
    %c0_14 = arith.constant 0 : index
    %22 = memref.load %arg6[%c0_14] : memref<1xf32, #tpu.memory_space<smem>>
    %23 = vector.broadcast %22 : f32 to vector<128x128xf32>
    %24 = arith.mulf %23, %21 : vector<128x128xf32>
    %25 = arith.extf %1 : vector<128x128xbf16> to vector<128x128xf32>
    %26 = arith.addf %24, %25 : vector<128x128xf32>
    %27 = arith.truncf %26 : vector<128x128xf32> to vector<128x128xbf16>
    %c0_15 = arith.constant 0 : index
    %c0_16 = arith.constant 0 : index
    %c0_17 = arith.constant 0 : index
    %28 = vector.load %arg7[%c0_15, %c0_16, %c0_17] : memref<1x128x128xbf16, #tpu.memory_space<vmem>>, vector<1x128x128xbf16>
    %29 = vector.shape_cast %28 : vector<1x128x128xbf16> to vector<128x128xbf16>
    %30 = vector.shape_cast %27 : vector<128x128xbf16> to vector<1x128x128xbf16>
    tpu.vector_store %arg7[%c0_15, %c0_16, %c0_17], %30 {strides = array<i32>} : memref<1x128x128xbf16, #tpu.memory_space<vmem>>, vector<1x128x128xbf16>,
    return
  }
  func.func @transform_0(%arg0: i32, %arg1: i32) -> (i32, i32, i32) {
    %c0_i32 = arith.constant 0 : i32
    %c0_i32_0 = arith.constant 0 : i32
    return %arg0, %arg1, %c0_i32 : i32, i32, i32
  }
  func.func @transform_1(%arg0: i32, %arg1: i32) -> (i32, i32, i32) {
    %c0_i32 = arith.constant 0 : i32
    %c0_i32_0 = arith.constant 0 : i32
    %c0_i32_1 = arith.constant 0 : i32
    return %arg0, %c0_i32, %c0_i32_0 : i32, i32, i32
  }
  func.func @transform_2(%arg0: i32, %arg1: i32) -> (i32, i32, i32) {
    %c0_i32 = arith.constant 0 : i32
    %c0_i32_0 = arith.constant 0 : i32
    %c0_i32_1 = arith.constant 0 : i32
    return %arg0, %c0_i32, %c0_i32_0 : i32, i32, i32
  }
  func.func @transform_3(%arg0: i32, %arg1: i32) -> (i32, i32) {
    %c0_i32 = arith.constant 0 : i32
    %c0_i32_0 = arith.constant 0 : i32
    %c0_i32_1 = arith.constant 0 : i32
    return %c0_i32, %c0_i32_0 : i32, i32
  }
  func.func @transform_4(%arg0: i32, %arg1: i32) -> i32 {
    %c0_i32 = arith.constant 0 : i32
    %c0_i32_0 = arith.constant 0 : i32
    return %c0_i32 : i32
  }
  func.func @transform_5(%arg0: i32, %arg1: i32) -> (i32, i32, i32) {
    %c0_i32 = arith.constant 0 : i32
    %c0_i32_0 = arith.constant 0 : i32
    return %arg0, %arg1, %c0_i32 : i32, i32, i32
  }
}

</mosaic_0001>

<llo_original>
// kernel: unet_block_deep_forward.5
$region0: #{unet_block_deep_forward.5}
  #allocation0 [shape = 'u32[]', space=smem, size = 0x4, offset = 0x4, fixed_abs, tag = 'smem constant byte address 0x4 - core index']
  #allocation1 [shape = 'u32[72,128]{1,0:T(1,128)}', space=vmem, size = 0x9000, scoped, tag = 'internal scratch']
  #allocation2 [shape = 'f32[128,128]{1,0:T(8,128)}', space=vmem, size = 0x10000, scoped, tag = 'scratch operand']
  %s0 = inlined_call_operand.vmem [shape: bf16[128,64], index: 0, kind: input, shape index: {}]
  %s1 = inlined_call_operand.vmem [shape: bf16[64,128], index: 1, kind: input, shape index: {}]
  %s2 = inlined_call_operand.vmem [shape: f32[1,128], index: 2, kind: input, shape index: {}]
  %s3 = inlined_call_operand.vmem [shape: f32[1,128], index: 3, kind: input, shape index: {}]
  %s4 = inlined_call_operand.vmem [shape: bf16[128,128], index: 4, kind: output, shape index: {}]
  %s5 = sld [smem:[#allocation0]]
  $region34: #{unet_block_deep_forward.5} parent=0
    _
  %s7 = ssub.s32 1, %s5
  %s8 = scalar_select 0, %s7, %s5
  // Predicated region
  $region2: #{unet_block_deep_forward.5} parent=0 // pred_check
    _
  $region3: #{unet_block_deep_forward.5} parent=0 // pred_check_branch
    %10 = sbr.rel (0) target = $region5
  $region4: #{unet_block_deep_forward.5} parent=0 // pred_region
    _
  $region5: #{unet_block_deep_forward.5} parent=0 // pred_fallthru
    _
  // Predicated region
  $region6: #{unet_block_deep_forward.5} parent=0 // pred_check
    _
  $region7: #{unet_block_deep_forward.5} parent=0 // pred_check_branch
    %12 = sbr.rel (0) target = $region9
  $region8: #{unet_block_deep_forward.5} parent=0 // pred_region
    _
  $region9: #{unet_block_deep_forward.5} parent=0 // pred_fallthru
    _
  // Predicated region
  $region10: #{unet_block_deep_forward.5} parent=0 // pred_check
    _
  $region11: #{unet_block_deep_forward.5} parent=0 // pred_check_branch
    %14 = sbr.rel (0) target = $region13
  $region12: #{unet_block_deep_forward.5} parent=0 // pred_region
    _
  $region13: #{unet_block_deep_forward.5} parent=0 // pred_fallthru
    _
  // Predicated region
  $region14: #{unet_block_deep_forward.5} parent=0 // pred_check
    _
  $region15: #{unet_block_deep_forward.5} parent=0 // pred_check_branch
    %16 = sbr.rel (0) target = $region17
  $region16: #{unet_block_deep_forward.5} parent=0 // pred_region
    _
  $region17: #{unet_block_deep_forward.5} parent=0 // pred_fallthru
    _
  %p18 = scmp.eq.s32.totalorder 0, 0
  // Predicated region
  $region18: #{unet_block_deep_forward.5} parent=0 // pred_check
    %p19 = pneg %p18
  $region19: #{unet_block_deep_forward.5} parent=0 // pred_check_branch
    %21 = sbr.rel (%p19) target = $region21
  $region20: #{unet_block_deep_forward.5} parent=0 // pred_region
    %22 = vst [vmem:[#allocation2] sm:$0xff] 0.0
    %23 = vst [vmem:[#allocation2 + $0x8] sm:$0xff] 0.0
    %24 = vst [vmem:[#allocation2 + $0x10] sm:$0xff] 0.0
    %25 = vst [vmem:[#allocation2 + $0x18] sm:$0xff] 0.0
    %26 = vst [vmem:[#allocation2 + $0x20] sm:$0xff] 0.0
    %27 = vst [vmem:[#allocation2 + $0x28] sm:$0xff] 0.0
    %28 = vst [vmem:[#allocation2 + $0x30] sm:$0xff] 0.0
    %29 = vst [vmem:[#allocation2 + $0x38] sm:$0xff] 0.0
    %30 = vst [vmem:[#allocation2 + $0x40] sm:$0xff] 0.0
    %31 = vst [vmem:[#allocation2 + $0x48] sm:$0xff] 0.0
    %32 = vst [vmem:[#allocation2 + $0x50] sm:$0xff] 0.0
    %33 = vst [vmem:[#allocation2 + $0x58] sm:$0xff] 0.0
    %34 = vst [vmem:[#allocation2 + $0x60] sm:$0xff] 0.0
    %35 = vst [vmem:[#allocation2 + $0x68] sm:$0xff] 0.0
    %36 = vst [vmem:[#allocation2 + $0x70] sm:$0xff] 0.0
    %37 = vst [vmem:[#allocation2 + $0x78] sm:$0xff] 0.0
  $region21: #{unet_block_deep_forward.5} parent=0 // pred_fallthru
    _
  %v38 = vld [vmem:[#allocation2] sm:$0xff]
  %v39 = vld [vmem:[#allocation2 + $0x8] sm:$0xff]
  %v40 = vld [vmem:[#allocation2 + $0x10] sm:$0xff]
  %v41 = vld [vmem:[#allocation2 + $0x18] sm:$0xff]
  %v42 = vld [vmem:[#allocation2 + $0x20] sm:$0xff]
  %v43 = vld [vmem:[#allocation2 + $0x28] sm:$0xff]
  %v44 = vld [vmem:[#allocation2 + $0x30] sm:$0xff]
  %v45 = vld [vmem:[#allocation2 + $0x38] sm:$0xff]
  %v46 = vld [vmem:[#allocation2 + $0x40] sm:$0xff]
  %v47 = vld [vmem:[#allocation2 + $0x48] sm:$0xff]
  %v48 = vld [vmem:[#allocation2 + $0x50] sm:$0xff]
  %v49 = vld [vmem:[#allocation2 + $0x58] sm:$0xff]
  %v50 = vld [vmem:[#allocation2 + $0x60] sm:$0xff]
  %v51 = vld [vmem:[#allocation2 + $0x68] sm:$0xff]
  %v52 = vld [vmem:[#allocation2 + $0x70] sm:$0xff]
  %v53 = vld [vmem:[#allocation2 + $0x78] sm:$0xff]
  %v54 = vld [vmem:[%s0] sm:$0xf]
  %v55 = vld [vmem:[%s0 + $0x4] sm:$0xf]
  %v56 = vld [vmem:[%s0 + $0x8] sm:$0xf]
  %v57 = vld [vmem:[%s0 + $0xc] sm:$0xf]
  %v58 = vld [vmem:[%s0 + $0x10] sm:$0xf]
  %v59 = vld [vmem:[%s0 + $0x14] sm:$0xf]
  %v60 = vld [vmem:[%s0 + $0x18] sm:$0xf]
  %v61 = vld [vmem:[%s0 + $0x1c] sm:$0xf]
  %v62 = vld [vmem:[%s0 + $0x20] sm:$0xf]
  %v63 = vld [vmem:[%s0 + $0x24] sm:$0xf]
  %v64 = vld [vmem:[%s0 + $0x28] sm:$0xf]
  %v65 = vld [vmem:[%s0 + $0x2c] sm:$0xf]
  %v66 = vld [vmem:[%s0 + $0x30] sm:$0xf]
  %v67 = vld [vmem:[%s0 + $0x34] sm:$0xf]
  %v68 = vld [vmem:[%s0 + $0x38] sm:$0xf]
  %v69 = vld [vmem:[%s0 + $0x3c] sm:$0xf]
  %v70 = vld [vmem:[%s1] sm:$0xf]
  %v71 = vld [vmem:[%s1 + $0x4] sm:$0xf]
  %v72 = vld [vmem:[%s1 + $0x8] sm:$0xf]
  %v73 = vld [vmem:[%s1 + $0xc] sm:$0xf]
  %v74 = vld [vmem:[%s1 + $0x10] sm:$0xf]
  %v75 = vld [vmem:[%s1 + $0x14] sm:$0xf]
  %v76 = vld [vmem:[%s1 + $0x18] sm:$0xf]
  %v77 = vld [vmem:[%s1 + $0x1c] sm:$0xf]
  %v94 = vunpack.c.l.b16 %v54
  %v95 = vunpack.c.l.b16 %v55
  %v96 = vunpack.c.l.b16 %v56
  %v97 = vunpack.c.l.b16 %v57
  %v98 = vunpack.c.l.b16 %v58
  %v99 = vunpack.c.l.b16 %v59
  %v100 = vunpack.c.l.b16 %v60
  %v101 = vunpack.c.l.b16 %v61
  %v102 = vunpack.c.l.b16 %v62
  %v103 = vunpack.c.l.b16 %v63
  %v104 = vunpack.c.l.b16 %v64
  %v105 = vunpack.c.l.b16 %v65
  %v106 = vunpack.c.l.b16 %v66
  %v107 = vunpack.c.l.b16 %v67
  %v108 = vunpack.c.l.b16 %v68
  %v109 = vunpack.c.l.b16 %v69
  %v110 = vpack.c.b16 %v95, %v94
  %v111 = vpack.c.b16 %v97, %v96
  %v112 = vpack.c.b16 %v99, %v98
  %v113 = vpack.c.b16 %v101, %v100
  %v114 = vpack.c.b16 %v103, %v102
  %v115 = vpack.c.b16 %v105, %v104
  %v116 = vpack.c.b16 %v107, %v106
  %v117 = vpack.c.b16 %v109, %v108
  %v126 = vunpack.c.l.b16 %v70
  %v127 = vunpack.c.l.b16 %v71
  %v128 = vunpack.c.l.b16 %v72
  %v129 = vunpack.c.l.b16 %v73
  %v130 = vunpack.c.l.b16 %v74
  %v131 = vunpack.c.l.b16 %v75
  %v132 = vunpack.c.l.b16 %v76
  %v133 = vunpack.c.l.b16 %v77
  %v134 = vpack.c.b16 %v127, %v126
  %v135 = vpack.c.b16 %v129, %v128
  %v136 = vpack.c.b16 %v131, %v130
  %v137 = vpack.c.b16 %v133, %v132
  %vm142 = vcmask 523264
  %v144 = vsel %vm142, %v110, 0
  %v147 = vsel %vm142, %v111, 0
  %v150 = vsel %vm142, %v112, 0
  %v153 = vsel %vm142, %v113, 0
  %v156 = vsel %vm142, %v114, 0
  %v159 = vsel %vm142, %v115, 0
  %v162 = vsel %vm142, %v116, 0
  %v165 = vsel %vm142, %v117, 0
  %167 = vmatpush.bf16.msra.mxu0 0
  %168 = vmatpush.bf16.msra.mxu0 0
  %169 = vmatpush.bf16.msra.mxu0 0
  %170 = vmatpush.bf16.msra.mxu0 0
  %171 = vmatpush.bf16.msra.mxu0 %v137
  %172 = vmatpush.bf16.msra.mxu0 %v136
  %173 = vmatpush.bf16.msra.mxu0 %v135
  %174 = vmatpush.bf16.msra.mxu0 %v134
  %175 = vmatmul.bf16.gmra.mxu0 %v144
  %v176 = vpop.f32.mrf.mxu0
  %v177 = vadd.f32 0.0, %v176
  %v178 = vpop.f32.mrf.mxu0
  %v179 = vadd.f32 0.0, %v178
  %180 = vmatmul.bf16.gmra.mxu0 %v147
  %v181 = vpop.f32.mrf.mxu0
  %v182 = vadd.f32 0.0, %v181
  %v183 = vpop.f32.mrf.mxu0
  %v184 = vadd.f32 0.0, %v183
  %185 = vmatmul.bf16.gmra.mxu0 %v150
  %v186 = vpop.f32.mrf.mxu0
  %v187 = vadd.f32 0.0, %v186
  %v188 = vpop.f32.mrf.mxu0
  %v189 = vadd.f32 0.0, %v188
  %190 = vmatmul.bf16.gmra.mxu0 %v153
  %v191 = vpop.f32.mrf.mxu0
  %v192 = vadd.f32 0.0, %v191
  %v193 = vpop.f32.mrf.mxu0
  %v194 = vadd.f32 0.0, %v193
  %195 = vmatmul.bf16.gmra.mxu0 %v156
  %v196 = vpop.f32.mrf.mxu0
  %v197 = vadd.f32 0.0, %v196
  %v198 = vpop.f32.mrf.mxu0
  %v199 = vadd.f32 0.0, %v198
  %200 = vmatmul.bf16.gmra.mxu0 %v159
  %v201 = vpop.f32.mrf.mxu0
  %v202 = vadd.f32 0.0, %v201
  %v203 = vpop.f32.mrf.mxu0
  %v204 = vadd.f32 0.0, %v203
  %205 = vmatmul.bf16.gmra.mxu0 %v162
  %v206 = vpop.f32.mrf.mxu0
  %v207 = vadd.f32 0.0, %v206
  %v208 = vpop.f32.mrf.mxu0
  %v209 = vadd.f32 0.0, %v208
  %210 = vmatmul.bf16.gmra.mxu0 %v165
  %v211 = vpop.f32.mrf.mxu0
  %v212 = vadd.f32 0.0, %v211
  %v213 = vpop.f32.mrf.mxu0
  %v214 = vadd.f32 0.0, %v213
  %215 = vdwg.mxu0
  %v216 = vadd.f32 %v38, %v177
  %v217 = vadd.f32 %v39, %v179
  %v218 = vadd.f32 %v40, %v182
  %v219 = vadd.f32 %v41, %v184
  %v220 = vadd.f32 %v42, %v187
  %v221 = vadd.f32 %v43, %v189
  %v222 = vadd.f32 %v44, %v192
  %v223 = vadd.f32 %v45, %v194
  %v224 = vadd.f32 %v46, %v197
  %v225 = vadd.f32 %v47, %v199
  %v226 = vadd.f32 %v48, %v202
  %v227 = vadd.f32 %v49, %v204
  %v228 = vadd.f32 %v50, %v207
  %v229 = vadd.f32 %v51, %v209
  %v230 = vadd.f32 %v52, %v212
  %v231 = vadd.f32 %v53, %v214
  %232 = vst [vmem:[#allocation2] sm:$0xff] %v216
  %233 = vst [vmem:[#allocation2 + $0x8] sm:$0xff] %v217
  %234 = vst [vmem:[#allocation2 + $0x10] sm:$0xff] %v218
  %235 = vst [vmem:[#allocation2 + $0x18] sm:$0xff] %v219
  %236 = vst [vmem:[#allocation2 + $0x20] sm:$0xff] %v220
  %237 = vst [vmem:[#allocation2 + $0x28] sm:$0xff] %v221
  %238 = vst [vmem:[#allocation2 + $0x30] sm:$0xff] %v222
  %239 = vst [vmem:[#allocation2 + $0x38] sm:$0xff] %v223
  %240 = vst [vmem:[#allocation2 + $0x40] sm:$0xff] %v224
  %241 = vst [vmem:[#allocation2 + $0x48] sm:$0xff] %v225
  %242 = vst [vmem:[#allocation2 + $0x50] sm:$0xff] %v226
  %243 = vst [vmem:[#allocation2 + $0x58] sm:$0xff] %v227
  %244 = vst [vmem:[#allocation2 + $0x60] sm:$0xff] %v228
  %245 = vst [vmem:[#allocation2 + $0x68] sm:$0xff] %v229
  %246 = vst [vmem:[#allocation2 + $0x70] sm:$0xff] %v230
  %247 = vst [vmem:[#allocation2 + $0x78] sm:$0xff] %v231
  // Predicated region
  $region22: #{unet_block_deep_forward.5} parent=0 // pred_check
    %p248 = pneg %p18
  $region23: #{unet_block_deep_forward.5} parent=0 // pred_check_branch
    %250 = sbr.rel (%p248) target = $region25
  $region24: #{unet_block_deep_forward.5} parent=0 // pred_region
    %v251 = vld [vmem:[#allocation2] sm:$0xff]
    %v252 = vld [vmem:[#allocation2 + $0x8] sm:$0xff]
    %v253 = vld [vmem:[#allocation2 + $0x10] sm:$0xff]
    %v254 = vld [vmem:[#allocation2 + $0x18] sm:$0xff]
    %v255 = vld [vmem:[#allocation2 + $0x20] sm:$0xff]
    %v256 = vld [vmem:[#allocation2 + $0x28] sm:$0xff]
    %v257 = vld [vmem:[#allocation2 + $0x30] sm:$0xff]
    %v258 = vld [vmem:[#allocation2 + $0x38] sm:$0xff]
    %v259 = vld [vmem:[#allocation2 + $0x40] sm:$0xff]
    %v260 = vld [vmem:[#allocation2 + $0x48] sm:$0xff]
    %v261 = vld [vmem:[#allocation2 + $0x50] sm:$0xff]
    %v262 = vld [vmem:[#allocation2 + $0x58] sm:$0xff]
    %v263 = vld [vmem:[#allocation2 + $0x60] sm:$0xff]
    %v264 = vld [vmem:[#allocation2 + $0x68] sm:$0xff]
    %v265 = vld [vmem:[#allocation2 + $0x70] sm:$0xff]
    %v266 = vld [vmem:[#allocation2 + $0x78] sm:$0xff]
    %v267 = vld [vmem:[%s2] sm:$0x1]
    %v269 = vperm.slane %v267, 0
    %v271 = vmul.f32 %v251, %v269
    %v272 = vmul.f32 %v252, %v269
    %v273 = vmul.f32 %v253, %v269
    %v274 = vmul.f32 %v254, %v269
    %v275 = vmul.f32 %v255, %v269
    %v276 = vmul.f32 %v256, %v269
    %v277 = vmul.f32 %v257, %v269
    %v278 = vmul.f32 %v258, %v269
    %v279 = vmul.f32 %v259, %v269
    %v280 = vmul.f32 %v260, %v269
    %v281 = vmul.f32 %v261, %v269
    %v282 = vmul.f32 %v262, %v269
    %v283 = vmul.f32 %v263, %v269
    %v284 = vmul.f32 %v264, %v269
    %v285 = vmul.f32 %v265, %v269
    %v286 = vmul.f32 %v266, %v269
    %v287 = vld [vmem:[%s3] sm:$0x1]
    %v289 = vperm.slane %v287, 0
    %v291 = vadd.f32 %v271, %v289
    %v292 = vadd.f32 %v272, %v289
    %v293 = vadd.f32 %v273, %v289
    %v294 = vadd.f32 %v274, %v289
    %v295 = vadd.f32 %v275, %v289
    %v296 = vadd.f32 %v276, %v289
    %v297 = vadd.f32 %v277, %v289
    %v298 = vadd.f32 %v278, %v289
    %v299 = vadd.f32 %v279, %v289
    %v300 = vadd.f32 %v280, %v289
    %v301 = vadd.f32 %v281, %v289
    %v302 = vadd.f32 %v282, %v289
    %v303 = vadd.f32 %v283, %v289
    %v304 = vadd.f32 %v284, %v289
    %v305 = vadd.f32 %v285, %v289
    %v306 = vadd.f32 %v286, %v289
    %v307 = vmax.f32 %v291, 0.0
    %v308 = vmax.f32 %v292, 0.0
    %v309 = vmax.f32 %v293, 0.0
    %v310 = vmax.f32 %v294, 0.0
    %v311 = vmax.f32 %v295, 0.0
    %v312 = vmax.f32 %v296, 0.0
    %v313 = vmax.f32 %v297, 0.0
    %v314 = vmax.f32 %v298, 0.0
    %v315 = vmax.f32 %v299, 0.0
    %v316 = vmax.f32 %v300, 0.0
    %v317 = vmax.f32 %v301, 0.0
    %v318 = vmax.f32 %v302, 0.0
    %v319 = vmax.f32 %v303, 0.0
    %v320 = vmax.f32 %v304, 0.0
    %v321 = vmax.f32 %v305, 0.0
    %v322 = vmax.f32 %v306, 0.0
    %v323 = vpack.c.bf16 %v307, %v307
    %v324 = vpack.c.bf16 %v308, %v308
    %v325 = vpack.c.bf16 %v309, %v309
    %v326 = vpack.c.bf16 %v310, %v310
    %v327 = vpack.c.bf16 %v311, %v311
    %v328 = vpack.c.bf16 %v312, %v312
    %v329 = vpack.c.bf16 %v313, %v313
    %v330 = vpack.c.bf16 %v314, %v314
    %v331 = vpack.c.bf16 %v315, %v315
    %v332 = vpack.c.bf16 %v316, %v316
    %v333 = vpack.c.bf16 %v317, %v317
    %v334 = vpack.c.bf16 %v318, %v318
    %v335 = vpack.c.bf16 %v319, %v319
    %v336 = vpack.c.bf16 %v320, %v320
    %v337 = vpack.c.bf16 %v321, %v321
    %v338 = vpack.c.bf16 %v322, %v322
    %339 = vst [vmem:[%s4] sm:$0xf] %v323
    %340 = vst [vmem:[%s4 + $0x4] sm:$0xf] %v324
    %341 = vst [vmem:[%s4 + $0x8] sm:$0xf] %v325
    %342 = vst [vmem:[%s4 + $0xc] sm:$0xf] %v326
    %343 = vst [vmem:[%s4 + $0x10] sm:$0xf] %v327
    %344 = vst [vmem:[%s4 + $0x14] sm:$0xf] %v328
    %345 = vst [vmem:[%s4 + $0x18] sm:$0xf] %v329
    %346 = vst [vmem:[%s4 + $0x1c] sm:$0xf] %v330
    %347 = vst [vmem:[%s4 + $0x20] sm:$0xf] %v331
    %348 = vst [vmem:[%s4 + $0x24] sm:$0xf] %v332
    %349 = vst [vmem:[%s4 + $0x28] sm:$0xf] %v333
    %350 = vst [vmem:[%s4 + $0x2c] sm:$0xf] %v334
    %351 = vst [vmem:[%s4 + $0x30] sm:$0xf] %v335
    %352 = vst [vmem:[%s4 + $0x34] sm:$0xf] %v336
    %353 = vst [vmem:[%s4 + $0x38] sm:$0xf] %v337
    %354 = vst [vmem:[%s4 + $0x3c] sm:$0xf] %v338
  $region25: #{unet_block_deep_forward.5} parent=0 // pred_fallthru
    _
  // Predicated region
  $region26: #{unet_block_deep_forward.5} parent=0 // pred_check
    _
  $region27: #{unet_block_deep_forward.5} parent=0 // pred_check_branch
    %356 = sbr.rel (0) target = $region29
  $region28: #{unet_block_deep_forward.5} parent=0 // pred_region
    _
  $region29: #{unet_block_deep_forward.5} parent=0 // pred_fallthru
    _
  // Predicated region
  $region30: #{unet_block_deep_forward.5} parent=0 // pred_check
    _
  $region31: #{unet_block_deep_forward.5} parent=0 // pred_check_branch
    %358 = sbr.rel (0) target = $region33
  $region32: #{unet_block_deep_forward.5} parent=0 // pred_region
    _
  $region33: #{unet_block_deep_forward.5} parent=0 // pred_fallthru
    _

// kernel: unet_block_deep_forward.8
$region0: #{unet_block_deep_forward.8}
  #allocation0 [shape = 'u32[]', space=smem, size = 0x4, offset = 0x4, fixed_abs, tag = 'smem constant byte address 0x4 - core index']
  #allocation1 [shape = 'u32[72,128]{1,0:T(1,128)}', space=vmem, size = 0x9000, scoped, tag = 'internal scratch']
  #allocation2 [shape = 'f32[256,144]{1,0:T(8,128)}', space=vmem, size = 0x40000, scoped, tag = 'scratch operand']
  %s0 = inlined_call_operand.vmem [shape: bf16[512,128], index: 0, kind: input, shape index: {}]
  %s1 = inlined_call_operand.vmem [shape: bf16[128,144], index: 1, kind: input, shape index: {}]
  %s2 = inlined_call_operand.vmem [shape: f32[1,144], index: 2, kind: input, shape index: {}]
  %s3 = inlined_call_operand.vmem [shape: f32[1,144], index: 3, kind: input, shape index: {}]
  %s4 = inlined_call_operand.vmem [shape: bf16[512,144], index: 4, kind: output, shape index: {}]
  %s5 = sld [smem:[#allocation0]]
  $region57: #{unet_block_deep_forward.8} parent=0
    _
  %s7 = ssub.s32 1, %s5
  %s8 = scalar_select 0, %s7, %s5
  loop: start=0, step=1, limit=4
  $region2: #{unet_block_deep_forward.8} parent=0 // loop_pre_header
    _
  $region3: #{unet_block_deep_forward.8} parent=0 // loop_header
    %s10 = sphi 0, %s14
    %p11 = scmp.ge.s32.totalorder %s10, 4
    %s17 = sphi 0, %s36
    %s18 = sphi 0, %s32
    %s19 = sphi 0, %s28
    %s20 = sphi 0, %s17
    %s21 = sphi 0, %s18
    %s22 = sphi 0, %s19
    %s23 = sphi 0, %s20
    %s24 = sphi 0, %s21
    %s25 = sphi 0, %s22
    %s41 = sphi 0, %s43
    %s44 = sphi 0, %s41
    %s45 = sphi 0, %s44
    %s61 = sphi 0, %s45
    %s69 = sphi 0, %s71
    %s72 = sphi 0, %s69
    %s73 = sphi 0, %s72
    %s89 = sphi 0, %s73
    %s95 = sphi 0, %s97
    %s98 = sphi 0, %s95
    %s99 = sphi 0, %s98
    %s115 = sphi 0, %s99
    %s121 = sphi 0, %s123
    %s124 = sphi 0, %s121
    %s125 = sphi 0, %s124
    %s141 = sphi 0, %s125
    %s149 = sphi 0, %s151
    %s152 = sphi 0, %s149
    %s153 = sphi 0, %s152
    %s169 = sphi 0, %s153
  $region4: #{unet_block_deep_forward.8} parent=0 // loop_header_branch
    %13 = sbr.rel (%p11) target = $region8
  $region5: #{unet_block_deep_forward.8} parent=0 // loop_body
    %s15 = ssub.s32 %s10, 1
    %s16 = ssub.s32 %s10, 2
    %s26 = sadd.s32 1, %s19
    %p27 = scmp.ge.s32.totalorder %s26, 1
    %s28 = scalar_select %p27, 0, %s26
    %s29 = sadd.s32 1, %s18
    %s30 = scalar_select %p27, %s29, %s18
    %p31 = scmp.ge.s32.totalorder %s30, 1
    %s32 = scalar_select %p31, 0, %s30
    %s33 = sadd.s32 1, %s17
    %s34 = scalar_select %p31, %s33, %s17
    %p35 = scmp.ge.s32.totalorder %s34, 2
    %s36 = scalar_select %p35, 0, %s34
    %s37 = ssub.s32 %s17, %s36
    %s38 = ssub.s32 %s19, %s28
    %s39 = sor.u32 %s37, %s38
    %p40 = scmp.eq.s32.totalorder %s39, 0
    %s42 = sadd.s32 %s41, 1
    %s43 = scalar_select %p40, %s41, %s42
    %p46 = pneg %p40
    %p47 = scmp.eq.s32.totalorder %s10, 1
    %p48 = por %p46, %p47
    %p49 = scmp.ne.s32.totalorder %s41, %s44
    %p50 = scmp.eq.s32.totalorder %s10, 0
    %p51 = por %p49, %p50
    %p52 = scmp.ne.s32.totalorder %s41, %s44
    %p53 = scmp.eq.s32.totalorder %s15, 1
    %p54 = por %p52, %p53
    %p55 = scmp.ne.s32.totalorder %s44, %s45
    %p56 = scmp.eq.s32.totalorder %s15, 0
    %p57 = por %p55, %p56
    %p58 = scmp.ne.s32.totalorder %s44, %s45
    %p59 = scmp.eq.s32.totalorder %s16, 1
    %p60 = por %p58, %p59
    %p62 = scmp.ne.s32.totalorder %s45, %s61
    %p63 = scmp.eq.s32.totalorder %s16, 0
    %p64 = por %p62, %p63
    %s65 = ssub.s32 %s19, %s28
    %s66 = ssub.s32 %s18, %s32
    %s67 = sor.u32 %s65, %s66
    %p68 = scmp.eq.s32.totalorder %s67, 0
    %s70 = sadd.s32 %s69, 1
    %s71 = scalar_select %p68, %s69, %s70
    %p74 = pneg %p68
    %p75 = scmp.eq.s32.totalorder %s10, 1
    %p76 = por %p74, %p75
    %p77 = scmp.ne.s32.totalorder %s69, %s72
    %p78 = scmp.eq.s32.totalorder %s10, 0
    %p79 = por %p77, %p78
    %p80 = scmp.ne.s32.totalorder %s69, %s72
    %p81 = scmp.eq.s32.totalorder %s15, 1
    %p82 = por %p80, %p81
    %p83 = scmp.ne.s32.totalorder %s72, %s73
    %p84 = scmp.eq.s32.totalorder %s15, 0
    %p85 = por %p83, %p84
    %p86 = scmp.ne.s32.totalorder %s72, %s73
    %p87 = scmp.eq.s32.totalorder %s16, 1
    %p88 = por %p86, %p87
    %p90 = scmp.ne.s32.totalorder %s73, %s89
    %p91 = scmp.eq.s32.totalorder %s16, 0
    %p92 = por %p90, %p91
    %s93 = ssub.s32 %s18, %s32
    %p94 = scmp.eq.s32.totalorder %s93, 0
    %s96 = sadd.s32 %s95, 1
    %s97 = scalar_select %p94, %s95, %s96
    %p100 = pneg %p94
    %p101 = scmp.eq.s32.totalorder %s10, 1
    %p102 = por %p100, %p101
    %p103 = scmp.ne.s32.totalorder %s95, %s98
    %p104 = scmp.eq.s32.totalorder %s10, 0
    %p105 = por %p103, %p104
    %p106 = scmp.ne.s32.totalorder %s95, %s98
    %p107 = scmp.eq.s32.totalorder %s15, 1
    %p108 = por %p106, %p107
    %p109 = scmp.ne.s32.totalorder %s98, %s99
    %p110 = scmp.eq.s32.totalorder %s15, 0
    %p111 = por %p109, %p110
    %p112 = scmp.ne.s32.totalorder %s98, %s99
    %p113 = scmp.eq.s32.totalorder %s16, 1
    %p114 = por %p112, %p113
    %p116 = scmp.ne.s32.totalorder %s99, %s115
    %p117 = scmp.eq.s32.totalorder %s16, 0
    %p118 = por %p116, %p117
    %s119 = ssub.s32 %s18, %s32
    %p120 = scmp.eq.s32.totalorder %s119, 0
    %s122 = sadd.s32 %s121, 1
    %s123 = scalar_select %p120, %s121, %s122
    %p126 = pneg %p120
    %p127 = scmp.eq.s32.totalorder %s10, 1
    %p128 = por %p126, %p127
    %p129 = scmp.ne.s32.totalorder %s121, %s124
    %p130 = scmp.eq.s32.totalorder %s10, 0
    %p131 = por %p129, %p130
    %p132 = scmp.ne.s32.totalorder %s121, %s124
    %p133 = scmp.eq.s32.totalorder %s15, 1
    %p134 = por %p132, %p133
    %p135 = scmp.ne.s32.totalorder %s124, %s125
    %p136 = scmp.eq.s32.totalorder %s15, 0
    %p137 = por %p135, %p136
    %p138 = scmp.ne.s32.totalorder %s124, %s125
    %p139 = scmp.eq.s32.totalorder %s16, 1
    %p140 = por %p138, %p139
    %p142 = scmp.ne.s32.totalorder %s125, %s141
    %p143 = scmp.eq.s32.totalorder %s16, 0
    %p144 = por %p142, %p143
    %s145 = ssub.s32 %s17, %s36
    %s146 = ssub.s32 %s18, %s32
    %s147 = sor.u32 %s145, %s146
    %p148 = scmp.eq.s32.totalorder %s147, 0
    %s150 = sadd.s32 %s149, 1
    %s151 = scalar_select %p148, %s149, %s150
    %p154 = pneg %p148
    %p155 = scmp.eq.s32.totalorder %s10, 1
    %p156 = por %p154, %p155
    %p157 = scmp.ne.s32.totalorder %s149, %s152
    %p158 = scmp.eq.s32.totalorder %s10, 0
    %p159 = por %p157, %p158
    %p160 = scmp.ne.s32.totalorder %s149, %s152
    %p161 = scmp.eq.s32.totalorder %s15, 1
    %p162 = por %p160, %p161
    %p163 = scmp.ne.s32.totalorder %s152, %s153
    %p164 = scmp.eq.s32.totalorder %s15, 0
    %p165 = por %p163, %p164
    %p166 = scmp.ne.s32.totalorder %s152, %s153
    %p167 = scmp.eq.s32.totalorder %s16, 1
    %p168 = por %p166, %p167
    %p170 = scmp.ne.s32.totalorder %s153, %s169
    %p171 = scmp.eq.s32.totalorder %s16, 0
    %p172 = por %p170, %p171
    %p173 = scmp.le.s32.totalorder 1, %s10
    %p174 = scmp.lt.s32.totalorder %s10, 3
    %p175 = pnand %p173, %p174
    %p176 = pneg %p175
    // Predicated region
    $region9: #{unet_block_deep_forward.8} parent=5 // pred_check
      _
    $region10: #{unet_block_deep_forward.8} parent=5 // pred_check_branch
      %178 = sbr.rel (%p175) target = $region12
    $region11: #{unet_block_deep_forward.8} parent=5 // pred_region
      %s179 = ssub.s32 %s10, 1
      // Predicated region
      $region13: #{unet_block_deep_forward.8} parent=11 // pred_check
        %p180 = pneg %p85
      $region14: #{unet_block_deep_forward.8} parent=11 // pred_check_branch
        %182 = sbr.rel (%p180) target = $region16
      $region15: #{unet_block_deep_forward.8} parent=11 // pred_region
        %s183 = smul.u32 16, %s22
        %s184 = smul.u32 2, %s21
        %p185 = scmp.lt.s32.totalorder %s183, 15
        %s186 = scalar_select %p185, %s183, 15
        %p187 = scmp.lt.s32.totalorder %s184, 1
        %s188 = scalar_select %p187, %s184, 1
        %s189 = smul.addr %s186, 2
        %s190 = sadd.s32 %s188, %s189
        %s191 = smul.addr %s190, 4
        %s192 = scalar_lea.vmem %s1, %s191
        %s193 = smul.u32 16, %s22
        %s194 = smul.u32 2, %s21
      $region16: #{unet_block_deep_forward.8} parent=11 // pred_fallthru
        _
      // Predicated region
      $region17: #{unet_block_deep_forward.8} parent=11 // pred_check
        %p195 = pneg %p111
      $region18: #{unet_block_deep_forward.8} parent=11 // pred_check_branch
        %197 = sbr.rel (%p195) target = $region20
      $region19: #{unet_block_deep_forward.8} parent=11 // pred_region
        %s198 = smul.u32 2, %s21
        %p199 = scmp.lt.s32.totalorder %s198, 1
        %s200 = scalar_select %p199, %s198, 1
        %s201 = scalar_lea.vmem %s2, %s200
        %s202 = smul.u32 2, %s21
      $region20: #{unet_block_deep_forward.8} parent=11 // pred_fallthru
        _
      // Predicated region
      $region21: #{unet_block_deep_forward.8} parent=11 // pred_check
        %p203 = pneg %p137
      $region22: #{unet_block_deep_forward.8} parent=11 // pred_check_branch
        %205 = sbr.rel (%p203) target = $region24
      $region23: #{unet_block_deep_forward.8} parent=11 // pred_region
        %s206 = smul.u32 2, %s21
        %p207 = scmp.lt.s32.totalorder %s206, 1
        %s208 = scalar_select %p207, %s206, 1
        %s209 = scalar_lea.vmem %s3, %s208
        %s210 = smul.u32 2, %s21
      $region24: #{unet_block_deep_forward.8} parent=11 // pred_fallthru
        _
    $region12: #{unet_block_deep_forward.8} parent=5 // pred_fallthru
      _
    %p211 = scmp.lt.s32.totalorder %s10, 2
    // Predicated region
    $region25: #{unet_block_deep_forward.8} parent=5 // pred_check
      %p212 = pneg %p211
    $region26: #{unet_block_deep_forward.8} parent=5 // pred_check_branch
      %214 = sbr.rel (%p212) target = $region28
    $region27: #{unet_block_deep_forward.8} parent=5 // pred_region
      // Predicated region
      $region29: #{unet_block_deep_forward.8} parent=27 // pred_check
        %p215 = pneg %p51
      $region30: #{unet_block_deep_forward.8} parent=27 // pred_check_branch
        %217 = sbr.rel (%p215) target = $region32
      $region31: #{unet_block_deep_forward.8} parent=27 // pred_region
        %s218 = smul.u32 32, %s17
        %p219 = scmp.lt.s32.totalorder %s218, 63
        %s220 = scalar_select %p219, %s218, 63
        %p221 = scmp.lt.s32.totalorder %s19, 0
        %s222 = scalar_select %p221, %s19, 0
        %s223 = sadd.s32 %s222, %s220
        %s224 = smul.addr %s223, 4
        %s225 = scalar_lea.vmem %s0, %s224
        %s226 = smul.u32 32, %s17
      $region32: #{unet_block_deep_forward.8} parent=27 // pred_fallthru
        _
    $region28: #{unet_block_deep_forward.8} parent=5 // pred_fallthru
      _
    %p227 = scmp.le.s32.totalorder 1, %s10
    %p228 = scmp.lt.s32.totalorder %s10, 3
    %p229 = pnand %p227, %p228
    %p230 = pneg %p229
    // Predicated region
    $region33: #{unet_block_deep_forward.8} parent=5 // pred_check
      _
    $region34: #{unet_block_deep_forward.8} parent=5 // pred_check_branch
      %232 = sbr.rel (%p229) target = $region36
    $region35: #{unet_block_deep_forward.8} parent=5 // pred_region
      %s233 = ssub.s32 %s10, 1
      %s234 = smul.u32 32, %s20
      %p235 = scmp.lt.s32.totalorder %s234, 63
      %s236 = scalar_select %p235, %s234, 63
      %p237 = scmp.lt.s32.totalorder %s22, 0
      %s238 = scalar_select %p237, %s22, 0
      %s239 = sadd.s32 %s238, %s236
      %s240 = smul.addr %s239, 4
      %s241 = scalar_lea.vmem %s0, %s240
      %p242 = pneg %p57
      %p243 = pneg %p54
      %s244 = smul.u32 16, %s22
      %s245 = smul.u32 2, %s21
      %p246 = scmp.lt.s32.totalorder %s244, 15
      %s247 = scalar_select %p246, %s244, 15
      %p248 = scmp.lt.s32.totalorder %s245, 1
      %s249 = scalar_select %p248, %s245, 1
      %s250 = smul.addr %s247, 2
      %s251 = sadd.s32 %s249, %s250
      %s252 = smul.addr %s251, 4
      %s253 = scalar_lea.vmem %s1, %s252
      %p254 = pneg %p85
      %p255 = pneg %p82
      %s256 = smul.u32 2, %s21
      %p257 = scmp.lt.s32.totalorder %s256, 1
      %s258 = scalar_select %p257, %s256, 1
      %s259 = scalar_lea.vmem %s2, %s258
      %p260 = pneg %p111
      %p261 = pneg %p108
      %s262 = smul.u32 2, %s21
      %p263 = scmp.lt.s32.totalorder %s262, 1
      %s264 = scalar_select %p263, %s262, 1
      %s265 = scalar_lea.vmem %s3, %s264
      %p266 = pneg %p137
      %p267 = pneg %p134
      %p268 = pneg %p165
      %p269 = pneg %p162
      %s270 = smul.u32 32, %s20
      %s271 = smul.u32 2, %s21
      %p272 = scmp.lt.s32.totalorder %s270, 63
      %s273 = scalar_select %p272, %s270, 63
      %p274 = scmp.lt.s32.totalorder %s271, 1
      %s275 = scalar_select %p274, %s271, 1
      %s276 = smul.addr %s273, 2
      %s277 = sadd.s32 %s275, %s276
      %s278 = smul.addr %s277, 4
      %s279 = scalar_lea.vmem %s4, %s278
      %s280 = smul.u32 32, %s20
      %p281 = scmp.lt.s32.totalorder %s280, 63
      %s282 = scalar_select %p281, %s280, 63
      %p283 = scmp.lt.s32.totalorder %s22, 0
      %s284 = scalar_select %p283, %s22, 0
      %s285 = sadd.s32 %s284, %s282
      %s286 = smul.addr %s285, 4
      %s287 = scalar_lea.vmem %s0, %s286
      %s288 = smul.u32 32, %s20
      %s289 = smul.u32 16, %s22
      %s290 = smul.u32 2, %s21
      %p291 = scmp.lt.s32.totalorder %s289, 15
      %s292 = scalar_select %p291, %s289, 15
      %p293 = scmp.lt.s32.totalorder %s290, 1
      %s294 = scalar_select %p293, %s290, 1
      %s295 = smul.addr %s292, 2
      %s296 = sadd.s32 %s294, %s295
      %s297 = smul.addr %s296, 4
      %s298 = scalar_lea.vmem %s1, %s297
      %s299 = smul.u32 16, %s22
      %s300 = smul.u32 2, %s21
      %s301 = smul.u32 2, %s21
      %p302 = scmp.lt.s32.totalorder %s301, 1
      %s303 = scalar_select %p302, %s301, 1
      %s304 = scalar_lea.vmem %s2, %s303
      %s305 = smul.u32 2, %s21
      %s306 = smul.u32 2, %s21
      %p307 = scmp.lt.s32.totalorder %s306, 1
      %s308 = scalar_select %p307, %s306, 1
      %s309 = scalar_lea.vmem %s3, %s308
      %s310 = smul.u32 2, %s21
      %s311 = smul.u32 32, %s20
      %s312 = smul.u32 2, %s21
      %p313 = scmp.lt.s32.totalorder %s311, 63
      %s314 = scalar_select %p313, %s311, 63
      %p315 = scmp.lt.s32.totalorder %s312, 1
      %s316 = scalar_select %p315, %s312, 1
      %s317 = smul.addr %s314, 2
      %s318 = sadd.s32 %s316, %s317
      %s319 = smul.addr %s318, 4
      %s320 = scalar_lea.vmem %s4, %s319
      %s321 = smul.u32 32, %s20
      %s322 = smul.u32 2, %s21
      %p323 = scmp.eq.s32.totalorder %s22, 0
      // Predicated region
      $region37: #{unet_block_deep_forward.8} parent=35 // pred_check
        %p324 = pneg %p323
      $region38: #{unet_block_deep_forward.8} parent=35 // pred_check_branch
        %326 = sbr.rel (%p324) target = $region40
      $region39: #{unet_block_deep_forward.8} parent=35 // pred_region
        %327 = vst [vmem:[#allocation2] sm:$0xff] 0.0
        %vm328 = vcmask 130048
        %329 = vst.msk [vmem:[#allocation2 + $0x8] sm:$0xff] %vm328, 0.0
        %330 = vst [vmem:[#allocation2 + $0x10] sm:$0xff] 0.0
        %331 = vst.msk [vmem:[#allocation2 + $0x18] sm:$0xff] %vm328, 0.0
        %332 = vst [vmem:[#allocation2 + $0x20] sm:$0xff] 0.0
        %333 = vst.msk [vmem:[#allocation2 + $0x28] sm:$0xff] %vm328, 0.0
        %334 = vst [vmem:[#allocation2 + $0x30] sm:$0xff] 0.0
        %335 = vst.msk [vmem:[#allocation2 + $0x38] sm:$0xff] %vm328, 0.0
        %336 = vst [vmem:[#allocation2 + $0x40] sm:$0xff] 0.0
        %337 = vst.msk [vmem:[#allocation2 + $0x48] sm:$0xff] %vm328, 0.0
        %338 = vst [vmem:[#allocation2 + $0x50] sm:$0xff] 0.0
        %339 = vst.msk [vmem:[#allocation2 + $0x58] sm:$0xff] %vm328, 0.0
        %340 = vst [vmem:[#allocation2 + $0x60] sm:$0xff] 0.0
        %341 = vst.msk [vmem:[#allocation2 + $0x68] sm:$0xff] %vm328, 0.0
        %342 = vst [vmem:[#allocation2 + $0x70] sm:$0xff] 0.0
        %343 = vst.msk [vmem:[#allocation2 + $0x78] sm:$0xff] %vm328, 0.0
        %344 = vst [vmem:[#allocation2 + $0x80] sm:$0xff] 0.0
        %345 = vst.msk [vmem:[#allocation2 + $0x88] sm:$0xff] %vm328, 0.0
        %346 = vst [vmem:[#allocation2 + $0x90] sm:$0xff] 0.0
        %347 = vst.msk [vmem:[#allocation2 + $0x98] sm:$0xff] %vm328, 0.0
        %348 = vst [vmem:[#allocation2 + $0xa0] sm:$0xff] 0.0
        %349 = vst.msk [vmem:[#allocation2 + $0xa8] sm:$0xff] %vm328, 0.0
        %350 = vst [vmem:[#allocation2 + $0xb0] sm:$0xff] 0.0
        %351 = vst.msk [vmem:[#allocation2 + $0xb8] sm:$0xff] %vm328, 0.0
        %352 = vst [vmem:[#allocation2 + $0xc0] sm:$0xff] 0.0
        %353 = vst.msk [vmem:[#allocation2 + $0xc8] sm:$0xff] %vm328, 0.0
        %354 = vst [vmem:[#allocation2 + $0xd0] sm:$0xff] 0.0
        %355 = vst.msk [vmem:[#allocation2 + $0xd8] sm:$0xff] %vm328, 0.0
        %356 = vst [vmem:[#allocation2 + $0xe0] sm:$0xff] 0.0
        %357 = vst.msk [vmem:[#allocation2 + $0xe8] sm:$0xff] %vm328, 0.0
        %358 = vst [vmem:[#allocation2 + $0xf0] sm:$0xff] 0.0
        %359 = vst.msk [vmem:[#allocation2 + $0xf8] sm:$0xff] %vm328, 0.0
        %360 = vst [vmem:[#allocation2 + $0x100] sm:$0xff] 0.0
        %361 = vst.msk [vmem:[#allocation2 + $0x108] sm:$0xff] %vm328, 0.0
        %362 = vst [vmem:[#allocation2 + $0x110] sm:$0xff] 0.0
        %363 = vst.msk [vmem:[#allocation2 + $0x118] sm:$0xff] %vm328, 0.0
        %364 = vst [vmem:[#allocation2 + $0x120] sm:$0xff] 0.0
        %365 = vst.msk [vmem:[#allocation2 + $0x128] sm:$0xff] %vm328, 0.0
        %366 = vst [vmem:[#allocation2 + $0x130] sm:$0xff] 0.0
        %367 = vst.msk [vmem:[#allocation2 + $0x138] sm:$0xff] %vm328, 0.0
        %368 = vst [vmem:[#allocation2 + $0x140] sm:$0xff] 0.0
        %369 = vst.msk [vmem:[#allocation2 + $0x148] sm:$0xff] %vm328, 0.0
        %370 = vst [vmem:[#allocation2 + $0x150] sm:$0xff] 0.0
        %371 = vst.msk [vmem:[#allocation2 + $0x158] sm:$0xff] %vm328, 0.0
        %372 = vst [vmem:[#allocation2 + $0x160] sm:$0xff] 0.0
        %373 = vst.msk [vmem:[#allocation2 + $0x168] sm:$0xff] %vm328, 0.0
        %374 = vst [vmem:[#allocation2 + $0x170] sm:$0xff] 0.0
        %375 = vst.msk [vmem:[#allocation2 + $0x178] sm:$0xff] %vm328, 0.0
        %376 = vst [vmem:[#allocation2 + $0x180] sm:$0xff] 0.0
        %377 = vst.msk [vmem:[#allocation2 + $0x188] sm:$0xff] %vm328, 0.0
        %378 = vst [vmem:[#allocation2 + $0x190] sm:$0xff] 0.0
        %379 = vst.msk [vmem:[#allocation2 + $0x198] sm:$0xff] %vm328, 0.0
        %380 = vst [vmem:[#allocation2 + $0x1a0] sm:$0xff] 0.0
        %381 = vst.msk [vmem:[#allocation2 + $0x1a8] sm:$0xff] %vm328, 0.0
        %382 = vst [vmem:[#allocation2 + $0x1b0] sm:$0xff] 0.0
        %383 = vst.msk [vmem:[#allocation2 + $0x1b8] sm:$0xff] %vm328, 0.0
        %384 = vst [vmem:[#allocation2 + $0x1c0] sm:$0xff] 0.0
        %385 = vst.msk [vmem:[#allocation2 + $0x1c8] sm:$0xff] %vm328, 0.0
        %386 = vst [vmem:[#allocation2 + $0x1d0] sm:$0xff] 0.0
        %387 = vst.msk [vmem:[#allocation2 + $0x1d8] sm:$0xff] %vm328, 0.0
        %388 = vst [vmem:[#allocation2 + $0x1e0] sm:$0xff] 0.0
        %389 = vst.msk [vmem:[#allocation2 + $0x1e8] sm:$0xff] %vm328, 0.0
        %390 = vst [vmem:[#allocation2 + $0x1f0] sm:$0xff] 0.0
        %391 = vst.msk [vmem:[#allocation2 + $0x1f8] sm:$0xff] %vm328, 0.0
      $region40: #{unet_block_deep_forward.8} parent=35 // pred_fallthru
        _
      %v392 = vld [vmem:[#allocation2] sm:$0xff]
      %v393 = vld [vmem:[#allocation2 + $0x8] sm:$0xff]
      %v394 = vld [vmem:[#allocation2 + $0x10] sm:$0xff]
      %v395 = vld [vmem:[#allocation2 + $0x18] sm:$0xff]
      %v396 = vld [vmem:[#allocation2 + $0x20] sm:$0xff]
      %v397 = vld [vmem:[#allocation2 + $0x28] sm:$0xff]
      %v398 = vld [vmem:[#allocation2 + $0x30] sm:$0xff]
      %v399 = vld [vmem:[#allocation2 + $0x38] sm:$0xff]
      %v400 = vld [vmem:[#allocation2 + $0x40] sm:$0xff]
      %v401 = vld [vmem:[#allocation2 + $0x48] sm:$0xff]
      %v402 = vld [vmem:[#allocation2 + $0x50] sm:$0xff]
      %v403 = vld [vmem:[#allocation2 + $0x58] sm:$0xff]
      %v404 = vld [vmem:[#allocation2 + $0x60] sm:$0xff]
      %v405 = vld [vmem:[#allocation2 + $0x68] sm:$0xff]
      %v406 = vld [vmem:[#allocation2 + $0x70] sm:$0xff]
      %v407 = vld [vmem:[#allocation2 + $0x78] sm:$0xff]
      %v408 = vld [vmem:[#allocation2 + $0x80] sm:$0xff]
      %v409 = vld [vmem:[#allocation2 + $0x88] sm:$0xff]
      %v410 = vld [vmem:[#allocation2 + $0x90] sm:$0xff]
      %v411 = vld [vmem:[#allocation2 + $0x98] sm:$0xff]
      %v412 = vld [vmem:[#allocation2 + $0xa0] sm:$0xff]
      %v413 = vld [vmem:[#allocation2 + $0xa8] sm:$0xff]
      %v414 = vld [vmem:[#allocation2 + $0xb0] sm:$0xff]
      %v415 = vld [vmem:[#allocation2 + $0xb8] sm:$0xff]
      %v416 = vld [vmem:[#allocation2 + $0xc0] sm:$0xff]
      %v417 = vld [vmem:[#allocation2 + $0xc8] sm:$0xff]
      %v418 = vld [vmem:[#allocation2 + $0xd0] sm:$0xff]
      %v419 = vld [vmem:[#allocation2 + $0xd8] sm:$0xff]
      %v420 = vld [vmem:[#allocation2 + $0xe0] sm:$0xff]
      %v421 = vld [vmem:[#allocation2 + $0xe8] sm:$0xff]
      %v422 = vld [vmem:[#allocation2 + $0xf0] sm:$0xff]
      %v423 = vld [vmem:[#allocation2 + $0xf8] sm:$0xff]
      %v424 = vld [vmem:[#allocation2 + $0x100] sm:$0xff]
      %v425 = vld [vmem:[#allocation2 + $0x108] sm:$0xff]
      %v426 = vld [vmem:[#allocation2 + $0x110] sm:$0xff]
      %v427 = vld [vmem:[#allocation2 + $0x118] sm:$0xff]
      %v428 = vld [vmem:[#allocation2 + $0x120] sm:$0xff]
      %v429 = vld [vmem:[#allocation2 + $0x128] sm:$0xff]
      %v430 = vld [vmem:[#allocation2 + $0x130] sm:$0xff]
      %v431 = vld [vmem:[#allocation2 + $0x138] sm:$0xff]
      %v432 = vld [vmem:[#allocation2 + $0x140] sm:$0xff]
      %v433 = vld [vmem:[#allocation2 + $0x148] sm:$0xff]
      %v434 = vld [vmem:[#allocation2 + $0x150] sm:$0xff]
      %v435 = vld [vmem:[#allocation2 + $0x158] sm:$0xff]
      %v436 = vld [vmem:[#allocation2 + $0x160] sm:$0xff]
      %v437 = vld [vmem:[#allocation2 + $0x168] sm:$0xff]
      %v438 = vld [vmem:[#allocation2 + $0x170] sm:$0xff]
      %v439 = vld [vmem:[#allocation2 + $0x178] sm:$0xff]
      %v440 = vld [vmem:[#allocation2 + $0x180] sm:$0xff]
      %v441 = vld [vmem:[#allocation2 + $0x188] sm:$0xff]
      %v442 = vld [vmem:[#allocation2 + $0x190] sm:$0xff]
      %v443 = vld [vmem:[#allocation2 + $0x198] sm:$0xff]
      %v444 = vld [vmem:[#allocation2 + $0x1a0] sm:$0xff]
      %v445 = vld [vmem:[#allocation2 + $0x1a8] sm:$0xff]
      %v446 = vld [vmem:[#allocation2 + $0x1b0] sm:$0xff]
      %v447 = vld [vmem:[#allocation2 + $0x1b8] sm:$0xff]
      %v448 = vld [vmem:[#allocation2 + $0x1c0] sm:$0xff]
      %v449 = vld [vmem:[#allocation2 + $0x1c8] sm:$0xff]
      %v450 = vld [vmem:[#allocation2 + $0x1d0] sm:$0xff]
      %v451 = vld [vmem:[#allocation2 + $0x1d8] sm:$0xff]
      %v452 = vld [vmem:[#allocation2 + $0x1e0] sm:$0xff]
      %v453 = vld [vmem:[#allocation2 + $0x1e8] sm:$0xff]
      %v454 = vld [vmem:[#allocation2 + $0x1f0] sm:$0xff]
      %v455 = vld [vmem:[#allocation2 + $0x1f8] sm:$0xff]
      %v456 = vld [vmem:[%s287] sm:$0xf]
      %v457 = vld [vmem:[%s287 + $0x4] sm:$0xf]
      %v458 = vld [vmem:[%s287 + $0x8] sm:$0xf]
      %v459 = vld [vmem:[%s287 + $0xc] sm:$0xf]
      %v460 = vld [vmem:[%s287 + $0x10] sm:$0xf]
      %v461 = vld [vmem:[%s287 + $0x14] sm:$0xf]
      %v462 = vld [vmem:[%s287 + $0x18] sm:$0xf]
      %v463 = vld [vmem:[%s287 + $0x1c] sm:$0xf]
      %v464 = vld [vmem:[%s287 + $0x20] sm:$0xf]
      %v465 = vld [vmem:[%s287 + $0x24] sm:$0xf]
      %v466 = vld [vmem:[%s287 + $0x28] sm:$0xf]
      %v467 = vld [vmem:[%s287 + $0x2c] sm:$0xf]
      %v468 = vld [vmem:[%s287 + $0x30] sm:$0xf]
      %v469 = vld [vmem:[%s287 + $0x34] sm:$0xf]
      %v470 = vld [vmem:[%s287 + $0x38] sm:$0xf]
      %v471 = vld [vmem:[%s287 + $0x3c] sm:$0xf]
      %v472 = vld [vmem:[%s287 + $0x40] sm:$0xf]
      %v473 = vld [vmem:[%s287 + $0x44] sm:$0xf]
      %v474 = vld [vmem:[%s287 + $0x48] sm:$0xf]
      %v475 = vld [vmem:[%s287 + $0x4c] sm:$0xf]
      %v476 = vld [vmem:[%s287 + $0x50] sm:$0xf]
      %v477 = vld [vmem:[%s287 + $0x54] sm:$0xf]
      %v478 = vld [vmem:[%s287 + $0x58] sm:$0xf]
      %v479 = vld [vmem:[%s287 + $0x5c] sm:$0xf]
      %v480 = vld [vmem:[%s287 + $0x60] sm:$0xf]
      %v481 = vld [vmem:[%s287 + $0x64] sm:$0xf]
      %v482 = vld [vmem:[%s287 + $0x68] sm:$0xf]
      %v483 = vld [vmem:[%s287 + $0x6c] sm:$0xf]
      %v484 = vld [vmem:[%s287 + $0x70] sm:$0xf]
      %v485 = vld [vmem:[%s287 + $0x74] sm:$0xf]
      %v486 = vld [vmem:[%s287 + $0x78] sm:$0xf]
      %v487 = vld [vmem:[%s287 + $0x7c] sm:$0xf]
      %v488 = vld [vmem:[%s298] sm:$0xff]
      %v489 = vld [vmem:[%s298 + $0x8] sm:$0xff]
      %v490 = vld [vmem:[%s298 + $0x10] sm:$0xff]
      %v491 = vld [vmem:[%s298 + $0x18] sm:$0xff]
      %v492 = vld [vmem:[%s298 + $0x20] sm:$0xff]
      %v493 = vld [vmem:[%s298 + $0x28] sm:$0xff]
      %v494 = vld [vmem:[%s298 + $0x30] sm:$0xff]
      %v495 = vld [vmem:[%s298 + $0x38] sm:$0xff]
      %v496 = vld [vmem:[%s298 + $0x40] sm:$0xff]
      %v497 = vld [vmem:[%s298 + $0x48] sm:$0xff]
      %v498 = vld [vmem:[%s298 + $0x50] sm:$0xff]
      %v499 = vld [vmem:[%s298 + $0x58] sm:$0xff]
      %v500 = vld [vmem:[%s298 + $0x60] sm:$0xff]
      %v501 = vld [vmem:[%s298 + $0x68] sm:$0xff]
      %v502 = vld [vmem:[%s298 + $0x70] sm:$0xff]
      %v503 = vld [vmem:[%s298 + $0x78] sm:$0xff]
      %v536 = vunpack.c.l.b16 %v456
      %v537 = vunpack.c.l.b16 %v457
      %v538 = vunpack.c.l.b16 %v458
      %v539 = vunpack.c.l.b16 %v459
      %v540 = vunpack.c.l.b16 %v460
      %v541 = vunpack.c.l.b16 %v461
      %v542 = vunpack.c.l.b16 %v462
      %v543 = vunpack.c.l.b16 %v463
      %v544 = vunpack.c.l.b16 %v464
      %v545 = vunpack.c.l.b16 %v465
      %v546 = vunpack.c.l.b16 %v466
      %v547 = vunpack.c.l.b16 %v467
      %v548 = vunpack.c.l.b16 %v468
      %v549 = vunpack.c.l.b16 %v469
      %v550 = vunpack.c.l.b16 %v470
      %v551 = vunpack.c.l.b16 %v471
      %v552 = vunpack.c.l.b16 %v472
      %v553 = vunpack.c.l.b16 %v473
      %v554 = vunpack.c.l.b16 %v474
      %v555 = vunpack.c.l.b16 %v475
      %v556 = vunpack.c.l.b16 %v476
      %v557 = vunpack.c.l.b16 %v477
      %v558 = vunpack.c.l.b16 %v478
      %v559 = vunpack.c.l.b16 %v479
      %v560 = vunpack.c.l.b16 %v480
      %v561 = vunpack.c.l.b16 %v481
      %v562 = vunpack.c.l.b16 %v482
      %v563 = vunpack.c.l.b16 %v483
      %v564 = vunpack.c.l.b16 %v484
      %v565 = vunpack.c.l.b16 %v485
      %v566 = vunpack.c.l.b16 %v486
      %v567 = vunpack.c.l.b16 %v487
      %v568 = vpack.c.b16 %v537, %v536
      %v569 = vpack.c.b16 %v539, %v538
      %v570 = vpack.c.b16 %v541, %v540
      %v571 = vpack.c.b16 %v543, %v542
      %v572 = vpack.c.b16 %v545, %v544
      %v573 = vpack.c.b16 %v547, %v546
      %v574 = vpack.c.b16 %v549, %v548
      %v575 = vpack.c.b16 %v551, %v550
      %v576 = vpack.c.b16 %v553, %v552
      %v577 = vpack.c.b16 %v555, %v554
      %v578 = vpack.c.b16 %v557, %v556
      %v579 = vpack.c.b16 %v559, %v558
      %v580 = vpack.c.b16 %v561, %v560
      %v581 = vpack.c.b16 %v563, %v562
      %v582 = vpack.c.b16 %v565, %v564
      %v583 = vpack.c.b16 %v567, %v566
      %v616 = vunpack.c.l.b16 %v488
      %v617 = vunpack.c.h.b16 %v488
      %v618 = vunpack.c.l.b16 %v489
      %v619 = vunpack.c.h.b16 %v489
      %v620 = vunpack.c.l.b16 %v490
      %v621 = vunpack.c.h.b16 %v490
      %v622 = vunpack.c.l.b16 %v491
      %v623 = vunpack.c.h.b16 %v491
      %v624 = vunpack.c.l.b16 %v492
      %v625 = vunpack.c.h.b16 %v492
      %v626 = vunpack.c.l.b16 %v493
      %v627 = vunpack.c.h.b16 %v493
      %v628 = vunpack.c.l.b16 %v494
      %v629 = vunpack.c.h.b16 %v494
      %v630 = vunpack.c.l.b16 %v495
      %v631 = vunpack.c.h.b16 %v495
      %v632 = vunpack.c.l.b16 %v496
      %v633 = vunpack.c.h.b16 %v496
      %v634 = vunpack.c.l.b16 %v497
      %v635 = vunpack.c.h.b16 %v497
      %v636 = vunpack.c.l.b16 %v498
      %v637 = vunpack.c.h.b16 %v498
      %v638 = vunpack.c.l.b16 %v499
      %v639 = vunpack.c.h.b16 %v499
      %v640 = vunpack.c.l.b16 %v500
      %v641 = vunpack.c.h.b16 %v500
      %v642 = vunpack.c.l.b16 %v501
      %v643 = vunpack.c.h.b16 %v501
      %v644 = vunpack.c.l.b16 %v502
      %v645 = vunpack.c.h.b16 %v502
      %v646 = vunpack.c.l.b16 %v503
      %v647 = vunpack.c.h.b16 %v503
      %v648 = vpack.c.b16 %v618, %v616
      %v649 = vpack.c.b16 %v619, %v617
      %v650 = vpack.c.b16 %v622, %v620
      %v651 = vpack.c.b16 %v623, %v621
      %v652 = vpack.c.b16 %v626, %v624
      %v653 = vpack.c.b16 %v627, %v625
      %v654 = vpack.c.b16 %v630, %v628
      %v655 = vpack.c.b16 %v631, %v629
      %v656 = vpack.c.b16 %v634, %v632
      %v657 = vpack.c.b16 %v635, %v633
      %v658 = vpack.c.b16 %v638, %v636
      %v659 = vpack.c.b16 %v639, %v637
      %v660 = vpack.c.b16 %v642, %v640
      %v661 = vpack.c.b16 %v643, %v641
      %v662 = vpack.c.b16 %v646, %v644
      %v663 = vpack.c.b16 %v647, %v645
      %680 = vmatpush.bf16.msra.mxu0 %v662
      %681 = vmatpush.bf16.msra.mxu0 %v660
      %682 = vmatpush.bf16.msra.mxu0 %v658
      %683 = vmatpush.bf16.msra.mxu0 %v656
      %684 = vmatpush.bf16.msra.mxu0 %v654
      %685 = vmatpush.bf16.msra.mxu0 %v652
      %686 = vmatpush.bf16.msra.mxu0 %v650
      %687 = vmatpush.bf16.msra.mxu0 %v648
      %688 = vmatmul.bf16.gmra.mxu0 %v568
      %v689 = vpop.f32.mrf.mxu0
      %v690 = vadd.f32 0.0, %v689
      %v691 = vpop.f32.mrf.mxu0
      %v692 = vadd.f32 0.0, %v691
      %693 = vmatmul.bf16.gmra.mxu0 %v569
      %v694 = vpop.f32.mrf.mxu0
      %v695 = vadd.f32 0.0, %v694
      %v696 = vpop.f32.mrf.mxu0
      %v697 = vadd.f32 0.0, %v696
      %698 = vmatmul.bf16.gmra.mxu0 %v570
      %v699 = vpop.f32.mrf.mxu0
      %v700 = vadd.f32 0.0, %v699
      %v701 = vpop.f32.mrf.mxu0
      %v702 = vadd.f32 0.0, %v701
      %703 = vmatmul.bf16.gmra.mxu0 %v571
      %v704 = vpop.f32.mrf.mxu0
      %v705 = vadd.f32 0.0, %v704
      %v706 = vpop.f32.mrf.mxu0
      %v707 = vadd.f32 0.0, %v706
      %708 = vmatmul.bf16.gmra.mxu0 %v572
      %v709 = vpop.f32.mrf.mxu0
      %v710 = vadd.f32 0.0, %v709
      %v711 = vpop.f32.mrf.mxu0
      %v712 = vadd.f32 0.0, %v711
      %713 = vmatmul.bf16.gmra.mxu0 %v573
      %v714 = vpop.f32.mrf.mxu0
      %v715 = vadd.f32 0.0, %v714
      %v716 = vpop.f32.mrf.mxu0
      %v717 = vadd.f32 0.0, %v716
      %718 = vmatmul.bf16.gmra.mxu0 %v574
      %v719 = vpop.f32.mrf.mxu0
      %v720 = vadd.f32 0.0, %v719
      %v721 = vpop.f32.mrf.mxu0
      %v722 = vadd.f32 0.0, %v721
      %723 = vmatmul.bf16.gmra.mxu0 %v575
      %v724 = vpop.f32.mrf.mxu0
      %v725 = vadd.f32 0.0, %v724
      %v726 = vpop.f32.mrf.mxu0
      %v727 = vadd.f32 0.0, %v726
      %728 = vmatmul.bf16.gmra.mxu0 %v576
      %v729 = vpop.f32.mrf.mxu0
      %v730 = vadd.f32 0.0, %v729
      %v731 = vpop.f32.mrf.mxu0
      %v732 = vadd.f32 0.0, %v731
      %733 = vmatmul.bf16.gmra.mxu0 %v577
      %v734 = vpop.f32.mrf.mxu0
      %v735 = vadd.f32 0.0, %v734
      %v736 = vpop.f32.mrf.mxu0
      %v737 = vadd.f32 0.0, %v736
      %738 = vmatmul.bf16.gmra.mxu0 %v578
      %v739 = vpop.f32.mrf.mxu0
      %v740 = vadd.f32 0.0, %v739
      %v741 = vpop.f32.mrf.mxu0
      %v742 = vadd.f32 0.0, %v741
      %743 = vmatmul.bf16.gmra.mxu0 %v579
      %v744 = vpop.f32.mrf.mxu0
      %v745 = vadd.f32 0.0, %v744
      %v746 = vpop.f32.mrf.mxu0
      %v747 = vadd.f32 0.0, %v746
      %748 = vmatmul.bf16.gmra.mxu0 %v580
      %v749 = vpop.f32.mrf.mxu0
      %v750 = vadd.f32 0.0, %v749
      %v751 = vpop.f32.mrf.mxu0
      %v752 = vadd.f32 0.0, %v751
      %753 = vmatmul.bf16.gmra.mxu0 %v581
      %v754 = vpop.f32.mrf.mxu0
      %v755 = vadd.f32 0.0, %v754
      %v756 = vpop.f32.mrf.mxu0
      %v757 = vadd.f32 0.0, %v756
      %758 = vmatmul.bf16.gmra.mxu0 %v582
      %v759 = vpop.f32.mrf.mxu0
      %v760 = vadd.f32 0.0, %v759
      %v761 = vpop.f32.mrf.mxu0
      %v762 = vadd.f32 0.0, %v761
      %763 = vmatmul.bf16.gmra.mxu0 %v583
      %v764 = vpop.f32.mrf.mxu0
      %v765 = vadd.f32 0.0, %v764
      %v766 = vpop.f32.mrf.mxu0
      %v767 = vadd.f32 0.0, %v766
      %768 = vdwg.mxu0
      %769 = vmatpush.bf16.msra.mxu0 %v663
      %770 = vmatpush.bf16.msra.mxu0 %v661
      %771 = vmatpush.bf16.msra.mxu0 %v659
      %772 = vmatpush.bf16.msra.mxu0 %v657
      %773 = vmatpush.bf16.msra.mxu0 %v655
      %774 = vmatpush.bf16.msra.mxu0 %v653
      %775 = vmatpush.bf16.msra.mxu0 %v651
      %776 = vmatpush.bf16.msra.mxu0 %v649
      %777 = vmatmul.bf16.gmra.mxu0 %v568
      %v778 = vpop.f32.mrf.mxu0
      %v779 = vadd.f32 0.0, %v778
      %v780 = vpop.f32.mrf.mxu0
      %v781 = vadd.f32 0.0, %v780
      %782 = vmatmul.bf16.gmra.mxu0 %v569
      %v783 = vpop.f32.mrf.mxu0
      %v784 = vadd.f32 0.0, %v783
      %v785 = vpop.f32.mrf.mxu0
      %v786 = vadd.f32 0.0, %v785
      %787 = vmatmul.bf16.gmra.mxu0 %v570
      %v788 = vpop.f32.mrf.mxu0
      %v789 = vadd.f32 0.0, %v788
      %v790 = vpop.f32.mrf.mxu0
      %v791 = vadd.f32 0.0, %v790
      %792 = vmatmul.bf16.gmra.mxu0 %v571
      %v793 = vpop.f32.mrf.mxu0
      %v794 = vadd.f32 0.0, %v793
      %v795 = vpop.f32.mrf.mxu0
      %v796 = vadd.f32 0.0, %v795
      %797 = vmatmul.bf16.gmra.mxu0 %v572
      %v798 = vpop.f32.mrf.mxu0
      %v799 = vadd.f32 0.0, %v798
      %v800 = vpop.f32.mrf.mxu0
      %v801 = vadd.f32 0.0, %v800
      %802 = vmatmul.bf16.gmra.mxu0 %v573
      %v803 = vpop.f32.mrf.mxu0
      %v804 = vadd.f32 0.0, %v803
      %v805 = vpop.f32.mrf.mxu0
      %v806 = vadd.f32 0.0, %v805
      %807 = vmatmul.bf16.gmra.mxu0 %v574
      %v808 = vpop.f32.mrf.mxu0
      %v809 = vadd.f32 0.0, %v808
      %v810 = vpop.f32.mrf.mxu0
      %v811 = vadd.f32 0.0, %v810
      %812 = vmatmul.bf16.gmra.mxu0 %v575
      %v813 = vpop.f32.mrf.mxu0
      %v814 = vadd.f32 0.0, %v813
      %v815 = vpop.f32.mrf.mxu0
      %v816 = vadd.f32 0.0, %v815
      %817 = vmatmul.bf16.gmra.mxu0 %v576
      %v818 = vpop.f32.mrf.mxu0
      %v819 = vadd.f32 0.0, %v818
      %v820 = vpop.f32.mrf.mxu0
      %v821 = vadd.f32 0.0, %v820
      %822 = vmatmul.bf16.gmra.mxu0 %v577
      %v823 = vpop.f32.mrf.mxu0
      %v824 = vadd.f32 0.0, %v823
      %v825 = vpop.f32.mrf.mxu0
      %v826 = vadd.f32 0.0, %v825
      %827 = vmatmul.bf16.gmra.mxu0 %v578
      %v828 = vpop.f32.mrf.mxu0
      %v829 = vadd.f32 0.0, %v828
      %v830 = vpop.f32.mrf.mxu0
      %v831 = vadd.f32 0.0, %v830
      %832 = vmatmul.bf16.gmra.mxu0 %v579
      %v833 = vpop.f32.mrf.mxu0
      %v834 = vadd.f32 0.0, %v833
      %v835 = vpop.f32.mrf.mxu0
      %v836 = vadd.f32 0.0, %v835
      %837 = vmatmul.bf16.gmra.mxu0 %v580
      %v838 = vpop.f32.mrf.mxu0
      %v839 = vadd.f32 0.0, %v838
      %v840 = vpop.f32.mrf.mxu0
      %v841 = vadd.f32 0.0, %v840
      %842 = vmatmul.bf16.gmra.mxu0 %v581
      %v843 = vpop.f32.mrf.mxu0
      %v844 = vadd.f32 0.0, %v843
      %v845 = vpop.f32.mrf.mxu0
      %v846 = vadd.f32 0.0, %v845
      %847 = vmatmul.bf16.gmra.mxu0 %v582
      %v848 = vpop.f32.mrf.mxu0
      %v849 = vadd.f32 0.0, %v848
      %v850 = vpop.f32.mrf.mxu0
      %v851 = vadd.f32 0.0, %v850
      %852 = vmatmul.bf16.gmra.mxu0 %v583
      %v853 = vpop.f32.mrf.mxu0
      %v854 = vadd.f32 0.0, %v853
      %v855 = vpop.f32.mrf.mxu0
      %v856 = vadd.f32 0.0, %v855
      %857 = vdwg.mxu0
      %v858 = vadd.f32 %v392, %v690
      %v859 = vadd.f32 %v393, %v779
      %v860 = vadd.f32 %v394, %v692
      %v861 = vadd.f32 %v395, %v781
      %v862 = vadd.f32 %v396, %v695
      %v863 = vadd.f32 %v397, %v784
      %v864 = vadd.f32 %v398, %v697
      %v865 = vadd.f32 %v399, %v786
      %v866 = vadd.f32 %v400, %v700
      %v867 = vadd.f32 %v401, %v789
      %v868 = vadd.f32 %v402, %v702
      %v869 = vadd.f32 %v403, %v791
      %v870 = vadd.f32 %v404, %v705
      %v871 = vadd.f32 %v405, %v794
      %v872 = vadd.f32 %v406, %v707
      %v873 = vadd.f32 %v407, %v796
      %v874 = vadd.f32 %v408, %v710
      %v875 = vadd.f32 %v409, %v799
      %v876 = vadd.f32 %v410, %v712
      %v877 = vadd.f32 %v411, %v801
      %v878 = vadd.f32 %v412, %v715
      %v879 = vadd.f32 %v413, %v804
      %v880 = vadd.f32 %v414, %v717
      %v881 = vadd.f32 %v415, %v806
      %v882 = vadd.f32 %v416, %v720
      %v883 = vadd.f32 %v417, %v809
      %v884 = vadd.f32 %v418, %v722
      %v885 = vadd.f32 %v419, %v811
      %v886 = vadd.f32 %v420, %v725
      %v887 = vadd.f32 %v421, %v814
      %v888 = vadd.f32 %v422, %v727
      %v889 = vadd.f32 %v423, %v816
      %v890 = vadd.f32 %v424, %v730
      %v891 = vadd.f32 %v425, %v819
      %v892 = vadd.f32 %v426, %v732
      %v893 = vadd.f32 %v427, %v821
      %v894 = vadd.f32 %v428, %v735
      %v895 = vadd.f32 %v429, %v824
      %v896 = vadd.f32 %v430, %v737
      %v897 = vadd.f32 %v431, %v826
      %v898 = vadd.f32 %v432, %v740
      %v899 = vadd.f32 %v433, %v829
      %v900 = vadd.f32 %v434, %v742
      %v901 = vadd.f32 %v435, %v831
      %v902 = vadd.f32 %v436, %v745
      %v903 = vadd.f32 %v437, %v834
      %v904 = vadd.f32 %v438, %v747
      %v905 = vadd.f32 %v439, %v836
      %v906 = vadd.f32 %v440, %v750
      %v907 = vadd.f32 %v441, %v839
      %v908 = vadd.f32 %v442, %v752
      %v909 = vadd.f32 %v443, %v841
      %v910 = vadd.f32 %v444, %v755
      %v911 = vadd.f32 %v445, %v844
      %v912 = vadd.f32 %v446, %v757
      %v913 = vadd.f32 %v447, %v846
      %v914 = vadd.f32 %v448, %v760
      %v915 = vadd.f32 %v449, %v849
      %v916 = vadd.f32 %v450, %v762
      %v917 = vadd.f32 %v451, %v851
      %v918 = vadd.f32 %v452, %v765
      %v919 = vadd.f32 %v453, %v854
      %v920 = vadd.f32 %v454, %v767
      %v921 = vadd.f32 %v455, %v856
      %922 = vst [vmem:[#allocation2] sm:$0xff] %v858
      %vm923 = vcmask 130048
      %924 = vst.msk [vmem:[#allocation2 + $0x8] sm:$0xff] %vm923, %v859
      %925 = vst [vmem:[#allocation2 + $0x10] sm:$0xff] %v860
      %926 = vst.msk [vmem:[#allocation2 + $0x18] sm:$0xff] %vm923, %v861
      %927 = vst [vmem:[#allocation2 + $0x20] sm:$0xff] %v862
      %928 = vst.msk [vmem:[#allocation2 + $0x28] sm:$0xff] %vm923, %v863
      %929 = vst [vmem:[#allocation2 + $0x30] sm:$0xff] %v864
      %930 = vst.msk [vmem:[#allocation2 + $0x38] sm:$0xff] %vm923, %v865
      %931 = vst [vmem:[#allocation2 + $0x40] sm:$0xff] %v866
      %932 = vst.msk [vmem:[#allocation2 + $0x48] sm:$0xff] %vm923, %v867
      %933 = vst [vmem:[#allocation2 + $0x50] sm:$0xff] %v868
      %934 = vst.msk [vmem:[#allocation2 + $0x58] sm:$0xff] %vm923, %v869
      %935 = vst [vmem:[#allocation2 + $0x60] sm:$0xff] %v870
      %936 = vst.msk [vmem:[#allocation2 + $0x68] sm:$0xff] %vm923, %v871
      %937 = vst [vmem:[#allocation2 + $0x70] sm:$0xff] %v872
      %938 = vst.msk [vmem:[#allocation2 + $0x78] sm:$0xff] %vm923, %v873
      %939 = vst [vmem:[#allocation2 + $0x80] sm:$0xff] %v874
      %940 = vst.msk [vmem:[#allocation2 + $0x88] sm:$0xff] %vm923, %v875
      %941 = vst [vmem:[#allocation2 + $0x90] sm:$0xff] %v876
      %942 = vst.msk [vmem:[#allocation2 + $0x98] sm:$0xff] %vm923, %v877
      %943 = vst [vmem:[#allocation2 + $0xa0] sm:$0xff] %v878
      %944 = vst.msk [vmem:[#allocation2 + $0xa8] sm:$0xff] %vm923, %v879
      %945 = vst [vmem:[#allocation2 + $0xb0] sm:$0xff] %v880
      %946 = vst.msk [vmem:[#allocation2 + $0xb8] sm:$0xff] %vm923, %v881
      %947 = vst [vmem:[#allocation2 + $0xc0] sm:$0xff] %v882
      %948 = vst.msk [vmem:[#allocation2 + $0xc8] sm:$0xff] %vm923, %v883
      %949 = vst [vmem:[#allocation2 + $0xd0] sm:$0xff] %v884
      %950 = vst.msk [vmem:[#allocation2 + $0xd8] sm:$0xff] %vm923, %v885
      %951 = vst [vmem:[#allocation2 + $0xe0] sm:$0xff] %v886
      %952 = vst.msk [vmem:[#allocation2 + $0xe8] sm:$0xff] %vm923, %v887
      %953 = vst [vmem:[#allocation2 + $0xf0] sm:$0xff] %v888
      %954 = vst.msk [vmem:[#allocation2 + $0xf8] sm:$0xff] %vm923, %v889
      %955 = vst [vmem:[#allocation2 + $0x100] sm:$0xff] %v890
      %956 = vst.msk [vmem:[#allocation2 + $0x108] sm:$0xff] %vm923, %v891
      %957 = vst [vmem:[#allocation2 + $0x110] sm:$0xff] %v892
      %958 = vst.msk [vmem:[#allocation2 + $0x118] sm:$0xff] %vm923, %v893
      %959 = vst [vmem:[#allocation2 + $0x120] sm:$0xff] %v894
      %960 = vst.msk [vmem:[#allocation2 + $0x128] sm:$0xff] %vm923, %v895
      %961 = vst [vmem:[#allocation2 + $0x130] sm:$0xff] %v896
      %962 = vst.msk [vmem:[#allocation2 + $0x138] sm:$0xff] %vm923, %v897
      %963 = vst [vmem:[#allocation2 + $0x140] sm:$0xff] %v898
      %964 = vst.msk [vmem:[#allocation2 + $0x148] sm:$0xff] %vm923, %v899
      %965 = vst [vmem:[#allocation2 + $0x150] sm:$0xff] %v900
      %966 = vst.msk [vmem:[#allocation2 + $0x158] sm:$0xff] %vm923, %v901
      %967 = vst [vmem:[#allocation2 + $0x160] sm:$0xff] %v902
      %968 = vst.msk [vmem:[#allocation2 + $0x168] sm:$0xff] %vm923, %v903
      %969 = vst [vmem:[#allocation2 + $0x170] sm:$0xff] %v904
      %970 = vst.msk [vmem:[#allocation2 + $0x178] sm:$0xff] %vm923, %v905
      %971 = vst [vmem:[#allocation2 + $0x180] sm:$0xff] %v906
      %972 = vst.msk [vmem:[#allocation2 + $0x188] sm:$0xff] %vm923, %v907
      %973 = vst [vmem:[#allocation2 + $0x190] sm:$0xff] %v908
      %974 = vst.msk [vmem:[#allocation2 + $0x198] sm:$0xff] %vm923, %v909
      %975 = vst [vmem:[#allocation2 + $0x1a0] sm:$0xff] %v910
      %976 = vst.msk [vmem:[#allocation2 + $0x1a8] sm:$0xff] %vm923, %v911
      %977 = vst [vmem:[#allocation2 + $0x1b0] sm:$0xff] %v912
      %978 = vst.msk [vmem:[#allocation2 + $0x1b8] sm:$0xff] %vm923, %v913
      %979 = vst [vmem:[#allocation2 + $0x1c0] sm:$0xff] %v914
      %980 = vst.msk [vmem:[#allocation2 + $0x1c8] sm:$0xff] %vm923, %v915
      %981 = vst [vmem:[#allocation2 + $0x1d0] sm:$0xff] %v916
      %982 = vst.msk [vmem:[#allocation2 + $0x1d8] sm:$0xff] %vm923, %v917
      %983 = vst [vmem:[#allocation2 + $0x1e0] sm:$0xff] %v918
      %984 = vst.msk [vmem:[#allocation2 + $0x1e8] sm:$0xff] %vm923, %v919
      %985 = vst [vmem:[#allocation2 + $0x1f0] sm:$0xff] %v920
      %986 = vst.msk [vmem:[#allocation2 + $0x1f8] sm:$0xff] %vm923, %v921
      // Predicated region
      $region41: #{unet_block_deep_forward.8} parent=35 // pred_check
        %p987 = pneg %p323
      $region42: #{unet_block_deep_forward.8} parent=35 // pred_check_branch
        %989 = sbr.rel (%p987) target = $region44
      $region43: #{unet_block_deep_forward.8} parent=35 // pred_region
        %v990 = vld [vmem:[#allocation2] sm:$0xff]
        %v991 = vld [vmem:[#allocation2 + $0x8] sm:$0xff]
        %v992 = vld [vmem:[#allocation2 + $0x10] sm:$0xff]
        %v993 = vld [vmem:[#allocation2 + $0x18] sm:$0xff]
        %v994 = vld [vmem:[#allocation2 + $0x20] sm:$0xff]
        %v995 = vld [vmem:[#allocation2 + $0x28] sm:$0xff]
        %v996 = vld [vmem:[#allocation2 + $0x30] sm:$0xff]
        %v997 = vld [vmem:[#allocation2 + $0x38] sm:$0xff]
        %v998 = vld [vmem:[#allocation2 + $0x40] sm:$0xff]
        %v999 = vld [vmem:[#allocation2 + $0x48] sm:$0xff]
        %v1000 = vld [vmem:[#allocation2 + $0x50] sm:$0xff]
        %v1001 = vld [vmem:[#allocation2 + $0x58] sm:$0xff]
        %v1002 = vld [vmem:[#allocation2 + $0x60] sm:$0xff]
        %v1003 = vld [vmem:[#allocation2 + $0x68] sm:$0xff]
        %v1004 = vld [vmem:[#allocation2 + $0x70] sm:$0xff]
        %v1005 = vld [vmem:[#allocation2 + $0x78] sm:$0xff]
        %v1006 = vld [vmem:[#allocation2 + $0x80] sm:$0xff]
        %v1007 = vld [vmem:[#allocation2 + $0x88] sm:$0xff]
        %v1008 = vld [vmem:[#allocation2 + $0x90] sm:$0xff]
        %v1009 = vld [vmem:[#allocation2 + $0x98] sm:$0xff]
        %v1010 = vld [vmem:[#allocation2 + $0xa0] sm:$0xff]
        %v1011 = vld [vmem:[#allocation2 + $0xa8] sm:$0xff]
        %v1012 = vld [vmem:[#allocation2 + $0xb0] sm:$0xff]
        %v1013 = vld [vmem:[#allocation2 + $0xb8] sm:$0xff]
        %v1014 = vld [vmem:[#allocation2 + $0xc0] sm:$0xff]
        %v1015 = vld [vmem:[#allocation2 + $0xc8] sm:$0xff]
        %v1016 = vld [vmem:[#allocation2 + $0xd0] sm:$0xff]
        %v1017 = vld [vmem:[#allocation2 + $0xd8] sm:$0xff]
        %v1018 = vld [vmem:[#allocation2 + $0xe0] sm:$0xff]
        %v1019 = vld [vmem:[#allocation2 + $0xe8] sm:$0xff]
        %v1020 = vld [vmem:[#allocation2 + $0xf0] sm:$0xff]
        %v1021 = vld [vmem:[#allocation2 + $0xf8] sm:$0xff]
        %v1022 = vld [vmem:[#allocation2 + $0x100] sm:$0xff]
        %v1023 = vld [vmem:[#allocation2 + $0x108] sm:$0xff]
        %v1024 = vld [vmem:[#allocation2 + $0x110] sm:$0xff]
        %v1025 = vld [vmem:[#allocation2 + $0x118] sm:$0xff]
        %v1026 = vld [vmem:[#allocation2 + $0x120] sm:$0xff]
        %v1027 = vld [vmem:[#allocation2 + $0x128] sm:$0xff]
        %v1028 = vld [vmem:[#allocation2 + $0x130] sm:$0xff]
        %v1029 = vld [vmem:[#allocation2 + $0x138] sm:$0xff]
        %v1030 = vld [vmem:[#allocation2 + $0x140] sm:$0xff]
        %v1031 = vld [vmem:[#allocation2 + $0x148] sm:$0xff]
        %v1032 = vld [vmem:[#allocation2 + $0x150] sm:$0xff]
        %v1033 = vld [vmem:[#allocation2 + $0x158] sm:$0xff]
        %v1034 = vld [vmem:[#allocation2 + $0x160] sm:$0xff]
        %v1035 = vld [vmem:[#allocation2 + $0x168] sm:$0xff]
        %v1036 = vld [vmem:[#allocation2 + $0x170] sm:$0xff]
        %v1037 = vld [vmem:[#allocation2 + $0x178] sm:$0xff]
        %v1038 = vld [vmem:[#allocation2 + $0x180] sm:$0xff]
        %v1039 = vld [vmem:[#allocation2 + $0x188] sm:$0xff]
        %v1040 = vld [vmem:[#allocation2 + $0x190] sm:$0xff]
        %v1041 = vld [vmem:[#allocation2 + $0x198] sm:$0xff]
        %v1042 = vld [vmem:[#allocation2 + $0x1a0] sm:$0xff]
        %v1043 = vld [vmem:[#allocation2 + $0x1a8] sm:$0xff]
        %v1044 = vld [vmem:[#allocation2 + $0x1b0] sm:$0xff]
        %v1045 = vld [vmem:[#allocation2 + $0x1b8] sm:$0xff]
        %v1046 = vld [vmem:[#allocation2 + $0x1c0] sm:$0xff]
        %v1047 = vld [vmem:[#allocation2 + $0x1c8] sm:$0xff]
        %v1048 = vld [vmem:[#allocation2 + $0x1d0] sm:$0xff]
        %v1049 = vld [vmem:[#allocation2 + $0x1d8] sm:$0xff]
        %v1050 = vld [vmem:[#allocation2 + $0x1e0] sm:$0xff]
        %v1051 = vld [vmem:[#allocation2 + $0x1e8] sm:$0xff]
        %v1052 = vld [vmem:[#allocation2 + $0x1f0] sm:$0xff]
        %v1053 = vld [vmem:[#allocation2 + $0x1f8] sm:$0xff]
        %v1054 = vld [vmem:[%s304] sm:$0x3]
        %v1056 = vperm.slane %v1054, 0
        %v1057 = vperm.slane %v1054, 1
        %v1060 = vmul.f32 %v990, %v1056
        %v1061 = vmul.f32 %v991, %v1057
        %v1062 = vmul.f32 %v992, %v1056
        %v1063 = vmul.f32 %v993, %v1057
        %v1064 = vmul.f32 %v994, %v1056
        %v1065 = vmul.f32 %v995, %v1057
        %v1066 = vmul.f32 %v996, %v1056
        %v1067 = vmul.f32 %v997, %v1057
        %v1068 = vmul.f32 %v998, %v1056
        %v1069 = vmul.f32 %v999, %v1057
        %v1070 = vmul.f32 %v1000, %v1056
        %v1071 = vmul.f32 %v1001, %v1057
        %v1072 = vmul.f32 %v1002, %v1056
        %v1073 = vmul.f32 %v1003, %v1057
        %v1074 = vmul.f32 %v1004, %v1056
        %v1075 = vmul.f32 %v1005, %v1057
        %v1076 = vmul.f32 %v1006, %v1056
        %v1077 = vmul.f32 %v1007, %v1057
        %v1078 = vmul.f32 %v1008, %v1056
        %v1079 = vmul.f32 %v1009, %v1057
        %v1080 = vmul.f32 %v1010, %v1056
        %v1081 = vmul.f32 %v1011, %v1057
        %v1082 = vmul.f32 %v1012, %v1056
        %v1083 = vmul.f32 %v1013, %v1057
        %v1084 = vmul.f32 %v1014, %v1056
        %v1085 = vmul.f32 %v1015, %v1057
        %v1086 = vmul.f32 %v1016, %v1056
        %v1087 = vmul.f32 %v1017, %v1057
        %v1088 = vmul.f32 %v1018, %v1056
        %v1089 = vmul.f32 %v1019, %v1057
        %v1090 = vmul.f32 %v1020, %v1056
        %v1091 = vmul.f32 %v1021, %v1057
        %v1092 = vmul.f32 %v1022, %v1056
        %v1093 = vmul.f32 %v1023, %v1057
        %v1094 = vmul.f32 %v1024, %v1056
        %v1095 = vmul.f32 %v1025, %v1057
        %v1096 = vmul.f32 %v1026, %v1056
        %v1097 = vmul.f32 %v1027, %v1057
        %v1098 = vmul.f32 %v1028, %v1056
        %v1099 = vmul.f32 %v1029, %v1057
        %v1100 = vmul.f32 %v1030, %v1056
        %v1101 = vmul.f32 %v1031, %v1057
        %v1102 = vmul.f32 %v1032, %v1056
        %v1103 = vmul.f32 %v1033, %v1057
        %v1104 = vmul.f32 %v1034, %v1056
        %v1105 = vmul.f32 %v1035, %v1057
        %v1106 = vmul.f32 %v1036, %v1056
        %v1107 = vmul.f32 %v1037, %v1057
        %v1108 = vmul.f32 %v1038, %v1056
        %v1109 = vmul.f32 %v1039, %v1057
        %v1110 = vmul.f32 %v1040, %v1056
        %v1111 = vmul.f32 %v1041, %v1057
        %v1112 = vmul.f32 %v1042, %v1056
        %v1113 = vmul.f32 %v1043, %v1057
        %v1114 = vmul.f32 %v1044, %v1056
        %v1115 = vmul.f32 %v1045, %v1057
        %v1116 = vmul.f32 %v1046, %v1056
        %v1117 = vmul.f32 %v1047, %v1057
        %v1118 = vmul.f32 %v1048, %v1056
        %v1119 = vmul.f32 %v1049, %v1057
        %v1120 = vmul.f32 %v1050, %v1056
        %v1121 = vmul.f32 %v1051, %v1057
        %v1122 = vmul.f32 %v1052, %v1056
        %v1123 = vmul.f32 %v1053, %v1057
        %v1124 = vld [vmem:[%s309] sm:$0x3]
        %v1126 = vperm.slane %v1124, 0
        %v1127 = vperm.slane %v1124, 1
        %v1130 = vadd.f32 %v1060, %v1126
        %v1131 = vadd.f32 %v1061, %v1127
        %v1132 = vadd.f32 %v1062, %v1126
        %v1133 = vadd.f32 %v1063, %v1127
        %v1134 = vadd.f32 %v1064, %v1126
        %v1135 = vadd.f32 %v1065, %v1127
        %v1136 = vadd.f32 %v1066, %v1126
        %v1137 = vadd.f32 %v1067, %v1127
        %v1138 = vadd.f32 %v1068, %v1126
        %v1139 = vadd.f32 %v1069, %v1127
        %v1140 = vadd.f32 %v1070, %v1126
        %v1141 = vadd.f32 %v1071, %v1127
        %v1142 = vadd.f32 %v1072, %v1126
        %v1143 = vadd.f32 %v1073, %v1127
        %v1144 = vadd.f32 %v1074, %v1126
        %v1145 = vadd.f32 %v1075, %v1127
        %v1146 = vadd.f32 %v1076, %v1126
        %v1147 = vadd.f32 %v1077, %v1127
        %v1148 = vadd.f32 %v1078, %v1126
        %v1149 = vadd.f32 %v1079, %v1127
        %v1150 = vadd.f32 %v1080, %v1126
        %v1151 = vadd.f32 %v1081, %v1127
        %v1152 = vadd.f32 %v1082, %v1126
        %v1153 = vadd.f32 %v1083, %v1127
        %v1154 = vadd.f32 %v1084, %v1126
        %v1155 = vadd.f32 %v1085, %v1127
        %v1156 = vadd.f32 %v1086, %v1126
        %v1157 = vadd.f32 %v1087, %v1127
        %v1158 = vadd.f32 %v1088, %v1126
        %v1159 = vadd.f32 %v1089, %v1127
        %v1160 = vadd.f32 %v1090, %v1126
        %v1161 = vadd.f32 %v1091, %v1127
        %v1162 = vadd.f32 %v1092, %v1126
        %v1163 = vadd.f32 %v1093, %v1127
        %v1164 = vadd.f32 %v1094, %v1126
        %v1165 = vadd.f32 %v1095, %v1127
        %v1166 = vadd.f32 %v1096, %v1126
        %v1167 = vadd.f32 %v1097, %v1127
        %v1168 = vadd.f32 %v1098, %v1126
        %v1169 = vadd.f32 %v1099, %v1127
        %v1170 = vadd.f32 %v1100, %v1126
        %v1171 = vadd.f32 %v1101, %v1127
        %v1172 = vadd.f32 %v1102, %v1126
        %v1173 = vadd.f32 %v1103, %v1127
        %v1174 = vadd.f32 %v1104, %v1126
        %v1175 = vadd.f32 %v1105, %v1127
        %v1176 = vadd.f32 %v1106, %v1126
        %v1177 = vadd.f32 %v1107, %v1127
        %v1178 = vadd.f32 %v1108, %v1126
        %v1179 = vadd.f32 %v1109, %v1127
        %v1180 = vadd.f32 %v1110, %v1126
        %v1181 = vadd.f32 %v1111, %v1127
        %v1182 = vadd.f32 %v1112, %v1126
        %v1183 = vadd.f32 %v1113, %v1127
        %v1184 = vadd.f32 %v1114, %v1126
        %v1185 = vadd.f32 %v1115, %v1127
        %v1186 = vadd.f32 %v1116, %v1126
        %v1187 = vadd.f32 %v1117, %v1127
        %v1188 = vadd.f32 %v1118, %v1126
        %v1189 = vadd.f32 %v1119, %v1127
        %v1190 = vadd.f32 %v1120, %v1126
        %v1191 = vadd.f32 %v1121, %v1127
        %v1192 = vadd.f32 %v1122, %v1126
        %v1193 = vadd.f32 %v1123, %v1127
        %v1194 = vpack.c.bf16 %v1131, %v1130
        %v1195 = vpack.c.bf16 %v1133, %v1132
        %v1196 = vpack.c.bf16 %v1135, %v1134
        %v1197 = vpack.c.bf16 %v1137, %v1136
        %v1198 = vpack.c.bf16 %v1139, %v1138
        %v1199 = vpack.c.bf16 %v1141, %v1140
        %v1200 = vpack.c.bf16 %v1143, %v1142
        %v1201 = vpack.c.bf16 %v1145, %v1144
        %v1202 = vpack.c.bf16 %v1147, %v1146
        %v1203 = vpack.c.bf16 %v1149, %v1148
        %v1204 = vpack.c.bf16 %v1151, %v1150
        %v1205 = vpack.c.bf16 %v1153, %v1152
        %v1206 = vpack.c.bf16 %v1155, %v1154
        %v1207 = vpack.c.bf16 %v1157, %v1156
        %v1208 = vpack.c.bf16 %v1159, %v1158
        %v1209 = vpack.c.bf16 %v1161, %v1160
        %v1210 = vpack.c.bf16 %v1163, %v1162
        %v1211 = vpack.c.bf16 %v1165, %v1164
        %v1212 = vpack.c.bf16 %v1167, %v1166
        %v1213 = vpack.c.bf16 %v1169, %v1168
        %v1214 = vpack.c.bf16 %v1171, %v1170
        %v1215 = vpack.c.bf16 %v1173, %v1172
        %v1216 = vpack.c.bf16 %v1175, %v1174
        %v1217 = vpack.c.bf16 %v1177, %v1176
        %v1218 = vpack.c.bf16 %v1179, %v1178
        %v1219 = vpack.c.bf16 %v1181, %v1180
        %v1220 = vpack.c.bf16 %v1183, %v1182
        %v1221 = vpack.c.bf16 %v1185, %v1184
        %v1222 = vpack.c.bf16 %v1187, %v1186
        %v1223 = vpack.c.bf16 %v1189, %v1188
        %v1224 = vpack.c.bf16 %v1191, %v1190
        %v1225 = vpack.c.bf16 %v1193, %v1192
        %vm1226 = vcmask 1043456
        %vm1227 = vcmask 130052
        %vm1228 = vmor %vm1227, %vm1226
        %1229 = vst.msk [vmem:[%s320] sm:$0xff] %vm1228, %v1194
        %1230 = vst.msk [vmem:[%s320 + $0x8] sm:$0xff] %vm1228, %v1195
        %1231 = vst.msk [vmem:[%s320 + $0x10] sm:$0xff] %vm1228, %v1196
        %1232 = vst.msk [vmem:[%s320 + $0x18] sm:$0xff] %vm1228, %v1197
        %1233 = vst.msk [vmem:[%s320 + $0x20] sm:$0xff] %vm1228, %v1198
        %1234 = vst.msk [vmem:[%s320 + $0x28] sm:$0xff] %vm1228, %v1199
        %1235 = vst.msk [vmem:[%s320 + $0x30] sm:$0xff] %vm1228, %v1200
        %1236 = vst.msk [vmem:[%s320 + $0x38] sm:$0xff] %vm1228, %v1201
        %1237 = vst.msk [vmem:[%s320 + $0x40] sm:$0xff] %vm1228, %v1202
        %1238 = vst.msk [vmem:[%s320 + $0x48] sm:$0xff] %vm1228, %v1203
        %1239 = vst.msk [vmem:[%s320 + $0x50] sm:$0xff] %vm1228, %v1204
        %1240 = vst.msk [vmem:[%s320 + $0x58] sm:$0xff] %vm1228, %v1205
        %1241 = vst.msk [vmem:[%s320 + $0x60] sm:$0xff] %vm1228, %v1206
        %1242 = vst.msk [vmem:[%s320 + $0x68] sm:$0xff] %vm1228, %v1207
        %1243 = vst.msk [vmem:[%s320 + $0x70] sm:$0xff] %vm1228, %v1208
        %1244 = vst.msk [vmem:[%s320 + $0x78] sm:$0xff] %vm1228, %v1209
        %1245 = vst.msk [vmem:[%s320 + $0x80] sm:$0xff] %vm1228, %v1210
        %1246 = vst.msk [vmem:[%s320 + $0x88] sm:$0xff] %vm1228, %v1211
        %1247 = vst.msk [vmem:[%s320 + $0x90] sm:$0xff] %vm1228, %v1212
        %1248 = vst.msk [vmem:[%s320 + $0x98] sm:$0xff] %vm1228, %v1213
        %1249 = vst.msk [vmem:[%s320 + $0xa0] sm:$0xff] %vm1228, %v1214
        %1250 = vst.msk [vmem:[%s320 + $0xa8] sm:$0xff] %vm1228, %v1215
        %1251 = vst.msk [vmem:[%s320 + $0xb0] sm:$0xff] %vm1228, %v1216
        %1252 = vst.msk [vmem:[%s320 + $0xb8] sm:$0xff] %vm1228, %v1217
        %1253 = vst.msk [vmem:[%s320 + $0xc0] sm:$0xff] %vm1228, %v1218
        %1254 = vst.msk [vmem:[%s320 + $0xc8] sm:$0xff] %vm1228, %v1219
        %1255 = vst.msk [vmem:[%s320 + $0xd0] sm:$0xff] %vm1228, %v1220
        %1256 = vst.msk [vmem:[%s320 + $0xd8] sm:$0xff] %vm1228, %v1221
        %1257 = vst.msk [vmem:[%s320 + $0xe0] sm:$0xff] %vm1228, %v1222
        %1258 = vst.msk [vmem:[%s320 + $0xe8] sm:$0xff] %vm1228, %v1223
        %1259 = vst.msk [vmem:[%s320 + $0xf0] sm:$0xff] %vm1228, %v1224
        %1260 = vst.msk [vmem:[%s320 + $0xf8] sm:$0xff] %vm1228, %v1225
      $region44: #{unet_block_deep_forward.8} parent=35 // pred_fallthru
        _
      %s1261 = smul.u32 32, %s20
      %s1262 = smul.u32 2, %s21
      %p1263 = scmp.lt.s32.totalorder %s1261, 63
      %s1264 = scalar_select %p1263, %s1261, 63
      %p1265 = scmp.lt.s32.totalorder %s1262, 1
      %s1266 = scalar_select %p1265, %s1262, 1
      %s1267 = smul.addr %s1264, 2
      %s1268 = sadd.s32 %s1266, %s1267
      %s1269 = smul.addr %s1268, 4
      %s1270 = scalar_lea.vmem %s4, %s1269
      // Predicated region
      $region45: #{unet_block_deep_forward.8} parent=35 // pred_check
        %p1271 = pneg %p162
      $region46: #{unet_block_deep_forward.8} parent=35 // pred_check_branch
        %1273 = sbr.rel (%p1271) target = $region48
      $region47: #{unet_block_deep_forward.8} parent=35 // pred_region
        %s1274 = smul.u32 32, %s20
        %s1275 = smul.u32 2, %s21
      $region48: #{unet_block_deep_forward.8} parent=35 // pred_fallthru
        _
    $region36: #{unet_block_deep_forward.8} parent=5 // pred_fallthru
      _
    %p1276 = scmp.le.s32.totalorder 2, %s10
    // Predicated region
    $region49: #{unet_block_deep_forward.8} parent=5 // pred_check
      %p1277 = pneg %p1276
    $region50: #{unet_block_deep_forward.8} parent=5 // pred_check_branch
      %1279 = sbr.rel (%p1277) target = $region52
    $region51: #{unet_block_deep_forward.8} parent=5 // pred_region
      %s1280 = ssub.s32 %s10, 2
      // Predicated region
      $region53: #{unet_block_deep_forward.8} parent=51 // pred_check
        %p1281 = pneg %p168
      $region54: #{unet_block_deep_forward.8} parent=51 // pred_check_branch
        %1283 = sbr.rel (%p1281) target = $region56
      $region55: #{unet_block_deep_forward.8} parent=51 // pred_region
        %s1284 = smul.u32 32, %s23
        %s1285 = smul.u32 2, %s24
        %p1286 = scmp.lt.s32.totalorder %s1284, 63
        %s1287 = scalar_select %p1286, %s1284, 63
        %p1288 = scmp.lt.s32.totalorder %s1285, 1
        %s1289 = scalar_select %p1288, %s1285, 1
        %s1290 = smul.addr %s1287, 2
        %s1291 = sadd.s32 %s1289, %s1290
        %s1292 = smul.addr %s1291, 4
        %s1293 = scalar_lea.vmem %s4, %s1292
      $region56: #{unet_block_deep_forward.8} parent=51 // pred_fallthru
        _
    $region52: #{unet_block_deep_forward.8} parent=5 // pred_fallthru
      _
  $region6: #{unet_block_deep_forward.8} parent=0 // loop_footer
    %s14 = sadd.s32 1, %s10
  $region7: #{unet_block_deep_forward.8} parent=0 // loop_footer_branch
    %9 = sbr.rel target = $region3
  $region8: #{unet_block_deep_forward.8} parent=0 // loop_exit
    _

// kernel: unet_block_deep_forward.9
$region0: #{unet_block_deep_forward.9}
  #allocation0 [shape = 'u32[]', space=smem, size = 0x4, offset = 0x4, fixed_abs, tag = 'smem constant byte address 0x4 - core index']
  #allocation1 [shape = 'u32[72,128]{1,0:T(1,128)}', space=vmem, size = 0x9000, scoped, tag = 'internal scratch']
  #allocation2 [shape = 'f32[1]{0:T(128)S(6)}', space=smem, size = 0x200, scoped, tag = 'scoped memory for unet_block_deep_forward.9']
  %s0 = inlined_call_operand.vmem [shape: bf16[2,256,128], index: 0, kind: input, shape index: {}]
  %s1 = inlined_call_operand.vmem [shape: bf16[2,16,256], index: 1, kind: input, shape index: {}]
  %s2 = inlined_call_operand.vmem [shape: bf16[2,256,128], index: 2, kind: input, shape index: {}]
  %s3 = inlined_call_operand.vmem [shape: bf16[128,16], index: 3, kind: input, shape index: {}]
  %s4 = inlined_call_operand.<no memory space> [shape: f32[1], index: 4, kind: input, shape index: {}]
  %s5 = inlined_call_operand.vmem [shape: bf16[2,256,128], index: 5, kind: output, shape index: {}]
  %s6 = sld [smem:[#allocation0]]
  $region53: #{unet_block_deep_forward.9} parent=0
    _
  %s8 = ssub.s32 1, %s6
  %s9 = scalar_select 0, %s8, %s6
  %10 = sst [smem:[#allocation2]] %s4
  loop: start=0, step=1, limit=6
  $region2: #{unet_block_deep_forward.9} parent=0 // loop_pre_header
    _
  $region3: #{unet_block_deep_forward.9} parent=0 // loop_header
    %s12 = sphi 0, %s16
    %p13 = scmp.ge.s32.totalorder %s12, 6
    %s19 = sphi 0, %s31
    %s20 = sphi 0, %s27
    %s21 = sphi 0, %s19
    %s22 = sphi 0, %s20
    %s23 = sphi 0, %s21
    %s24 = sphi 0, %s22
    %s36 = sphi 0, %s38
    %s39 = sphi 0, %s36
    %s40 = sphi 0, %s39
    %s56 = sphi 0, %s40
    %s62 = sphi 0, %s64
    %s65 = sphi 0, %s62
    %s66 = sphi 0, %s65
    %s82 = sphi 0, %s66
    %s88 = sphi 0, %s90
    %s91 = sphi 0, %s88
    %s92 = sphi 0, %s91
    %s108 = sphi 0, %s92
    %s112 = sphi 0, %s112
    %s114 = sphi 0, %s112
    %s115 = sphi 0, %s114
    %s129 = sphi 0, %s115
    %s133 = sphi 0, %s133
    %s135 = sphi 0, %s133
    %s136 = sphi 0, %s135
    %s150 = sphi 0, %s136
    %s158 = sphi 0, %s160
    %s161 = sphi 0, %s158
    %s162 = sphi 0, %s161
    %s178 = sphi 0, %s162
  $region4: #{unet_block_deep_forward.9} parent=0 // loop_header_branch
    %15 = sbr.rel (%p13) target = $region8
  $region5: #{unet_block_deep_forward.9} parent=0 // loop_body
    %s17 = ssub.s32 %s12, 1
    %s18 = ssub.s32 %s12, 2
    %s25 = sadd.s32 1, %s20
    %p26 = scmp.ge.s32.totalorder %s25, 2
    %s27 = scalar_select %p26, 0, %s25
    %s28 = sadd.s32 1, %s19
    %s29 = scalar_select %p26, %s28, %s19
    %p30 = scmp.ge.s32.totalorder %s29, 2
    %s31 = scalar_select %p30, 0, %s29
    %s32 = ssub.s32 %s19, %s31
    %s33 = ssub.s32 %s20, %s27
    %s34 = sor.u32 %s32, %s33
    %p35 = scmp.eq.s32.totalorder %s34, 0
    %s37 = sadd.s32 %s36, 1
    %s38 = scalar_select %p35, %s36, %s37
    %p41 = pneg %p35
    %p42 = scmp.eq.s32.totalorder %s12, 3
    %p43 = por %p41, %p42
    %p44 = scmp.ne.s32.totalorder %s36, %s39
    %p45 = scmp.eq.s32.totalorder %s12, 0
    %p46 = por %p44, %p45
    %p47 = scmp.ne.s32.totalorder %s36, %s39
    %p48 = scmp.eq.s32.totalorder %s17, 3
    %p49 = por %p47, %p48
    %p50 = scmp.ne.s32.totalorder %s39, %s40
    %p51 = scmp.eq.s32.totalorder %s17, 0
    %p52 = por %p50, %p51
    %p53 = scmp.ne.s32.totalorder %s39, %s40
    %p54 = scmp.eq.s32.totalorder %s18, 3
    %p55 = por %p53, %p54
    %p57 = scmp.ne.s32.totalorder %s40, %s56
    %p58 = scmp.eq.s32.totalorder %s18, 0
    %p59 = por %p57, %p58
    %s60 = ssub.s32 %s19, %s31
    %p61 = scmp.eq.s32.totalorder %s60, 0
    %s63 = sadd.s32 %s62, 1
    %s64 = scalar_select %p61, %s62, %s63
    %p67 = pneg %p61
    %p68 = scmp.eq.s32.totalorder %s12, 3
    %p69 = por %p67, %p68
    %p70 = scmp.ne.s32.totalorder %s62, %s65
    %p71 = scmp.eq.s32.totalorder %s12, 0
    %p72 = por %p70, %p71
    %p73 = scmp.ne.s32.totalorder %s62, %s65
    %p74 = scmp.eq.s32.totalorder %s17, 3
    %p75 = por %p73, %p74
    %p76 = scmp.ne.s32.totalorder %s65, %s66
    %p77 = scmp.eq.s32.totalorder %s17, 0
    %p78 = por %p76, %p77
    %p79 = scmp.ne.s32.totalorder %s65, %s66
    %p80 = scmp.eq.s32.totalorder %s18, 3
    %p81 = por %p79, %p80
    %p83 = scmp.ne.s32.totalorder %s66, %s82
    %p84 = scmp.eq.s32.totalorder %s18, 0
    %p85 = por %p83, %p84
    %s86 = ssub.s32 %s19, %s31
    %p87 = scmp.eq.s32.totalorder %s86, 0
    %s89 = sadd.s32 %s88, 1
    %s90 = scalar_select %p87, %s88, %s89
    %p93 = pneg %p87
    %p94 = scmp.eq.s32.totalorder %s12, 3
    %p95 = por %p93, %p94
    %p96 = scmp.ne.s32.totalorder %s88, %s91
    %p97 = scmp.eq.s32.totalorder %s12, 0
    %p98 = por %p96, %p97
    %p99 = scmp.ne.s32.totalorder %s88, %s91
    %p100 = scmp.eq.s32.totalorder %s17, 3
    %p101 = por %p99, %p100
    %p102 = scmp.ne.s32.totalorder %s91, %s92
    %p103 = scmp.eq.s32.totalorder %s17, 0
    %p104 = por %p102, %p103
    %p105 = scmp.ne.s32.totalorder %s91, %s92
    %p106 = scmp.eq.s32.totalorder %s18, 3
    %p107 = por %p105, %p106
    %p109 = scmp.ne.s32.totalorder %s92, %s108
    %p110 = scmp.eq.s32.totalorder %s18, 0
    %p111 = por %p109, %p110
    %s113 = sadd.s32 %s112, 1
    %p116 = scmp.eq.s32.totalorder %s12, 3
    %p117 = scmp.ne.s32.totalorder %s112, %s114
    %p118 = scmp.eq.s32.totalorder %s12, 0
    %p119 = por %p117, %p118
    %p120 = scmp.ne.s32.totalorder %s112, %s114
    %p121 = scmp.eq.s32.totalorder %s17, 3
    %p122 = por %p120, %p121
    %p123 = scmp.ne.s32.totalorder %s114, %s115
    %p124 = scmp.eq.s32.totalorder %s17, 0
    %p125 = por %p123, %p124
    %p126 = scmp.ne.s32.totalorder %s114, %s115
    %p127 = scmp.eq.s32.totalorder %s18, 3
    %p128 = por %p126, %p127
    %p130 = scmp.ne.s32.totalorder %s115, %s129
    %p131 = scmp.eq.s32.totalorder %s18, 0
    %p132 = por %p130, %p131
    %s134 = sadd.s32 %s133, 1
    %p137 = scmp.eq.s32.totalorder %s12, 3
    %p138 = scmp.ne.s32.totalorder %s133, %s135
    %p139 = scmp.eq.s32.totalorder %s12, 0
    %p140 = por %p138, %p139
    %p141 = scmp.ne.s32.totalorder %s133, %s135
    %p142 = scmp.eq.s32.totalorder %s17, 3
    %p143 = por %p141, %p142
    %p144 = scmp.ne.s32.totalorder %s135, %s136
    %p145 = scmp.eq.s32.totalorder %s17, 0
    %p146 = por %p144, %p145
    %p147 = scmp.ne.s32.totalorder %s135, %s136
    %p148 = scmp.eq.s32.totalorder %s18, 3
    %p149 = por %p147, %p148
    %p151 = scmp.ne.s32.totalorder %s136, %s150
    %p152 = scmp.eq.s32.totalorder %s18, 0
    %p153 = por %p151, %p152
    %s154 = ssub.s32 %s19, %s31
    %s155 = ssub.s32 %s20, %s27
    %s156 = sor.u32 %s154, %s155
    %p157 = scmp.eq.s32.totalorder %s156, 0
    %s159 = sadd.s32 %s158, 1
    %s160 = scalar_select %p157, %s158, %s159
    %p163 = pneg %p157
    %p164 = scmp.eq.s32.totalorder %s12, 3
    %p165 = por %p163, %p164
    %p166 = scmp.ne.s32.totalorder %s158, %s161
    %p167 = scmp.eq.s32.totalorder %s12, 0
    %p168 = por %p166, %p167
    %p169 = scmp.ne.s32.totalorder %s158, %s161
    %p170 = scmp.eq.s32.totalorder %s17, 3
    %p171 = por %p169, %p170
    %p172 = scmp.ne.s32.totalorder %s161, %s162
    %p173 = scmp.eq.s32.totalorder %s17, 0
    %p174 = por %p172, %p173
    %p175 = scmp.ne.s32.totalorder %s161, %s162
    %p176 = scmp.eq.s32.totalorder %s18, 3
    %p177 = por %p175, %p176
    %p179 = scmp.ne.s32.totalorder %s162, %s178
    %p180 = scmp.eq.s32.totalorder %s18, 0
    %p181 = por %p179, %p180
    %p182 = scmp.le.s32.totalorder 1, %s12
    %p183 = scmp.lt.s32.totalorder %s12, 5
    %p184 = pnand %p182, %p183
    %p185 = pneg %p184
    // Predicated region
    $region9: #{unet_block_deep_forward.9} parent=5 // pred_check
      _
    $region10: #{unet_block_deep_forward.9} parent=5 // pred_check_branch
      %187 = sbr.rel (%p184) target = $region12
    $region11: #{unet_block_deep_forward.9} parent=5 // pred_region
      %s188 = ssub.s32 %s12, 1
      // Predicated region
      $region13: #{unet_block_deep_forward.9} parent=11 // pred_check
        %p189 = pneg %p125
      $region14: #{unet_block_deep_forward.9} parent=11 // pred_check_branch
        %191 = sbr.rel (%p189) target = $region16
      $region15: #{unet_block_deep_forward.9} parent=11 // pred_region
        _
      $region16: #{unet_block_deep_forward.9} parent=11 // pred_fallthru
        _
      // Predicated region
      $region17: #{unet_block_deep_forward.9} parent=11 // pred_check
        %p192 = pneg %p146
      $region18: #{unet_block_deep_forward.9} parent=11 // pred_check_branch
        %194 = sbr.rel (%p192) target = $region20
      $region19: #{unet_block_deep_forward.9} parent=11 // pred_region
        _
      $region20: #{unet_block_deep_forward.9} parent=11 // pred_fallthru
        _
    $region12: #{unet_block_deep_forward.9} parent=5 // pred_fallthru
      _
    %p195 = scmp.lt.s32.totalorder %s12, 4
    // Predicated region
    $region21: #{unet_block_deep_forward.9} parent=5 // pred_check
      %p196 = pneg %p195
    $region22: #{unet_block_deep_forward.9} parent=5 // pred_check_branch
      %198 = sbr.rel (%p196) target = $region24
    $region23: #{unet_block_deep_forward.9} parent=5 // pred_region
      // Predicated region
      $region25: #{unet_block_deep_forward.9} parent=23 // pred_check
        %p199 = pneg %p46
      $region26: #{unet_block_deep_forward.9} parent=23 // pred_check_branch
        %201 = sbr.rel (%p199) target = $region28
      $region27: #{unet_block_deep_forward.9} parent=23 // pred_region
        %s202 = smul.u32 16, %s20
        %p203 = scmp.lt.s32.totalorder %s19, 1
        %s204 = scalar_select %p203, %s19, 1
        %p205 = scmp.lt.s32.totalorder %s202, 31
        %s206 = scalar_select %p205, %s202, 31
        %s207 = smul.addr %s204, 32
        %s208 = sadd.s32 %s206, %s207
        %s209 = smul.addr %s208, 4
        %s210 = scalar_lea.vmem %s0, %s209
        %s211 = smul.u32 16, %s20
      $region28: #{unet_block_deep_forward.9} parent=23 // pred_fallthru
        _
      // Predicated region
      $region29: #{unet_block_deep_forward.9} parent=23 // pred_check
        %p212 = pneg %p72
      $region30: #{unet_block_deep_forward.9} parent=23 // pred_check_branch
        %214 = sbr.rel (%p212) target = $region32
      $region31: #{unet_block_deep_forward.9} parent=23 // pred_region
        %p215 = scmp.lt.s32.totalorder %s19, 1
        %s216 = scalar_select %p215, %s19, 1
        %s217 = smul.addr %s216, 4
        %s218 = smul.addr %s217, 4
        %s219 = scalar_lea.vmem %s1, %s218
      $region32: #{unet_block_deep_forward.9} parent=23 // pred_fallthru
        _
      // Predicated region
      $region33: #{unet_block_deep_forward.9} parent=23 // pred_check
        %p220 = pneg %p98
      $region34: #{unet_block_deep_forward.9} parent=23 // pred_check_branch
        %222 = sbr.rel (%p220) target = $region36
      $region35: #{unet_block_deep_forward.9} parent=23 // pred_region
        %p223 = scmp.lt.s32.totalorder %s19, 1
        %s224 = scalar_select %p223, %s19, 1
        %s225 = smul.addr %s224, 32
        %s226 = smul.addr %s225, 4
        %s227 = scalar_lea.vmem %s2, %s226
      $region36: #{unet_block_deep_forward.9} parent=23 // pred_fallthru
        _
    $region24: #{unet_block_deep_forward.9} parent=5 // pred_fallthru
      _
    %p228 = scmp.le.s32.totalorder 1, %s12
    %p229 = scmp.lt.s32.totalorder %s12, 5
    %p230 = pnand %p228, %p229
    %p231 = pneg %p230
    // Predicated region
    $region37: #{unet_block_deep_forward.9} parent=5 // pred_check
      _
    $region38: #{unet_block_deep_forward.9} parent=5 // pred_check_branch
      %233 = sbr.rel (%p230) target = $region40
    $region39: #{unet_block_deep_forward.9} parent=5 // pred_region
      %s234 = ssub.s32 %s12, 1
      %s235 = smul.u32 16, %s22
      %p236 = scmp.lt.s32.totalorder %s21, 1
      %s237 = scalar_select %p236, %s21, 1
      %p238 = scmp.lt.s32.totalorder %s235, 31
      %s239 = scalar_select %p238, %s235, 31
      %s240 = smul.addr %s237, 32
      %s241 = sadd.s32 %s239, %s240
      %s242 = smul.addr %s241, 4
      %s243 = scalar_lea.vmem %s0, %s242
      %p244 = pneg %p52
      %p245 = pneg %p49
      %p246 = scmp.lt.s32.totalorder %s21, 1
      %s247 = scalar_select %p246, %s21, 1
      %s248 = smul.addr %s247, 4
      %s249 = smul.addr %s248, 4
      %s250 = scalar_lea.vmem %s1, %s249
      %p251 = pneg %p78
      %p252 = pneg %p75
      %p253 = scmp.lt.s32.totalorder %s21, 1
      %s254 = scalar_select %p253, %s21, 1
      %s255 = smul.addr %s254, 32
      %s256 = smul.addr %s255, 4
      %s257 = scalar_lea.vmem %s2, %s256
      %p258 = pneg %p104
      %p259 = pneg %p101
      %p260 = pneg %p125
      %p261 = pneg %p122
      %p262 = pneg %p146
      %p263 = pneg %p143
      %p264 = pneg %p174
      %p265 = pneg %p171
      %s266 = smul.u32 16, %s22
      %p267 = scmp.lt.s32.totalorder %s21, 1
      %s268 = scalar_select %p267, %s21, 1
      %p269 = scmp.lt.s32.totalorder %s266, 31
      %s270 = scalar_select %p269, %s266, 31
      %s271 = smul.addr %s268, 32
      %s272 = sadd.s32 %s270, %s271
      %s273 = smul.addr %s272, 4
      %s274 = scalar_lea.vmem %s5, %s273
      %s275 = smul.u32 16, %s22
      %p276 = scmp.lt.s32.totalorder %s21, 1
      %s277 = scalar_select %p276, %s21, 1
      %p278 = scmp.lt.s32.totalorder %s275, 31
      %s279 = scalar_select %p278, %s275, 31
      %s280 = smul.addr %s277, 32
      %s281 = sadd.s32 %s279, %s280
      %s282 = smul.addr %s281, 4
      %s283 = scalar_lea.vmem %s0, %s282
      %s284 = smul.u32 16, %s22
      %p285 = scmp.lt.s32.totalorder %s21, 1
      %s286 = scalar_select %p285, %s21, 1
      %s287 = smul.addr %s286, 4
      %s288 = smul.addr %s287, 4
      %s289 = scalar_lea.vmem %s1, %s288
      %p290 = scmp.lt.s32.totalorder %s21, 1
      %s291 = scalar_select %p290, %s21, 1
      %s292 = smul.addr %s291, 32
      %s293 = smul.addr %s292, 4
      %s294 = scalar_lea.vmem %s2, %s293
      %s295 = smul.u32 16, %s22
      %p296 = scmp.lt.s32.totalorder %s21, 1
      %s297 = scalar_select %p296, %s21, 1
      %p298 = scmp.lt.s32.totalorder %s295, 31
      %s299 = scalar_select %p298, %s295, 31
      %s300 = smul.addr %s297, 32
      %s301 = sadd.s32 %s299, %s300
      %s302 = smul.addr %s301, 4
      %s303 = scalar_lea.vmem %s5, %s302
      %s304 = smul.u32 16, %s22
      %v306 = vld [vmem:[%s283] sm:$0xf]
      %v307 = vld [vmem:[%s283 + $0x4] sm:$0xf]
      %v308 = vld [vmem:[%s283 + $0x8] sm:$0xf]
      %v309 = vld [vmem:[%s283 + $0xc] sm:$0xf]
      %v310 = vld [vmem:[%s283 + $0x10] sm:$0xf]
      %v311 = vld [vmem:[%s283 + $0x14] sm:$0xf]
      %v312 = vld [vmem:[%s283 + $0x18] sm:$0xf]
      %v313 = vld [vmem:[%s283 + $0x1c] sm:$0xf]
      %v314 = vld [vmem:[%s283 + $0x20] sm:$0xf]
      %v315 = vld [vmem:[%s283 + $0x24] sm:$0xf]
      %v316 = vld [vmem:[%s283 + $0x28] sm:$0xf]
      %v317 = vld [vmem:[%s283 + $0x2c] sm:$0xf]
      %v318 = vld [vmem:[%s283 + $0x30] sm:$0xf]
      %v319 = vld [vmem:[%s283 + $0x34] sm:$0xf]
      %v320 = vld [vmem:[%s283 + $0x38] sm:$0xf]
      %v321 = vld [vmem:[%s283 + $0x3c] sm:$0xf]
      %v322 = vld [vmem:[%s3] sm:$0xf]
      %v323 = vld [vmem:[%s3 + $0x4] sm:$0xf]
      %v324 = vld [vmem:[%s3 + $0x8] sm:$0xf]
      %v325 = vld [vmem:[%s3 + $0xc] sm:$0xf]
      %v326 = vld [vmem:[%s3 + $0x10] sm:$0xf]
      %v327 = vld [vmem:[%s3 + $0x14] sm:$0xf]
      %v328 = vld [vmem:[%s3 + $0x18] sm:$0xf]
      %v329 = vld [vmem:[%s3 + $0x1c] sm:$0xf]
      %v330 = vld [vmem:[%s3 + $0x20] sm:$0xf]
      %v331 = vld [vmem:[%s3 + $0x24] sm:$0xf]
      %v332 = vld [vmem:[%s3 + $0x28] sm:$0xf]
      %v333 = vld [vmem:[%s3 + $0x2c] sm:$0xf]
      %v334 = vld [vmem:[%s3 + $0x30] sm:$0xf]
      %v335 = vld [vmem:[%s3 + $0x34] sm:$0xf]
      %v336 = vld [vmem:[%s3 + $0x38] sm:$0xf]
      %v337 = vld [vmem:[%s3 + $0x3c] sm:$0xf]
      %v354 = vunpack.c.l.b16 %v306
      %v355 = vunpack.c.l.b16 %v307
      %v356 = vunpack.c.l.b16 %v308
      %v357 = vunpack.c.l.b16 %v309
      %v358 = vunpack.c.l.b16 %v310
      %v359 = vunpack.c.l.b16 %v311
      %v360 = vunpack.c.l.b16 %v312
      %v361 = vunpack.c.l.b16 %v313
      %v362 = vunpack.c.l.b16 %v314
      %v363 = vunpack.c.l.b16 %v315
      %v364 = vunpack.c.l.b16 %v316
      %v365 = vunpack.c.l.b16 %v317
      %v366 = vunpack.c.l.b16 %v318
      %v367 = vunpack.c.l.b16 %v319
      %v368 = vunpack.c.l.b16 %v320
      %v369 = vunpack.c.l.b16 %v321
      %v370 = vpack.c.b16 %v355, %v354
      %v371 = vpack.c.b16 %v357, %v356
      %v372 = vpack.c.b16 %v359, %v358
      %v373 = vpack.c.b16 %v361, %v360
      %v374 = vpack.c.b16 %v363, %v362
      %v375 = vpack.c.b16 %v365, %v364
      %v376 = vpack.c.b16 %v367, %v366
      %v377 = vpack.c.b16 %v369, %v368
      %v402 = vunpack.c.l.b16 %v322
      %v403 = vunpack.c.l.b16 %v323
      %v404 = vunpack.c.l.b16 %v324
      %v405 = vunpack.c.l.b16 %v325
      %v406 = vunpack.c.l.b16 %v326
      %v407 = vunpack.c.l.b16 %v327
      %v408 = vunpack.c.l.b16 %v328
      %v409 = vunpack.c.l.b16 %v329
      %v410 = vunpack.c.l.b16 %v330
      %v411 = vunpack.c.l.b16 %v331
      %v412 = vunpack.c.l.b16 %v332
      %v413 = vunpack.c.l.b16 %v333
      %v414 = vunpack.c.l.b16 %v334
      %v415 = vunpack.c.l.b16 %v335
      %v416 = vunpack.c.l.b16 %v336
      %v417 = vunpack.c.l.b16 %v337
      %v418 = vpack.c.b16 %v403, %v402
      %v419 = vpack.c.b16 %v405, %v404
      %v420 = vpack.c.b16 %v407, %v406
      %v421 = vpack.c.b16 %v409, %v408
      %v422 = vpack.c.b16 %v411, %v410
      %v423 = vpack.c.b16 %v413, %v412
      %v424 = vpack.c.b16 %v415, %v414
      %v425 = vpack.c.b16 %v417, %v416
      %434 = vmatpush.bf16.msra.mxu0 %v425
      %435 = vmatpush.bf16.msra.mxu0 %v424
      %436 = vmatpush.bf16.msra.mxu0 %v423
      %437 = vmatpush.bf16.msra.mxu0 %v422
      %438 = vmatpush.bf16.msra.mxu0 %v421
      %439 = vmatpush.bf16.msra.mxu0 %v420
      %440 = vmatpush.bf16.msra.mxu0 %v419
      %441 = vmatpush.bf16.msra.mxu0 %v418
      %442 = vmatmul.bf16.gmra.mxu0 %v370
      %v443 = vpop.f32.mrf.mxu0
      %v444 = vadd.f32 0.0, %v443
      %v445 = vpop.f32.mrf.mxu0
      %v446 = vadd.f32 0.0, %v445
      %447 = vmatmul.bf16.gmra.mxu0 %v371
      %v448 = vpop.f32.mrf.mxu0
      %v449 = vadd.f32 0.0, %v448
      %v450 = vpop.f32.mrf.mxu0
      %v451 = vadd.f32 0.0, %v450
      %452 = vmatmul.bf16.gmra.mxu0 %v372
      %v453 = vpop.f32.mrf.mxu0
      %v454 = vadd.f32 0.0, %v453
      %v455 = vpop.f32.mrf.mxu0
      %v456 = vadd.f32 0.0, %v455
      %457 = vmatmul.bf16.gmra.mxu0 %v373
      %v458 = vpop.f32.mrf.mxu0
      %v459 = vadd.f32 0.0, %v458
      %v460 = vpop.f32.mrf.mxu0
      %v461 = vadd.f32 0.0, %v460
      %462 = vmatmul.bf16.gmra.mxu0 %v374
      %v463 = vpop.f32.mrf.mxu0
      %v464 = vadd.f32 0.0, %v463
      %v465 = vpop.f32.mrf.mxu0
      %v466 = vadd.f32 0.0, %v465
      %467 = vmatmul.bf16.gmra.mxu0 %v375
      %v468 = vpop.f32.mrf.mxu0
      %v469 = vadd.f32 0.0, %v468
      %v470 = vpop.f32.mrf.mxu0
      %v471 = vadd.f32 0.0, %v470
      %472 = vmatmul.bf16.gmra.mxu0 %v376
      %v473 = vpop.f32.mrf.mxu0
      %v474 = vadd.f32 0.0, %v473
      %v475 = vpop.f32.mrf.mxu0
      %v476 = vadd.f32 0.0, %v475
      %477 = vmatmul.bf16.gmra.mxu0 %v377
      %v478 = vpop.f32.mrf.mxu0
      %v479 = vadd.f32 0.0, %v478
      %v480 = vpop.f32.mrf.mxu0
      %v481 = vadd.f32 0.0, %v480
      %482 = vdwg.mxu0
      %v483 = vpack.c.bf16 %v446, %v444
      %v484 = vpack.c.bf16 %v451, %v449
      %v485 = vpack.c.bf16 %v456, %v454
      %v486 = vpack.c.bf16 %v461, %v459
      %v487 = vpack.c.bf16 %v466, %v464
      %v488 = vpack.c.bf16 %v471, %v469
      %v489 = vpack.c.bf16 %v476, %v474
      %v490 = vpack.c.bf16 %v481, %v479
      %v491 = vld [vmem:[%s289] sm:$0xff]
      %v492 = vld [vmem:[%s289 + $0x8] sm:$0xff]
      %v495 = vunpack.c.l.b16 %v491
      %v496 = vunpack.c.h.b16 %v491
      %v497 = vunpack.c.l.b16 %v492
      %v498 = vunpack.c.h.b16 %v492
      %v499 = vpack.c.b16 %v497, %v495
      %v500 = vpack.c.b16 %v498, %v496
      %vm503 = vcmask 130048
      %v505 = vsel %vm503, %v483, 0
      %v508 = vsel %vm503, %v484, 0
      %v511 = vsel %vm503, %v485, 0
      %v514 = vsel %vm503, %v486, 0
      %v517 = vsel %vm503, %v487, 0
      %v520 = vsel %vm503, %v488, 0
      %v523 = vsel %vm503, %v489, 0
      %v526 = vsel %vm503, %v490, 0
      %528 = vmatpush.bf16.msra.mxu0 0
      %529 = vmatpush.bf16.msra.mxu0 0
      %530 = vmatpush.bf16.msra.mxu0 0
      %531 = vmatpush.bf16.msra.mxu0 0
      %532 = vmatpush.bf16.msra.mxu0 0
      %533 = vmatpush.bf16.msra.mxu0 0
      %534 = vmatpush.bf16.msra.mxu0 0
      %535 = vmatpush.bf16.msra.mxu0 %v499
      %536 = vmatmul.bf16.gmra.mxu0 %v505
      %v537 = vpop.f32.mrf.mxu0
      %v538 = vadd.f32 0.0, %v537
      %v539 = vpop.f32.mrf.mxu0
      %v540 = vadd.f32 0.0, %v539
      %541 = vmatmul.bf16.gmra.mxu0 %v508
      %v542 = vpop.f32.mrf.mxu0
      %v543 = vadd.f32 0.0, %v542
      %v544 = vpop.f32.mrf.mxu0
      %v545 = vadd.f32 0.0, %v544
      %546 = vmatmul.bf16.gmra.mxu0 %v511
      %v547 = vpop.f32.mrf.mxu0
      %v548 = vadd.f32 0.0, %v547
      %v549 = vpop.f32.mrf.mxu0
      %v550 = vadd.f32 0.0, %v549
      %551 = vmatmul.bf16.gmra.mxu0 %v514
      %v552 = vpop.f32.mrf.mxu0
      %v553 = vadd.f32 0.0, %v552
      %v554 = vpop.f32.mrf.mxu0
      %v555 = vadd.f32 0.0, %v554
      %556 = vmatmul.bf16.gmra.mxu0 %v517
      %v557 = vpop.f32.mrf.mxu0
      %v558 = vadd.f32 0.0, %v557
      %v559 = vpop.f32.mrf.mxu0
      %v560 = vadd.f32 0.0, %v559
      %561 = vmatmul.bf16.gmra.mxu0 %v520
      %v562 = vpop.f32.mrf.mxu0
      %v563 = vadd.f32 0.0, %v562
      %v564 = vpop.f32.mrf.mxu0
      %v565 = vadd.f32 0.0, %v564
      %566 = vmatmul.bf16.gmra.mxu0 %v523
      %v567 = vpop.f32.mrf.mxu0
      %v568 = vadd.f32 0.0, %v567
      %v569 = vpop.f32.mrf.mxu0
      %v570 = vadd.f32 0.0, %v569
      %571 = vmatmul.bf16.gmra.mxu0 %v526
      %v572 = vpop.f32.mrf.mxu0
      %v573 = vadd.f32 0.0, %v572
      %v574 = vpop.f32.mrf.mxu0
      %v575 = vadd.f32 0.0, %v574
      %576 = vdwg.mxu0
      %577 = vmatpush.bf16.msra.mxu0 0
      %578 = vmatpush.bf16.msra.mxu0 0
      %579 = vmatpush.bf16.msra.mxu0 0
      %580 = vmatpush.bf16.msra.mxu0 0
      %581 = vmatpush.bf16.msra.mxu0 0
      %582 = vmatpush.bf16.msra.mxu0 0
      %583 = vmatpush.bf16.msra.mxu0 0
      %584 = vmatpush.bf16.msra.mxu0 %v500
      %585 = vmatmul.bf16.gmra.mxu0 %v505
      %v586 = vpop.f32.mrf.mxu0
      %v587 = vadd.f32 0.0, %v586
      %v588 = vpop.f32.mrf.mxu0
      %v589 = vadd.f32 0.0, %v588
      %590 = vmatmul.bf16.gmra.mxu0 %v508
      %v591 = vpop.f32.mrf.mxu0
      %v592 = vadd.f32 0.0, %v591
      %v593 = vpop.f32.mrf.mxu0
      %v594 = vadd.f32 0.0, %v593
      %595 = vmatmul.bf16.gmra.mxu0 %v511
      %v596 = vpop.f32.mrf.mxu0
      %v597 = vadd.f32 0.0, %v596
      %v598 = vpop.f32.mrf.mxu0
      %v599 = vadd.f32 0.0, %v598
      %600 = vmatmul.bf16.gmra.mxu0 %v514
      %v601 = vpop.f32.mrf.mxu0
      %v602 = vadd.f32 0.0, %v601
      %v603 = vpop.f32.mrf.mxu0
      %v604 = vadd.f32 0.0, %v603
      %605 = vmatmul.bf16.gmra.mxu0 %v517
      %v606 = vpop.f32.mrf.mxu0
      %v607 = vadd.f32 0.0, %v606
      %v608 = vpop.f32.mrf.mxu0
      %v609 = vadd.f32 0.0, %v608
      %610 = vmatmul.bf16.gmra.mxu0 %v520
      %v611 = vpop.f32.mrf.mxu0
      %v612 = vadd.f32 0.0, %v611
      %v613 = vpop.f32.mrf.mxu0
      %v614 = vadd.f32 0.0, %v613
      %615 = vmatmul.bf16.gmra.mxu0 %v523
      %v616 = vpop.f32.mrf.mxu0
      %v617 = vadd.f32 0.0, %v616
      %v618 = vpop.f32.mrf.mxu0
      %v619 = vadd.f32 0.0, %v618
      %620 = vmatmul.bf16.gmra.mxu0 %v526
      %v621 = vpop.f32.mrf.mxu0
      %v622 = vadd.f32 0.0, %v621
      %v623 = vpop.f32.mrf.mxu0
      %v624 = vadd.f32 0.0, %v623
      %625 = vdwg.mxu0
      %v626 = vmax.f32 %v538, %v587
      %627 = vmax.xlane.f32.xlu0 %v626
      %v628 = vpop.xlane.xlu0 %627
      %v629 = vmax.f32 %v540, %v589
      %630 = vmax.xlane.f32.xlu0 %v629
      %v631 = vpop.xlane.xlu0 %630
      %v632 = vmax.f32 %v543, %v592
      %633 = vmax.xlane.f32.xlu0 %v632
      %v634 = vpop.xlane.xlu0 %633
      %v635 = vmax.f32 %v545, %v594
      %636 = vmax.xlane.f32.xlu0 %v635
      %v637 = vpop.xlane.xlu0 %636
      %v638 = vmax.f32 %v548, %v597
      %639 = vmax.xlane.f32.xlu0 %v638
      %v640 = vpop.xlane.xlu0 %639
      %v641 = vmax.f32 %v550, %v599
      %642 = vmax.xlane.f32.xlu0 %v641
      %v643 = vpop.xlane.xlu0 %642
      %v644 = vmax.f32 %v553, %v602
      %645 = vmax.xlane.f32.xlu0 %v644
      %v646 = vpop.xlane.xlu0 %645
      %v647 = vmax.f32 %v555, %v604
      %648 = vmax.xlane.f32.xlu0 %v647
      %v649 = vpop.xlane.xlu0 %648
      %v650 = vmax.f32 %v558, %v607
      %651 = vmax.xlane.f32.xlu0 %v650
      %v652 = vpop.xlane.xlu0 %651
      %v653 = vmax.f32 %v560, %v609
      %654 = vmax.xlane.f32.xlu0 %v653
      %v655 = vpop.xlane.xlu0 %654
      %v656 = vmax.f32 %v563, %v612
      %657 = vmax.xlane.f32.xlu0 %v656
      %v658 = vpop.xlane.xlu0 %657
      %v659 = vmax.f32 %v565, %v614
      %660 = vmax.xlane.f32.xlu0 %v659
      %v661 = vpop.xlane.xlu0 %660
      %v662 = vmax.f32 %v568, %v617
      %663 = vmax.xlane.f32.xlu0 %v662
      %v664 = vpop.xlane.xlu0 %663
      %v665 = vmax.f32 %v570, %v619
      %666 = vmax.xlane.f32.xlu0 %v665
      %v667 = vpop.xlane.xlu0 %666
      %v668 = vmax.f32 %v573, %v622
      %669 = vmax.xlane.f32.xlu0 %v668
      %v670 = vpop.xlane.xlu0 %669
      %v671 = vmax.f32 %v575, %v624
      %672 = vmax.xlane.f32.xlu0 %v671
      %v673 = vpop.xlane.xlu0 %672
      %v674 = vsub.f32 %v538, %v628
      %v675 = vsub.f32 %v587, %v628
      %v676 = vsub.f32 %v540, %v631
      %v677 = vsub.f32 %v589, %v631
      %v678 = vsub.f32 %v543, %v634
      %v679 = vsub.f32 %v592, %v634
      %v680 = vsub.f32 %v545, %v637
      %v681 = vsub.f32 %v594, %v637
      %v682 = vsub.f32 %v548, %v640
      %v683 = vsub.f32 %v597, %v640
      %v684 = vsub.f32 %v550, %v643
      %v685 = vsub.f32 %v599, %v643
      %v686 = vsub.f32 %v553, %v646
      %v687 = vsub.f32 %v602, %v646
      %v688 = vsub.f32 %v555, %v649
      %v689 = vsub.f32 %v604, %v649
      %v690 = vsub.f32 %v558, %v652
      %v691 = vsub.f32 %v607, %v652
      %v692 = vsub.f32 %v560, %v655
      %v693 = vsub.f32 %v609, %v655
      %v694 = vsub.f32 %v563, %v658
      %v695 = vsub.f32 %v612, %v658
      %v696 = vsub.f32 %v565, %v661
      %v697 = vsub.f32 %v614, %v661
      %v698 = vsub.f32 %v568, %v664
      %v699 = vsub.f32 %v617, %v664
      %v700 = vsub.f32 %v570, %v667
      %v701 = vsub.f32 %v619, %v667
      %v702 = vsub.f32 %v573, %v670
      %v703 = vsub.f32 %v622, %v670
      %v704 = vsub.f32 %v575, %v673
      %v705 = vsub.f32 %v624, %v673
      %v706 = vmul.f32 %v674, 1.442695
      %v707 = vpow.pop %v706
      %v708 = vmul.f32 %v675, 1.442695
      %v709 = vpow.pop %v708
      %v710 = vmul.f32 %v676, 1.442695
      %v711 = vpow.pop %v710
      %v712 = vmul.f32 %v677, 1.442695
      %v713 = vpow.pop %v712
      %v714 = vmul.f32 %v678, 1.442695
      %v715 = vpow.pop %v714
      %v716 = vmul.f32 %v679, 1.442695
      %v717 = vpow.pop %v716
      %v718 = vmul.f32 %v680, 1.442695
      %v719 = vpow.pop %v718
      %v720 = vmul.f32 %v681, 1.442695
      %v721 = vpow.pop %v720
      %v722 = vmul.f32 %v682, 1.442695
      %v723 = vpow.pop %v722
      %v724 = vmul.f32 %v683, 1.442695
      %v725 = vpow.pop %v724
      %v726 = vmul.f32 %v684, 1.442695
      %v727 = vpow.pop %v726
      %v728 = vmul.f32 %v685, 1.442695
      %v729 = vpow.pop %v728
      %v730 = vmul.f32 %v686, 1.442695
      %v731 = vpow.pop %v730
      %v732 = vmul.f32 %v687, 1.442695
      %v733 = vpow.pop %v732
      %v734 = vmul.f32 %v688, 1.442695
      %v735 = vpow.pop %v734
      %v736 = vmul.f32 %v689, 1.442695
      %v737 = vpow.pop %v736
      %v738 = vmul.f32 %v690, 1.442695
      %v739 = vpow.pop %v738
      %v740 = vmul.f32 %v691, 1.442695
      %v741 = vpow.pop %v740
      %v742 = vmul.f32 %v692, 1.442695
      %v743 = vpow.pop %v742
      %v744 = vmul.f32 %v693, 1.442695
      %v745 = vpow.pop %v744
      %v746 = vmul.f32 %v694, 1.442695
      %v747 = vpow.pop %v746
      %v748 = vmul.f32 %v695, 1.442695
      %v749 = vpow.pop %v748
      %v750 = vmul.f32 %v696, 1.442695
      %v751 = vpow.pop %v750
      %v752 = vmul.f32 %v697, 1.442695
      %v753 = vpow.pop %v752
      %v754 = vmul.f32 %v698, 1.442695
      %v755 = vpow.pop %v754
      %v756 = vmul.f32 %v699, 1.442695
      %v757 = vpow.pop %v756
      %v758 = vmul.f32 %v700, 1.442695
      %v759 = vpow.pop %v758
      %v760 = vmul.f32 %v701, 1.442695
      %v761 = vpow.pop %v760
      %v762 = vmul.f32 %v702, 1.442695
      %v763 = vpow.pop %v762
      %v764 = vmul.f32 %v703, 1.442695
      %v765 = vpow.pop %v764
      %v766 = vmul.f32 %v704, 1.442695
      %v767 = vpow.pop %v766
      %v768 = vmul.f32 %v705, 1.442695
      %v769 = vpow.pop %v768
      %v770 = vadd.f32 %v707, %v709
      %771 = vadd.xlane.f32.xlu0 %v770
      %v772 = vpop.xlane.xlu0 %771
      %v773 = vadd.f32 %v711, %v713
      %774 = vadd.xlane.f32.xlu0 %v773
      %v775 = vpop.xlane.xlu0 %774
      %v776 = vadd.f32 %v715, %v717
      %777 = vadd.xlane.f32.xlu0 %v776
      %v778 = vpop.xlane.xlu0 %777
      %v779 = vadd.f32 %v719, %v721
      %780 = vadd.xlane.f32.xlu0 %v779
      %v781 = vpop.xlane.xlu0 %780
      %v782 = vadd.f32 %v723, %v725
      %783 = vadd.xlane.f32.xlu0 %v782
      %v784 = vpop.xlane.xlu0 %783
      %v785 = vadd.f32 %v727, %v729
      %786 = vadd.xlane.f32.xlu0 %v785
      %v787 = vpop.xlane.xlu0 %786
      %v788 = vadd.f32 %v731, %v733
      %789 = vadd.xlane.f32.xlu0 %v788
      %v790 = vpop.xlane.xlu0 %789
      %v791 = vadd.f32 %v735, %v737
      %792 = vadd.xlane.f32.xlu0 %v791
      %v793 = vpop.xlane.xlu0 %792
      %v794 = vadd.f32 %v739, %v741
      %795 = vadd.xlane.f32.xlu0 %v794
      %v796 = vpop.xlane.xlu0 %795
      %v797 = vadd.f32 %v743, %v745
      %798 = vadd.xlane.f32.xlu0 %v797
      %v799 = vpop.xlane.xlu0 %798
      %v800 = vadd.f32 %v747, %v749
      %801 = vadd.xlane.f32.xlu0 %v800
      %v802 = vpop.xlane.xlu0 %801
      %v803 = vadd.f32 %v751, %v753
      %804 = vadd.xlane.f32.xlu0 %v803
      %v805 = vpop.xlane.xlu0 %804
      %v806 = vadd.f32 %v755, %v757
      %807 = vadd.xlane.f32.xlu0 %v806
      %v808 = vpop.xlane.xlu0 %807
      %v809 = vadd.f32 %v759, %v761
      %810 = vadd.xlane.f32.xlu0 %v809
      %v811 = vpop.xlane.xlu0 %810
      %v812 = vadd.f32 %v763, %v765
      %813 = vadd.xlane.f32.xlu0 %v812
      %v814 = vpop.xlane.xlu0 %813
      %v815 = vadd.f32 %v767, %v769
      %816 = vadd.xlane.f32.xlu0 %v815
      %v817 = vpop.xlane.xlu0 %816
      %v818 = vrcp.pop %v772
      %v819 = vmul.f32 %v772, %v818
      %v820 = vsub.f32 1.0, %v819
      %v821 = vmul.f32 %v818, %v820
      %v822 = vadd.f32 %v818, %v821
      %vm823 = vweird.f32 %v772
      %vm824 = vweird.f32 %v818
      %vm825 = vmor %vm823, %vm824
      %v826 = vsel %vm825, %v818, %v822
      %v827 = vand.u32 2147483647, %v772
      %vm828 = vcmp.eq.f32.partialorder %v827, 8.507059e+37
      %v829 = vand.u32 %v772, 2147483648
      %v830 = vor.u32 1.1754944e-38, %v829
      %v831 = vsel %vm828, %v830, %v826
      %v832 = vrcp.pop %v775
      %v833 = vmul.f32 %v775, %v832
      %v834 = vsub.f32 1.0, %v833
      %v835 = vmul.f32 %v832, %v834
      %v836 = vadd.f32 %v832, %v835
      %vm837 = vweird.f32 %v775
      %vm838 = vweird.f32 %v832
      %vm839 = vmor %vm837, %vm838
      %v840 = vsel %vm839, %v832, %v836
      %v841 = vand.u32 2147483647, %v775
      %vm842 = vcmp.eq.f32.partialorder %v841, 8.507059e+37
      %v843 = vand.u32 %v775, 2147483648
      %v844 = vor.u32 1.1754944e-38, %v843
      %v845 = vsel %vm842, %v844, %v840
      %v846 = vrcp.pop %v778
      %v847 = vmul.f32 %v778, %v846
      %v848 = vsub.f32 1.0, %v847
      %v849 = vmul.f32 %v846, %v848
      %v850 = vadd.f32 %v846, %v849
      %vm851 = vweird.f32 %v778
      %vm852 = vweird.f32 %v846
      %vm853 = vmor %vm851, %vm852
      %v854 = vsel %vm853, %v846, %v850
      %v855 = vand.u32 2147483647, %v778
      %vm856 = vcmp.eq.f32.partialorder %v855, 8.507059e+37
      %v857 = vand.u32 %v778, 2147483648
      %v858 = vor.u32 1.1754944e-38, %v857
      %v859 = vsel %vm856, %v858, %v854
      %v860 = vrcp.pop %v781
      %v861 = vmul.f32 %v781, %v860
      %v862 = vsub.f32 1.0, %v861
      %v863 = vmul.f32 %v860, %v862
      %v864 = vadd.f32 %v860, %v863
      %vm865 = vweird.f32 %v781
      %vm866 = vweird.f32 %v860
      %vm867 = vmor %vm865, %vm866
      %v868 = vsel %vm867, %v860, %v864
      %v869 = vand.u32 2147483647, %v781
      %vm870 = vcmp.eq.f32.partialorder %v869, 8.507059e+37
      %v871 = vand.u32 %v781, 2147483648
      %v872 = vor.u32 1.1754944e-38, %v871
      %v873 = vsel %vm870, %v872, %v868
      %v874 = vrcp.pop %v784
      %v875 = vmul.f32 %v784, %v874
      %v876 = vsub.f32 1.0, %v875
      %v877 = vmul.f32 %v874, %v876
      %v878 = vadd.f32 %v874, %v877
      %vm879 = vweird.f32 %v784
      %vm880 = vweird.f32 %v874
      %vm881 = vmor %vm879, %vm880
      %v882 = vsel %vm881, %v874, %v878
      %v883 = vand.u32 2147483647, %v784
      %vm884 = vcmp.eq.f32.partialorder %v883, 8.507059e+37
      %v885 = vand.u32 %v784, 2147483648
      %v886 = vor.u32 1.1754944e-38, %v885
      %v887 = vsel %vm884, %v886, %v882
      %v888 = vrcp.pop %v787
      %v889 = vmul.f32 %v787, %v888
      %v890 = vsub.f32 1.0, %v889
      %v891 = vmul.f32 %v888, %v890
      %v892 = vadd.f32 %v888, %v891
      %vm893 = vweird.f32 %v787
      %vm894 = vweird.f32 %v888
      %vm895 = vmor %vm893, %vm894
      %v896 = vsel %vm895, %v888, %v892
      %v897 = vand.u32 2147483647, %v787
      %vm898 = vcmp.eq.f32.partialorder %v897, 8.507059e+37
      %v899 = vand.u32 %v787, 2147483648
      %v900 = vor.u32 1.1754944e-38, %v899
      %v901 = vsel %vm898, %v900, %v896
      %v902 = vrcp.pop %v790
      %v903 = vmul.f32 %v790, %v902
      %v904 = vsub.f32 1.0, %v903
      %v905 = vmul.f32 %v902, %v904
      %v906 = vadd.f32 %v902, %v905
      %vm907 = vweird.f32 %v790
      %vm908 = vweird.f32 %v902
      %vm909 = vmor %vm907, %vm908
      %v910 = vsel %vm909, %v902, %v906
      %v911 = vand.u32 2147483647, %v790
      %vm912 = vcmp.eq.f32.partialorder %v911, 8.507059e+37
      %v913 = vand.u32 %v790, 2147483648
      %v914 = vor.u32 1.1754944e-38, %v913
      %v915 = vsel %vm912, %v914, %v910
      %v916 = vrcp.pop %v793
      %v917 = vmul.f32 %v793, %v916
      %v918 = vsub.f32 1.0, %v917
      %v919 = vmul.f32 %v916, %v918
      %v920 = vadd.f32 %v916, %v919
      %vm921 = vweird.f32 %v793
      %vm922 = vweird.f32 %v916
      %vm923 = vmor %vm921, %vm922
      %v924 = vsel %vm923, %v916, %v920
      %v925 = vand.u32 2147483647, %v793
      %vm926 = vcmp.eq.f32.partialorder %v925, 8.507059e+37
      %v927 = vand.u32 %v793, 2147483648
      %v928 = vor.u32 1.1754944e-38, %v927
      %v929 = vsel %vm926, %v928, %v924
      %v930 = vrcp.pop %v796
      %v931 = vmul.f32 %v796, %v930
      %v932 = vsub.f32 1.0, %v931
      %v933 = vmul.f32 %v930, %v932
      %v934 = vadd.f32 %v930, %v933
      %vm935 = vweird.f32 %v796
      %vm936 = vweird.f32 %v930
      %vm937 = vmor %vm935, %vm936
      %v938 = vsel %vm937, %v930, %v934
      %v939 = vand.u32 2147483647, %v796
      %vm940 = vcmp.eq.f32.partialorder %v939, 8.507059e+37
      %v941 = vand.u32 %v796, 2147483648
      %v942 = vor.u32 1.1754944e-38, %v941
      %v943 = vsel %vm940, %v942, %v938
      %v944 = vrcp.pop %v799
      %v945 = vmul.f32 %v799, %v944
      %v946 = vsub.f32 1.0, %v945
      %v947 = vmul.f32 %v944, %v946
      %v948 = vadd.f32 %v944, %v947
      %vm949 = vweird.f32 %v799
      %vm950 = vweird.f32 %v944
      %vm951 = vmor %vm949, %vm950
      %v952 = vsel %vm951, %v944, %v948
      %v953 = vand.u32 2147483647, %v799
      %vm954 = vcmp.eq.f32.partialorder %v953, 8.507059e+37
      %v955 = vand.u32 %v799, 2147483648
      %v956 = vor.u32 1.1754944e-38, %v955
      %v957 = vsel %vm954, %v956, %v952
      %v958 = vrcp.pop %v802
      %v959 = vmul.f32 %v802, %v958
      %v960 = vsub.f32 1.0, %v959
      %v961 = vmul.f32 %v958, %v960
      %v962 = vadd.f32 %v958, %v961
      %vm963 = vweird.f32 %v802
      %vm964 = vweird.f32 %v958
      %vm965 = vmor %vm963, %vm964
      %v966 = vsel %vm965, %v958, %v962
      %v967 = vand.u32 2147483647, %v802
      %vm968 = vcmp.eq.f32.partialorder %v967, 8.507059e+37
      %v969 = vand.u32 %v802, 2147483648
      %v970 = vor.u32 1.1754944e-38, %v969
      %v971 = vsel %vm968, %v970, %v966
      %v972 = vrcp.pop %v805
      %v973 = vmul.f32 %v805, %v972
      %v974 = vsub.f32 1.0, %v973
      %v975 = vmul.f32 %v972, %v974
      %v976 = vadd.f32 %v972, %v975
      %vm977 = vweird.f32 %v805
      %vm978 = vweird.f32 %v972
      %vm979 = vmor %vm977, %vm978
      %v980 = vsel %vm979, %v972, %v976
      %v981 = vand.u32 2147483647, %v805
      %vm982 = vcmp.eq.f32.partialorder %v981, 8.507059e+37
      %v983 = vand.u32 %v805, 2147483648
      %v984 = vor.u32 1.1754944e-38, %v983
      %v985 = vsel %vm982, %v984, %v980
      %v986 = vrcp.pop %v808
      %v987 = vmul.f32 %v808, %v986
      %v988 = vsub.f32 1.0, %v987
      %v989 = vmul.f32 %v986, %v988
      %v990 = vadd.f32 %v986, %v989
      %vm991 = vweird.f32 %v808
      %vm992 = vweird.f32 %v986
      %vm993 = vmor %vm991, %vm992
      %v994 = vsel %vm993, %v986, %v990
      %v995 = vand.u32 2147483647, %v808
      %vm996 = vcmp.eq.f32.partialorder %v995, 8.507059e+37
      %v997 = vand.u32 %v808, 2147483648
      %v998 = vor.u32 1.1754944e-38, %v997
      %v999 = vsel %vm996, %v998, %v994
      %v1000 = vrcp.pop %v811
      %v1001 = vmul.f32 %v811, %v1000
      %v1002 = vsub.f32 1.0, %v1001
      %v1003 = vmul.f32 %v1000, %v1002
      %v1004 = vadd.f32 %v1000, %v1003
      %vm1005 = vweird.f32 %v811
      %vm1006 = vweird.f32 %v1000
      %vm1007 = vmor %vm1005, %vm1006
      %v1008 = vsel %vm1007, %v1000, %v1004
      %v1009 = vand.u32 2147483647, %v811
      %vm1010 = vcmp.eq.f32.partialorder %v1009, 8.507059e+37
      %v1011 = vand.u32 %v811, 2147483648
      %v1012 = vor.u32 1.1754944e-38, %v1011
      %v1013 = vsel %vm1010, %v1012, %v1008
      %v1014 = vrcp.pop %v814
      %v1015 = vmul.f32 %v814, %v1014
      %v1016 = vsub.f32 1.0, %v1015
      %v1017 = vmul.f32 %v1014, %v1016
      %v1018 = vadd.f32 %v1014, %v1017
      %vm1019 = vweird.f32 %v814
      %vm1020 = vweird.f32 %v1014
      %vm1021 = vmor %vm1019, %vm1020
      %v1022 = vsel %vm1021, %v1014, %v1018
      %v1023 = vand.u32 2147483647, %v814
      %vm1024 = vcmp.eq.f32.partialorder %v1023, 8.507059e+37
      %v1025 = vand.u32 %v814, 2147483648
      %v1026 = vor.u32 1.1754944e-38, %v1025
      %v1027 = vsel %vm1024, %v1026, %v1022
      %v1028 = vrcp.pop %v817
      %v1029 = vmul.f32 %v817, %v1028
      %v1030 = vsub.f32 1.0, %v1029
      %v1031 = vmul.f32 %v1028, %v1030
      %v1032 = vadd.f32 %v1028, %v1031
      %vm1033 = vweird.f32 %v817
      %vm1034 = vweird.f32 %v1028
      %vm1035 = vmor %vm1033, %vm1034
      %v1036 = vsel %vm1035, %v1028, %v1032
      %v1037 = vand.u32 2147483647, %v817
      %vm1038 = vcmp.eq.f32.partialorder %v1037, 8.507059e+37
      %v1039 = vand.u32 %v817, 2147483648
      %v1040 = vor.u32 1.1754944e-38, %v1039
      %v1041 = vsel %vm1038, %v1040, %v1036
      %v1042 = vmul.f32 %v707, %v831
      %v1043 = vmul.f32 %v709, %v831
      %v1044 = vmul.f32 %v711, %v845
      %v1045 = vmul.f32 %v713, %v845
      %v1046 = vmul.f32 %v715, %v859
      %v1047 = vmul.f32 %v717, %v859
      %v1048 = vmul.f32 %v719, %v873
      %v1049 = vmul.f32 %v721, %v873
      %v1050 = vmul.f32 %v723, %v887
      %v1051 = vmul.f32 %v725, %v887
      %v1052 = vmul.f32 %v727, %v901
      %v1053 = vmul.f32 %v729, %v901
      %v1054 = vmul.f32 %v731, %v915
      %v1055 = vmul.f32 %v733, %v915
      %v1056 = vmul.f32 %v735, %v929
      %v1057 = vmul.f32 %v737, %v929
      %v1058 = vmul.f32 %v739, %v943
      %v1059 = vmul.f32 %v741, %v943
      %v1060 = vmul.f32 %v743, %v957
      %v1061 = vmul.f32 %v745, %v957
      %v1062 = vmul.f32 %v747, %v971
      %v1063 = vmul.f32 %v749, %v971
      %v1064 = vmul.f32 %v751, %v985
      %v1065 = vmul.f32 %v753, %v985
      %v1066 = vmul.f32 %v755, %v999
      %v1067 = vmul.f32 %v757, %v999
      %v1068 = vmul.f32 %v759, %v1013
      %v1069 = vmul.f32 %v761, %v1013
      %v1070 = vmul.f32 %v763, %v1027
      %v1071 = vmul.f32 %v765, %v1027
      %v1072 = vmul.f32 %v767, %v1041
      %v1073 = vmul.f32 %v769, %v1041
      %v1074 = vpack.c.bf16 %v1044, %v1042
      %v1075 = vpack.c.bf16 %v1045, %v1043
      %v1076 = vpack.c.bf16 %v1048, %v1046
      %v1077 = vpack.c.bf16 %v1049, %v1047
      %v1078 = vpack.c.bf16 %v1052, %v1050
      %v1079 = vpack.c.bf16 %v1053, %v1051
      %v1080 = vpack.c.bf16 %v1056, %v1054
      %v1081 = vpack.c.bf16 %v1057, %v1055
      %v1082 = vpack.c.bf16 %v1060, %v1058
      %v1083 = vpack.c.bf16 %v1061, %v1059
      %v1084 = vpack.c.bf16 %v1064, %v1062
      %v1085 = vpack.c.bf16 %v1065, %v1063
      %v1086 = vpack.c.bf16 %v1068, %v1066
      %v1087 = vpack.c.bf16 %v1069, %v1067
      %v1088 = vpack.c.bf16 %v1072, %v1070
      %v1089 = vpack.c.bf16 %v1073, %v1071
      %v1090 = vld [vmem:[%s294] sm:$0xf]
      %v1091 = vld [vmem:[%s294 + $0x4] sm:$0xf]
      %v1092 = vld [vmem:[%s294 + $0x8] sm:$0xf]
      %v1093 = vld [vmem:[%s294 + $0xc] sm:$0xf]
      %v1094 = vld [vmem:[%s294 + $0x10] sm:$0xf]
      %v1095 = vld [vmem:[%s294 + $0x14] sm:$0xf]
      %v1096 = vld [vmem:[%s294 + $0x18] sm:$0xf]
      %v1097 = vld [vmem:[%s294 + $0x1c] sm:$0xf]
      %v1098 = vld [vmem:[%s294 + $0x20] sm:$0xf]
      %v1099 = vld [vmem:[%s294 + $0x24] sm:$0xf]
      %v1100 = vld [vmem:[%s294 + $0x28] sm:$0xf]
      %v1101 = vld [vmem:[%s294 + $0x2c] sm:$0xf]
      %v1102 = vld [vmem:[%s294 + $0x30] sm:$0xf]
      %v1103 = vld [vmem:[%s294 + $0x34] sm:$0xf]
      %v1104 = vld [vmem:[%s294 + $0x38] sm:$0xf]
      %v1105 = vld [vmem:[%s294 + $0x3c] sm:$0xf]
      %v1106 = vld [vmem:[%s294 + $0x40] sm:$0xf]
      %v1107 = vld [vmem:[%s294 + $0x44] sm:$0xf]
      %v1108 = vld [vmem:[%s294 + $0x48] sm:$0xf]
      %v1109 = vld [vmem:[%s294 + $0x4c] sm:$0xf]
      %v1110 = vld [vmem:[%s294 + $0x50] sm:$0xf]
      %v1111 = vld [vmem:[%s294 + $0x54] sm:$0xf]
      %v1112 = vld [vmem:[%s294 + $0x58] sm:$0xf]
      %v1113 = vld [vmem:[%s294 + $0x5c] sm:$0xf]
      %v1114 = vld [vmem:[%s294 + $0x60] sm:$0xf]
      %v1115 = vld [vmem:[%s294 + $0x64] sm:$0xf]
      %v1116 = vld [vmem:[%s294 + $0x68] sm:$0xf]
      %v1117 = vld [vmem:[%s294 + $0x6c] sm:$0xf]
      %v1118 = vld [vmem:[%s294 + $0x70] sm:$0xf]
      %v1119 = vld [vmem:[%s294 + $0x74] sm:$0xf]
      %v1120 = vld [vmem:[%s294 + $0x78] sm:$0xf]
      %v1121 = vld [vmem:[%s294 + $0x7c] sm:$0xf]
      %v1154 = vunpack.c.l.b16 %v1090
      %v1155 = vunpack.c.l.b16 %v1091
      %v1156 = vunpack.c.l.b16 %v1092
      %v1157 = vunpack.c.l.b16 %v1093
      %v1158 = vunpack.c.l.b16 %v1094
      %v1159 = vunpack.c.l.b16 %v1095
      %v1160 = vunpack.c.l.b16 %v1096
      %v1161 = vunpack.c.l.b16 %v1097
      %v1162 = vunpack.c.l.b16 %v1098
      %v1163 = vunpack.c.l.b16 %v1099
      %v1164 = vunpack.c.l.b16 %v1100
      %v1165 = vunpack.c.l.b16 %v1101
      %v1166 = vunpack.c.l.b16 %v1102
      %v1167 = vunpack.c.l.b16 %v1103
      %v1168 = vunpack.c.l.b16 %v1104
      %v1169 = vunpack.c.l.b16 %v1105
      %v1170 = vunpack.c.l.b16 %v1106
      %v1171 = vunpack.c.l.b16 %v1107
      %v1172 = vunpack.c.l.b16 %v1108
      %v1173 = vunpack.c.l.b16 %v1109
      %v1174 = vunpack.c.l.b16 %v1110
      %v1175 = vunpack.c.l.b16 %v1111
      %v1176 = vunpack.c.l.b16 %v1112
      %v1177 = vunpack.c.l.b16 %v1113
      %v1178 = vunpack.c.l.b16 %v1114
      %v1179 = vunpack.c.l.b16 %v1115
      %v1180 = vunpack.c.l.b16 %v1116
      %v1181 = vunpack.c.l.b16 %v1117
      %v1182 = vunpack.c.l.b16 %v1118
      %v1183 = vunpack.c.l.b16 %v1119
      %v1184 = vunpack.c.l.b16 %v1120
      %v1185 = vunpack.c.l.b16 %v1121
      %v1186 = vpack.c.b16 %v1155, %v1154
      %v1187 = vpack.c.b16 %v1157, %v1156
      %v1188 = vpack.c.b16 %v1159, %v1158
      %v1189 = vpack.c.b16 %v1161, %v1160
      %v1190 = vpack.c.b16 %v1163, %v1162
      %v1191 = vpack.c.b16 %v1165, %v1164
      %v1192 = vpack.c.b16 %v1167, %v1166
      %v1193 = vpack.c.b16 %v1169, %v1168
      %v1194 = vpack.c.b16 %v1171, %v1170
      %v1195 = vpack.c.b16 %v1173, %v1172
      %v1196 = vpack.c.b16 %v1175, %v1174
      %v1197 = vpack.c.b16 %v1177, %v1176
      %v1198 = vpack.c.b16 %v1179, %v1178
      %v1199 = vpack.c.b16 %v1181, %v1180
      %v1200 = vpack.c.b16 %v1183, %v1182
      %v1201 = vpack.c.b16 %v1185, %v1184
      %1218 = vmatpush.bf16.msra.mxu0 %v1193
      %1219 = vmatpush.bf16.msra.mxu0 %v1192
      %1220 = vmatpush.bf16.msra.mxu0 %v1191
      %1221 = vmatpush.bf16.msra.mxu0 %v1190
      %1222 = vmatpush.bf16.msra.mxu0 %v1189
      %1223 = vmatpush.bf16.msra.mxu0 %v1188
      %1224 = vmatpush.bf16.msra.mxu0 %v1187
      %1225 = vmatpush.bf16.msra.mxu0 %v1186
      %1226 = vmatmul.bf16.gmra.mxu0 %v1074
      %v1227 = vpop.f32.mrf.mxu0
      %v1228 = vadd.f32 0.0, %v1227
      %v1229 = vpop.f32.mrf.mxu0
      %v1230 = vadd.f32 0.0, %v1229
      %1231 = vmatmul.bf16.gmra.mxu0 %v1076
      %v1232 = vpop.f32.mrf.mxu0
      %v1233 = vadd.f32 0.0, %v1232
      %v1234 = vpop.f32.mrf.mxu0
      %v1235 = vadd.f32 0.0, %v1234
      %1236 = vmatmul.bf16.gmra.mxu0 %v1078
      %v1237 = vpop.f32.mrf.mxu0
      %v1238 = vadd.f32 0.0, %v1237
      %v1239 = vpop.f32.mrf.mxu0
      %v1240 = vadd.f32 0.0, %v1239
      %1241 = vmatmul.bf16.gmra.mxu0 %v1080
      %v1242 = vpop.f32.mrf.mxu0
      %v1243 = vadd.f32 0.0, %v1242
      %v1244 = vpop.f32.mrf.mxu0
      %v1245 = vadd.f32 0.0, %v1244
      %1246 = vmatmul.bf16.gmra.mxu0 %v1082
      %v1247 = vpop.f32.mrf.mxu0
      %v1248 = vadd.f32 0.0, %v1247
      %v1249 = vpop.f32.mrf.mxu0
      %v1250 = vadd.f32 0.0, %v1249
      %1251 = vmatmul.bf16.gmra.mxu0 %v1084
      %v1252 = vpop.f32.mrf.mxu0
      %v1253 = vadd.f32 0.0, %v1252
      %v1254 = vpop.f32.mrf.mxu0
      %v1255 = vadd.f32 0.0, %v1254
      %1256 = vmatmul.bf16.gmra.mxu0 %v1086
      %v1257 = vpop.f32.mrf.mxu0
      %v1258 = vadd.f32 0.0, %v1257
      %v1259 = vpop.f32.mrf.mxu0
      %v1260 = vadd.f32 0.0, %v1259
      %1261 = vmatmul.bf16.gmra.mxu0 %v1088
      %v1262 = vpop.f32.mrf.mxu0
      %v1263 = vadd.f32 0.0, %v1262
      %v1264 = vpop.f32.mrf.mxu0
      %v1265 = vadd.f32 0.0, %v1264
      %1266 = vdwg.mxu0
      %1267 = vmatpush.bf16.msra.mxu0 %v1201
      %1268 = vmatpush.bf16.msra.mxu0 %v1200
      %1269 = vmatpush.bf16.msra.mxu0 %v1199
      %1270 = vmatpush.bf16.msra.mxu0 %v1198
      %1271 = vmatpush.bf16.msra.mxu0 %v1197
      %1272 = vmatpush.bf16.msra.mxu0 %v1196
      %1273 = vmatpush.bf16.msra.mxu0 %v1195
      %1274 = vmatpush.bf16.msra.mxu0 %v1194
      %1275 = vmatmul.bf16.gmra.mxu0 %v1075
      %v1276 = vpop.f32.mrf.mxu0
      %v1277 = vadd.f32 %v1228, %v1276
      %v1278 = vpop.f32.mrf.mxu0
      %v1279 = vadd.f32 %v1230, %v1278
      %1280 = vmatmul.bf16.gmra.mxu0 %v1077
      %v1281 = vpop.f32.mrf.mxu0
      %v1282 = vadd.f32 %v1233, %v1281
      %v1283 = vpop.f32.mrf.mxu0
      %v1284 = vadd.f32 %v1235, %v1283
      %1285 = vmatmul.bf16.gmra.mxu0 %v1079
      %v1286 = vpop.f32.mrf.mxu0
      %v1287 = vadd.f32 %v1238, %v1286
      %v1288 = vpop.f32.mrf.mxu0
      %v1289 = vadd.f32 %v1240, %v1288
      %1290 = vmatmul.bf16.gmra.mxu0 %v1081
      %v1291 = vpop.f32.mrf.mxu0
      %v1292 = vadd.f32 %v1243, %v1291
      %v1293 = vpop.f32.mrf.mxu0
      %v1294 = vadd.f32 %v1245, %v1293
      %1295 = vmatmul.bf16.gmra.mxu0 %v1083
      %v1296 = vpop.f32.mrf.mxu0
      %v1297 = vadd.f32 %v1248, %v1296
      %v1298 = vpop.f32.mrf.mxu0
      %v1299 = vadd.f32 %v1250, %v1298
      %1300 = vmatmul.bf16.gmra.mxu0 %v1085
      %v1301 = vpop.f32.mrf.mxu0
      %v1302 = vadd.f32 %v1253, %v1301
      %v1303 = vpop.f32.mrf.mxu0
      %v1304 = vadd.f32 %v1255, %v1303
      %1305 = vmatmul.bf16.gmra.mxu0 %v1087
      %v1306 = vpop.f32.mrf.mxu0
      %v1307 = vadd.f32 %v1258, %v1306
      %v1308 = vpop.f32.mrf.mxu0
      %v1309 = vadd.f32 %v1260, %v1308
      %1310 = vmatmul.bf16.gmra.mxu0 %v1089
      %v1311 = vpop.f32.mrf.mxu0
      %v1312 = vadd.f32 %v1263, %v1311
      %v1313 = vpop.f32.mrf.mxu0
      %v1314 = vadd.f32 %v1265, %v1313
      %1315 = vdwg.mxu0
      %s1316 = sld [smem:[#allocation2]]
      %v1317 = vstv %s1316
      %v1318 = vmul.f32 %v1317, %v1277
      %v1319 = vmul.f32 %v1317, %v1279
      %v1320 = vmul.f32 %v1317, %v1282
      %v1321 = vmul.f32 %v1317, %v1284
      %v1322 = vmul.f32 %v1317, %v1287
      %v1323 = vmul.f32 %v1317, %v1289
      %v1324 = vmul.f32 %v1317, %v1292
      %v1325 = vmul.f32 %v1317, %v1294
      %v1326 = vmul.f32 %v1317, %v1297
      %v1327 = vmul.f32 %v1317, %v1299
      %v1328 = vmul.f32 %v1317, %v1302
      %v1329 = vmul.f32 %v1317, %v1304
      %v1330 = vmul.f32 %v1317, %v1307
      %v1331 = vmul.f32 %v1317, %v1309
      %v1332 = vmul.f32 %v1317, %v1312
      %v1333 = vmul.f32 %v1317, %v1314
      %v1334 = vunpack.c.l.bf16 %v306
      %v1335 = vunpack.c.l.bf16 %v307
      %v1336 = vunpack.c.l.bf16 %v308
      %v1337 = vunpack.c.l.bf16 %v309
      %v1338 = vunpack.c.l.bf16 %v310
      %v1339 = vunpack.c.l.bf16 %v311
      %v1340 = vunpack.c.l.bf16 %v312
      %v1341 = vunpack.c.l.bf16 %v313
      %v1342 = vunpack.c.l.bf16 %v314
      %v1343 = vunpack.c.l.bf16 %v315
      %v1344 = vunpack.c.l.bf16 %v316
      %v1345 = vunpack.c.l.bf16 %v317
      %v1346 = vunpack.c.l.bf16 %v318
      %v1347 = vunpack.c.l.bf16 %v319
      %v1348 = vunpack.c.l.bf16 %v320
      %v1349 = vunpack.c.l.bf16 %v321
      %v1350 = vadd.f32 %v1318, %v1334
      %v1351 = vadd.f32 %v1319, %v1335
      %v1352 = vadd.f32 %v1320, %v1336
      %v1353 = vadd.f32 %v1321, %v1337
      %v1354 = vadd.f32 %v1322, %v1338
      %v1355 = vadd.f32 %v1323, %v1339
      %v1356 = vadd.f32 %v1324, %v1340
      %v1357 = vadd.f32 %v1325, %v1341
      %v1358 = vadd.f32 %v1326, %v1342
      %v1359 = vadd.f32 %v1327, %v1343
      %v1360 = vadd.f32 %v1328, %v1344
      %v1361 = vadd.f32 %v1329, %v1345
      %v1362 = vadd.f32 %v1330, %v1346
      %v1363 = vadd.f32 %v1331, %v1347
      %v1364 = vadd.f32 %v1332, %v1348
      %v1365 = vadd.f32 %v1333, %v1349
      %v1366 = vpack.c.bf16 %v1350, %v1350
      %v1367 = vpack.c.bf16 %v1351, %v1351
      %v1368 = vpack.c.bf16 %v1352, %v1352
      %v1369 = vpack.c.bf16 %v1353, %v1353
      %v1370 = vpack.c.bf16 %v1354, %v1354
      %v1371 = vpack.c.bf16 %v1355, %v1355
      %v1372 = vpack.c.bf16 %v1356, %v1356
      %v1373 = vpack.c.bf16 %v1357, %v1357
      %v1374 = vpack.c.bf16 %v1358, %v1358
      %v1375 = vpack.c.bf16 %v1359, %v1359
      %v1376 = vpack.c.bf16 %v1360, %v1360
      %v1377 = vpack.c.bf16 %v1361, %v1361
      %v1378 = vpack.c.bf16 %v1362, %v1362
      %v1379 = vpack.c.bf16 %v1363, %v1363
      %v1380 = vpack.c.bf16 %v1364, %v1364
      %v1381 = vpack.c.bf16 %v1365, %v1365
      %1382 = vst [vmem:[%s303] sm:$0xf] %v1366
      %1383 = vst [vmem:[%s303 + $0x4] sm:$0xf] %v1367
      %1384 = vst [vmem:[%s303 + $0x8] sm:$0xf] %v1368
      %1385 = vst [vmem:[%s303 + $0xc] sm:$0xf] %v1369
      %1386 = vst [vmem:[%s303 + $0x10] sm:$0xf] %v1370
      %1387 = vst [vmem:[%s303 + $0x14] sm:$0xf] %v1371
      %1388 = vst [vmem:[%s303 + $0x18] sm:$0xf] %v1372
      %1389 = vst [vmem:[%s303 + $0x1c] sm:$0xf] %v1373
      %1390 = vst [vmem:[%s303 + $0x20] sm:$0xf] %v1374
      %1391 = vst [vmem:[%s303 + $0x24] sm:$0xf] %v1375
      %1392 = vst [vmem:[%s303 + $0x28] sm:$0xf] %v1376
      %1393 = vst [vmem:[%s303 + $0x2c] sm:$0xf] %v1377
      %1394 = vst [vmem:[%s303 + $0x30] sm:$0xf] %v1378
      %1395 = vst [vmem:[%s303 + $0x34] sm:$0xf] %v1379
      %1396 = vst [vmem:[%s303 + $0x38] sm:$0xf] %v1380
      %1397 = vst [vmem:[%s303 + $0x3c] sm:$0xf] %v1381
      %s1398 = smul.u32 16, %s22
      %p1399 = scmp.lt.s32.totalorder %s21, 1
      %s1400 = scalar_select %p1399, %s21, 1
      %p1401 = scmp.lt.s32.totalorder %s1398, 31
      %s1402 = scalar_select %p1401, %s1398, 31
      %s1403 = smul.addr %s1400, 32
      %s1404 = sadd.s32 %s1402, %s1403
      %s1405 = smul.addr %s1404, 4
      %s1406 = scalar_lea.vmem %s5, %s1405
      // Predicated region
      $region41: #{unet_block_deep_forward.9} parent=39 // pred_check
        %p1407 = pneg %p171
      $region42: #{unet_block_deep_forward.9} parent=39 // pred_check_branch
        %1409 = sbr.rel (%p1407) target = $region44
      $region43: #{unet_block_deep_forward.9} parent=39 // pred_region
        %s1410 = smul.u32 16, %s22
      $region44: #{unet_block_deep_forward.9} parent=39 // pred_fallthru
        _
    $region40: #{unet_block_deep_forward.9} parent=5 // pred_fallthru
      _
    %p1411 = scmp.le.s32.totalorder 2, %s12
    // Predicated region
    $region45: #{unet_block_deep_forward.9} parent=5 // pred_check
      %p1412 = pneg %p1411
    $region46: #{unet_block_deep_forward.9} parent=5 // pred_check_branch
      %1414 = sbr.rel (%p1412) target = $region48
    $region47: #{unet_block_deep_forward.9} parent=5 // pred_region
      %s1415 = ssub.s32 %s12, 2
      // Predicated region
      $region49: #{unet_block_deep_forward.9} parent=47 // pred_check
        %p1416 = pneg %p177
      $region50: #{unet_block_deep_forward.9} parent=47 // pred_check_branch
        %1418 = sbr.rel (%p1416) target = $region52
      $region51: #{unet_block_deep_forward.9} parent=47 // pred_region
        %s1419 = smul.u32 16, %s24
        %p1420 = scmp.lt.s32.totalorder %s23, 1
        %s1421 = scalar_select %p1420, %s23, 1
        %p1422 = scmp.lt.s32.totalorder %s1419, 31
        %s1423 = scalar_select %p1422, %s1419, 31
        %s1424 = smul.addr %s1421, 32
        %s1425 = sadd.s32 %s1423, %s1424
        %s1426 = smul.addr %s1425, 4
        %s1427 = scalar_lea.vmem %s5, %s1426
      $region52: #{unet_block_deep_forward.9} parent=47 // pred_fallthru
        _
    $region48: #{unet_block_deep_forward.9} parent=5 // pred_fallthru
      _
  $region6: #{unet_block_deep_forward.9} parent=0 // loop_footer
    %s16 = sadd.s32 1, %s12
  $region7: #{unet_block_deep_forward.9} parent=0 // loop_footer_branch
    %11 = sbr.rel target = $region3
  $region8: #{unet_block_deep_forward.9} parent=0 // loop_exit
    _

// kernel: unet_block_deep_forward.7
$region0: #{unet_block_deep_forward.7}
  #allocation0 [shape = 'u32[]', space=smem, size = 0x4, offset = 0x4, fixed_abs, tag = 'smem constant byte address 0x4 - core index']
  #allocation1 [shape = 'u32[72,128]{1,0:T(1,128)}', space=vmem, size = 0x9000, scoped, tag = 'internal scratch']
  #allocation2 [shape = 'bf16[10,25,128]{2,1,0:T(8,128)(2,1)}', space=vmem, size = 0x14000, scoped, tag = 'scratch operand']
  %s0 = inlined_call_operand.vmem [shape: bf16[2,16,16,128], index: 0, kind: input, shape index: {}, may-alias: {0,1,2}]
  %s1 = inlined_call_operand.vmem [shape: bf16[2,16,16,128], index: 1, kind: input, shape index: {}, may-alias: {0,1,2}]
  %s2 = inlined_call_operand.vmem [shape: bf16[2,16,16,128], index: 2, kind: input, shape index: {}, may-alias: {0,1,2}]
  %s3 = inlined_call_operand.vmem [shape: bf16[9,128,128], index: 3, kind: input, shape index: {}]
  %s4 = inlined_call_operand.vmem [shape: f32[1,128], index: 4, kind: input, shape index: {}]
  %s5 = inlined_call_operand.vmem [shape: f32[1,128], index: 5, kind: input, shape index: {}]
  %s6 = inlined_call_operand.vmem [shape: bf16[2,16,16,128], index: 6, kind: output, shape index: {}]
  %s7 = sld [smem:[#allocation0]]
  $region65: #{unet_block_deep_forward.7} parent=0
    _
  %s9 = ssub.s32 1, %s7
  %s10 = scalar_select 0, %s9, %s7
  loop: start=0, step=1, limit=6
  $region2: #{unet_block_deep_forward.7} parent=0 // loop_pre_header
    _
  $region3: #{unet_block_deep_forward.7} parent=0 // loop_header
    %s12 = sphi 0, %s16
    %p13 = scmp.ge.s32.totalorder %s12, 6
    %s19 = sphi 0, %s31
    %s20 = sphi 0, %s27
    %s21 = sphi 0, %s19
    %s22 = sphi 0, %s20
    %s23 = sphi 0, %s21
    %s24 = sphi 0, %s22
    %s36 = sphi 0, %s38
    %s39 = sphi 0, %s36
    %s40 = sphi 0, %s39
    %s56 = sphi 0, %s40
    %s72 = sphi 0, %s74
    %s75 = sphi 0, %s72
    %s76 = sphi 0, %s75
    %s92 = sphi 0, %s76
    %s108 = sphi 0, %s110
    %s111 = sphi 0, %s108
    %s112 = sphi 0, %s111
    %s128 = sphi 0, %s112
    %s132 = sphi 0, %s132
    %s134 = sphi 0, %s132
    %s135 = sphi 0, %s134
    %s149 = sphi 0, %s135
    %s153 = sphi 0, %s153
    %s155 = sphi 0, %s153
    %s156 = sphi 0, %s155
    %s170 = sphi 0, %s156
    %s174 = sphi 0, %s174
    %s176 = sphi 0, %s174
    %s177 = sphi 0, %s176
    %s191 = sphi 0, %s177
    %s199 = sphi 0, %s201
    %s202 = sphi 0, %s199
    %s203 = sphi 0, %s202
    %s219 = sphi 0, %s203
  $region4: #{unet_block_deep_forward.7} parent=0 // loop_header_branch
    %15 = sbr.rel (%p13) target = $region8
  $region5: #{unet_block_deep_forward.7} parent=0 // loop_body
    %s17 = ssub.s32 %s12, 1
    %s18 = ssub.s32 %s12, 2
    %s25 = sadd.s32 1, %s20
    %p26 = scmp.ge.s32.totalorder %s25, 2
    %s27 = scalar_select %p26, 0, %s25
    %s28 = sadd.s32 1, %s19
    %s29 = scalar_select %p26, %s28, %s19
    %p30 = scmp.ge.s32.totalorder %s29, 2
    %s31 = scalar_select %p30, 0, %s29
    %s32 = ssub.s32 %s19, %s31
    %s33 = ssub.s32 %s20, %s27
    %s34 = sor.u32 %s32, %s33
    %p35 = scmp.eq.s32.totalorder %s34, 0
    %s37 = sadd.s32 %s36, 1
    %s38 = scalar_select %p35, %s36, %s37
    %p41 = pneg %p35
    %p42 = scmp.eq.s32.totalorder %s12, 3
    %p43 = por %p41, %p42
    %p44 = scmp.ne.s32.totalorder %s36, %s39
    %p45 = scmp.eq.s32.totalorder %s12, 0
    %p46 = por %p44, %p45
    %p47 = scmp.ne.s32.totalorder %s36, %s39
    %p48 = scmp.eq.s32.totalorder %s17, 3
    %p49 = por %p47, %p48
    %p50 = scmp.ne.s32.totalorder %s39, %s40
    %p51 = scmp.eq.s32.totalorder %s17, 0
    %p52 = por %p50, %p51
    %p53 = scmp.ne.s32.totalorder %s39, %s40
    %p54 = scmp.eq.s32.totalorder %s18, 3
    %p55 = por %p53, %p54
    %p57 = scmp.ne.s32.totalorder %s40, %s56
    %p58 = scmp.eq.s32.totalorder %s18, 0
    %p59 = por %p57, %p58
    %s60 = smul.u32 %s20, 8
    %s61 = ssub.s32 %s60, 1
    %p62 = scmp.gt.s32.totalorder %s61, 0
    %s63 = scalar_select %p62, %s61, 0
    %s64 = smul.u32 %s27, 8
    %s65 = ssub.s32 %s64, 1
    %p66 = scmp.gt.s32.totalorder %s65, 0
    %s67 = scalar_select %p66, %s65, 0
    %s68 = ssub.s32 %s19, %s31
    %s69 = ssub.s32 %s63, %s67
    %s70 = sor.u32 %s68, %s69
    %p71 = scmp.eq.s32.totalorder %s70, 0
    %s73 = sadd.s32 %s72, 1
    %s74 = scalar_select %p71, %s72, %s73
    %p77 = pneg %p71
    %p78 = scmp.eq.s32.totalorder %s12, 3
    %p79 = por %p77, %p78
    %p80 = scmp.ne.s32.totalorder %s72, %s75
    %p81 = scmp.eq.s32.totalorder %s12, 0
    %p82 = por %p80, %p81
    %p83 = scmp.ne.s32.totalorder %s72, %s75
    %p84 = scmp.eq.s32.totalorder %s17, 3
    %p85 = por %p83, %p84
    %p86 = scmp.ne.s32.totalorder %s75, %s76
    %p87 = scmp.eq.s32.totalorder %s17, 0
    %p88 = por %p86, %p87
    %p89 = scmp.ne.s32.totalorder %s75, %s76
    %p90 = scmp.eq.s32.totalorder %s18, 3
    %p91 = por %p89, %p90
    %p93 = scmp.ne.s32.totalorder %s76, %s92
    %p94 = scmp.eq.s32.totalorder %s18, 0
    %p95 = por %p93, %p94
    %s96 = smul.u32 %s20, 8
    %s97 = sadd.s32 %s96, 8
    %p98 = scmp.lt.s32.totalorder %s97, 15
    %s99 = scalar_select %p98, %s97, 15
    %s100 = smul.u32 %s27, 8
    %s101 = sadd.s32 %s100, 8
    %p102 = scmp.lt.s32.totalorder %s101, 15
    %s103 = scalar_select %p102, %s101, 15
    %s104 = ssub.s32 %s19, %s31
    %s105 = ssub.s32 %s99, %s103
    %s106 = sor.u32 %s104, %s105
    %p107 = scmp.eq.s32.totalorder %s106, 0
    %s109 = sadd.s32 %s108, 1
    %s110 = scalar_select %p107, %s108, %s109
    %p113 = pneg %p107
    %p114 = scmp.eq.s32.totalorder %s12, 3
    %p115 = por %p113, %p114
    %p116 = scmp.ne.s32.totalorder %s108, %s111
    %p117 = scmp.eq.s32.totalorder %s12, 0
    %p118 = por %p116, %p117
    %p119 = scmp.ne.s32.totalorder %s108, %s111
    %p120 = scmp.eq.s32.totalorder %s17, 3
    %p121 = por %p119, %p120
    %p122 = scmp.ne.s32.totalorder %s111, %s112
    %p123 = scmp.eq.s32.totalorder %s17, 0
    %p124 = por %p122, %p123
    %p125 = scmp.ne.s32.totalorder %s111, %s112
    %p126 = scmp.eq.s32.totalorder %s18, 3
    %p127 = por %p125, %p126
    %p129 = scmp.ne.s32.totalorder %s112, %s128
    %p130 = scmp.eq.s32.totalorder %s18, 0
    %p131 = por %p129, %p130
    %s133 = sadd.s32 %s132, 1
    %p136 = scmp.eq.s32.totalorder %s12, 3
    %p137 = scmp.ne.s32.totalorder %s132, %s134
    %p138 = scmp.eq.s32.totalorder %s12, 0
    %p139 = por %p137, %p138
    %p140 = scmp.ne.s32.totalorder %s132, %s134
    %p141 = scmp.eq.s32.totalorder %s17, 3
    %p142 = por %p140, %p141
    %p143 = scmp.ne.s32.totalorder %s134, %s135
    %p144 = scmp.eq.s32.totalorder %s17, 0
    %p145 = por %p143, %p144
    %p146 = scmp.ne.s32.totalorder %s134, %s135
    %p147 = scmp.eq.s32.totalorder %s18, 3
    %p148 = por %p146, %p147
    %p150 = scmp.ne.s32.totalorder %s135, %s149
    %p151 = scmp.eq.s32.totalorder %s18, 0
    %p152 = por %p150, %p151
    %s154 = sadd.s32 %s153, 1
    %p157 = scmp.eq.s32.totalorder %s12, 3
    %p158 = scmp.ne.s32.totalorder %s153, %s155
    %p159 = scmp.eq.s32.totalorder %s12, 0
    %p160 = por %p158, %p159
    %p161 = scmp.ne.s32.totalorder %s153, %s155
    %p162 = scmp.eq.s32.totalorder %s17, 3
    %p163 = por %p161, %p162
    %p164 = scmp.ne.s32.totalorder %s155, %s156
    %p165 = scmp.eq.s32.totalorder %s17, 0
    %p166 = por %p164, %p165
    %p167 = scmp.ne.s32.totalorder %s155, %s156
    %p168 = scmp.eq.s32.totalorder %s18, 3
    %p169 = por %p167, %p168
    %p171 = scmp.ne.s32.totalorder %s156, %s170
    %p172 = scmp.eq.s32.totalorder %s18, 0
    %p173 = por %p171, %p172
    %s175 = sadd.s32 %s174, 1
    %p178 = scmp.eq.s32.totalorder %s12, 3
    %p179 = scmp.ne.s32.totalorder %s174, %s176
    %p180 = scmp.eq.s32.totalorder %s12, 0
    %p181 = por %p179, %p180
    %p182 = scmp.ne.s32.totalorder %s174, %s176
    %p183 = scmp.eq.s32.totalorder %s17, 3
    %p184 = por %p182, %p183
    %p185 = scmp.ne.s32.totalorder %s176, %s177
    %p186 = scmp.eq.s32.totalorder %s17, 0
    %p187 = por %p185, %p186
    %p188 = scmp.ne.s32.totalorder %s176, %s177
    %p189 = scmp.eq.s32.totalorder %s18, 3
    %p190 = por %p188, %p189
    %p192 = scmp.ne.s32.totalorder %s177, %s191
    %p193 = scmp.eq.s32.totalorder %s18, 0
    %p194 = por %p192, %p193
    %s195 = ssub.s32 %s19, %s31
    %s196 = ssub.s32 %s20, %s27
    %s197 = sor.u32 %s195, %s196
    %p198 = scmp.eq.s32.totalorder %s197, 0
    %s200 = sadd.s32 %s199, 1
    %s201 = scalar_select %p198, %s199, %s200
    %p204 = pneg %p198
    %p205 = scmp.eq.s32.totalorder %s12, 3
    %p206 = por %p204, %p205
    %p207 = scmp.ne.s32.totalorder %s199, %s202
    %p208 = scmp.eq.s32.totalorder %s12, 0
    %p209 = por %p207, %p208
    %p210 = scmp.ne.s32.totalorder %s199, %s202
    %p211 = scmp.eq.s32.totalorder %s17, 3
    %p212 = por %p210, %p211
    %p213 = scmp.ne.s32.totalorder %s202, %s203
    %p214 = scmp.eq.s32.totalorder %s17, 0
    %p215 = por %p213, %p214
    %p216 = scmp.ne.s32.totalorder %s202, %s203
    %p217 = scmp.eq.s32.totalorder %s18, 3
    %p218 = por %p216, %p217
    %p220 = scmp.ne.s32.totalorder %s203, %s219
    %p221 = scmp.eq.s32.totalorder %s18, 0
    %p222 = por %p220, %p221
    %p223 = scmp.le.s32.totalorder 1, %s12
    %p224 = scmp.lt.s32.totalorder %s12, 5
    %p225 = pnand %p223, %p224
    %p226 = pneg %p225
    // Predicated region
    $region9: #{unet_block_deep_forward.7} parent=5 // pred_check
      _
    $region10: #{unet_block_deep_forward.7} parent=5 // pred_check_branch
      %228 = sbr.rel (%p225) target = $region12
    $region11: #{unet_block_deep_forward.7} parent=5 // pred_region
      %s229 = ssub.s32 %s12, 1
      // Predicated region
      $region13: #{unet_block_deep_forward.7} parent=11 // pred_check
        %p230 = pneg %p145
      $region14: #{unet_block_deep_forward.7} parent=11 // pred_check_branch
        %232 = sbr.rel (%p230) target = $region16
      $region15: #{unet_block_deep_forward.7} parent=11 // pred_region
        _
      $region16: #{unet_block_deep_forward.7} parent=11 // pred_fallthru
        _
      // Predicated region
      $region17: #{unet_block_deep_forward.7} parent=11 // pred_check
        %p233 = pneg %p166
      $region18: #{unet_block_deep_forward.7} parent=11 // pred_check_branch
        %235 = sbr.rel (%p233) target = $region20
      $region19: #{unet_block_deep_forward.7} parent=11 // pred_region
        _
      $region20: #{unet_block_deep_forward.7} parent=11 // pred_fallthru
        _
      // Predicated region
      $region21: #{unet_block_deep_forward.7} parent=11 // pred_check
        %p236 = pneg %p187
      $region22: #{unet_block_deep_forward.7} parent=11 // pred_check_branch
        %238 = sbr.rel (%p236) target = $region24
      $region23: #{unet_block_deep_forward.7} parent=11 // pred_region
        _
      $region24: #{unet_block_deep_forward.7} parent=11 // pred_fallthru
        _
    $region12: #{unet_block_deep_forward.7} parent=5 // pred_fallthru
      _
    %p239 = scmp.lt.s32.totalorder %s12, 4
    // Predicated region
    $region25: #{unet_block_deep_forward.7} parent=5 // pred_check
      %p240 = pneg %p239
    $region26: #{unet_block_deep_forward.7} parent=5 // pred_check_branch
      %242 = sbr.rel (%p240) target = $region28
    $region27: #{unet_block_deep_forward.7} parent=5 // pred_region
      // Predicated region
      $region29: #{unet_block_deep_forward.7} parent=27 // pred_check
        %p243 = pneg %p46
      $region30: #{unet_block_deep_forward.7} parent=27 // pred_check_branch
        %245 = sbr.rel (%p243) target = $region32
      $region31: #{unet_block_deep_forward.7} parent=27 // pred_region
        %s246 = smul.u32 8, %s20
        %p247 = scmp.lt.s32.totalorder %s19, 1
        %s248 = scalar_select %p247, %s19, 1
        %p249 = scmp.lt.s32.totalorder %s246, 15
        %s250 = scalar_select %p249, %s246, 15
        %s251 = smul.addr %s250, 2
        %s252 = smul.addr %s248, 32
        %s253 = sadd.s32 %s251, %s252
        %s254 = smul.addr %s253, 4
        %s255 = scalar_lea.vmem %s0, %s254
        %s256 = smul.u32 8, %s20
      $region32: #{unet_block_deep_forward.7} parent=27 // pred_fallthru
        _
      // Predicated region
      $region33: #{unet_block_deep_forward.7} parent=27 // pred_check
        %p257 = pneg %p82
      $region34: #{unet_block_deep_forward.7} parent=27 // pred_check_branch
        %259 = sbr.rel (%p257) target = $region36
      $region35: #{unet_block_deep_forward.7} parent=27 // pred_region
        %s260 = smul.u32 %s20, 8
        %s261 = ssub.s32 %s260, 1
        %p262 = scmp.gt.s32.totalorder %s261, 0
        %s263 = scalar_select %p262, %s261, 0
        %p264 = scmp.lt.s32.totalorder %s19, 1
        %s265 = scalar_select %p264, %s19, 1
        %p266 = scmp.lt.s32.totalorder %s263, 15
        %s267 = scalar_select %p266, %s263, 15
        %s268 = smul.addr %s267, 2
        %s269 = smul.addr %s265, 32
        %s270 = sadd.s32 %s268, %s269
        %s271 = smul.addr %s270, 4
        %s272 = scalar_lea.vmem %s1, %s271
        %s273 = smul.u32 %s20, 8
        %s274 = ssub.s32 %s273, 1
        %p275 = scmp.gt.s32.totalorder %s274, 0
        %s276 = scalar_select %p275, %s274, 0
      $region36: #{unet_block_deep_forward.7} parent=27 // pred_fallthru
        _
      // Predicated region
      $region37: #{unet_block_deep_forward.7} parent=27 // pred_check
        %p277 = pneg %p118
      $region38: #{unet_block_deep_forward.7} parent=27 // pred_check_branch
        %279 = sbr.rel (%p277) target = $region40
      $region39: #{unet_block_deep_forward.7} parent=27 // pred_region
        %s280 = smul.u32 %s20, 8
        %s281 = sadd.s32 %s280, 8
        %p282 = scmp.lt.s32.totalorder %s281, 15
        %s283 = scalar_select %p282, %s281, 15
        %p284 = scmp.lt.s32.totalorder %s19, 1
        %s285 = scalar_select %p284, %s19, 1
        %p286 = scmp.lt.s32.totalorder %s283, 15
        %s287 = scalar_select %p286, %s283, 15
        %s288 = smul.addr %s287, 2
        %s289 = smul.addr %s285, 32
        %s290 = sadd.s32 %s288, %s289
        %s291 = smul.addr %s290, 4
        %s292 = scalar_lea.vmem %s2, %s291
        %s293 = smul.u32 %s20, 8
        %s294 = sadd.s32 %s293, 8
        %p295 = scmp.lt.s32.totalorder %s294, 15
        %s296 = scalar_select %p295, %s294, 15
      $region40: #{unet_block_deep_forward.7} parent=27 // pred_fallthru
        _
    $region28: #{unet_block_deep_forward.7} parent=5 // pred_fallthru
      _
    %p297 = scmp.le.s32.totalorder 1, %s12
    %p298 = scmp.lt.s32.totalorder %s12, 5
    %p299 = pnand %p297, %p298
    %p300 = pneg %p299
    // Predicated region
    $region41: #{unet_block_deep_forward.7} parent=5 // pred_check
      _
    $region42: #{unet_block_deep_forward.7} parent=5 // pred_check_branch
      %302 = sbr.rel (%p299) target = $region44
    $region43: #{unet_block_deep_forward.7} parent=5 // pred_region
      %s303 = ssub.s32 %s12, 1
      %s304 = smul.u32 8, %s22
      %p305 = scmp.lt.s32.totalorder %s21, 1
      %s306 = scalar_select %p305, %s21, 1
      %p307 = scmp.lt.s32.totalorder %s304, 15
      %s308 = scalar_select %p307, %s304, 15
      %s309 = smul.addr %s308, 2
      %s310 = smul.addr %s306, 32
      %s311 = sadd.s32 %s309, %s310
      %s312 = smul.addr %s311, 4
      %s313 = scalar_lea.vmem %s0, %s312
      %p314 = pneg %p52
      %p315 = pneg %p49
      %s316 = smul.u32 %s22, 8
      %s317 = ssub.s32 %s316, 1
      %p318 = scmp.gt.s32.totalorder %s317, 0
      %s319 = scalar_select %p318, %s317, 0
      %p320 = scmp.lt.s32.totalorder %s21, 1
      %s321 = scalar_select %p320, %s21, 1
      %p322 = scmp.lt.s32.totalorder %s319, 15
      %s323 = scalar_select %p322, %s319, 15
      %s324 = smul.addr %s323, 2
      %s325 = smul.addr %s321, 32
      %s326 = sadd.s32 %s324, %s325
      %s327 = smul.addr %s326, 4
      %s328 = scalar_lea.vmem %s1, %s327
      %p329 = pneg %p88
      %p330 = pneg %p85
      %s331 = smul.u32 %s22, 8
      %s332 = sadd.s32 %s331, 8
      %p333 = scmp.lt.s32.totalorder %s332, 15
      %s334 = scalar_select %p333, %s332, 15
      %p335 = scmp.lt.s32.totalorder %s21, 1
      %s336 = scalar_select %p335, %s21, 1
      %p337 = scmp.lt.s32.totalorder %s334, 15
      %s338 = scalar_select %p337, %s334, 15
      %s339 = smul.addr %s338, 2
      %s340 = smul.addr %s336, 32
      %s341 = sadd.s32 %s339, %s340
      %s342 = smul.addr %s341, 4
      %s343 = scalar_lea.vmem %s2, %s342
      %p344 = pneg %p124
      %p345 = pneg %p121
      %p346 = pneg %p145
      %p347 = pneg %p142
      %p348 = pneg %p166
      %p349 = pneg %p163
      %p350 = pneg %p187
      %p351 = pneg %p184
      %p352 = pneg %p215
      %p353 = pneg %p212
      %s354 = smul.u32 8, %s22
      %p355 = scmp.lt.s32.totalorder %s21, 1
      %s356 = scalar_select %p355, %s21, 1
      %p357 = scmp.lt.s32.totalorder %s354, 15
      %s358 = scalar_select %p357, %s354, 15
      %s359 = smul.addr %s358, 2
      %s360 = smul.addr %s356, 32
      %s361 = sadd.s32 %s359, %s360
      %s362 = smul.addr %s361, 4
      %s363 = scalar_lea.vmem %s6, %s362
      %s364 = smul.u32 8, %s22
      %p365 = scmp.lt.s32.totalorder %s21, 1
      %s366 = scalar_select %p365, %s21, 1
      %p367 = scmp.lt.s32.totalorder %s364, 15
      %s368 = scalar_select %p367, %s364, 15
      %s369 = smul.addr %s368, 2
      %s370 = smul.addr %s366, 32
      %s371 = sadd.s32 %s369, %s370
      %s372 = smul.addr %s371, 4
      %s373 = scalar_lea.vmem %s0, %s372
      %s374 = smul.u32 8, %s22
      %s375 = smul.u32 %s22, 8
      %s376 = ssub.s32 %s375, 1
      %p377 = scmp.gt.s32.totalorder %s376, 0
      %s378 = scalar_select %p377, %s376, 0
      %p379 = scmp.lt.s32.totalorder %s21, 1
      %s380 = scalar_select %p379, %s21, 1
      %p381 = scmp.lt.s32.totalorder %s378, 15
      %s382 = scalar_select %p381, %s378, 15
      %s383 = smul.addr %s382, 2
      %s384 = smul.addr %s380, 32
      %s385 = sadd.s32 %s383, %s384
      %s386 = smul.addr %s385, 4
      %s387 = scalar_lea.vmem %s1, %s386
      %s388 = smul.u32 %s22, 8
      %s389 = ssub.s32 %s388, 1
      %p390 = scmp.gt.s32.totalorder %s389, 0
      %s391 = scalar_select %p390, %s389, 0
      %s392 = smul.u32 %s22, 8
      %s393 = sadd.s32 %s392, 8
      %p394 = scmp.lt.s32.totalorder %s393, 15
      %s395 = scalar_select %p394, %s393, 15
      %p396 = scmp.lt.s32.totalorder %s21, 1
      %s397 = scalar_select %p396, %s21, 1
      %p398 = scmp.lt.s32.totalorder %s395, 15
      %s399 = scalar_select %p398, %s395, 15
      %s400 = smul.addr %s399, 2
      %s401 = smul.addr %s397, 32
      %s402 = sadd.s32 %s400, %s401
      %s403 = smul.addr %s402, 4
      %s404 = scalar_lea.vmem %s2, %s403
      %s405 = smul.u32 %s22, 8
      %s406 = sadd.s32 %s405, 8
      %p407 = scmp.lt.s32.totalorder %s406, 15
      %s408 = scalar_select %p407, %s406, 15
      %s409 = smul.u32 8, %s22
      %p410 = scmp.lt.s32.totalorder %s21, 1
      %s411 = scalar_select %p410, %s21, 1
      %p412 = scmp.lt.s32.totalorder %s409, 15
      %s413 = scalar_select %p412, %s409, 15
      %s414 = smul.addr %s413, 2
      %s415 = smul.addr %s411, 32
      %s416 = sadd.s32 %s414, %s415
      %s417 = smul.addr %s416, 4
      %s418 = scalar_lea.vmem %s6, %s417
      %s419 = smul.u32 8, %s22
      %421 = vst [vmem:[#allocation2] sm:$0xf] 0
      %422 = vst [vmem:[#allocation2 + $0x10] sm:$0xf] 0
      %423 = vst [vmem:[#allocation2 + $0x20] sm:$0xf] 0
      %424 = vst [vmem:[#allocation2 + $0x30] sm:$0xf] 0
      %425 = vst [vmem:[#allocation2 + $0x40] sm:$0xf] 0
      %426 = vst [vmem:[#allocation2 + $0x50] sm:$0xf] 0
      %427 = vst [vmem:[#allocation2 + $0x60] sm:$0xf] 0
      %428 = vst [vmem:[#allocation2 + $0x70] sm:$0xf] 0
      %429 = vst [vmem:[#allocation2 + $0x80] sm:$0xf] 0
      %430 = vst [vmem:[#allocation2 + $0x90] sm:$0xf] 0
      %vm431 = vcmask 1040384
      %vm432 = vsmask.f32 256
      %vm433 = vmand %vm431, %vm432
      %v434 = vld [vmem:[#allocation2 + $0xc] sm:$0x1]
      %v435 = vsel %vm433, 0, %v434
      %436 = vst [vmem:[#allocation2 + $0xc] sm:$0x1] %v435
      %v437 = vld [vmem:[#allocation2 + $0x1c] sm:$0x1]
      %v438 = vsel %vm433, 0, %v437
      %439 = vst [vmem:[#allocation2 + $0x1c] sm:$0x1] %v438
      %v440 = vld [vmem:[#allocation2 + $0x2c] sm:$0x1]
      %v441 = vsel %vm433, 0, %v440
      %442 = vst [vmem:[#allocation2 + $0x2c] sm:$0x1] %v441
      %v443 = vld [vmem:[#allocation2 + $0x3c] sm:$0x1]
      %v444 = vsel %vm433, 0, %v443
      %445 = vst [vmem:[#allocation2 + $0x3c] sm:$0x1] %v444
      %v446 = vld [vmem:[#allocation2 + $0x4c] sm:$0x1]
      %v447 = vsel %vm433, 0, %v446
      %448 = vst [vmem:[#allocation2 + $0x4c] sm:$0x1] %v447
      %v449 = vld [vmem:[#allocation2 + $0x5c] sm:$0x1]
      %v450 = vsel %vm433, 0, %v449
      %451 = vst [vmem:[#allocation2 + $0x5c] sm:$0x1] %v450
      %v452 = vld [vmem:[#allocation2 + $0x6c] sm:$0x1]
      %v453 = vsel %vm433, 0, %v452
      %454 = vst [vmem:[#allocation2 + $0x6c] sm:$0x1] %v453
      %v455 = vld [vmem:[#allocation2 + $0x7c] sm:$0x1]
      %v456 = vsel %vm433, 0, %v455
      %457 = vst [vmem:[#allocation2 + $0x7c] sm:$0x1] %v456
      %v458 = vld [vmem:[#allocation2 + $0x8c] sm:$0x1]
      %v459 = vsel %vm433, 0, %v458
      %460 = vst [vmem:[#allocation2 + $0x8c] sm:$0x1] %v459
      %v461 = vld [vmem:[#allocation2 + $0x9c] sm:$0x1]
      %v462 = vsel %vm433, 0, %v461
      %463 = vst [vmem:[#allocation2 + $0x9c] sm:$0x1] %v462
      %v464 = vld [vmem:[%s373] sm:$0xf]
      %v465 = vld [vmem:[%s373 + $0x4] sm:$0xf]
      %v466 = vld [vmem:[%s373 + $0x8] sm:$0xf]
      %v467 = vld [vmem:[%s373 + $0xc] sm:$0xf]
      %v468 = vld [vmem:[%s373 + $0x10] sm:$0xf]
      %v469 = vld [vmem:[%s373 + $0x14] sm:$0xf]
      %v470 = vld [vmem:[%s373 + $0x18] sm:$0xf]
      %v471 = vld [vmem:[%s373 + $0x1c] sm:$0xf]
      %v472 = vld [vmem:[%s373 + $0x20] sm:$0xf]
      %v473 = vld [vmem:[%s373 + $0x24] sm:$0xf]
      %v474 = vld [vmem:[%s373 + $0x28] sm:$0xf]
      %v475 = vld [vmem:[%s373 + $0x2c] sm:$0xf]
      %v476 = vld [vmem:[%s373 + $0x30] sm:$0xf]
      %v477 = vld [vmem:[%s373 + $0x34] sm:$0xf]
      %v478 = vld [vmem:[%s373 + $0x38] sm:$0xf]
      %v479 = vld [vmem:[%s373 + $0x3c] sm:$0xf]
      %s480 = scalar_lea.vmem [#allocation2], 16
      %481 = vst [vmem:[%s480 + $0x4] sm:$0xf] %v464
      %482 = vst [vmem:[%s480 + $0x8] sm:$0xf] %v465
      %483 = vst [vmem:[%s480 + $0x14] sm:$0xf] %v466
      %484 = vst [vmem:[%s480 + $0x18] sm:$0xf] %v467
      %485 = vst [vmem:[%s480 + $0x24] sm:$0xf] %v468
      %486 = vst [vmem:[%s480 + $0x28] sm:$0xf] %v469
      %487 = vst [vmem:[%s480 + $0x34] sm:$0xf] %v470
      %488 = vst [vmem:[%s480 + $0x38] sm:$0xf] %v471
      %489 = vst [vmem:[%s480 + $0x44] sm:$0xf] %v472
      %490 = vst [vmem:[%s480 + $0x48] sm:$0xf] %v473
      %491 = vst [vmem:[%s480 + $0x54] sm:$0xf] %v474
      %492 = vst [vmem:[%s480 + $0x58] sm:$0xf] %v475
      %493 = vst [vmem:[%s480 + $0x64] sm:$0xf] %v476
      %494 = vst [vmem:[%s480 + $0x68] sm:$0xf] %v477
      %495 = vst [vmem:[%s480 + $0x74] sm:$0xf] %v478
      %496 = vst [vmem:[%s480 + $0x78] sm:$0xf] %v479
      %v497 = vld [vmem:[%s387] sm:$0xf]
      %v498 = vld [vmem:[%s387 + $0x4] sm:$0xf]
      %499 = vst [vmem:[#allocation2 + $0x4] sm:$0xf] %v497
      %500 = vst [vmem:[#allocation2 + $0x8] sm:$0xf] %v498
      %v501 = vld [vmem:[%s404] sm:$0xf]
      %v502 = vld [vmem:[%s404 + $0x4] sm:$0xf]
      %s503 = scalar_lea.vmem [#allocation2], 144
      %504 = vst [vmem:[%s503 + $0x4] sm:$0xf] %v501
      %505 = vst [vmem:[%s503 + $0x8] sm:$0xf] %v502
      %p506 = scmp.eq.s32.totalorder %s22, 0
      // Predicated region
      $region45: #{unet_block_deep_forward.7} parent=43 // pred_check
        %p507 = pneg %p506
      $region46: #{unet_block_deep_forward.7} parent=43 // pred_check_branch
        %509 = sbr.rel (%p507) target = $region48
      $region47: #{unet_block_deep_forward.7} parent=43 // pred_region
        %510 = vst [vmem:[#allocation2] sm:$0xf] 0
        %511 = vst [vmem:[#allocation2 + $0x4] sm:$0xf] 0
        %512 = vst [vmem:[#allocation2 + $0x8] sm:$0xf] 0
        %v513 = vld [vmem:[#allocation2 + $0xc] sm:$0x1]
        %v514 = vsel %vm433, 0, %v513
        %515 = vst [vmem:[#allocation2 + $0xc] sm:$0x1] %v514
      $region48: #{unet_block_deep_forward.7} parent=43 // pred_fallthru
        _
      %p516 = scmp.eq.s32.totalorder %s22, 1
      // Predicated region
      $region49: #{unet_block_deep_forward.7} parent=43 // pred_check
        %p517 = pneg %p516
      $region50: #{unet_block_deep_forward.7} parent=43 // pred_check_branch
        %519 = sbr.rel (%p517) target = $region52
      $region51: #{unet_block_deep_forward.7} parent=43 // pred_region
        %520 = vst [vmem:[%s503] sm:$0xf] 0
        %521 = vst [vmem:[%s503 + $0x4] sm:$0xf] 0
        %522 = vst [vmem:[%s503 + $0x8] sm:$0xf] 0
        %v523 = vld [vmem:[%s503 + $0xc] sm:$0x1]
        %v524 = vsel %vm433, 0, %v523
        %525 = vst [vmem:[%s503 + $0xc] sm:$0x1] %v524
      $region52: #{unet_block_deep_forward.7} parent=43 // pred_fallthru
        _
      %v526 = vld [vmem:[#allocation2] sm:$0x8]
      %v527 = vld [vmem:[#allocation2 + $0x4] sm:$0xf]
      %v528 = vld [vmem:[#allocation2 + $0x8] sm:$0xf]
      %v529 = vld [vmem:[#allocation2 + $0x10] sm:$0x8]
      %v530 = vld [vmem:[#allocation2 + $0x14] sm:$0xf]
      %v531 = vld [vmem:[#allocation2 + $0x18] sm:$0xf]
      %v532 = vld [vmem:[#allocation2 + $0x20] sm:$0x8]
      %v533 = vld [vmem:[#allocation2 + $0x24] sm:$0xf]
      %v534 = vld [vmem:[#allocation2 + $0x28] sm:$0xf]
      %v535 = vld [vmem:[#allocation2 + $0x30] sm:$0x8]
      %v536 = vld [vmem:[#allocation2 + $0x34] sm:$0xf]
      %v537 = vld [vmem:[#allocation2 + $0x38] sm:$0xf]
      %v538 = vld [vmem:[#allocation2 + $0x40] sm:$0x8]
      %v539 = vld [vmem:[#allocation2 + $0x44] sm:$0xf]
      %v540 = vld [vmem:[#allocation2 + $0x48] sm:$0xf]
      %v541 = vld [vmem:[#allocation2 + $0x50] sm:$0x8]
      %v542 = vld [vmem:[#allocation2 + $0x54] sm:$0xf]
      %v543 = vld [vmem:[#allocation2 + $0x58] sm:$0xf]
      %v544 = vld [vmem:[#allocation2 + $0x60] sm:$0x8]
      %v545 = vld [vmem:[#allocation2 + $0x64] sm:$0xf]
      %v546 = vld [vmem:[#allocation2 + $0x68] sm:$0xf]
      %v547 = vld [vmem:[#allocation2 + $0x70] sm:$0x8]
      %v548 = vld [vmem:[#allocation2 + $0x74] sm:$0xf]
      %v549 = vld [vmem:[#allocation2 + $0x78] sm:$0xf]
      %vm550 = vsmask.f32 4368
      %vm551 = vmor %vm432, %vm550
      %v553 = vshrl.u32 %v526, 16
      %v555 = vrot.slane %v553, 7
      %v556 = vrot.slane %v555, 4
      %v558 = vshrl.u32 %v527, 16
      %v560 = vrot.slane %v558, 7
      %v561 = vshll.u32 %v527, 16
      %v563 = vor.u32 %v560, %v561
      %v564 = vsel %vm551, %v556, %v563
      %v565 = vrot.slane %v560, 4
      %v567 = vshrl.u32 %v528, 16
      %v569 = vrot.slane %v567, 7
      %v570 = vshll.u32 %v528, 16
      %v572 = vor.u32 %v569, %v570
      %v573 = vsel %vm551, %v565, %v572
      %v575 = vshrl.u32 %v529, 16
      %v577 = vrot.slane %v575, 7
      %v578 = vrot.slane %v577, 4
      %v580 = vshrl.u32 %v530, 16
      %v582 = vrot.slane %v580, 7
      %v583 = vshll.u32 %v530, 16
      %v585 = vor.u32 %v582, %v583
      %v586 = vsel %vm551, %v578, %v585
      %v587 = vrot.slane %v582, 4
      %v589 = vshrl.u32 %v531, 16
      %v591 = vrot.slane %v589, 7
      %v592 = vshll.u32 %v531, 16
      %v594 = vor.u32 %v591, %v592
      %v595 = vsel %vm551, %v587, %v594
      %v597 = vshrl.u32 %v532, 16
      %v599 = vrot.slane %v597, 7
      %v600 = vrot.slane %v599, 4
      %v602 = vshrl.u32 %v533, 16
      %v604 = vrot.slane %v602, 7
      %v605 = vshll.u32 %v533, 16
      %v607 = vor.u32 %v604, %v605
      %v608 = vsel %vm551, %v600, %v607
      %v609 = vrot.slane %v604, 4
      %v611 = vshrl.u32 %v534, 16
      %v613 = vrot.slane %v611, 7
      %v614 = vshll.u32 %v534, 16
      %v616 = vor.u32 %v613, %v614
      %v617 = vsel %vm551, %v609, %v616
      %v619 = vshrl.u32 %v535, 16
      %v621 = vrot.slane %v619, 7
      %v622 = vrot.slane %v621, 4
      %v624 = vshrl.u32 %v536, 16
      %v626 = vrot.slane %v624, 7
      %v627 = vshll.u32 %v536, 16
      %v629 = vor.u32 %v626, %v627
      %v630 = vsel %vm551, %v622, %v629
      %v631 = vrot.slane %v626, 4
      %v633 = vshrl.u32 %v537, 16
      %v635 = vrot.slane %v633, 7
      %v636 = vshll.u32 %v537, 16
      %v638 = vor.u32 %v635, %v636
      %v639 = vsel %vm551, %v631, %v638
      %v641 = vshrl.u32 %v538, 16
      %v643 = vrot.slane %v641, 7
      %v644 = vrot.slane %v643, 4
      %v646 = vshrl.u32 %v539, 16
      %v648 = vrot.slane %v646, 7
      %v649 = vshll.u32 %v539, 16
      %v651 = vor.u32 %v648, %v649
      %v652 = vsel %vm551, %v644, %v651
      %v653 = vrot.slane %v648, 4
      %v655 = vshrl.u32 %v540, 16
      %v657 = vrot.slane %v655, 7
      %v658 = vshll.u32 %v540, 16
      %v660 = vor.u32 %v657, %v658
      %v661 = vsel %vm551, %v653, %v660
      %v663 = vshrl.u32 %v541, 16
      %v665 = vrot.slane %v663, 7
      %v666 = vrot.slane %v665, 4
      %v668 = vshrl.u32 %v542, 16
      %v670 = vrot.slane %v668, 7
      %v671 = vshll.u32 %v542, 16
      %v673 = vor.u32 %v670, %v671
      %v674 = vsel %vm551, %v666, %v673
      %v675 = vrot.slane %v670, 4
      %v677 = vshrl.u32 %v543, 16
      %v679 = vrot.slane %v677, 7
      %v680 = vshll.u32 %v543, 16
      %v682 = vor.u32 %v679, %v680
      %v683 = vsel %vm551, %v675, %v682
      %v685 = vshrl.u32 %v544, 16
      %v687 = vrot.slane %v685, 7
      %v688 = vrot.slane %v687, 4
      %v690 = vshrl.u32 %v545, 16
      %v692 = vrot.slane %v690, 7
      %v693 = vshll.u32 %v545, 16
      %v695 = vor.u32 %v692, %v693
      %v696 = vsel %vm551, %v688, %v695
      %v697 = vrot.slane %v692, 4
      %v699 = vshrl.u32 %v546, 16
      %v701 = vrot.slane %v699, 7
      %v702 = vshll.u32 %v546, 16
      %v704 = vor.u32 %v701, %v702
      %v705 = vsel %vm551, %v697, %v704
      %v707 = vshrl.u32 %v547, 16
      %v709 = vrot.slane %v707, 7
      %v710 = vrot.slane %v709, 4
      %v712 = vshrl.u32 %v548, 16
      %v714 = vrot.slane %v712, 7
      %v715 = vshll.u32 %v548, 16
      %v717 = vor.u32 %v714, %v715
      %v718 = vsel %vm551, %v710, %v717
      %v719 = vrot.slane %v714, 4
      %v721 = vshrl.u32 %v549, 16
      %v723 = vrot.slane %v721, 7
      %v724 = vshll.u32 %v549, 16
      %v726 = vor.u32 %v723, %v724
      %v727 = vsel %vm551, %v719, %v726
      %v728 = vld [vmem:[%s3] sm:$0xf]
      %v729 = vld [vmem:[%s3 + $0x4] sm:$0xf]
      %v730 = vld [vmem:[%s3 + $0x8] sm:$0xf]
      %v731 = vld [vmem:[%s3 + $0xc] sm:$0xf]
      %v732 = vld [vmem:[%s3 + $0x10] sm:$0xf]
      %v733 = vld [vmem:[%s3 + $0x14] sm:$0xf]
      %v734 = vld [vmem:[%s3 + $0x18] sm:$0xf]
      %v735 = vld [vmem:[%s3 + $0x1c] sm:$0xf]
      %v736 = vld [vmem:[%s3 + $0x20] sm:$0xf]
      %v737 = vld [vmem:[%s3 + $0x24] sm:$0xf]
      %v738 = vld [vmem:[%s3 + $0x28] sm:$0xf]
      %v739 = vld [vmem:[%s3 + $0x2c] sm:$0xf]
      %v740 = vld [vmem:[%s3 + $0x30] sm:$0xf]
      %v741 = vld [vmem:[%s3 + $0x34] sm:$0xf]
      %v742 = vld [vmem:[%s3 + $0x38] sm:$0xf]
      %v743 = vld [vmem:[%s3 + $0x3c] sm:$0xf]
      %s744 = scalar_lea.vmem %s3, 64
      %v745 = vld [vmem:[%s744] sm:$0xf]
      %v746 = vld [vmem:[%s744 + $0x4] sm:$0xf]
      %v747 = vld [vmem:[%s744 + $0x8] sm:$0xf]
      %v748 = vld [vmem:[%s744 + $0xc] sm:$0xf]
      %v749 = vld [vmem:[%s744 + $0x10] sm:$0xf]
      %v750 = vld [vmem:[%s744 + $0x14] sm:$0xf]
      %v751 = vld [vmem:[%s744 + $0x18] sm:$0xf]
      %v752 = vld [vmem:[%s744 + $0x1c] sm:$0xf]
      %v753 = vld [vmem:[%s744 + $0x20] sm:$0xf]
      %v754 = vld [vmem:[%s744 + $0x24] sm:$0xf]
      %v755 = vld [vmem:[%s744 + $0x28] sm:$0xf]
      %v756 = vld [vmem:[%s744 + $0x2c] sm:$0xf]
      %v757 = vld [vmem:[%s744 + $0x30] sm:$0xf]
      %v758 = vld [vmem:[%s744 + $0x34] sm:$0xf]
      %v759 = vld [vmem:[%s744 + $0x38] sm:$0xf]
      %v760 = vld [vmem:[%s744 + $0x3c] sm:$0xf]
      %v777 = vunpack.c.l.b16 %v527
      %v778 = vunpack.c.l.b16 %v528
      %v779 = vunpack.c.l.b16 %v530
      %v780 = vunpack.c.l.b16 %v531
      %v781 = vunpack.c.l.b16 %v533
      %v782 = vunpack.c.l.b16 %v534
      %v783 = vunpack.c.l.b16 %v536
      %v784 = vunpack.c.l.b16 %v537
      %v785 = vunpack.c.l.b16 %v539
      %v786 = vunpack.c.l.b16 %v540
      %v787 = vunpack.c.l.b16 %v542
      %v788 = vunpack.c.l.b16 %v543
      %v789 = vunpack.c.l.b16 %v545
      %v790 = vunpack.c.l.b16 %v546
      %v791 = vunpack.c.l.b16 %v548
      %v792 = vunpack.c.l.b16 %v549
      %v793 = vpack.c.b16 %v778, %v777
      %v794 = vpack.c.b16 %v780, %v779
      %v795 = vpack.c.b16 %v782, %v781
      %v796 = vpack.c.b16 %v784, %v783
      %v797 = vpack.c.b16 %v786, %v785
      %v798 = vpack.c.b16 %v788, %v787
      %v799 = vpack.c.b16 %v790, %v789
      %v800 = vpack.c.b16 %v792, %v791
      %v825 = vunpack.c.l.b16 %v745
      %v826 = vunpack.c.l.b16 %v746
      %v827 = vunpack.c.l.b16 %v747
      %v828 = vunpack.c.l.b16 %v748
      %v829 = vunpack.c.l.b16 %v749
      %v830 = vunpack.c.l.b16 %v750
      %v831 = vunpack.c.l.b16 %v751
      %v832 = vunpack.c.l.b16 %v752
      %v833 = vunpack.c.l.b16 %v753
      %v834 = vunpack.c.l.b16 %v754
      %v835 = vunpack.c.l.b16 %v755
      %v836 = vunpack.c.l.b16 %v756
      %v837 = vunpack.c.l.b16 %v757
      %v838 = vunpack.c.l.b16 %v758
      %v839 = vunpack.c.l.b16 %v759
      %v840 = vunpack.c.l.b16 %v760
      %v841 = vpack.c.b16 %v826, %v825
      %v842 = vpack.c.b16 %v828, %v827
      %v843 = vpack.c.b16 %v830, %v829
      %v844 = vpack.c.b16 %v832, %v831
      %v845 = vpack.c.b16 %v834, %v833
      %v846 = vpack.c.b16 %v836, %v835
      %v847 = vpack.c.b16 %v838, %v837
      %v848 = vpack.c.b16 %v840, %v839
      %857 = vmatpush.bf16.msra.mxu0 %v848
      %858 = vmatpush.bf16.msra.mxu0 %v847
      %859 = vmatpush.bf16.msra.mxu0 %v846
      %860 = vmatpush.bf16.msra.mxu0 %v845
      %861 = vmatpush.bf16.msra.mxu0 %v844
      %862 = vmatpush.bf16.msra.mxu0 %v843
      %863 = vmatpush.bf16.msra.mxu0 %v842
      %864 = vmatpush.bf16.msra.mxu0 %v841
      %865 = vmatmul.bf16.gmra.mxu0 %v793
      %v866 = vpop.f32.mrf.mxu0
      %v867 = vadd.f32 0.0, %v866
      %v868 = vpop.f32.mrf.mxu0
      %v869 = vadd.f32 0.0, %v868
      %870 = vmatmul.bf16.gmra.mxu0 %v794
      %v871 = vpop.f32.mrf.mxu0
      %v872 = vadd.f32 0.0, %v871
      %v873 = vpop.f32.mrf.mxu0
      %v874 = vadd.f32 0.0, %v873
      %875 = vmatmul.bf16.gmra.mxu0 %v795
      %v876 = vpop.f32.mrf.mxu0
      %v877 = vadd.f32 0.0, %v876
      %v878 = vpop.f32.mrf.mxu0
      %v879 = vadd.f32 0.0, %v878
      %880 = vmatmul.bf16.gmra.mxu0 %v796
      %v881 = vpop.f32.mrf.mxu0
      %v882 = vadd.f32 0.0, %v881
      %v883 = vpop.f32.mrf.mxu0
      %v884 = vadd.f32 0.0, %v883
      %885 = vmatmul.bf16.gmra.mxu0 %v797
      %v886 = vpop.f32.mrf.mxu0
      %v887 = vadd.f32 0.0, %v886
      %v888 = vpop.f32.mrf.mxu0
      %v889 = vadd.f32 0.0, %v888
      %890 = vmatmul.bf16.gmra.mxu0 %v798
      %v891 = vpop.f32.mrf.mxu0
      %v892 = vadd.f32 0.0, %v891
      %v893 = vpop.f32.mrf.mxu0
      %v894 = vadd.f32 0.0, %v893
      %895 = vmatmul.bf16.gmra.mxu0 %v799
      %v896 = vpop.f32.mrf.mxu0
      %v897 = vadd.f32 0.0, %v896
      %v898 = vpop.f32.mrf.mxu0
      %v899 = vadd.f32 0.0, %v898
      %900 = vmatmul.bf16.gmra.mxu0 %v800
      %v901 = vpop.f32.mrf.mxu0
      %v902 = vadd.f32 0.0, %v901
      %v903 = vpop.f32.mrf.mxu0
      %v904 = vadd.f32 0.0, %v903
      %905 = vdwg.mxu0
      %v906 = vunpack.c.l.b16 %v564
      %v907 = vunpack.c.l.b16 %v573
      %v908 = vunpack.c.l.b16 %v586
      %v909 = vunpack.c.l.b16 %v595
      %v910 = vunpack.c.l.b16 %v608
      %v911 = vunpack.c.l.b16 %v617
      %v912 = vunpack.c.l.b16 %v630
      %v913 = vunpack.c.l.b16 %v639
      %v914 = vunpack.c.l.b16 %v652
      %v915 = vunpack.c.l.b16 %v661
      %v916 = vunpack.c.l.b16 %v674
      %v917 = vunpack.c.l.b16 %v683
      %v918 = vunpack.c.l.b16 %v696
      %v919 = vunpack.c.l.b16 %v705
      %v920 = vunpack.c.l.b16 %v718
      %v921 = vunpack.c.l.b16 %v727
      %v922 = vpack.c.b16 %v907, %v906
      %v923 = vpack.c.b16 %v909, %v908
      %v924 = vpack.c.b16 %v911, %v910
      %v925 = vpack.c.b16 %v913, %v912
      %v926 = vpack.c.b16 %v915, %v914
      %v927 = vpack.c.b16 %v917, %v916
      %v928 = vpack.c.b16 %v919, %v918
      %v929 = vpack.c.b16 %v921, %v920
      %v954 = vunpack.c.l.b16 %v728
      %v955 = vunpack.c.l.b16 %v729
      %v956 = vunpack.c.l.b16 %v730
      %v957 = vunpack.c.l.b16 %v731
      %v958 = vunpack.c.l.b16 %v732
      %v959 = vunpack.c.l.b16 %v733
      %v960 = vunpack.c.l.b16 %v734
      %v961 = vunpack.c.l.b16 %v735
      %v962 = vunpack.c.l.b16 %v736
      %v963 = vunpack.c.l.b16 %v737
      %v964 = vunpack.c.l.b16 %v738
      %v965 = vunpack.c.l.b16 %v739
      %v966 = vunpack.c.l.b16 %v740
      %v967 = vunpack.c.l.b16 %v741
      %v968 = vunpack.c.l.b16 %v742
      %v969 = vunpack.c.l.b16 %v743
      %v970 = vpack.c.b16 %v955, %v954
      %v971 = vpack.c.b16 %v957, %v956
      %v972 = vpack.c.b16 %v959, %v958
      %v973 = vpack.c.b16 %v961, %v960
      %v974 = vpack.c.b16 %v963, %v962
      %v975 = vpack.c.b16 %v965, %v964
      %v976 = vpack.c.b16 %v967, %v966
      %v977 = vpack.c.b16 %v969, %v968
      %986 = vmatpush.bf16.msra.mxu0 %v977
      %987 = vmatpush.bf16.msra.mxu0 %v976
      %988 = vmatpush.bf16.msra.mxu0 %v975
      %989 = vmatpush.bf16.msra.mxu0 %v974
      %990 = vmatpush.bf16.msra.mxu0 %v973
      %991 = vmatpush.bf16.msra.mxu0 %v972
      %992 = vmatpush.bf16.msra.mxu0 %v971
      %993 = vmatpush.bf16.msra.mxu0 %v970
      %994 = vmatmul.bf16.gmra.mxu0 %v922
      %v995 = vpop.f32.mrf.mxu0
      %v996 = vadd.f32 %v867, %v995
      %v997 = vpop.f32.mrf.mxu0
      %v998 = vadd.f32 %v869, %v997
      %999 = vmatmul.bf16.gmra.mxu0 %v923
      %v1000 = vpop.f32.mrf.mxu0
      %v1001 = vadd.f32 %v872, %v1000
      %v1002 = vpop.f32.mrf.mxu0
      %v1003 = vadd.f32 %v874, %v1002
      %1004 = vmatmul.bf16.gmra.mxu0 %v924
      %v1005 = vpop.f32.mrf.mxu0
      %v1006 = vadd.f32 %v877, %v1005
      %v1007 = vpop.f32.mrf.mxu0
      %v1008 = vadd.f32 %v879, %v1007
      %1009 = vmatmul.bf16.gmra.mxu0 %v925
      %v1010 = vpop.f32.mrf.mxu0
      %v1011 = vadd.f32 %v882, %v1010
      %v1012 = vpop.f32.mrf.mxu0
      %v1013 = vadd.f32 %v884, %v1012
      %1014 = vmatmul.bf16.gmra.mxu0 %v926
      %v1015 = vpop.f32.mrf.mxu0
      %v1016 = vadd.f32 %v887, %v1015
      %v1017 = vpop.f32.mrf.mxu0
      %v1018 = vadd.f32 %v889, %v1017
      %1019 = vmatmul.bf16.gmra.mxu0 %v927
      %v1020 = vpop.f32.mrf.mxu0
      %v1021 = vadd.f32 %v892, %v1020
      %v1022 = vpop.f32.mrf.mxu0
      %v1023 = vadd.f32 %v894, %v1022
      %1024 = vmatmul.bf16.gmra.mxu0 %v928
      %v1025 = vpop.f32.mrf.mxu0
      %v1026 = vadd.f32 %v897, %v1025
      %v1027 = vpop.f32.mrf.mxu0
      %v1028 = vadd.f32 %v899, %v1027
      %1029 = vmatmul.bf16.gmra.mxu0 %v929
      %v1030 = vpop.f32.mrf.mxu0
      %v1031 = vadd.f32 %v902, %v1030
      %v1032 = vpop.f32.mrf.mxu0
      %v1033 = vadd.f32 %v904, %v1032
      %1034 = vdwg.mxu0
      %v1035 = vld [vmem:[#allocation2 + $0x4] sm:$0xf]
      %v1036 = vld [vmem:[#allocation2 + $0x8] sm:$0xf]
      %v1037 = vld [vmem:[#allocation2 + $0xc] sm:$0x1]
      %v1038 = vld [vmem:[#allocation2 + $0x14] sm:$0xf]
      %v1039 = vld [vmem:[#allocation2 + $0x18] sm:$0xf]
      %v1040 = vld [vmem:[#allocation2 + $0x1c] sm:$0x1]
      %v1041 = vld [vmem:[#allocation2 + $0x24] sm:$0xf]
      %v1042 = vld [vmem:[#allocation2 + $0x28] sm:$0xf]
      %v1043 = vld [vmem:[#allocation2 + $0x2c] sm:$0x1]
      %v1044 = vld [vmem:[#allocation2 + $0x34] sm:$0xf]
      %v1045 = vld [vmem:[#allocation2 + $0x38] sm:$0xf]
      %v1046 = vld [vmem:[#allocation2 + $0x3c] sm:$0x1]
      %v1047 = vld [vmem:[#allocation2 + $0x44] sm:$0xf]
      %v1048 = vld [vmem:[#allocation2 + $0x48] sm:$0xf]
      %v1049 = vld [vmem:[#allocation2 + $0x4c] sm:$0x1]
      %v1050 = vld [vmem:[#allocation2 + $0x54] sm:$0xf]
      %v1051 = vld [vmem:[#allocation2 + $0x58] sm:$0xf]
      %v1052 = vld [vmem:[#allocation2 + $0x5c] sm:$0x1]
      %v1053 = vld [vmem:[#allocation2 + $0x64] sm:$0xf]
      %v1054 = vld [vmem:[#allocation2 + $0x68] sm:$0xf]
      %v1055 = vld [vmem:[#allocation2 + $0x6c] sm:$0x1]
      %v1056 = vld [vmem:[#allocation2 + $0x74] sm:$0xf]
      %v1057 = vld [vmem:[#allocation2 + $0x78] sm:$0xf]
      %v1058 = vld [vmem:[#allocation2 + $0x7c] sm:$0x1]
      %vm1059 = vsmask.f32 3328
      %vm1060 = vsmask.f32 7440
      %vm1061 = vmor %vm1059, %vm1060
      %v1063 = vshrl.u32 %v1035, 16
      %v1065 = vrot.slane %v1063, 4
      %v1066 = vshll.u32 %v1035, 16
      %v1068 = vrot.slane %v1066, 5
      %v1069 = vor.u32 %v1065, %v1068
      %v1070 = vrot.slane %v1069, 4
      %v1072 = vshll.u32 %v1036, 16
      %v1074 = vrot.slane %v1072, 5
      %v1075 = vsel %vm1061, %v1070, %v1074
      %v1076 = vshrl.u32 %v1036, 16
      %v1078 = vrot.slane %v1076, 4
      %v1079 = vor.u32 %v1078, %v1074
      %v1080 = vrot.slane %v1079, 4
      %v1082 = vshll.u32 %v1037, 16
      %v1084 = vrot.slane %v1082, 5
      %v1085 = vsel %vm1061, %v1080, %v1084
      %v1087 = vshrl.u32 %v1038, 16
      %v1089 = vrot.slane %v1087, 4
      %v1090 = vshll.u32 %v1038, 16
      %v1092 = vrot.slane %v1090, 5
      %v1093 = vor.u32 %v1089, %v1092
      %v1094 = vrot.slane %v1093, 4
      %v1096 = vshll.u32 %v1039, 16
      %v1098 = vrot.slane %v1096, 5
      %v1099 = vsel %vm1061, %v1094, %v1098
      %v1100 = vshrl.u32 %v1039, 16
      %v1102 = vrot.slane %v1100, 4
      %v1103 = vor.u32 %v1102, %v1098
      %v1104 = vrot.slane %v1103, 4
      %v1106 = vshll.u32 %v1040, 16
      %v1108 = vrot.slane %v1106, 5
      %v1109 = vsel %vm1061, %v1104, %v1108
      %v1111 = vshrl.u32 %v1041, 16
      %v1113 = vrot.slane %v1111, 4
      %v1114 = vshll.u32 %v1041, 16
      %v1116 = vrot.slane %v1114, 5
      %v1117 = vor.u32 %v1113, %v1116
      %v1118 = vrot.slane %v1117, 4
      %v1120 = vshll.u32 %v1042, 16
      %v1122 = vrot.slane %v1120, 5
      %v1123 = vsel %vm1061, %v1118, %v1122
      %v1124 = vshrl.u32 %v1042, 16
      %v1126 = vrot.slane %v1124, 4
      %v1127 = vor.u32 %v1126, %v1122
      %v1128 = vrot.slane %v1127, 4
      %v1130 = vshll.u32 %v1043, 16
      %v1132 = vrot.slane %v1130, 5
      %v1133 = vsel %vm1061, %v1128, %v1132
      %v1135 = vshrl.u32 %v1044, 16
      %v1137 = vrot.slane %v1135, 4
      %v1138 = vshll.u32 %v1044, 16
      %v1140 = vrot.slane %v1138, 5
      %v1141 = vor.u32 %v1137, %v1140
      %v1142 = vrot.slane %v1141, 4
      %v1144 = vshll.u32 %v1045, 16
      %v1146 = vrot.slane %v1144, 5
      %v1147 = vsel %vm1061, %v1142, %v1146
      %v1148 = vshrl.u32 %v1045, 16
      %v1150 = vrot.slane %v1148, 4
      %v1151 = vor.u32 %v1150, %v1146
      %v1152 = vrot.slane %v1151, 4
      %v1154 = vshll.u32 %v1046, 16
      %v1156 = vrot.slane %v1154, 5
      %v1157 = vsel %vm1061, %v1152, %v1156
      %v1159 = vshrl.u32 %v1047, 16
      %v1161 = vrot.slane %v1159, 4
      %v1162 = vshll.u32 %v1047, 16
      %v1164 = vrot.slane %v1162, 5
      %v1165 = vor.u32 %v1161, %v1164
      %v1166 = vrot.slane %v1165, 4
      %v1168 = vshll.u32 %v1048, 16
      %v1170 = vrot.slane %v1168, 5
      %v1171 = vsel %vm1061, %v1166, %v1170
      %v1172 = vshrl.u32 %v1048, 16
      %v1174 = vrot.slane %v1172, 4
      %v1175 = vor.u32 %v1174, %v1170
      %v1176 = vrot.slane %v1175, 4
      %v1178 = vshll.u32 %v1049, 16
      %v1180 = vrot.slane %v1178, 5
      %v1181 = vsel %vm1061, %v1176, %v1180
      %v1183 = vshrl.u32 %v1050, 16
      %v1185 = vrot.slane %v1183, 4
      %v1186 = vshll.u32 %v1050, 16
      %v1188 = vrot.slane %v1186, 5
      %v1189 = vor.u32 %v1185, %v1188
      %v1190 = vrot.slane %v1189, 4
      %v1192 = vshll.u32 %v1051, 16
      %v1194 = vrot.slane %v1192, 5
      %v1195 = vsel %vm1061, %v1190, %v1194
      %v1196 = vshrl.u32 %v1051, 16
      %v1198 = vrot.slane %v1196, 4
      %v1199 = vor.u32 %v1198, %v1194
      %v1200 = vrot.slane %v1199, 4
      %v1202 = vshll.u32 %v1052, 16
      %v1204 = vrot.slane %v1202, 5
      %v1205 = vsel %vm1061, %v1200, %v1204
      %v1207 = vshrl.u32 %v1053, 16
      %v1209 = vrot.slane %v1207, 4
      %v1210 = vshll.u32 %v1053, 16
      %v1212 = vrot.slane %v1210, 5
      %v1213 = vor.u32 %v1209, %v1212
      %v1214 = vrot.slane %v1213, 4
      %v1216 = vshll.u32 %v1054, 16
      %v1218 = vrot.slane %v1216, 5
      %v1219 = vsel %vm1061, %v1214, %v1218
      %v1220 = vshrl.u32 %v1054, 16
      %v1222 = vrot.slane %v1220, 4
      %v1223 = vor.u32 %v1222, %v1218
      %v1224 = vrot.slane %v1223, 4
      %v1226 = vshll.u32 %v1055, 16
      %v1228 = vrot.slane %v1226, 5
      %v1229 = vsel %vm1061, %v1224, %v1228
      %v1231 = vshrl.u32 %v1056, 16
      %v1233 = vrot.slane %v1231, 4
      %v1234 = vshll.u32 %v1056, 16
      %v1236 = vrot.slane %v1234, 5
      %v1237 = vor.u32 %v1233, %v1236
      %v1238 = vrot.slane %v1237, 4
      %v1240 = vshll.u32 %v1057, 16
      %v1242 = vrot.slane %v1240, 5
      %v1243 = vsel %vm1061, %v1238, %v1242
      %v1244 = vshrl.u32 %v1057, 16
      %v1246 = vrot.slane %v1244, 4
      %v1247 = vor.u32 %v1246, %v1242
      %v1248 = vrot.slane %v1247, 4
      %v1250 = vshll.u32 %v1058, 16
      %v1252 = vrot.slane %v1250, 5
      %v1253 = vsel %vm1061, %v1248, %v1252
      %s1254 = scalar_lea.vmem %s3, 128
      %v1255 = vld [vmem:[%s1254] sm:$0xf]
      %v1256 = vld [vmem:[%s1254 + $0x4] sm:$0xf]
      %v1257 = vld [vmem:[%s1254 + $0x8] sm:$0xf]
      %v1258 = vld [vmem:[%s1254 + $0xc] sm:$0xf]
      %v1259 = vld [vmem:[%s1254 + $0x10] sm:$0xf]
      %v1260 = vld [vmem:[%s1254 + $0x14] sm:$0xf]
      %v1261 = vld [vmem:[%s1254 + $0x18] sm:$0xf]
      %v1262 = vld [vmem:[%s1254 + $0x1c] sm:$0xf]
      %v1263 = vld [vmem:[%s1254 + $0x20] sm:$0xf]
      %v1264 = vld [vmem:[%s1254 + $0x24] sm:$0xf]
      %v1265 = vld [vmem:[%s1254 + $0x28] sm:$0xf]
      %v1266 = vld [vmem:[%s1254 + $0x2c] sm:$0xf]
      %v1267 = vld [vmem:[%s1254 + $0x30] sm:$0xf]
      %v1268 = vld [vmem:[%s1254 + $0x34] sm:$0xf]
      %v1269 = vld [vmem:[%s1254 + $0x38] sm:$0xf]
      %v1270 = vld [vmem:[%s1254 + $0x3c] sm:$0xf]
      %v1271 = vunpack.c.l.b16 %v1075
      %v1272 = vunpack.c.l.b16 %v1085
      %v1273 = vunpack.c.l.b16 %v1099
      %v1274 = vunpack.c.l.b16 %v1109
      %v1275 = vunpack.c.l.b16 %v1123
      %v1276 = vunpack.c.l.b16 %v1133
      %v1277 = vunpack.c.l.b16 %v1147
      %v1278 = vunpack.c.l.b16 %v1157
      %v1279 = vunpack.c.l.b16 %v1171
      %v1280 = vunpack.c.l.b16 %v1181
      %v1281 = vunpack.c.l.b16 %v1195
      %v1282 = vunpack.c.l.b16 %v1205
      %v1283 = vunpack.c.l.b16 %v1219
      %v1284 = vunpack.c.l.b16 %v1229
      %v1285 = vunpack.c.l.b16 %v1243
      %v1286 = vunpack.c.l.b16 %v1253
      %v1287 = vpack.c.b16 %v1272, %v1271
      %v1288 = vpack.c.b16 %v1274, %v1273
      %v1289 = vpack.c.b16 %v1276, %v1275
      %v1290 = vpack.c.b16 %v1278, %v1277
      %v1291 = vpack.c.b16 %v1280, %v1279
      %v1292 = vpack.c.b16 %v1282, %v1281
      %v1293 = vpack.c.b16 %v1284, %v1283
      %v1294 = vpack.c.b16 %v1286, %v1285
      %v1319 = vunpack.c.l.b16 %v1255
      %v1320 = vunpack.c.l.b16 %v1256
      %v1321 = vunpack.c.l.b16 %v1257
      %v1322 = vunpack.c.l.b16 %v1258
      %v1323 = vunpack.c.l.b16 %v1259
      %v1324 = vunpack.c.l.b16 %v1260
      %v1325 = vunpack.c.l.b16 %v1261
      %v1326 = vunpack.c.l.b16 %v1262
      %v1327 = vunpack.c.l.b16 %v1263
      %v1328 = vunpack.c.l.b16 %v1264
      %v1329 = vunpack.c.l.b16 %v1265
      %v1330 = vunpack.c.l.b16 %v1266
      %v1331 = vunpack.c.l.b16 %v1267
      %v1332 = vunpack.c.l.b16 %v1268
      %v1333 = vunpack.c.l.b16 %v1269
      %v1334 = vunpack.c.l.b16 %v1270
      %v1335 = vpack.c.b16 %v1320, %v1319
      %v1336 = vpack.c.b16 %v1322, %v1321
      %v1337 = vpack.c.b16 %v1324, %v1323
      %v1338 = vpack.c.b16 %v1326, %v1325
      %v1339 = vpack.c.b16 %v1328, %v1327
      %v1340 = vpack.c.b16 %v1330, %v1329
      %v1341 = vpack.c.b16 %v1332, %v1331
      %v1342 = vpack.c.b16 %v1334, %v1333
      %1351 = vmatpush.bf16.msra.mxu0 %v1342
      %1352 = vmatpush.bf16.msra.mxu0 %v1341
      %1353 = vmatpush.bf16.msra.mxu0 %v1340
      %1354 = vmatpush.bf16.msra.mxu0 %v1339
      %1355 = vmatpush.bf16.msra.mxu0 %v1338
      %1356 = vmatpush.bf16.msra.mxu0 %v1337
      %1357 = vmatpush.bf16.msra.mxu0 %v1336
      %1358 = vmatpush.bf16.msra.mxu0 %v1335
      %1359 = vmatmul.bf16.gmra.mxu0 %v1287
      %v1360 = vpop.f32.mrf.mxu0
      %v1361 = vadd.f32 0.0, %v1360
      %v1362 = vpop.f32.mrf.mxu0
      %v1363 = vadd.f32 0.0, %v1362
      %1364 = vmatmul.bf16.gmra.mxu0 %v1288
      %v1365 = vpop.f32.mrf.mxu0
      %v1366 = vadd.f32 0.0, %v1365
      %v1367 = vpop.f32.mrf.mxu0
      %v1368 = vadd.f32 0.0, %v1367
      %1369 = vmatmul.bf16.gmra.mxu0 %v1289
      %v1370 = vpop.f32.mrf.mxu0
      %v1371 = vadd.f32 0.0, %v1370
      %v1372 = vpop.f32.mrf.mxu0
      %v1373 = vadd.f32 0.0, %v1372
      %1374 = vmatmul.bf16.gmra.mxu0 %v1290
      %v1375 = vpop.f32.mrf.mxu0
      %v1376 = vadd.f32 0.0, %v1375
      %v1377 = vpop.f32.mrf.mxu0
      %v1378 = vadd.f32 0.0, %v1377
      %1379 = vmatmul.bf16.gmra.mxu0 %v1291
      %v1380 = vpop.f32.mrf.mxu0
      %v1381 = vadd.f32 0.0, %v1380
      %v1382 = vpop.f32.mrf.mxu0
      %v1383 = vadd.f32 0.0, %v1382
      %1384 = vmatmul.bf16.gmra.mxu0 %v1292
      %v1385 = vpop.f32.mrf.mxu0
      %v1386 = vadd.f32 0.0, %v1385
      %v1387 = vpop.f32.mrf.mxu0
      %v1388 = vadd.f32 0.0, %v1387
      %1389 = vmatmul.bf16.gmra.mxu0 %v1293
      %v1390 = vpop.f32.mrf.mxu0
      %v1391 = vadd.f32 0.0, %v1390
      %v1392 = vpop.f32.mrf.mxu0
      %v1393 = vadd.f32 0.0, %v1392
      %1394 = vmatmul.bf16.gmra.mxu0 %v1294
      %v1395 = vpop.f32.mrf.mxu0
      %v1396 = vadd.f32 0.0, %v1395
      %v1397 = vpop.f32.mrf.mxu0
      %v1398 = vadd.f32 0.0, %v1397
      %1399 = vdwg.mxu0
      %v1400 = vadd.f32 %v996, %v1361
      %v1401 = vadd.f32 %v998, %v1363
      %v1402 = vadd.f32 %v1001, %v1366
      %v1403 = vadd.f32 %v1003, %v1368
      %v1404 = vadd.f32 %v1006, %v1371
      %v1405 = vadd.f32 %v1008, %v1373
      %v1406 = vadd.f32 %v1011, %v1376
      %v1407 = vadd.f32 %v1013, %v1378
      %v1408 = vadd.f32 %v1016, %v1381
      %v1409 = vadd.f32 %v1018, %v1383
      %v1410 = vadd.f32 %v1021, %v1386
      %v1411 = vadd.f32 %v1023, %v1388
      %v1412 = vadd.f32 %v1026, %v1391
      %v1413 = vadd.f32 %v1028, %v1393
      %v1414 = vadd.f32 %v1031, %v1396
      %v1415 = vadd.f32 %v1033, %v1398
      %v1416 = vld [vmem:[%s480] sm:$0x8]
      %v1417 = vld [vmem:[%s480 + $0x4] sm:$0xf]
      %v1418 = vld [vmem:[%s480 + $0x8] sm:$0xf]
      %v1419 = vld [vmem:[%s480 + $0x10] sm:$0x8]
      %v1420 = vld [vmem:[%s480 + $0x14] sm:$0xf]
      %v1421 = vld [vmem:[%s480 + $0x18] sm:$0xf]
      %v1422 = vld [vmem:[%s480 + $0x20] sm:$0x8]
      %v1423 = vld [vmem:[%s480 + $0x24] sm:$0xf]
      %v1424 = vld [vmem:[%s480 + $0x28] sm:$0xf]
      %v1425 = vld [vmem:[%s480 + $0x30] sm:$0x8]
      %v1426 = vld [vmem:[%s480 + $0x34] sm:$0xf]
      %v1427 = vld [vmem:[%s480 + $0x38] sm:$0xf]
      %v1428 = vld [vmem:[%s480 + $0x40] sm:$0x8]
      %v1429 = vld [vmem:[%s480 + $0x44] sm:$0xf]
      %v1430 = vld [vmem:[%s480 + $0x48] sm:$0xf]
      %v1431 = vld [vmem:[%s480 + $0x50] sm:$0x8]
      %v1432 = vld [vmem:[%s480 + $0x54] sm:$0xf]
      %v1433 = vld [vmem:[%s480 + $0x58] sm:$0xf]
      %v1434 = vld [vmem:[%s480 + $0x60] sm:$0x8]
      %v1435 = vld [vmem:[%s480 + $0x64] sm:$0xf]
      %v1436 = vld [vmem:[%s480 + $0x68] sm:$0xf]
      %v1437 = vld [vmem:[%s480 + $0x70] sm:$0x8]
      %v1438 = vld [vmem:[%s480 + $0x74] sm:$0xf]
      %v1439 = vld [vmem:[%s480 + $0x78] sm:$0xf]
      %v1441 = vshrl.u32 %v1416, 16
      %v1443 = vrot.slane %v1441, 7
      %v1444 = vrot.slane %v1443, 4
      %v1446 = vshrl.u32 %v1417, 16
      %v1448 = vrot.slane %v1446, 7
      %v1449 = vshll.u32 %v1417, 16
      %v1451 = vor.u32 %v1448, %v1449
      %v1452 = vsel %vm551, %v1444, %v1451
      %v1453 = vrot.slane %v1448, 4
      %v1455 = vshrl.u32 %v1418, 16
      %v1457 = vrot.slane %v1455, 7
      %v1458 = vshll.u32 %v1418, 16
      %v1460 = vor.u32 %v1457, %v1458
      %v1461 = vsel %vm551, %v1453, %v1460
      %v1463 = vshrl.u32 %v1419, 16
      %v1465 = vrot.slane %v1463, 7
      %v1466 = vrot.slane %v1465, 4
      %v1468 = vshrl.u32 %v1420, 16
      %v1470 = vrot.slane %v1468, 7
      %v1471 = vshll.u32 %v1420, 16
      %v1473 = vor.u32 %v1470, %v1471
      %v1474 = vsel %vm551, %v1466, %v1473
      %v1475 = vrot.slane %v1470, 4
      %v1477 = vshrl.u32 %v1421, 16
      %v1479 = vrot.slane %v1477, 7
      %v1480 = vshll.u32 %v1421, 16
      %v1482 = vor.u32 %v1479, %v1480
      %v1483 = vsel %vm551, %v1475, %v1482
      %v1485 = vshrl.u32 %v1422, 16
      %v1487 = vrot.slane %v1485, 7
      %v1488 = vrot.slane %v1487, 4
      %v1490 = vshrl.u32 %v1423, 16
      %v1492 = vrot.slane %v1490, 7
      %v1493 = vshll.u32 %v1423, 16
      %v1495 = vor.u32 %v1492, %v1493
      %v1496 = vsel %vm551, %v1488, %v1495
      %v1497 = vrot.slane %v1492, 4
      %v1499 = vshrl.u32 %v1424, 16
      %v1501 = vrot.slane %v1499, 7
      %v1502 = vshll.u32 %v1424, 16
      %v1504 = vor.u32 %v1501, %v1502
      %v1505 = vsel %vm551, %v1497, %v1504
      %v1507 = vshrl.u32 %v1425, 16
      %v1509 = vrot.slane %v1507, 7
      %v1510 = vrot.slane %v1509, 4
      %v1512 = vshrl.u32 %v1426, 16
      %v1514 = vrot.slane %v1512, 7
      %v1515 = vshll.u32 %v1426, 16
      %v1517 = vor.u32 %v1514, %v1515
      %v1518 = vsel %vm551, %v1510, %v1517
      %v1519 = vrot.slane %v1514, 4
      %v1521 = vshrl.u32 %v1427, 16
      %v1523 = vrot.slane %v1521, 7
      %v1524 = vshll.u32 %v1427, 16
      %v1526 = vor.u32 %v1523, %v1524
      %v1527 = vsel %vm551, %v1519, %v1526
      %v1529 = vshrl.u32 %v1428, 16
      %v1531 = vrot.slane %v1529, 7
      %v1532 = vrot.slane %v1531, 4
      %v1534 = vshrl.u32 %v1429, 16
      %v1536 = vrot.slane %v1534, 7
      %v1537 = vshll.u32 %v1429, 16
      %v1539 = vor.u32 %v1536, %v1537
      %v1540 = vsel %vm551, %v1532, %v1539
      %v1541 = vrot.slane %v1536, 4
      %v1543 = vshrl.u32 %v1430, 16
      %v1545 = vrot.slane %v1543, 7
      %v1546 = vshll.u32 %v1430, 16
      %v1548 = vor.u32 %v1545, %v1546
      %v1549 = vsel %vm551, %v1541, %v1548
      %v1551 = vshrl.u32 %v1431, 16
      %v1553 = vrot.slane %v1551, 7
      %v1554 = vrot.slane %v1553, 4
      %v1556 = vshrl.u32 %v1432, 16
      %v1558 = vrot.slane %v1556, 7
      %v1559 = vshll.u32 %v1432, 16
      %v1561 = vor.u32 %v1558, %v1559
      %v1562 = vsel %vm551, %v1554, %v1561
      %v1563 = vrot.slane %v1558, 4
      %v1565 = vshrl.u32 %v1433, 16
      %v1567 = vrot.slane %v1565, 7
      %v1568 = vshll.u32 %v1433, 16
      %v1570 = vor.u32 %v1567, %v1568
      %v1571 = vsel %vm551, %v1563, %v1570
      %v1573 = vshrl.u32 %v1434, 16
      %v1575 = vrot.slane %v1573, 7
      %v1576 = vrot.slane %v1575, 4
      %v1578 = vshrl.u32 %v1435, 16
      %v1580 = vrot.slane %v1578, 7
      %v1581 = vshll.u32 %v1435, 16
      %v1583 = vor.u32 %v1580, %v1581
      %v1584 = vsel %vm551, %v1576, %v1583
      %v1585 = vrot.slane %v1580, 4
      %v1587 = vshrl.u32 %v1436, 16
      %v1589 = vrot.slane %v1587, 7
      %v1590 = vshll.u32 %v1436, 16
      %v1592 = vor.u32 %v1589, %v1590
      %v1593 = vsel %vm551, %v1585, %v1592
      %v1595 = vshrl.u32 %v1437, 16
      %v1597 = vrot.slane %v1595, 7
      %v1598 = vrot.slane %v1597, 4
      %v1600 = vshrl.u32 %v1438, 16
      %v1602 = vrot.slane %v1600, 7
      %v1603 = vshll.u32 %v1438, 16
      %v1605 = vor.u32 %v1602, %v1603
      %v1606 = vsel %vm551, %v1598, %v1605
      %v1607 = vrot.slane %v1602, 4
      %v1609 = vshrl.u32 %v1439, 16
      %v1611 = vrot.slane %v1609, 7
      %v1612 = vshll.u32 %v1439, 16
      %v1614 = vor.u32 %v1611, %v1612
      %v1615 = vsel %vm551, %v1607, %v1614
      %s1616 = scalar_lea.vmem %s3, 192
      %v1617 = vld [vmem:[%s1616] sm:$0xf]
      %v1618 = vld [vmem:[%s1616 + $0x4] sm:$0xf]
      %v1619 = vld [vmem:[%s1616 + $0x8] sm:$0xf]
      %v1620 = vld [vmem:[%s1616 + $0xc] sm:$0xf]
      %v1621 = vld [vmem:[%s1616 + $0x10] sm:$0xf]
      %v1622 = vld [vmem:[%s1616 + $0x14] sm:$0xf]
      %v1623 = vld [vmem:[%s1616 + $0x18] sm:$0xf]
      %v1624 = vld [vmem:[%s1616 + $0x1c] sm:$0xf]
      %v1625 = vld [vmem:[%s1616 + $0x20] sm:$0xf]
      %v1626 = vld [vmem:[%s1616 + $0x24] sm:$0xf]
      %v1627 = vld [vmem:[%s1616 + $0x28] sm:$0xf]
      %v1628 = vld [vmem:[%s1616 + $0x2c] sm:$0xf]
      %v1629 = vld [vmem:[%s1616 + $0x30] sm:$0xf]
      %v1630 = vld [vmem:[%s1616 + $0x34] sm:$0xf]
      %v1631 = vld [vmem:[%s1616 + $0x38] sm:$0xf]
      %v1632 = vld [vmem:[%s1616 + $0x3c] sm:$0xf]
      %v1633 = vunpack.c.l.b16 %v1452
      %v1634 = vunpack.c.l.b16 %v1461
      %v1635 = vunpack.c.l.b16 %v1474
      %v1636 = vunpack.c.l.b16 %v1483
      %v1637 = vunpack.c.l.b16 %v1496
      %v1638 = vunpack.c.l.b16 %v1505
      %v1639 = vunpack.c.l.b16 %v1518
      %v1640 = vunpack.c.l.b16 %v1527
      %v1641 = vunpack.c.l.b16 %v1540
      %v1642 = vunpack.c.l.b16 %v1549
      %v1643 = vunpack.c.l.b16 %v1562
      %v1644 = vunpack.c.l.b16 %v1571
      %v1645 = vunpack.c.l.b16 %v1584
      %v1646 = vunpack.c.l.b16 %v1593
      %v1647 = vunpack.c.l.b16 %v1606
      %v1648 = vunpack.c.l.b16 %v1615
      %v1649 = vpack.c.b16 %v1634, %v1633
      %v1650 = vpack.c.b16 %v1636, %v1635
      %v1651 = vpack.c.b16 %v1638, %v1637
      %v1652 = vpack.c.b16 %v1640, %v1639
      %v1653 = vpack.c.b16 %v1642, %v1641
      %v1654 = vpack.c.b16 %v1644, %v1643
      %v1655 = vpack.c.b16 %v1646, %v1645
      %v1656 = vpack.c.b16 %v1648, %v1647
      %v1681 = vunpack.c.l.b16 %v1617
      %v1682 = vunpack.c.l.b16 %v1618
      %v1683 = vunpack.c.l.b16 %v1619
      %v1684 = vunpack.c.l.b16 %v1620
      %v1685 = vunpack.c.l.b16 %v1621
      %v1686 = vunpack.c.l.b16 %v1622
      %v1687 = vunpack.c.l.b16 %v1623
      %v1688 = vunpack.c.l.b16 %v1624
      %v1689 = vunpack.c.l.b16 %v1625
      %v1690 = vunpack.c.l.b16 %v1626
      %v1691 = vunpack.c.l.b16 %v1627
      %v1692 = vunpack.c.l.b16 %v1628
      %v1693 = vunpack.c.l.b16 %v1629
      %v1694 = vunpack.c.l.b16 %v1630
      %v1695 = vunpack.c.l.b16 %v1631
      %v1696 = vunpack.c.l.b16 %v1632
      %v1697 = vpack.c.b16 %v1682, %v1681
      %v1698 = vpack.c.b16 %v1684, %v1683
      %v1699 = vpack.c.b16 %v1686, %v1685
      %v1700 = vpack.c.b16 %v1688, %v1687
      %v1701 = vpack.c.b16 %v1690, %v1689
      %v1702 = vpack.c.b16 %v1692, %v1691
      %v1703 = vpack.c.b16 %v1694, %v1693
      %v1704 = vpack.c.b16 %v1696, %v1695
      %1713 = vmatpush.bf16.msra.mxu0 %v1704
      %1714 = vmatpush.bf16.msra.mxu0 %v1703
      %1715 = vmatpush.bf16.msra.mxu0 %v1702
      %1716 = vmatpush.bf16.msra.mxu0 %v1701
      %1717 = vmatpush.bf16.msra.mxu0 %v1700
      %1718 = vmatpush.bf16.msra.mxu0 %v1699
      %1719 = vmatpush.bf16.msra.mxu0 %v1698
      %1720 = vmatpush.bf16.msra.mxu0 %v1697
      %1721 = vmatmul.bf16.gmra.mxu0 %v1649
      %v1722 = vpop.f32.mrf.mxu0
      %v1723 = vadd.f32 0.0, %v1722
      %v1724 = vpop.f32.mrf.mxu0
      %v1725 = vadd.f32 0.0, %v1724
      %1726 = vmatmul.bf16.gmra.mxu0 %v1650
      %v1727 = vpop.f32.mrf.mxu0
      %v1728 = vadd.f32 0.0, %v1727
      %v1729 = vpop.f32.mrf.mxu0
      %v1730 = vadd.f32 0.0, %v1729
      %1731 = vmatmul.bf16.gmra.mxu0 %v1651
      %v1732 = vpop.f32.mrf.mxu0
      %v1733 = vadd.f32 0.0, %v1732
      %v1734 = vpop.f32.mrf.mxu0
      %v1735 = vadd.f32 0.0, %v1734
      %1736 = vmatmul.bf16.gmra.mxu0 %v1652
      %v1737 = vpop.f32.mrf.mxu0
      %v1738 = vadd.f32 0.0, %v1737
      %v1739 = vpop.f32.mrf.mxu0
      %v1740 = vadd.f32 0.0, %v1739
      %1741 = vmatmul.bf16.gmra.mxu0 %v1653
      %v1742 = vpop.f32.mrf.mxu0
      %v1743 = vadd.f32 0.0, %v1742
      %v1744 = vpop.f32.mrf.mxu0
      %v1745 = vadd.f32 0.0, %v1744
      %1746 = vmatmul.bf16.gmra.mxu0 %v1654
      %v1747 = vpop.f32.mrf.mxu0
      %v1748 = vadd.f32 0.0, %v1747
      %v1749 = vpop.f32.mrf.mxu0
      %v1750 = vadd.f32 0.0, %v1749
      %1751 = vmatmul.bf16.gmra.mxu0 %v1655
      %v1752 = vpop.f32.mrf.mxu0
      %v1753 = vadd.f32 0.0, %v1752
      %v1754 = vpop.f32.mrf.mxu0
      %v1755 = vadd.f32 0.0, %v1754
      %1756 = vmatmul.bf16.gmra.mxu0 %v1656
      %v1757 = vpop.f32.mrf.mxu0
      %v1758 = vadd.f32 0.0, %v1757
      %v1759 = vpop.f32.mrf.mxu0
      %v1760 = vadd.f32 0.0, %v1759
      %1761 = vdwg.mxu0
      %v1762 = vadd.f32 %v1400, %v1723
      %v1763 = vadd.f32 %v1401, %v1725
      %v1764 = vadd.f32 %v1402, %v1728
      %v1765 = vadd.f32 %v1403, %v1730
      %v1766 = vadd.f32 %v1404, %v1733
      %v1767 = vadd.f32 %v1405, %v1735
      %v1768 = vadd.f32 %v1406, %v1738
      %v1769 = vadd.f32 %v1407, %v1740
      %v1770 = vadd.f32 %v1408, %v1743
      %v1771 = vadd.f32 %v1409, %v1745
      %v1772 = vadd.f32 %v1410, %v1748
      %v1773 = vadd.f32 %v1411, %v1750
      %v1774 = vadd.f32 %v1412, %v1753
      %v1775 = vadd.f32 %v1413, %v1755
      %v1776 = vadd.f32 %v1414, %v1758
      %v1777 = vadd.f32 %v1415, %v1760
      %s1778 = scalar_lea.vmem %s3, 256
      %v1779 = vld [vmem:[%s1778] sm:$0xf]
      %v1780 = vld [vmem:[%s1778 + $0x4] sm:$0xf]
      %v1781 = vld [vmem:[%s1778 + $0x8] sm:$0xf]
      %v1782 = vld [vmem:[%s1778 + $0xc] sm:$0xf]
      %v1783 = vld [vmem:[%s1778 + $0x10] sm:$0xf]
      %v1784 = vld [vmem:[%s1778 + $0x14] sm:$0xf]
      %v1785 = vld [vmem:[%s1778 + $0x18] sm:$0xf]
      %v1786 = vld [vmem:[%s1778 + $0x1c] sm:$0xf]
      %v1787 = vld [vmem:[%s1778 + $0x20] sm:$0xf]
      %v1788 = vld [vmem:[%s1778 + $0x24] sm:$0xf]
      %v1789 = vld [vmem:[%s1778 + $0x28] sm:$0xf]
      %v1790 = vld [vmem:[%s1778 + $0x2c] sm:$0xf]
      %v1791 = vld [vmem:[%s1778 + $0x30] sm:$0xf]
      %v1792 = vld [vmem:[%s1778 + $0x34] sm:$0xf]
      %v1793 = vld [vmem:[%s1778 + $0x38] sm:$0xf]
      %v1794 = vld [vmem:[%s1778 + $0x3c] sm:$0xf]
      %v1811 = vunpack.c.l.b16 %v1417
      %v1812 = vunpack.c.l.b16 %v1418
      %v1813 = vunpack.c.l.b16 %v1420
      %v1814 = vunpack.c.l.b16 %v1421
      %v1815 = vunpack.c.l.b16 %v1423
      %v1816 = vunpack.c.l.b16 %v1424
      %v1817 = vunpack.c.l.b16 %v1426
      %v1818 = vunpack.c.l.b16 %v1427
      %v1819 = vunpack.c.l.b16 %v1429
      %v1820 = vunpack.c.l.b16 %v1430
      %v1821 = vunpack.c.l.b16 %v1432
      %v1822 = vunpack.c.l.b16 %v1433
      %v1823 = vunpack.c.l.b16 %v1435
      %v1824 = vunpack.c.l.b16 %v1436
      %v1825 = vunpack.c.l.b16 %v1438
      %v1826 = vunpack.c.l.b16 %v1439
      %v1827 = vpack.c.b16 %v1812, %v1811
      %v1828 = vpack.c.b16 %v1814, %v1813
      %v1829 = vpack.c.b16 %v1816, %v1815
      %v1830 = vpack.c.b16 %v1818, %v1817
      %v1831 = vpack.c.b16 %v1820, %v1819
      %v1832 = vpack.c.b16 %v1822, %v1821
      %v1833 = vpack.c.b16 %v1824, %v1823
      %v1834 = vpack.c.b16 %v1826, %v1825
      %v1859 = vunpack.c.l.b16 %v1779
      %v1860 = vunpack.c.l.b16 %v1780
      %v1861 = vunpack.c.l.b16 %v1781
      %v1862 = vunpack.c.l.b16 %v1782
      %v1863 = vunpack.c.l.b16 %v1783
      %v1864 = vunpack.c.l.b16 %v1784
      %v1865 = vunpack.c.l.b16 %v1785
      %v1866 = vunpack.c.l.b16 %v1786
      %v1867 = vunpack.c.l.b16 %v1787
      %v1868 = vunpack.c.l.b16 %v1788
      %v1869 = vunpack.c.l.b16 %v1789
      %v1870 = vunpack.c.l.b16 %v1790
      %v1871 = vunpack.c.l.b16 %v1791
      %v1872 = vunpack.c.l.b16 %v1792
      %v1873 = vunpack.c.l.b16 %v1793
      %v1874 = vunpack.c.l.b16 %v1794
      %v1875 = vpack.c.b16 %v1860, %v1859
      %v1876 = vpack.c.b16 %v1862, %v1861
      %v1877 = vpack.c.b16 %v1864, %v1863
      %v1878 = vpack.c.b16 %v1866, %v1865
      %v1879 = vpack.c.b16 %v1868, %v1867
      %v1880 = vpack.c.b16 %v1870, %v1869
      %v1881 = vpack.c.b16 %v1872, %v1871
      %v1882 = vpack.c.b16 %v1874, %v1873
      %1891 = vmatpush.bf16.msra.mxu0 %v1882
      %1892 = vmatpush.bf16.msra.mxu0 %v1881
      %1893 = vmatpush.bf16.msra.mxu0 %v1880
      %1894 = vmatpush.bf16.msra.mxu0 %v1879
      %1895 = vmatpush.bf16.msra.mxu0 %v1878
      %1896 = vmatpush.bf16.msra.mxu0 %v1877
      %1897 = vmatpush.bf16.msra.mxu0 %v1876
      %1898 = vmatpush.bf16.msra.mxu0 %v1875
      %1899 = vmatmul.bf16.gmra.mxu0 %v1827
      %v1900 = vpop.f32.mrf.mxu0
      %v1901 = vadd.f32 0.0, %v1900
      %v1902 = vpop.f32.mrf.mxu0
      %v1903 = vadd.f32 0.0, %v1902
      %1904 = vmatmul.bf16.gmra.mxu0 %v1828
      %v1905 = vpop.f32.mrf.mxu0
      %v1906 = vadd.f32 0.0, %v1905
      %v1907 = vpop.f32.mrf.mxu0
      %v1908 = vadd.f32 0.0, %v1907
      %1909 = vmatmul.bf16.gmra.mxu0 %v1829
      %v1910 = vpop.f32.mrf.mxu0
      %v1911 = vadd.f32 0.0, %v1910
      %v1912 = vpop.f32.mrf.mxu0
      %v1913 = vadd.f32 0.0, %v1912
      %1914 = vmatmul.bf16.gmra.mxu0 %v1830
      %v1915 = vpop.f32.mrf.mxu0
      %v1916 = vadd.f32 0.0, %v1915
      %v1917 = vpop.f32.mrf.mxu0
      %v1918 = vadd.f32 0.0, %v1917
      %1919 = vmatmul.bf16.gmra.mxu0 %v1831
      %v1920 = vpop.f32.mrf.mxu0
      %v1921 = vadd.f32 0.0, %v1920
      %v1922 = vpop.f32.mrf.mxu0
      %v1923 = vadd.f32 0.0, %v1922
      %1924 = vmatmul.bf16.gmra.mxu0 %v1832
      %v1925 = vpop.f32.mrf.mxu0
      %v1926 = vadd.f32 0.0, %v1925
      %v1927 = vpop.f32.mrf.mxu0
      %v1928 = vadd.f32 0.0, %v1927
      %1929 = vmatmul.bf16.gmra.mxu0 %v1833
      %v1930 = vpop.f32.mrf.mxu0
      %v1931 = vadd.f32 0.0, %v1930
      %v1932 = vpop.f32.mrf.mxu0
      %v1933 = vadd.f32 0.0, %v1932
      %1934 = vmatmul.bf16.gmra.mxu0 %v1834
      %v1935 = vpop.f32.mrf.mxu0
      %v1936 = vadd.f32 0.0, %v1935
      %v1937 = vpop.f32.mrf.mxu0
      %v1938 = vadd.f32 0.0, %v1937
      %1939 = vdwg.mxu0
      %v1940 = vadd.f32 %v1762, %v1901
      %v1941 = vadd.f32 %v1763, %v1903
      %v1942 = vadd.f32 %v1764, %v1906
      %v1943 = vadd.f32 %v1765, %v1908
      %v1944 = vadd.f32 %v1766, %v1911
      %v1945 = vadd.f32 %v1767, %v1913
      %v1946 = vadd.f32 %v1768, %v1916
      %v1947 = vadd.f32 %v1769, %v1918
      %v1948 = vadd.f32 %v1770, %v1921
      %v1949 = vadd.f32 %v1771, %v1923
      %v1950 = vadd.f32 %v1772, %v1926
      %v1951 = vadd.f32 %v1773, %v1928
      %v1952 = vadd.f32 %v1774, %v1931
      %v1953 = vadd.f32 %v1775, %v1933
      %v1954 = vadd.f32 %v1776, %v1936
      %v1955 = vadd.f32 %v1777, %v1938
      %v1956 = vld [vmem:[%s480 + $0x4] sm:$0xf]
      %v1957 = vld [vmem:[%s480 + $0x8] sm:$0xf]
      %v1958 = vld [vmem:[%s480 + $0xc] sm:$0x1]
      %v1959 = vld [vmem:[%s480 + $0x14] sm:$0xf]
      %v1960 = vld [vmem:[%s480 + $0x18] sm:$0xf]
      %v1961 = vld [vmem:[%s480 + $0x1c] sm:$0x1]
      %v1962 = vld [vmem:[%s480 + $0x24] sm:$0xf]
      %v1963 = vld [vmem:[%s480 + $0x28] sm:$0xf]
      %v1964 = vld [vmem:[%s480 + $0x2c] sm:$0x1]
      %v1965 = vld [vmem:[%s480 + $0x34] sm:$0xf]
      %v1966 = vld [vmem:[%s480 + $0x38] sm:$0xf]
      %v1967 = vld [vmem:[%s480 + $0x3c] sm:$0x1]
      %v1968 = vld [vmem:[%s480 + $0x44] sm:$0xf]
      %v1969 = vld [vmem:[%s480 + $0x48] sm:$0xf]
      %v1970 = vld [vmem:[%s480 + $0x4c] sm:$0x1]
      %v1971 = vld [vmem:[%s480 + $0x54] sm:$0xf]
      %v1972 = vld [vmem:[%s480 + $0x58] sm:$0xf]
      %v1973 = vld [vmem:[%s480 + $0x5c] sm:$0x1]
      %v1974 = vld [vmem:[%s480 + $0x64] sm:$0xf]
      %v1975 = vld [vmem:[%s480 + $0x68] sm:$0xf]
      %v1976 = vld [vmem:[%s480 + $0x6c] sm:$0x1]
      %v1977 = vld [vmem:[%s480 + $0x74] sm:$0xf]
      %v1978 = vld [vmem:[%s480 + $0x78] sm:$0xf]
      %v1979 = vld [vmem:[%s480 + $0x7c] sm:$0x1]
      %v1981 = vshrl.u32 %v1956, 16
      %v1983 = vrot.slane %v1981, 4
      %v1984 = vshll.u32 %v1956, 16
      %v1986 = vrot.slane %v1984, 5
      %v1987 = vor.u32 %v1983, %v1986
      %v1988 = vrot.slane %v1987, 4
      %v1990 = vshll.u32 %v1957, 16
      %v1992 = vrot.slane %v1990, 5
      %v1993 = vsel %vm1061, %v1988, %v1992
      %v1994 = vshrl.u32 %v1957, 16
      %v1996 = vrot.slane %v1994, 4
      %v1997 = vor.u32 %v1996, %v1992
      %v1998 = vrot.slane %v1997, 4
      %v2000 = vshll.u32 %v1958, 16
      %v2002 = vrot.slane %v2000, 5
      %v2003 = vsel %vm1061, %v1998, %v2002
      %v2005 = vshrl.u32 %v1959, 16
      %v2007 = vrot.slane %v2005, 4
      %v2008 = vshll.u32 %v1959, 16
      %v2010 = vrot.slane %v2008, 5
      %v2011 = vor.u32 %v2007, %v2010
      %v2012 = vrot.slane %v2011, 4
      %v2014 = vshll.u32 %v1960, 16
      %v2016 = vrot.slane %v2014, 5
      %v2017 = vsel %vm1061, %v2012, %v2016
      %v2018 = vshrl.u32 %v1960, 16
      %v2020 = vrot.slane %v2018, 4
      %v2021 = vor.u32 %v2020, %v2016
      %v2022 = vrot.slane %v2021, 4
      %v2024 = vshll.u32 %v1961, 16
      %v2026 = vrot.slane %v2024, 5
      %v2027 = vsel %vm1061, %v2022, %v2026
      %v2029 = vshrl.u32 %v1962, 16
      %v2031 = vrot.slane %v2029, 4
      %v2032 = vshll.u32 %v1962, 16
      %v2034 = vrot.slane %v2032, 5
      %v2035 = vor.u32 %v2031, %v2034
      %v2036 = vrot.slane %v2035, 4
      %v2038 = vshll.u32 %v1963, 16
      %v2040 = vrot.slane %v2038, 5
      %v2041 = vsel %vm1061, %v2036, %v2040
      %v2042 = vshrl.u32 %v1963, 16
      %v2044 = vrot.slane %v2042, 4
      %v2045 = vor.u32 %v2044, %v2040
      %v2046 = vrot.slane %v2045, 4
      %v2048 = vshll.u32 %v1964, 16
      %v2050 = vrot.slane %v2048, 5
      %v2051 = vsel %vm1061, %v2046, %v2050
      %v2053 = vshrl.u32 %v1965, 16
      %v2055 = vrot.slane %v2053, 4
      %v2056 = vshll.u32 %v1965, 16
      %v2058 = vrot.slane %v2056, 5
      %v2059 = vor.u32 %v2055, %v2058
      %v2060 = vrot.slane %v2059, 4
      %v2062 = vshll.u32 %v1966, 16
      %v2064 = vrot.slane %v2062, 5
      %v2065 = vsel %vm1061, %v2060, %v2064
      %v2066 = vshrl.u32 %v1966, 16
      %v2068 = vrot.slane %v2066, 4
      %v2069 = vor.u32 %v2068, %v2064
      %v2070 = vrot.slane %v2069, 4
      %v2072 = vshll.u32 %v1967, 16
      %v2074 = vrot.slane %v2072, 5
      %v2075 = vsel %vm1061, %v2070, %v2074
      %v2077 = vshrl.u32 %v1968, 16
      %v2079 = vrot.slane %v2077, 4
      %v2080 = vshll.u32 %v1968, 16
      %v2082 = vrot.slane %v2080, 5
      %v2083 = vor.u32 %v2079, %v2082
      %v2084 = vrot.slane %v2083, 4
      %v2086 = vshll.u32 %v1969, 16
      %v2088 = vrot.slane %v2086, 5
      %v2089 = vsel %vm1061, %v2084, %v2088
      %v2090 = vshrl.u32 %v1969, 16
      %v2092 = vrot.slane %v2090, 4
      %v2093 = vor.u32 %v2092, %v2088
      %v2094 = vrot.slane %v2093, 4
      %v2096 = vshll.u32 %v1970, 16
      %v2098 = vrot.slane %v2096, 5
      %v2099 = vsel %vm1061, %v2094, %v2098
      %v2101 = vshrl.u32 %v1971, 16
      %v2103 = vrot.slane %v2101, 4
      %v2104 = vshll.u32 %v1971, 16
      %v2106 = vrot.slane %v2104, 5
      %v2107 = vor.u32 %v2103, %v2106
      %v2108 = vrot.slane %v2107, 4
      %v2110 = vshll.u32 %v1972, 16
      %v2112 = vrot.slane %v2110, 5
      %v2113 = vsel %vm1061, %v2108, %v2112
      %v2114 = vshrl.u32 %v1972, 16
      %v2116 = vrot.slane %v2114, 4
      %v2117 = vor.u32 %v2116, %v2112
      %v2118 = vrot.slane %v2117, 4
      %v2120 = vshll.u32 %v1973, 16
      %v2122 = vrot.slane %v2120, 5
      %v2123 = vsel %vm1061, %v2118, %v2122
      %v2125 = vshrl.u32 %v1974, 16
      %v2127 = vrot.slane %v2125, 4
      %v2128 = vshll.u32 %v1974, 16
      %v2130 = vrot.slane %v2128, 5
      %v2131 = vor.u32 %v2127, %v2130
      %v2132 = vrot.slane %v2131, 4
      %v2134 = vshll.u32 %v1975, 16
      %v2136 = vrot.slane %v2134, 5
      %v2137 = vsel %vm1061, %v2132, %v2136
      %v2138 = vshrl.u32 %v1975, 16
      %v2140 = vrot.slane %v2138, 4
      %v2141 = vor.u32 %v2140, %v2136
      %v2142 = vrot.slane %v2141, 4
      %v2144 = vshll.u32 %v1976, 16
      %v2146 = vrot.slane %v2144, 5
      %v2147 = vsel %vm1061, %v2142, %v2146
      %v2149 = vshrl.u32 %v1977, 16
      %v2151 = vrot.slane %v2149, 4
      %v2152 = vshll.u32 %v1977, 16
      %v2154 = vrot.slane %v2152, 5
      %v2155 = vor.u32 %v2151, %v2154
      %v2156 = vrot.slane %v2155, 4
      %v2158 = vshll.u32 %v1978, 16
      %v2160 = vrot.slane %v2158, 5
      %v2161 = vsel %vm1061, %v2156, %v2160
      %v2162 = vshrl.u32 %v1978, 16
      %v2164 = vrot.slane %v2162, 4
      %v2165 = vor.u32 %v2164, %v2160
      %v2166 = vrot.slane %v2165, 4
      %v2168 = vshll.u32 %v1979, 16
      %v2170 = vrot.slane %v2168, 5
      %v2171 = vsel %vm1061, %v2166, %v2170
      %s2172 = scalar_lea.vmem %s3, 320
      %v2173 = vld [vmem:[%s2172] sm:$0xf]
      %v2174 = vld [vmem:[%s2172 + $0x4] sm:$0xf]
      %v2175 = vld [vmem:[%s2172 + $0x8] sm:$0xf]
      %v2176 = vld [vmem:[%s2172 + $0xc] sm:$0xf]
      %v2177 = vld [vmem:[%s2172 + $0x10] sm:$0xf]
      %v2178 = vld [vmem:[%s2172 + $0x14] sm:$0xf]
      %v2179 = vld [vmem:[%s2172 + $0x18] sm:$0xf]
      %v2180 = vld [vmem:[%s2172 + $0x1c] sm:$0xf]
      %v2181 = vld [vmem:[%s2172 + $0x20] sm:$0xf]
      %v2182 = vld [vmem:[%s2172 + $0x24] sm:$0xf]
      %v2183 = vld [vmem:[%s2172 + $0x28] sm:$0xf]
      %v2184 = vld [vmem:[%s2172 + $0x2c] sm:$0xf]
      %v2185 = vld [vmem:[%s2172 + $0x30] sm:$0xf]
      %v2186 = vld [vmem:[%s2172 + $0x34] sm:$0xf]
      %v2187 = vld [vmem:[%s2172 + $0x38] sm:$0xf]
      %v2188 = vld [vmem:[%s2172 + $0x3c] sm:$0xf]
      %v2189 = vunpack.c.l.b16 %v1993
      %v2190 = vunpack.c.l.b16 %v2003
      %v2191 = vunpack.c.l.b16 %v2017
      %v2192 = vunpack.c.l.b16 %v2027
      %v2193 = vunpack.c.l.b16 %v2041
      %v2194 = vunpack.c.l.b16 %v2051
      %v2195 = vunpack.c.l.b16 %v2065
      %v2196 = vunpack.c.l.b16 %v2075
      %v2197 = vunpack.c.l.b16 %v2089
      %v2198 = vunpack.c.l.b16 %v2099
      %v2199 = vunpack.c.l.b16 %v2113
      %v2200 = vunpack.c.l.b16 %v2123
      %v2201 = vunpack.c.l.b16 %v2137
      %v2202 = vunpack.c.l.b16 %v2147
      %v2203 = vunpack.c.l.b16 %v2161
      %v2204 = vunpack.c.l.b16 %v2171
      %v2205 = vpack.c.b16 %v2190, %v2189
      %v2206 = vpack.c.b16 %v2192, %v2191
      %v2207 = vpack.c.b16 %v2194, %v2193
      %v2208 = vpack.c.b16 %v2196, %v2195
      %v2209 = vpack.c.b16 %v2198, %v2197
      %v2210 = vpack.c.b16 %v2200, %v2199
      %v2211 = vpack.c.b16 %v2202, %v2201
      %v2212 = vpack.c.b16 %v2204, %v2203
      %v2237 = vunpack.c.l.b16 %v2173
      %v2238 = vunpack.c.l.b16 %v2174
      %v2239 = vunpack.c.l.b16 %v2175
      %v2240 = vunpack.c.l.b16 %v2176
      %v2241 = vunpack.c.l.b16 %v2177
      %v2242 = vunpack.c.l.b16 %v2178
      %v2243 = vunpack.c.l.b16 %v2179
      %v2244 = vunpack.c.l.b16 %v2180
      %v2245 = vunpack.c.l.b16 %v2181
      %v2246 = vunpack.c.l.b16 %v2182
      %v2247 = vunpack.c.l.b16 %v2183
      %v2248 = vunpack.c.l.b16 %v2184
      %v2249 = vunpack.c.l.b16 %v2185
      %v2250 = vunpack.c.l.b16 %v2186
      %v2251 = vunpack.c.l.b16 %v2187
      %v2252 = vunpack.c.l.b16 %v2188
      %v2253 = vpack.c.b16 %v2238, %v2237
      %v2254 = vpack.c.b16 %v2240, %v2239
      %v2255 = vpack.c.b16 %v2242, %v2241
      %v2256 = vpack.c.b16 %v2244, %v2243
      %v2257 = vpack.c.b16 %v2246, %v2245
      %v2258 = vpack.c.b16 %v2248, %v2247
      %v2259 = vpack.c.b16 %v2250, %v2249
      %v2260 = vpack.c.b16 %v2252, %v2251
      %2269 = vmatpush.bf16.msra.mxu0 %v2260
      %2270 = vmatpush.bf16.msra.mxu0 %v2259
      %2271 = vmatpush.bf16.msra.mxu0 %v2258
      %2272 = vmatpush.bf16.msra.mxu0 %v2257
      %2273 = vmatpush.bf16.msra.mxu0 %v2256
      %2274 = vmatpush.bf16.msra.mxu0 %v2255
      %2275 = vmatpush.bf16.msra.mxu0 %v2254
      %2276 = vmatpush.bf16.msra.mxu0 %v2253
      %2277 = vmatmul.bf16.gmra.mxu0 %v2205
      %v2278 = vpop.f32.mrf.mxu0
      %v2279 = vadd.f32 0.0, %v2278
      %v2280 = vpop.f32.mrf.mxu0
      %v2281 = vadd.f32 0.0, %v2280
      %2282 = vmatmul.bf16.gmra.mxu0 %v2206
      %v2283 = vpop.f32.mrf.mxu0
      %v2284 = vadd.f32 0.0, %v2283
      %v2285 = vpop.f32.mrf.mxu0
      %v2286 = vadd.f32 0.0, %v2285
      %2287 = vmatmul.bf16.gmra.mxu0 %v2207
      %v2288 = vpop.f32.mrf.mxu0
      %v2289 = vadd.f32 0.0, %v2288
      %v2290 = vpop.f32.mrf.mxu0
      %v2291 = vadd.f32 0.0, %v2290
      %2292 = vmatmul.bf16.gmra.mxu0 %v2208
      %v2293 = vpop.f32.mrf.mxu0
      %v2294 = vadd.f32 0.0, %v2293
      %v2295 = vpop.f32.mrf.mxu0
      %v2296 = vadd.f32 0.0, %v2295
      %2297 = vmatmul.bf16.gmra.mxu0 %v2209
      %v2298 = vpop.f32.mrf.mxu0
      %v2299 = vadd.f32 0.0, %v2298
      %v2300 = vpop.f32.mrf.mxu0
      %v2301 = vadd.f32 0.0, %v2300
      %2302 = vmatmul.bf16.gmra.mxu0 %v2210
      %v2303 = vpop.f32.mrf.mxu0
      %v2304 = vadd.f32 0.0, %v2303
      %v2305 = vpop.f32.mrf.mxu0
      %v2306 = vadd.f32 0.0, %v2305
      %2307 = vmatmul.bf16.gmra.mxu0 %v2211
      %v2308 = vpop.f32.mrf.mxu0
      %v2309 = vadd.f32 0.0, %v2308
      %v2310 = vpop.f32.mrf.mxu0
      %v2311 = vadd.f32 0.0, %v2310
      %2312 = vmatmul.bf16.gmra.mxu0 %v2212
      %v2313 = vpop.f32.mrf.mxu0
      %v2314 = vadd.f32 0.0, %v2313
      %v2315 = vpop.f32.mrf.mxu0
      %v2316 = vadd.f32 0.0, %v2315
      %2317 = vdwg.mxu0
      %v2318 = vadd.f32 %v1940, %v2279
      %v2319 = vadd.f32 %v1941, %v2281
      %v2320 = vadd.f32 %v1942, %v2284
      %v2321 = vadd.f32 %v1943, %v2286
      %v2322 = vadd.f32 %v1944, %v2289
      %v2323 = vadd.f32 %v1945, %v2291
      %v2324 = vadd.f32 %v1946, %v2294
      %v2325 = vadd.f32 %v1947, %v2296
      %v2326 = vadd.f32 %v1948, %v2299
      %v2327 = vadd.f32 %v1949, %v2301
      %v2328 = vadd.f32 %v1950, %v2304
      %v2329 = vadd.f32 %v1951, %v2306
      %v2330 = vadd.f32 %v1952, %v2309
      %v2331 = vadd.f32 %v1953, %v2311
      %v2332 = vadd.f32 %v1954, %v2314
      %v2333 = vadd.f32 %v1955, %v2316
      %s2334 = scalar_lea.vmem [#allocation2], 32
      %v2335 = vld [vmem:[%s2334] sm:$0x8]
      %v2336 = vld [vmem:[%s2334 + $0x4] sm:$0xf]
      %v2337 = vld [vmem:[%s2334 + $0x8] sm:$0xf]
      %v2338 = vld [vmem:[%s2334 + $0x10] sm:$0x8]
      %v2339 = vld [vmem:[%s2334 + $0x14] sm:$0xf]
      %v2340 = vld [vmem:[%s2334 + $0x18] sm:$0xf]
      %v2341 = vld [vmem:[%s2334 + $0x20] sm:$0x8]
      %v2342 = vld [vmem:[%s2334 + $0x24] sm:$0xf]
      %v2343 = vld [vmem:[%s2334 + $0x28] sm:$0xf]
      %v2344 = vld [vmem:[%s2334 + $0x30] sm:$0x8]
      %v2345 = vld [vmem:[%s2334 + $0x34] sm:$0xf]
      %v2346 = vld [vmem:[%s2334 + $0x38] sm:$0xf]
      %v2347 = vld [vmem:[%s2334 + $0x40] sm:$0x8]
      %v2348 = vld [vmem:[%s2334 + $0x44] sm:$0xf]
      %v2349 = vld [vmem:[%s2334 + $0x48] sm:$0xf]
      %v2350 = vld [vmem:[%s2334 + $0x50] sm:$0x8]
      %v2351 = vld [vmem:[%s2334 + $0x54] sm:$0xf]
      %v2352 = vld [vmem:[%s2334 + $0x58] sm:$0xf]
      %v2353 = vld [vmem:[%s2334 + $0x60] sm:$0x8]
      %v2354 = vld [vmem:[%s2334 + $0x64] sm:$0xf]
      %v2355 = vld [vmem:[%s2334 + $0x68] sm:$0xf]
      %v2356 = vld [vmem:[%s2334 + $0x70] sm:$0x8]
      %v2357 = vld [vmem:[%s2334 + $0x74] sm:$0xf]
      %v2358 = vld [vmem:[%s2334 + $0x78] sm:$0xf]
      %v2360 = vshrl.u32 %v2335, 16
      %v2362 = vrot.slane %v2360, 7
      %v2363 = vrot.slane %v2362, 4
      %v2365 = vshrl.u32 %v2336, 16
      %v2367 = vrot.slane %v2365, 7
      %v2368 = vshll.u32 %v2336, 16
      %v2370 = vor.u32 %v2367, %v2368
      %v2371 = vsel %vm551, %v2363, %v2370
      %v2372 = vrot.slane %v2367, 4
      %v2374 = vshrl.u32 %v2337, 16
      %v2376 = vrot.slane %v2374, 7
      %v2377 = vshll.u32 %v2337, 16
      %v2379 = vor.u32 %v2376, %v2377
      %v2380 = vsel %vm551, %v2372, %v2379
      %v2382 = vshrl.u32 %v2338, 16
      %v2384 = vrot.slane %v2382, 7
      %v2385 = vrot.slane %v2384, 4
      %v2387 = vshrl.u32 %v2339, 16
      %v2389 = vrot.slane %v2387, 7
      %v2390 = vshll.u32 %v2339, 16
      %v2392 = vor.u32 %v2389, %v2390
      %v2393 = vsel %vm551, %v2385, %v2392
      %v2394 = vrot.slane %v2389, 4
      %v2396 = vshrl.u32 %v2340, 16
      %v2398 = vrot.slane %v2396, 7
      %v2399 = vshll.u32 %v2340, 16
      %v2401 = vor.u32 %v2398, %v2399
      %v2402 = vsel %vm551, %v2394, %v2401
      %v2404 = vshrl.u32 %v2341, 16
      %v2406 = vrot.slane %v2404, 7
      %v2407 = vrot.slane %v2406, 4
      %v2409 = vshrl.u32 %v2342, 16
      %v2411 = vrot.slane %v2409, 7
      %v2412 = vshll.u32 %v2342, 16
      %v2414 = vor.u32 %v2411, %v2412
      %v2415 = vsel %vm551, %v2407, %v2414
      %v2416 = vrot.slane %v2411, 4
      %v2418 = vshrl.u32 %v2343, 16
      %v2420 = vrot.slane %v2418, 7
      %v2421 = vshll.u32 %v2343, 16
      %v2423 = vor.u32 %v2420, %v2421
      %v2424 = vsel %vm551, %v2416, %v2423
      %v2426 = vshrl.u32 %v2344, 16
      %v2428 = vrot.slane %v2426, 7
      %v2429 = vrot.slane %v2428, 4
      %v2431 = vshrl.u32 %v2345, 16
      %v2433 = vrot.slane %v2431, 7
      %v2434 = vshll.u32 %v2345, 16
      %v2436 = vor.u32 %v2433, %v2434
      %v2437 = vsel %vm551, %v2429, %v2436
      %v2438 = vrot.slane %v2433, 4
      %v2440 = vshrl.u32 %v2346, 16
      %v2442 = vrot.slane %v2440, 7
      %v2443 = vshll.u32 %v2346, 16
      %v2445 = vor.u32 %v2442, %v2443
      %v2446 = vsel %vm551, %v2438, %v2445
      %v2448 = vshrl.u32 %v2347, 16
      %v2450 = vrot.slane %v2448, 7
      %v2451 = vrot.slane %v2450, 4
      %v2453 = vshrl.u32 %v2348, 16
      %v2455 = vrot.slane %v2453, 7
      %v2456 = vshll.u32 %v2348, 16
      %v2458 = vor.u32 %v2455, %v2456
      %v2459 = vsel %vm551, %v2451, %v2458
      %v2460 = vrot.slane %v2455, 4
      %v2462 = vshrl.u32 %v2349, 16
      %v2464 = vrot.slane %v2462, 7
      %v2465 = vshll.u32 %v2349, 16
      %v2467 = vor.u32 %v2464, %v2465
      %v2468 = vsel %vm551, %v2460, %v2467
      %v2470 = vshrl.u32 %v2350, 16
      %v2472 = vrot.slane %v2470, 7
      %v2473 = vrot.slane %v2472, 4
      %v2475 = vshrl.u32 %v2351, 16
      %v2477 = vrot.slane %v2475, 7
      %v2478 = vshll.u32 %v2351, 16
      %v2480 = vor.u32 %v2477, %v2478
      %v2481 = vsel %vm551, %v2473, %v2480
      %v2482 = vrot.slane %v2477, 4
      %v2484 = vshrl.u32 %v2352, 16
      %v2486 = vrot.slane %v2484, 7
      %v2487 = vshll.u32 %v2352, 16
      %v2489 = vor.u32 %v2486, %v2487
      %v2490 = vsel %vm551, %v2482, %v2489
      %v2492 = vshrl.u32 %v2353, 16
      %v2494 = vrot.slane %v2492, 7
      %v2495 = vrot.slane %v2494, 4
      %v2497 = vshrl.u32 %v2354, 16
      %v2499 = vrot.slane %v2497, 7
      %v2500 = vshll.u32 %v2354, 16
      %v2502 = vor.u32 %v2499, %v2500
      %v2503 = vsel %vm551, %v2495, %v2502
      %v2504 = vrot.slane %v2499, 4
      %v2506 = vshrl.u32 %v2355, 16
      %v2508 = vrot.slane %v2506, 7
      %v2509 = vshll.u32 %v2355, 16
      %v2511 = vor.u32 %v2508, %v2509
      %v2512 = vsel %vm551, %v2504, %v2511
      %v2514 = vshrl.u32 %v2356, 16
      %v2516 = vrot.slane %v2514, 7
      %v2517 = vrot.slane %v2516, 4
      %v2519 = vshrl.u32 %v2357, 16
      %v2521 = vrot.slane %v2519, 7
      %v2522 = vshll.u32 %v2357, 16
      %v2524 = vor.u32 %v2521, %v2522
      %v2525 = vsel %vm551, %v2517, %v2524
      %v2526 = vrot.slane %v2521, 4
      %v2528 = vshrl.u32 %v2358, 16
      %v2530 = vrot.slane %v2528, 7
      %v2531 = vshll.u32 %v2358, 16
      %v2533 = vor.u32 %v2530, %v2531
      %v2534 = vsel %vm551, %v2526, %v2533
      %s2535 = scalar_lea.vmem %s3, 384
      %v2536 = vld [vmem:[%s2535] sm:$0xf]
      %v2537 = vld [vmem:[%s2535 + $0x4] sm:$0xf]
      %v2538 = vld [vmem:[%s2535 + $0x8] sm:$0xf]
      %v2539 = vld [vmem:[%s2535 + $0xc] sm:$0xf]
      %v2540 = vld [vmem:[%s2535 + $0x10] sm:$0xf]
      %v2541 = vld [vmem:[%s2535 + $0x14] sm:$0xf]
      %v2542 = vld [vmem:[%s2535 + $0x18] sm:$0xf]
      %v2543 = vld [vmem:[%s2535 + $0x1c] sm:$0xf]
      %v2544 = vld [vmem:[%s2535 + $0x20] sm:$0xf]
      %v2545 = vld [vmem:[%s2535 + $0x24] sm:$0xf]
      %v2546 = vld [vmem:[%s2535 + $0x28] sm:$0xf]
      %v2547 = vld [vmem:[%s2535 + $0x2c] sm:$0xf]
      %v2548 = vld [vmem:[%s2535 + $0x30] sm:$0xf]
      %v2549 = vld [vmem:[%s2535 + $0x34] sm:$0xf]
      %v2550 = vld [vmem:[%s2535 + $0x38] sm:$0xf]
      %v2551 = vld [vmem:[%s2535 + $0x3c] sm:$0xf]
      %v2552 = vunpack.c.l.b16 %v2371
      %v2553 = vunpack.c.l.b16 %v2380
      %v2554 = vunpack.c.l.b16 %v2393
      %v2555 = vunpack.c.l.b16 %v2402
      %v2556 = vunpack.c.l.b16 %v2415
      %v2557 = vunpack.c.l.b16 %v2424
      %v2558 = vunpack.c.l.b16 %v2437
      %v2559 = vunpack.c.l.b16 %v2446
      %v2560 = vunpack.c.l.b16 %v2459
      %v2561 = vunpack.c.l.b16 %v2468
      %v2562 = vunpack.c.l.b16 %v2481
      %v2563 = vunpack.c.l.b16 %v2490
      %v2564 = vunpack.c.l.b16 %v2503
      %v2565 = vunpack.c.l.b16 %v2512
      %v2566 = vunpack.c.l.b16 %v2525
      %v2567 = vunpack.c.l.b16 %v2534
      %v2568 = vpack.c.b16 %v2553, %v2552
      %v2569 = vpack.c.b16 %v2555, %v2554
      %v2570 = vpack.c.b16 %v2557, %v2556
      %v2571 = vpack.c.b16 %v2559, %v2558
      %v2572 = vpack.c.b16 %v2561, %v2560
      %v2573 = vpack.c.b16 %v2563, %v2562
      %v2574 = vpack.c.b16 %v2565, %v2564
      %v2575 = vpack.c.b16 %v2567, %v2566
      %v2600 = vunpack.c.l.b16 %v2536
      %v2601 = vunpack.c.l.b16 %v2537
      %v2602 = vunpack.c.l.b16 %v2538
      %v2603 = vunpack.c.l.b16 %v2539
      %v2604 = vunpack.c.l.b16 %v2540
      %v2605 = vunpack.c.l.b16 %v2541
      %v2606 = vunpack.c.l.b16 %v2542
      %v2607 = vunpack.c.l.b16 %v2543
      %v2608 = vunpack.c.l.b16 %v2544
      %v2609 = vunpack.c.l.b16 %v2545
      %v2610 = vunpack.c.l.b16 %v2546
      %v2611 = vunpack.c.l.b16 %v2547
      %v2612 = vunpack.c.l.b16 %v2548
      %v2613 = vunpack.c.l.b16 %v2549
      %v2614 = vunpack.c.l.b16 %v2550
      %v2615 = vunpack.c.l.b16 %v2551
      %v2616 = vpack.c.b16 %v2601, %v2600
      %v2617 = vpack.c.b16 %v2603, %v2602
      %v2618 = vpack.c.b16 %v2605, %v2604
      %v2619 = vpack.c.b16 %v2607, %v2606
      %v2620 = vpack.c.b16 %v2609, %v2608
      %v2621 = vpack.c.b16 %v2611, %v2610
      %v2622 = vpack.c.b16 %v2613, %v2612
      %v2623 = vpack.c.b16 %v2615, %v2614
      %2632 = vmatpush.bf16.msra.mxu0 %v2623
      %2633 = vmatpush.bf16.msra.mxu0 %v2622
      %2634 = vmatpush.bf16.msra.mxu0 %v2621
      %2635 = vmatpush.bf16.msra.mxu0 %v2620
      %2636 = vmatpush.bf16.msra.mxu0 %v2619
      %2637 = vmatpush.bf16.msra.mxu0 %v2618
      %2638 = vmatpush.bf16.msra.mxu0 %v2617
      %2639 = vmatpush.bf16.msra.mxu0 %v2616
      %2640 = vmatmul.bf16.gmra.mxu0 %v2568
      %v2641 = vpop.f32.mrf.mxu0
      %v2642 = vadd.f32 0.0, %v2641
      %v2643 = vpop.f32.mrf.mxu0
      %v2644 = vadd.f32 0.0, %v2643
      %2645 = vmatmul.bf16.gmra.mxu0 %v2569
      %v2646 = vpop.f32.mrf.mxu0
      %v2647 = vadd.f32 0.0, %v2646
      %v2648 = vpop.f32.mrf.mxu0
      %v2649 = vadd.f32 0.0, %v2648
      %2650 = vmatmul.bf16.gmra.mxu0 %v2570
      %v2651 = vpop.f32.mrf.mxu0
      %v2652 = vadd.f32 0.0, %v2651
      %v2653 = vpop.f32.mrf.mxu0
      %v2654 = vadd.f32 0.0, %v2653
      %2655 = vmatmul.bf16.gmra.mxu0 %v2571
      %v2656 = vpop.f32.mrf.mxu0
      %v2657 = vadd.f32 0.0, %v2656
      %v2658 = vpop.f32.mrf.mxu0
      %v2659 = vadd.f32 0.0, %v2658
      %2660 = vmatmul.bf16.gmra.mxu0 %v2572
      %v2661 = vpop.f32.mrf.mxu0
      %v2662 = vadd.f32 0.0, %v2661
      %v2663 = vpop.f32.mrf.mxu0
      %v2664 = vadd.f32 0.0, %v2663
      %2665 = vmatmul.bf16.gmra.mxu0 %v2573
      %v2666 = vpop.f32.mrf.mxu0
      %v2667 = vadd.f32 0.0, %v2666
      %v2668 = vpop.f32.mrf.mxu0
      %v2669 = vadd.f32 0.0, %v2668
      %2670 = vmatmul.bf16.gmra.mxu0 %v2574
      %v2671 = vpop.f32.mrf.mxu0
      %v2672 = vadd.f32 0.0, %v2671
      %v2673 = vpop.f32.mrf.mxu0
      %v2674 = vadd.f32 0.0, %v2673
      %2675 = vmatmul.bf16.gmra.mxu0 %v2575
      %v2676 = vpop.f32.mrf.mxu0
      %v2677 = vadd.f32 0.0, %v2676
      %v2678 = vpop.f32.mrf.mxu0
      %v2679 = vadd.f32 0.0, %v2678
      %2680 = vdwg.mxu0
      %v2681 = vadd.f32 %v2318, %v2642
      %v2682 = vadd.f32 %v2319, %v2644
      %v2683 = vadd.f32 %v2320, %v2647
      %v2684 = vadd.f32 %v2321, %v2649
      %v2685 = vadd.f32 %v2322, %v2652
      %v2686 = vadd.f32 %v2323, %v2654
      %v2687 = vadd.f32 %v2324, %v2657
      %v2688 = vadd.f32 %v2325, %v2659
      %v2689 = vadd.f32 %v2326, %v2662
      %v2690 = vadd.f32 %v2327, %v2664
      %v2691 = vadd.f32 %v2328, %v2667
      %v2692 = vadd.f32 %v2329, %v2669
      %v2693 = vadd.f32 %v2330, %v2672
      %v2694 = vadd.f32 %v2331, %v2674
      %v2695 = vadd.f32 %v2332, %v2677
      %v2696 = vadd.f32 %v2333, %v2679
      %s2697 = scalar_lea.vmem %s3, 448
      %v2698 = vld [vmem:[%s2697] sm:$0xf]
      %v2699 = vld [vmem:[%s2697 + $0x4] sm:$0xf]
      %v2700 = vld [vmem:[%s2697 + $0x8] sm:$0xf]
      %v2701 = vld [vmem:[%s2697 + $0xc] sm:$0xf]
      %v2702 = vld [vmem:[%s2697 + $0x10] sm:$0xf]
      %v2703 = vld [vmem:[%s2697 + $0x14] sm:$0xf]
      %v2704 = vld [vmem:[%s2697 + $0x18] sm:$0xf]
      %v2705 = vld [vmem:[%s2697 + $0x1c] sm:$0xf]
      %v2706 = vld [vmem:[%s2697 + $0x20] sm:$0xf]
      %v2707 = vld [vmem:[%s2697 + $0x24] sm:$0xf]
      %v2708 = vld [vmem:[%s2697 + $0x28] sm:$0xf]
      %v2709 = vld [vmem:[%s2697 + $0x2c] sm:$0xf]
      %v2710 = vld [vmem:[%s2697 + $0x30] sm:$0xf]
      %v2711 = vld [vmem:[%s2697 + $0x34] sm:$0xf]
      %v2712 = vld [vmem:[%s2697 + $0x38] sm:$0xf]
      %v2713 = vld [vmem:[%s2697 + $0x3c] sm:$0xf]
      %v2730 = vunpack.c.l.b16 %v2336
      %v2731 = vunpack.c.l.b16 %v2337
      %v2732 = vunpack.c.l.b16 %v2339
      %v2733 = vunpack.c.l.b16 %v2340
      %v2734 = vunpack.c.l.b16 %v2342
      %v2735 = vunpack.c.l.b16 %v2343
      %v2736 = vunpack.c.l.b16 %v2345
      %v2737 = vunpack.c.l.b16 %v2346
      %v2738 = vunpack.c.l.b16 %v2348
      %v2739 = vunpack.c.l.b16 %v2349
      %v2740 = vunpack.c.l.b16 %v2351
      %v2741 = vunpack.c.l.b16 %v2352
      %v2742 = vunpack.c.l.b16 %v2354
      %v2743 = vunpack.c.l.b16 %v2355
      %v2744 = vunpack.c.l.b16 %v2357
      %v2745 = vunpack.c.l.b16 %v2358
      %v2746 = vpack.c.b16 %v2731, %v2730
      %v2747 = vpack.c.b16 %v2733, %v2732
      %v2748 = vpack.c.b16 %v2735, %v2734
      %v2749 = vpack.c.b16 %v2737, %v2736
      %v2750 = vpack.c.b16 %v2739, %v2738
      %v2751 = vpack.c.b16 %v2741, %v2740
      %v2752 = vpack.c.b16 %v2743, %v2742
      %v2753 = vpack.c.b16 %v2745, %v2744
      %v2778 = vunpack.c.l.b16 %v2698
      %v2779 = vunpack.c.l.b16 %v2699
      %v2780 = vunpack.c.l.b16 %v2700
      %v2781 = vunpack.c.l.b16 %v2701
      %v2782 = vunpack.c.l.b16 %v2702
      %v2783 = vunpack.c.l.b16 %v2703
      %v2784 = vunpack.c.l.b16 %v2704
      %v2785 = vunpack.c.l.b16 %v2705
      %v2786 = vunpack.c.l.b16 %v2706
      %v2787 = vunpack.c.l.b16 %v2707
      %v2788 = vunpack.c.l.b16 %v2708
      %v2789 = vunpack.c.l.b16 %v2709
      %v2790 = vunpack.c.l.b16 %v2710
      %v2791 = vunpack.c.l.b16 %v2711
      %v2792 = vunpack.c.l.b16 %v2712
      %v2793 = vunpack.c.l.b16 %v2713
      %v2794 = vpack.c.b16 %v2779, %v2778
      %v2795 = vpack.c.b16 %v2781, %v2780
      %v2796 = vpack.c.b16 %v2783, %v2782
      %v2797 = vpack.c.b16 %v2785, %v2784
      %v2798 = vpack.c.b16 %v2787, %v2786
      %v2799 = vpack.c.b16 %v2789, %v2788
      %v2800 = vpack.c.b16 %v2791, %v2790
      %v2801 = vpack.c.b16 %v2793, %v2792
      %2810 = vmatpush.bf16.msra.mxu0 %v2801
      %2811 = vmatpush.bf16.msra.mxu0 %v2800
      %2812 = vmatpush.bf16.msra.mxu0 %v2799
      %2813 = vmatpush.bf16.msra.mxu0 %v2798
      %2814 = vmatpush.bf16.msra.mxu0 %v2797
      %2815 = vmatpush.bf16.msra.mxu0 %v2796
      %2816 = vmatpush.bf16.msra.mxu0 %v2795
      %2817 = vmatpush.bf16.msra.mxu0 %v2794
      %2818 = vmatmul.bf16.gmra.mxu0 %v2746
      %v2819 = vpop.f32.mrf.mxu0
      %v2820 = vadd.f32 0.0, %v2819
      %v2821 = vpop.f32.mrf.mxu0
      %v2822 = vadd.f32 0.0, %v2821
      %2823 = vmatmul.bf16.gmra.mxu0 %v2747
      %v2824 = vpop.f32.mrf.mxu0
      %v2825 = vadd.f32 0.0, %v2824
      %v2826 = vpop.f32.mrf.mxu0
      %v2827 = vadd.f32 0.0, %v2826
      %2828 = vmatmul.bf16.gmra.mxu0 %v2748
      %v2829 = vpop.f32.mrf.mxu0
      %v2830 = vadd.f32 0.0, %v2829
      %v2831 = vpop.f32.mrf.mxu0
      %v2832 = vadd.f32 0.0, %v2831
      %2833 = vmatmul.bf16.gmra.mxu0 %v2749
      %v2834 = vpop.f32.mrf.mxu0
      %v2835 = vadd.f32 0.0, %v2834
      %v2836 = vpop.f32.mrf.mxu0
      %v2837 = vadd.f32 0.0, %v2836
      %2838 = vmatmul.bf16.gmra.mxu0 %v2750
      %v2839 = vpop.f32.mrf.mxu0
      %v2840 = vadd.f32 0.0, %v2839
      %v2841 = vpop.f32.mrf.mxu0
      %v2842 = vadd.f32 0.0, %v2841
      %2843 = vmatmul.bf16.gmra.mxu0 %v2751
      %v2844 = vpop.f32.mrf.mxu0
      %v2845 = vadd.f32 0.0, %v2844
      %v2846 = vpop.f32.mrf.mxu0
      %v2847 = vadd.f32 0.0, %v2846
      %2848 = vmatmul.bf16.gmra.mxu0 %v2752
      %v2849 = vpop.f32.mrf.mxu0
      %v2850 = vadd.f32 0.0, %v2849
      %v2851 = vpop.f32.mrf.mxu0
      %v2852 = vadd.f32 0.0, %v2851
      %2853 = vmatmul.bf16.gmra.mxu0 %v2753
      %v2854 = vpop.f32.mrf.mxu0
      %v2855 = vadd.f32 0.0, %v2854
      %v2856 = vpop.f32.mrf.mxu0
      %v2857 = vadd.f32 0.0, %v2856
      %2858 = vdwg.mxu0
      %v2859 = vadd.f32 %v2681, %v2820
      %v2860 = vadd.f32 %v2682, %v2822
      %v2861 = vadd.f32 %v2683, %v2825
      %v2862 = vadd.f32 %v2684, %v2827
      %v2863 = vadd.f32 %v2685, %v2830
      %v2864 = vadd.f32 %v2686, %v2832
      %v2865 = vadd.f32 %v2687, %v2835
      %v2866 = vadd.f32 %v2688, %v2837
      %v2867 = vadd.f32 %v2689, %v2840
      %v2868 = vadd.f32 %v2690, %v2842
      %v2869 = vadd.f32 %v2691, %v2845
      %v2870 = vadd.f32 %v2692, %v2847
      %v2871 = vadd.f32 %v2693, %v2850
      %v2872 = vadd.f32 %v2694, %v2852
      %v2873 = vadd.f32 %v2695, %v2855
      %v2874 = vadd.f32 %v2696, %v2857
      %v2875 = vld [vmem:[%s2334 + $0x4] sm:$0xf]
      %v2876 = vld [vmem:[%s2334 + $0x8] sm:$0xf]
      %v2877 = vld [vmem:[%s2334 + $0xc] sm:$0x1]
      %v2878 = vld [vmem:[%s2334 + $0x14] sm:$0xf]
      %v2879 = vld [vmem:[%s2334 + $0x18] sm:$0xf]
      %v2880 = vld [vmem:[%s2334 + $0x1c] sm:$0x1]
      %v2881 = vld [vmem:[%s2334 + $0x24] sm:$0xf]
      %v2882 = vld [vmem:[%s2334 + $0x28] sm:$0xf]
      %v2883 = vld [vmem:[%s2334 + $0x2c] sm:$0x1]
      %v2884 = vld [vmem:[%s2334 + $0x34] sm:$0xf]
      %v2885 = vld [vmem:[%s2334 + $0x38] sm:$0xf]
      %v2886 = vld [vmem:[%s2334 + $0x3c] sm:$0x1]
      %v2887 = vld [vmem:[%s2334 + $0x44] sm:$0xf]
      %v2888 = vld [vmem:[%s2334 + $0x48] sm:$0xf]
      %v2889 = vld [vmem:[%s2334 + $0x4c] sm:$0x1]
      %v2890 = vld [vmem:[%s2334 + $0x54] sm:$0xf]
      %v2891 = vld [vmem:[%s2334 + $0x58] sm:$0xf]
      %v2892 = vld [vmem:[%s2334 + $0x5c] sm:$0x1]
      %v2893 = vld [vmem:[%s2334 + $0x64] sm:$0xf]
      %v2894 = vld [vmem:[%s2334 + $0x68] sm:$0xf]
      %v2895 = vld [vmem:[%s2334 + $0x6c] sm:$0x1]
      %v2896 = vld [vmem:[%s2334 + $0x74] sm:$0xf]
      %v2897 = vld [vmem:[%s2334 + $0x78] sm:$0xf]
      %v2898 = vld [vmem:[%s2334 + $0x7c] sm:$0x1]
      %v2900 = vshrl.u32 %v2875, 16
      %v2902 = vrot.slane %v2900, 4
      %v2903 = vshll.u32 %v2875, 16
      %v2905 = vrot.slane %v2903, 5
      %v2906 = vor.u32 %v2902, %v2905
      %v2907 = vrot.slane %v2906, 4
      %v2909 = vshll.u32 %v2876, 16
      %v2911 = vrot.slane %v2909, 5
      %v2912 = vsel %vm1061, %v2907, %v2911
      %v2913 = vshrl.u32 %v2876, 16
      %v2915 = vrot.slane %v2913, 4
      %v2916 = vor.u32 %v2915, %v2911
      %v2917 = vrot.slane %v2916, 4
      %v2919 = vshll.u32 %v2877, 16
      %v2921 = vrot.slane %v2919, 5
      %v2922 = vsel %vm1061, %v2917, %v2921
      %v2924 = vshrl.u32 %v2878, 16
      %v2926 = vrot.slane %v2924, 4
      %v2927 = vshll.u32 %v2878, 16
      %v2929 = vrot.slane %v2927, 5
      %v2930 = vor.u32 %v2926, %v2929
      %v2931 = vrot.slane %v2930, 4
      %v2933 = vshll.u32 %v2879, 16
      %v2935 = vrot.slane %v2933, 5
      %v2936 = vsel %vm1061, %v2931, %v2935
      %v2937 = vshrl.u32 %v2879, 16
      %v2939 = vrot.slane %v2937, 4
      %v2940 = vor.u32 %v2939, %v2935
      %v2941 = vrot.slane %v2940, 4
      %v2943 = vshll.u32 %v2880, 16
      %v2945 = vrot.slane %v2943, 5
      %v2946 = vsel %vm1061, %v2941, %v2945
      %v2948 = vshrl.u32 %v2881, 16
      %v2950 = vrot.slane %v2948, 4
      %v2951 = vshll.u32 %v2881, 16
      %v2953 = vrot.slane %v2951, 5
      %v2954 = vor.u32 %v2950, %v2953
      %v2955 = vrot.slane %v2954, 4
      %v2957 = vshll.u32 %v2882, 16
      %v2959 = vrot.slane %v2957, 5
      %v2960 = vsel %vm1061, %v2955, %v2959
      %v2961 = vshrl.u32 %v2882, 16
      %v2963 = vrot.slane %v2961, 4
      %v2964 = vor.u32 %v2963, %v2959
      %v2965 = vrot.slane %v2964, 4
      %v2967 = vshll.u32 %v2883, 16
      %v2969 = vrot.slane %v2967, 5
      %v2970 = vsel %vm1061, %v2965, %v2969
      %v2972 = vshrl.u32 %v2884, 16
      %v2974 = vrot.slane %v2972, 4
      %v2975 = vshll.u32 %v2884, 16
      %v2977 = vrot.slane %v2975, 5
      %v2978 = vor.u32 %v2974, %v2977
      %v2979 = vrot.slane %v2978, 4
      %v2981 = vshll.u32 %v2885, 16
      %v2983 = vrot.slane %v2981, 5
      %v2984 = vsel %vm1061, %v2979, %v2983
      %v2985 = vshrl.u32 %v2885, 16
      %v2987 = vrot.slane %v2985, 4
      %v2988 = vor.u32 %v2987, %v2983
      %v2989 = vrot.slane %v2988, 4
      %v2991 = vshll.u32 %v2886, 16
      %v2993 = vrot.slane %v2991, 5
      %v2994 = vsel %vm1061, %v2989, %v2993
      %v2996 = vshrl.u32 %v2887, 16
      %v2998 = vrot.slane %v2996, 4
      %v2999 = vshll.u32 %v2887, 16
      %v3001 = vrot.slane %v2999, 5
      %v3002 = vor.u32 %v2998, %v3001
      %v3003 = vrot.slane %v3002, 4
      %v3005 = vshll.u32 %v2888, 16
      %v3007 = vrot.slane %v3005, 5
      %v3008 = vsel %vm1061, %v3003, %v3007
      %v3009 = vshrl.u32 %v2888, 16
      %v3011 = vrot.slane %v3009, 4
      %v3012 = vor.u32 %v3011, %v3007
      %v3013 = vrot.slane %v3012, 4
      %v3015 = vshll.u32 %v2889, 16
      %v3017 = vrot.slane %v3015, 5
      %v3018 = vsel %vm1061, %v3013, %v3017
      %v3020 = vshrl.u32 %v2890, 16
      %v3022 = vrot.slane %v3020, 4
      %v3023 = vshll.u32 %v2890, 16
      %v3025 = vrot.slane %v3023, 5
      %v3026 = vor.u32 %v3022, %v3025
      %v3027 = vrot.slane %v3026, 4
      %v3029 = vshll.u32 %v2891, 16
      %v3031 = vrot.slane %v3029, 5
      %v3032 = vsel %vm1061, %v3027, %v3031
      %v3033 = vshrl.u32 %v2891, 16
      %v3035 = vrot.slane %v3033, 4
      %v3036 = vor.u32 %v3035, %v3031
      %v3037 = vrot.slane %v3036, 4
      %v3039 = vshll.u32 %v2892, 16
      %v3041 = vrot.slane %v3039, 5
      %v3042 = vsel %vm1061, %v3037, %v3041
      %v3044 = vshrl.u32 %v2893, 16
      %v3046 = vrot.slane %v3044, 4
      %v3047 = vshll.u32 %v2893, 16
      %v3049 = vrot.slane %v3047, 5
      %v3050 = vor.u32 %v3046, %v3049
      %v3051 = vrot.slane %v3050, 4
      %v3053 = vshll.u32 %v2894, 16
      %v3055 = vrot.slane %v3053, 5
      %v3056 = vsel %vm1061, %v3051, %v3055
      %v3057 = vshrl.u32 %v2894, 16
      %v3059 = vrot.slane %v3057, 4
      %v3060 = vor.u32 %v3059, %v3055
      %v3061 = vrot.slane %v3060, 4
      %v3063 = vshll.u32 %v2895, 16
      %v3065 = vrot.slane %v3063, 5
      %v3066 = vsel %vm1061, %v3061, %v3065
      %v3068 = vshrl.u32 %v2896, 16
      %v3070 = vrot.slane %v3068, 4
      %v3071 = vshll.u32 %v2896, 16
      %v3073 = vrot.slane %v3071, 5
      %v3074 = vor.u32 %v3070, %v3073
      %v3075 = vrot.slane %v3074, 4
      %v3077 = vshll.u32 %v2897, 16
      %v3079 = vrot.slane %v3077, 5
      %v3080 = vsel %vm1061, %v3075, %v3079
      %v3081 = vshrl.u32 %v2897, 16
      %v3083 = vrot.slane %v3081, 4
      %v3084 = vor.u32 %v3083, %v3079
      %v3085 = vrot.slane %v3084, 4
      %v3087 = vshll.u32 %v2898, 16
      %v3089 = vrot.slane %v3087, 5
      %v3090 = vsel %vm1061, %v3085, %v3089
      %s3091 = scalar_lea.vmem %s3, 512
      %v3092 = vld [vmem:[%s3091] sm:$0xf]
      %v3093 = vld [vmem:[%s3091 + $0x4] sm:$0xf]
      %v3094 = vld [vmem:[%s3091 + $0x8] sm:$0xf]
      %v3095 = vld [vmem:[%s3091 + $0xc] sm:$0xf]
      %v3096 = vld [vmem:[%s3091 + $0x10] sm:$0xf]
      %v3097 = vld [vmem:[%s3091 + $0x14] sm:$0xf]
      %v3098 = vld [vmem:[%s3091 + $0x18] sm:$0xf]
      %v3099 = vld [vmem:[%s3091 + $0x1c] sm:$0xf]
      %v3100 = vld [vmem:[%s3091 + $0x20] sm:$0xf]
      %v3101 = vld [vmem:[%s3091 + $0x24] sm:$0xf]
      %v3102 = vld [vmem:[%s3091 + $0x28] sm:$0xf]
      %v3103 = vld [vmem:[%s3091 + $0x2c] sm:$0xf]
      %v3104 = vld [vmem:[%s3091 + $0x30] sm:$0xf]
      %v3105 = vld [vmem:[%s3091 + $0x34] sm:$0xf]
      %v3106 = vld [vmem:[%s3091 + $0x38] sm:$0xf]
      %v3107 = vld [vmem:[%s3091 + $0x3c] sm:$0xf]
      %v3108 = vunpack.c.l.b16 %v2912
      %v3109 = vunpack.c.l.b16 %v2922
      %v3110 = vunpack.c.l.b16 %v2936
      %v3111 = vunpack.c.l.b16 %v2946
      %v3112 = vunpack.c.l.b16 %v2960
      %v3113 = vunpack.c.l.b16 %v2970
      %v3114 = vunpack.c.l.b16 %v2984
      %v3115 = vunpack.c.l.b16 %v2994
      %v3116 = vunpack.c.l.b16 %v3008
      %v3117 = vunpack.c.l.b16 %v3018
      %v3118 = vunpack.c.l.b16 %v3032
      %v3119 = vunpack.c.l.b16 %v3042
      %v3120 = vunpack.c.l.b16 %v3056
      %v3121 = vunpack.c.l.b16 %v3066
      %v3122 = vunpack.c.l.b16 %v3080
      %v3123 = vunpack.c.l.b16 %v3090
      %v3124 = vpack.c.b16 %v3109, %v3108
      %v3125 = vpack.c.b16 %v3111, %v3110
      %v3126 = vpack.c.b16 %v3113, %v3112
      %v3127 = vpack.c.b16 %v3115, %v3114
      %v3128 = vpack.c.b16 %v3117, %v3116
      %v3129 = vpack.c.b16 %v3119, %v3118
      %v3130 = vpack.c.b16 %v3121, %v3120
      %v3131 = vpack.c.b16 %v3123, %v3122
      %v3156 = vunpack.c.l.b16 %v3092
      %v3157 = vunpack.c.l.b16 %v3093
      %v3158 = vunpack.c.l.b16 %v3094
      %v3159 = vunpack.c.l.b16 %v3095
      %v3160 = vunpack.c.l.b16 %v3096
      %v3161 = vunpack.c.l.b16 %v3097
      %v3162 = vunpack.c.l.b16 %v3098
      %v3163 = vunpack.c.l.b16 %v3099
      %v3164 = vunpack.c.l.b16 %v3100
      %v3165 = vunpack.c.l.b16 %v3101
      %v3166 = vunpack.c.l.b16 %v3102
      %v3167 = vunpack.c.l.b16 %v3103
      %v3168 = vunpack.c.l.b16 %v3104
      %v3169 = vunpack.c.l.b16 %v3105
      %v3170 = vunpack.c.l.b16 %v3106
      %v3171 = vunpack.c.l.b16 %v3107
      %v3172 = vpack.c.b16 %v3157, %v3156
      %v3173 = vpack.c.b16 %v3159, %v3158
      %v3174 = vpack.c.b16 %v3161, %v3160
      %v3175 = vpack.c.b16 %v3163, %v3162
      %v3176 = vpack.c.b16 %v3165, %v3164
      %v3177 = vpack.c.b16 %v3167, %v3166
      %v3178 = vpack.c.b16 %v3169, %v3168
      %v3179 = vpack.c.b16 %v3171, %v3170
      %3188 = vmatpush.bf16.msra.mxu0 %v3179
      %3189 = vmatpush.bf16.msra.mxu0 %v3178
      %3190 = vmatpush.bf16.msra.mxu0 %v3177
      %3191 = vmatpush.bf16.msra.mxu0 %v3176
      %3192 = vmatpush.bf16.msra.mxu0 %v3175
      %3193 = vmatpush.bf16.msra.mxu0 %v3174
      %3194 = vmatpush.bf16.msra.mxu0 %v3173
      %3195 = vmatpush.bf16.msra.mxu0 %v3172
      %3196 = vmatmul.bf16.gmra.mxu0 %v3124
      %v3197 = vpop.f32.mrf.mxu0
      %v3198 = vadd.f32 0.0, %v3197
      %v3199 = vpop.f32.mrf.mxu0
      %v3200 = vadd.f32 0.0, %v3199
      %3201 = vmatmul.bf16.gmra.mxu0 %v3125
      %v3202 = vpop.f32.mrf.mxu0
      %v3203 = vadd.f32 0.0, %v3202
      %v3204 = vpop.f32.mrf.mxu0
      %v3205 = vadd.f32 0.0, %v3204
      %3206 = vmatmul.bf16.gmra.mxu0 %v3126
      %v3207 = vpop.f32.mrf.mxu0
      %v3208 = vadd.f32 0.0, %v3207
      %v3209 = vpop.f32.mrf.mxu0
      %v3210 = vadd.f32 0.0, %v3209
      %3211 = vmatmul.bf16.gmra.mxu0 %v3127
      %v3212 = vpop.f32.mrf.mxu0
      %v3213 = vadd.f32 0.0, %v3212
      %v3214 = vpop.f32.mrf.mxu0
      %v3215 = vadd.f32 0.0, %v3214
      %3216 = vmatmul.bf16.gmra.mxu0 %v3128
      %v3217 = vpop.f32.mrf.mxu0
      %v3218 = vadd.f32 0.0, %v3217
      %v3219 = vpop.f32.mrf.mxu0
      %v3220 = vadd.f32 0.0, %v3219
      %3221 = vmatmul.bf16.gmra.mxu0 %v3129
      %v3222 = vpop.f32.mrf.mxu0
      %v3223 = vadd.f32 0.0, %v3222
      %v3224 = vpop.f32.mrf.mxu0
      %v3225 = vadd.f32 0.0, %v3224
      %3226 = vmatmul.bf16.gmra.mxu0 %v3130
      %v3227 = vpop.f32.mrf.mxu0
      %v3228 = vadd.f32 0.0, %v3227
      %v3229 = vpop.f32.mrf.mxu0
      %v3230 = vadd.f32 0.0, %v3229
      %3231 = vmatmul.bf16.gmra.mxu0 %v3131
      %v3232 = vpop.f32.mrf.mxu0
      %v3233 = vadd.f32 0.0, %v3232
      %v3234 = vpop.f32.mrf.mxu0
      %v3235 = vadd.f32 0.0, %v3234
      %3236 = vdwg.mxu0
      %v3237 = vadd.f32 %v2859, %v3198
      %v3238 = vadd.f32 %v2860, %v3200
      %v3239 = vadd.f32 %v2861, %v3203
      %v3240 = vadd.f32 %v2862, %v3205
      %v3241 = vadd.f32 %v2863, %v3208
      %v3242 = vadd.f32 %v2864, %v3210
      %v3243 = vadd.f32 %v2865, %v3213
      %v3244 = vadd.f32 %v2866, %v3215
      %v3245 = vadd.f32 %v2867, %v3218
      %v3246 = vadd.f32 %v2868, %v3220
      %v3247 = vadd.f32 %v2869, %v3223
      %v3248 = vadd.f32 %v2870, %v3225
      %v3249 = vadd.f32 %v2871, %v3228
      %v3250 = vadd.f32 %v2872, %v3230
      %v3251 = vadd.f32 %v2873, %v3233
      %v3252 = vadd.f32 %v2874, %v3235
      %v3253 = vmax.f32 %v3237, 0.0
      %v3254 = vmax.f32 %v3238, 0.0
      %v3255 = vmax.f32 %v3239, 0.0
      %v3256 = vmax.f32 %v3240, 0.0
      %v3257 = vmax.f32 %v3241, 0.0
      %v3258 = vmax.f32 %v3242, 0.0
      %v3259 = vmax.f32 %v3243, 0.0
      %v3260 = vmax.f32 %v3244, 0.0
      %v3261 = vmax.f32 %v3245, 0.0
      %v3262 = vmax.f32 %v3246, 0.0
      %v3263 = vmax.f32 %v3247, 0.0
      %v3264 = vmax.f32 %v3248, 0.0
      %v3265 = vmax.f32 %v3249, 0.0
      %v3266 = vmax.f32 %v3250, 0.0
      %v3267 = vmax.f32 %v3251, 0.0
      %v3268 = vmax.f32 %v3252, 0.0
      %v3269 = vld [vmem:[%s4] sm:$0x1]
      %v3271 = vperm.slane %v3269, 0
      %v3273 = vmul.f32 %v3253, %v3271
      %v3274 = vmul.f32 %v3254, %v3271
      %v3275 = vmul.f32 %v3255, %v3271
      %v3276 = vmul.f32 %v3256, %v3271
      %v3277 = vmul.f32 %v3257, %v3271
      %v3278 = vmul.f32 %v3258, %v3271
      %v3279 = vmul.f32 %v3259, %v3271
      %v3280 = vmul.f32 %v3260, %v3271
      %v3281 = vmul.f32 %v3261, %v3271
      %v3282 = vmul.f32 %v3262, %v3271
      %v3283 = vmul.f32 %v3263, %v3271
      %v3284 = vmul.f32 %v3264, %v3271
      %v3285 = vmul.f32 %v3265, %v3271
      %v3286 = vmul.f32 %v3266, %v3271
      %v3287 = vmul.f32 %v3267, %v3271
      %v3288 = vmul.f32 %v3268, %v3271
      %v3289 = vld [vmem:[%s5] sm:$0x1]
      %v3291 = vperm.slane %v3289, 0
      %v3293 = vadd.f32 %v3273, %v3291
      %v3294 = vadd.f32 %v3274, %v3291
      %v3295 = vadd.f32 %v3275, %v3291
      %v3296 = vadd.f32 %v3276, %v3291
      %v3297 = vadd.f32 %v3277, %v3291
      %v3298 = vadd.f32 %v3278, %v3291
      %v3299 = vadd.f32 %v3279, %v3291
      %v3300 = vadd.f32 %v3280, %v3291
      %v3301 = vadd.f32 %v3281, %v3291
      %v3302 = vadd.f32 %v3282, %v3291
      %v3303 = vadd.f32 %v3283, %v3291
      %v3304 = vadd.f32 %v3284, %v3291
      %v3305 = vadd.f32 %v3285, %v3291
      %v3306 = vadd.f32 %v3286, %v3291
      %v3307 = vadd.f32 %v3287, %v3291
      %v3308 = vadd.f32 %v3288, %v3291
      %v3309 = vpack.c.bf16 %v3293, %v3293
      %v3310 = vpack.c.bf16 %v3294, %v3294
      %v3311 = vpack.c.bf16 %v3295, %v3295
      %v3312 = vpack.c.bf16 %v3296, %v3296
      %v3313 = vpack.c.bf16 %v3297, %v3297
      %v3314 = vpack.c.bf16 %v3298, %v3298
      %v3315 = vpack.c.bf16 %v3299, %v3299
      %v3316 = vpack.c.bf16 %v3300, %v3300
      %v3317 = vpack.c.bf16 %v3301, %v3301
      %v3318 = vpack.c.bf16 %v3302, %v3302
      %v3319 = vpack.c.bf16 %v3303, %v3303
      %v3320 = vpack.c.bf16 %v3304, %v3304
      %v3321 = vpack.c.bf16 %v3305, %v3305
      %v3322 = vpack.c.bf16 %v3306, %v3306
      %v3323 = vpack.c.bf16 %v3307, %v3307
      %v3324 = vpack.c.bf16 %v3308, %v3308
      %3325 = vst [vmem:[%s418] sm:$0xf] %v3309
      %3326 = vst [vmem:[%s418 + $0x4] sm:$0xf] %v3310
      %3327 = vst [vmem:[%s418 + $0x8] sm:$0xf] %v3311
      %3328 = vst [vmem:[%s418 + $0xc] sm:$0xf] %v3312
      %3329 = vst [vmem:[%s418 + $0x10] sm:$0xf] %v3313
      %3330 = vst [vmem:[%s418 + $0x14] sm:$0xf] %v3314
      %3331 = vst [vmem:[%s418 + $0x18] sm:$0xf] %v3315
      %3332 = vst [vmem:[%s418 + $0x1c] sm:$0xf] %v3316
      %3333 = vst [vmem:[%s418 + $0x20] sm:$0xf] %v3317
      %3334 = vst [vmem:[%s418 + $0x24] sm:$0xf] %v3318
      %3335 = vst [vmem:[%s418 + $0x28] sm:$0xf] %v3319
      %3336 = vst [vmem:[%s418 + $0x2c] sm:$0xf] %v3320
      %3337 = vst [vmem:[%s418 + $0x30] sm:$0xf] %v3321
      %3338 = vst [vmem:[%s418 + $0x34] sm:$0xf] %v3322
      %3339 = vst [vmem:[%s418 + $0x38] sm:$0xf] %v3323
      %3340 = vst [vmem:[%s418 + $0x3c] sm:$0xf] %v3324
      %s3341 = smul.u32 8, %s22
      %p3342 = scmp.lt.s32.totalorder %s21, 1
      %s3343 = scalar_select %p3342, %s21, 1
      %p3344 = scmp.lt.s32.totalorder %s3341, 15
      %s3345 = scalar_select %p3344, %s3341, 15
      %s3346 = smul.addr %s3345, 2
      %s3347 = smul.addr %s3343, 32
      %s3348 = sadd.s32 %s3346, %s3347
      %s3349 = smul.addr %s3348, 4
      %s3350 = scalar_lea.vmem %s6, %s3349
      // Predicated region
      $region53: #{unet_block_deep_forward.7} parent=43 // pred_check
        %p3351 = pneg %p212
      $region54: #{unet_block_deep_forward.7} parent=43 // pred_check_branch
        %3353 = sbr.rel (%p3351) target = $region56
      $region55: #{unet_block_deep_forward.7} parent=43 // pred_region
        %s3354 = smul.u32 8, %s22
      $region56: #{unet_block_deep_forward.7} parent=43 // pred_fallthru
        _
    $region44: #{unet_block_deep_forward.7} parent=5 // pred_fallthru
      _
    %p3355 = scmp.le.s32.totalorder 2, %s12
    // Predicated region
    $region57: #{unet_block_deep_forward.7} parent=5 // pred_check
      %p3356 = pneg %p3355
    $region58: #{unet_block_deep_forward.7} parent=5 // pred_check_branch
      %3358 = sbr.rel (%p3356) target = $region60
    $region59: #{unet_block_deep_forward.7} parent=5 // pred_region
      %s3359 = ssub.s32 %s12, 2
      // Predicated region
      $region61: #{unet_block_deep_forward.7} parent=59 // pred_check
        %p3360 = pneg %p218
      $region62: #{unet_block_deep_forward.7} parent=59 // pred_check_branch
        %3362 = sbr.rel (%p3360) target = $region64
      $region63: #{unet_block_deep_forward.7} parent=59 // pred_region
        %s3363 = smul.u32 8, %s24
        %p3364 = scmp.lt.s32.totalorder %s23, 1
        %s3365 = scalar_select %p3364, %s23, 1
        %p3366 = scmp.lt.s32.totalorder %s3363, 15
        %s3367 = scalar_select %p3366, %s3363, 15
        %s3368 = smul.addr %s3367, 2
        %s3369 = smul.addr %s3365, 32
        %s3370 = sadd.s32 %s3368, %s3369
        %s3371 = smul.addr %s3370, 4
        %s3372 = scalar_lea.vmem %s6, %s3371
      $region64: #{unet_block_deep_forward.7} parent=59 // pred_fallthru
        _
    $region60: #{unet_block_deep_forward.7} parent=5 // pred_fallthru
      _
  $region6: #{unet_block_deep_forward.7} parent=0 // loop_footer
    %s16 = sadd.s32 1, %s12
  $region7: #{unet_block_deep_forward.7} parent=0 // loop_footer_branch
    %11 = sbr.rel target = $region3
  $region8: #{unet_block_deep_forward.7} parent=0 // loop_exit
    _

// kernel: unet_block_deep_forward.6
$region0: #{unet_block_deep_forward.6}
  #allocation0 [shape = 'u32[]', space=smem, size = 0x4, offset = 0x4, fixed_abs, tag = 'smem constant byte address 0x4 - core index']
  #allocation1 [shape = 'u32[72,128]{1,0:T(1,128)}', space=vmem, size = 0x9000, scoped, tag = 'internal scratch']
  #allocation2 [shape = 'bf16[10,25,64]{2,1,0:T(8,128)(2,1)}', space=vmem, size = 0x14000, scoped, tag = 'scratch operand']
  %s0 = inlined_call_operand.vmem [shape: bf16[2,16,16,32], index: 0, kind: input, shape index: {}, may-alias: {0,1,2}]
  %s1 = inlined_call_operand.vmem [shape: bf16[2,16,16,32], index: 1, kind: input, shape index: {}, may-alias: {0,1,2}]
  %s2 = inlined_call_operand.vmem [shape: bf16[2,16,16,32], index: 2, kind: input, shape index: {}, may-alias: {0,1,2}]
  %s3 = inlined_call_operand.vmem [shape: bf16[2,16,16,32], index: 3, kind: input, shape index: {}, may-alias: {3,4,5}]
  %s4 = inlined_call_operand.vmem [shape: bf16[2,16,16,32], index: 4, kind: input, shape index: {}, may-alias: {3,4,5}]
  %s5 = inlined_call_operand.vmem [shape: bf16[2,16,16,32], index: 5, kind: input, shape index: {}, may-alias: {3,4,5}]
  %s6 = inlined_call_operand.vmem [shape: bf16[9,64,128], index: 6, kind: input, shape index: {}]
  %s7 = inlined_call_operand.vmem [shape: f32[1,32], index: 7, kind: input, shape index: {}]
  %s8 = inlined_call_operand.vmem [shape: f32[1,32], index: 8, kind: input, shape index: {}]
  %s9 = inlined_call_operand.vmem [shape: f32[1,128], index: 9, kind: input, shape index: {}]
  %s10 = inlined_call_operand.vmem [shape: f32[1,128], index: 10, kind: input, shape index: {}]
  %s11 = inlined_call_operand.vmem [shape: bf16[2,16,16,128], index: 11, kind: output, shape index: {}]
  %s12 = sld [smem:[#allocation0]]
  $region85: #{unet_block_deep_forward.6} parent=0
    _
  %s14 = ssub.s32 1, %s12
  %s15 = scalar_select 0, %s14, %s12
  loop: start=0, step=1, limit=6
  $region2: #{unet_block_deep_forward.6} parent=0 // loop_pre_header
    _
  $region3: #{unet_block_deep_forward.6} parent=0 // loop_header
    %s17 = sphi 0, %s21
    %p18 = scmp.ge.s32.totalorder %s17, 6
    %s24 = sphi 0, %s36
    %s25 = sphi 0, %s32
    %s26 = sphi 0, %s24
    %s27 = sphi 0, %s25
    %s28 = sphi 0, %s26
    %s29 = sphi 0, %s27
    %s41 = sphi 0, %s43
    %s44 = sphi 0, %s41
    %s45 = sphi 0, %s44
    %s61 = sphi 0, %s45
    %s77 = sphi 0, %s79
    %s80 = sphi 0, %s77
    %s81 = sphi 0, %s80
    %s97 = sphi 0, %s81
    %s113 = sphi 0, %s115
    %s116 = sphi 0, %s113
    %s117 = sphi 0, %s116
    %s133 = sphi 0, %s117
    %s141 = sphi 0, %s143
    %s144 = sphi 0, %s141
    %s145 = sphi 0, %s144
    %s161 = sphi 0, %s145
    %s177 = sphi 0, %s179
    %s180 = sphi 0, %s177
    %s181 = sphi 0, %s180
    %s197 = sphi 0, %s181
    %s213 = sphi 0, %s215
    %s216 = sphi 0, %s213
    %s217 = sphi 0, %s216
    %s233 = sphi 0, %s217
    %s237 = sphi 0, %s237
    %s239 = sphi 0, %s237
    %s240 = sphi 0, %s239
    %s254 = sphi 0, %s240
    %s258 = sphi 0, %s258
    %s260 = sphi 0, %s258
    %s261 = sphi 0, %s260
    %s275 = sphi 0, %s261
    %s279 = sphi 0, %s279
    %s281 = sphi 0, %s279
    %s282 = sphi 0, %s281
    %s296 = sphi 0, %s282
    %s300 = sphi 0, %s300
    %s302 = sphi 0, %s300
    %s303 = sphi 0, %s302
    %s317 = sphi 0, %s303
    %s321 = sphi 0, %s321
    %s323 = sphi 0, %s321
    %s324 = sphi 0, %s323
    %s338 = sphi 0, %s324
    %s346 = sphi 0, %s348
    %s349 = sphi 0, %s346
    %s350 = sphi 0, %s349
    %s366 = sphi 0, %s350
  $region4: #{unet_block_deep_forward.6} parent=0 // loop_header_branch
    %20 = sbr.rel (%p18) target = $region8
  $region5: #{unet_block_deep_forward.6} parent=0 // loop_body
    %s22 = ssub.s32 %s17, 1
    %s23 = ssub.s32 %s17, 2
    %s30 = sadd.s32 1, %s25
    %p31 = scmp.ge.s32.totalorder %s30, 2
    %s32 = scalar_select %p31, 0, %s30
    %s33 = sadd.s32 1, %s24
    %s34 = scalar_select %p31, %s33, %s24
    %p35 = scmp.ge.s32.totalorder %s34, 2
    %s36 = scalar_select %p35, 0, %s34
    %s37 = ssub.s32 %s24, %s36
    %s38 = ssub.s32 %s25, %s32
    %s39 = sor.u32 %s37, %s38
    %p40 = scmp.eq.s32.totalorder %s39, 0
    %s42 = sadd.s32 %s41, 1
    %s43 = scalar_select %p40, %s41, %s42
    %p46 = pneg %p40
    %p47 = scmp.eq.s32.totalorder %s17, 3
    %p48 = por %p46, %p47
    %p49 = scmp.ne.s32.totalorder %s41, %s44
    %p50 = scmp.eq.s32.totalorder %s17, 0
    %p51 = por %p49, %p50
    %p52 = scmp.ne.s32.totalorder %s41, %s44
    %p53 = scmp.eq.s32.totalorder %s22, 3
    %p54 = por %p52, %p53
    %p55 = scmp.ne.s32.totalorder %s44, %s45
    %p56 = scmp.eq.s32.totalorder %s22, 0
    %p57 = por %p55, %p56
    %p58 = scmp.ne.s32.totalorder %s44, %s45
    %p59 = scmp.eq.s32.totalorder %s23, 3
    %p60 = por %p58, %p59
    %p62 = scmp.ne.s32.totalorder %s45, %s61
    %p63 = scmp.eq.s32.totalorder %s23, 0
    %p64 = por %p62, %p63
    %s65 = smul.u32 %s25, 8
    %s66 = ssub.s32 %s65, 1
    %p67 = scmp.gt.s32.totalorder %s66, 0
    %s68 = scalar_select %p67, %s66, 0
    %s69 = smul.u32 %s32, 8
    %s70 = ssub.s32 %s69, 1
    %p71 = scmp.gt.s32.totalorder %s70, 0
    %s72 = scalar_select %p71, %s70, 0
    %s73 = ssub.s32 %s24, %s36
    %s74 = ssub.s32 %s68, %s72
    %s75 = sor.u32 %s73, %s74
    %p76 = scmp.eq.s32.totalorder %s75, 0
    %s78 = sadd.s32 %s77, 1
    %s79 = scalar_select %p76, %s77, %s78
    %p82 = pneg %p76
    %p83 = scmp.eq.s32.totalorder %s17, 3
    %p84 = por %p82, %p83
    %p85 = scmp.ne.s32.totalorder %s77, %s80
    %p86 = scmp.eq.s32.totalorder %s17, 0
    %p87 = por %p85, %p86
    %p88 = scmp.ne.s32.totalorder %s77, %s80
    %p89 = scmp.eq.s32.totalorder %s22, 3
    %p90 = por %p88, %p89
    %p91 = scmp.ne.s32.totalorder %s80, %s81
    %p92 = scmp.eq.s32.totalorder %s22, 0
    %p93 = por %p91, %p92
    %p94 = scmp.ne.s32.totalorder %s80, %s81
    %p95 = scmp.eq.s32.totalorder %s23, 3
    %p96 = por %p94, %p95
    %p98 = scmp.ne.s32.totalorder %s81, %s97
    %p99 = scmp.eq.s32.totalorder %s23, 0
    %p100 = por %p98, %p99
    %s101 = smul.u32 %s25, 8
    %s102 = sadd.s32 %s101, 8
    %p103 = scmp.lt.s32.totalorder %s102, 15
    %s104 = scalar_select %p103, %s102, 15
    %s105 = smul.u32 %s32, 8
    %s106 = sadd.s32 %s105, 8
    %p107 = scmp.lt.s32.totalorder %s106, 15
    %s108 = scalar_select %p107, %s106, 15
    %s109 = ssub.s32 %s24, %s36
    %s110 = ssub.s32 %s104, %s108
    %s111 = sor.u32 %s109, %s110
    %p112 = scmp.eq.s32.totalorder %s111, 0
    %s114 = sadd.s32 %s113, 1
    %s115 = scalar_select %p112, %s113, %s114
    %p118 = pneg %p112
    %p119 = scmp.eq.s32.totalorder %s17, 3
    %p120 = por %p118, %p119
    %p121 = scmp.ne.s32.totalorder %s113, %s116
    %p122 = scmp.eq.s32.totalorder %s17, 0
    %p123 = por %p121, %p122
    %p124 = scmp.ne.s32.totalorder %s113, %s116
    %p125 = scmp.eq.s32.totalorder %s22, 3
    %p126 = por %p124, %p125
    %p127 = scmp.ne.s32.totalorder %s116, %s117
    %p128 = scmp.eq.s32.totalorder %s22, 0
    %p129 = por %p127, %p128
    %p130 = scmp.ne.s32.totalorder %s116, %s117
    %p131 = scmp.eq.s32.totalorder %s23, 3
    %p132 = por %p130, %p131
    %p134 = scmp.ne.s32.totalorder %s117, %s133
    %p135 = scmp.eq.s32.totalorder %s23, 0
    %p136 = por %p134, %p135
    %s137 = ssub.s32 %s24, %s36
    %s138 = ssub.s32 %s25, %s32
    %s139 = sor.u32 %s137, %s138
    %p140 = scmp.eq.s32.totalorder %s139, 0
    %s142 = sadd.s32 %s141, 1
    %s143 = scalar_select %p140, %s141, %s142
    %p146 = pneg %p140
    %p147 = scmp.eq.s32.totalorder %s17, 3
    %p148 = por %p146, %p147
    %p149 = scmp.ne.s32.totalorder %s141, %s144
    %p150 = scmp.eq.s32.totalorder %s17, 0
    %p151 = por %p149, %p150
    %p152 = scmp.ne.s32.totalorder %s141, %s144
    %p153 = scmp.eq.s32.totalorder %s22, 3
    %p154 = por %p152, %p153
    %p155 = scmp.ne.s32.totalorder %s144, %s145
    %p156 = scmp.eq.s32.totalorder %s22, 0
    %p157 = por %p155, %p156
    %p158 = scmp.ne.s32.totalorder %s144, %s145
    %p159 = scmp.eq.s32.totalorder %s23, 3
    %p160 = por %p158, %p159
    %p162 = scmp.ne.s32.totalorder %s145, %s161
    %p163 = scmp.eq.s32.totalorder %s23, 0
    %p164 = por %p162, %p163
    %s165 = smul.u32 %s25, 8
    %s166 = ssub.s32 %s165, 1
    %p167 = scmp.gt.s32.totalorder %s166, 0
    %s168 = scalar_select %p167, %s166, 0
    %s169 = smul.u32 %s32, 8
    %s170 = ssub.s32 %s169, 1
    %p171 = scmp.gt.s32.totalorder %s170, 0
    %s172 = scalar_select %p171, %s170, 0
    %s173 = ssub.s32 %s24, %s36
    %s174 = ssub.s32 %s168, %s172
    %s175 = sor.u32 %s173, %s174
    %p176 = scmp.eq.s32.totalorder %s175, 0
    %s178 = sadd.s32 %s177, 1
    %s179 = scalar_select %p176, %s177, %s178
    %p182 = pneg %p176
    %p183 = scmp.eq.s32.totalorder %s17, 3
    %p184 = por %p182, %p183
    %p185 = scmp.ne.s32.totalorder %s177, %s180
    %p186 = scmp.eq.s32.totalorder %s17, 0
    %p187 = por %p185, %p186
    %p188 = scmp.ne.s32.totalorder %s177, %s180
    %p189 = scmp.eq.s32.totalorder %s22, 3
    %p190 = por %p188, %p189
    %p191 = scmp.ne.s32.totalorder %s180, %s181
    %p192 = scmp.eq.s32.totalorder %s22, 0
    %p193 = por %p191, %p192
    %p194 = scmp.ne.s32.totalorder %s180, %s181
    %p195 = scmp.eq.s32.totalorder %s23, 3
    %p196 = por %p194, %p195
    %p198 = scmp.ne.s32.totalorder %s181, %s197
    %p199 = scmp.eq.s32.totalorder %s23, 0
    %p200 = por %p198, %p199
    %s201 = smul.u32 %s25, 8
    %s202 = sadd.s32 %s201, 8
    %p203 = scmp.lt.s32.totalorder %s202, 15
    %s204 = scalar_select %p203, %s202, 15
    %s205 = smul.u32 %s32, 8
    %s206 = sadd.s32 %s205, 8
    %p207 = scmp.lt.s32.totalorder %s206, 15
    %s208 = scalar_select %p207, %s206, 15
    %s209 = ssub.s32 %s24, %s36
    %s210 = ssub.s32 %s204, %s208
    %s211 = sor.u32 %s209, %s210
    %p212 = scmp.eq.s32.totalorder %s211, 0
    %s214 = sadd.s32 %s213, 1
    %s215 = scalar_select %p212, %s213, %s214
    %p218 = pneg %p212
    %p219 = scmp.eq.s32.totalorder %s17, 3
    %p220 = por %p218, %p219
    %p221 = scmp.ne.s32.totalorder %s213, %s216
    %p222 = scmp.eq.s32.totalorder %s17, 0
    %p223 = por %p221, %p222
    %p224 = scmp.ne.s32.totalorder %s213, %s216
    %p225 = scmp.eq.s32.totalorder %s22, 3
    %p226 = por %p224, %p225
    %p227 = scmp.ne.s32.totalorder %s216, %s217
    %p228 = scmp.eq.s32.totalorder %s22, 0
    %p229 = por %p227, %p228
    %p230 = scmp.ne.s32.totalorder %s216, %s217
    %p231 = scmp.eq.s32.totalorder %s23, 3
    %p232 = por %p230, %p231
    %p234 = scmp.ne.s32.totalorder %s217, %s233
    %p235 = scmp.eq.s32.totalorder %s23, 0
    %p236 = por %p234, %p235
    %s238 = sadd.s32 %s237, 1
    %p241 = scmp.eq.s32.totalorder %s17, 3
    %p242 = scmp.ne.s32.totalorder %s237, %s239
    %p243 = scmp.eq.s32.totalorder %s17, 0
    %p244 = por %p242, %p243
    %p245 = scmp.ne.s32.totalorder %s237, %s239
    %p246 = scmp.eq.s32.totalorder %s22, 3
    %p247 = por %p245, %p246
    %p248 = scmp.ne.s32.totalorder %s239, %s240
    %p249 = scmp.eq.s32.totalorder %s22, 0
    %p250 = por %p248, %p249
    %p251 = scmp.ne.s32.totalorder %s239, %s240
    %p252 = scmp.eq.s32.totalorder %s23, 3
    %p253 = por %p251, %p252
    %p255 = scmp.ne.s32.totalorder %s240, %s254
    %p256 = scmp.eq.s32.totalorder %s23, 0
    %p257 = por %p255, %p256
    %s259 = sadd.s32 %s258, 1
    %p262 = scmp.eq.s32.totalorder %s17, 3
    %p263 = scmp.ne.s32.totalorder %s258, %s260
    %p264 = scmp.eq.s32.totalorder %s17, 0
    %p265 = por %p263, %p264
    %p266 = scmp.ne.s32.totalorder %s258, %s260
    %p267 = scmp.eq.s32.totalorder %s22, 3
    %p268 = por %p266, %p267
    %p269 = scmp.ne.s32.totalorder %s260, %s261
    %p270 = scmp.eq.s32.totalorder %s22, 0
    %p271 = por %p269, %p270
    %p272 = scmp.ne.s32.totalorder %s260, %s261
    %p273 = scmp.eq.s32.totalorder %s23, 3
    %p274 = por %p272, %p273
    %p276 = scmp.ne.s32.totalorder %s261, %s275
    %p277 = scmp.eq.s32.totalorder %s23, 0
    %p278 = por %p276, %p277
    %s280 = sadd.s32 %s279, 1
    %p283 = scmp.eq.s32.totalorder %s17, 3
    %p284 = scmp.ne.s32.totalorder %s279, %s281
    %p285 = scmp.eq.s32.totalorder %s17, 0
    %p286 = por %p284, %p285
    %p287 = scmp.ne.s32.totalorder %s279, %s281
    %p288 = scmp.eq.s32.totalorder %s22, 3
    %p289 = por %p287, %p288
    %p290 = scmp.ne.s32.totalorder %s281, %s282
    %p291 = scmp.eq.s32.totalorder %s22, 0
    %p292 = por %p290, %p291
    %p293 = scmp.ne.s32.totalorder %s281, %s282
    %p294 = scmp.eq.s32.totalorder %s23, 3
    %p295 = por %p293, %p294
    %p297 = scmp.ne.s32.totalorder %s282, %s296
    %p298 = scmp.eq.s32.totalorder %s23, 0
    %p299 = por %p297, %p298
    %s301 = sadd.s32 %s300, 1
    %p304 = scmp.eq.s32.totalorder %s17, 3
    %p305 = scmp.ne.s32.totalorder %s300, %s302
    %p306 = scmp.eq.s32.totalorder %s17, 0
    %p307 = por %p305, %p306
    %p308 = scmp.ne.s32.totalorder %s300, %s302
    %p309 = scmp.eq.s32.totalorder %s22, 3
    %p310 = por %p308, %p309
    %p311 = scmp.ne.s32.totalorder %s302, %s303
    %p312 = scmp.eq.s32.totalorder %s22, 0
    %p313 = por %p311, %p312
    %p314 = scmp.ne.s32.totalorder %s302, %s303
    %p315 = scmp.eq.s32.totalorder %s23, 3
    %p316 = por %p314, %p315
    %p318 = scmp.ne.s32.totalorder %s303, %s317
    %p319 = scmp.eq.s32.totalorder %s23, 0
    %p320 = por %p318, %p319
    %s322 = sadd.s32 %s321, 1
    %p325 = scmp.eq.s32.totalorder %s17, 3
    %p326 = scmp.ne.s32.totalorder %s321, %s323
    %p327 = scmp.eq.s32.totalorder %s17, 0
    %p328 = por %p326, %p327
    %p329 = scmp.ne.s32.totalorder %s321, %s323
    %p330 = scmp.eq.s32.totalorder %s22, 3
    %p331 = por %p329, %p330
    %p332 = scmp.ne.s32.totalorder %s323, %s324
    %p333 = scmp.eq.s32.totalorder %s22, 0
    %p334 = por %p332, %p333
    %p335 = scmp.ne.s32.totalorder %s323, %s324
    %p336 = scmp.eq.s32.totalorder %s23, 3
    %p337 = por %p335, %p336
    %p339 = scmp.ne.s32.totalorder %s324, %s338
    %p340 = scmp.eq.s32.totalorder %s23, 0
    %p341 = por %p339, %p340
    %s342 = ssub.s32 %s24, %s36
    %s343 = ssub.s32 %s25, %s32
    %s344 = sor.u32 %s342, %s343
    %p345 = scmp.eq.s32.totalorder %s344, 0
    %s347 = sadd.s32 %s346, 1
    %s348 = scalar_select %p345, %s346, %s347
    %p351 = pneg %p345
    %p352 = scmp.eq.s32.totalorder %s17, 3
    %p353 = por %p351, %p352
    %p354 = scmp.ne.s32.totalorder %s346, %s349
    %p355 = scmp.eq.s32.totalorder %s17, 0
    %p356 = por %p354, %p355
    %p357 = scmp.ne.s32.totalorder %s346, %s349
    %p358 = scmp.eq.s32.totalorder %s22, 3
    %p359 = por %p357, %p358
    %p360 = scmp.ne.s32.totalorder %s349, %s350
    %p361 = scmp.eq.s32.totalorder %s22, 0
    %p362 = por %p360, %p361
    %p363 = scmp.ne.s32.totalorder %s349, %s350
    %p364 = scmp.eq.s32.totalorder %s23, 3
    %p365 = por %p363, %p364
    %p367 = scmp.ne.s32.totalorder %s350, %s366
    %p368 = scmp.eq.s32.totalorder %s23, 0
    %p369 = por %p367, %p368
    %p370 = scmp.le.s32.totalorder 1, %s17
    %p371 = scmp.lt.s32.totalorder %s17, 5
    %p372 = pnand %p370, %p371
    %p373 = pneg %p372
    // Predicated region
    $region9: #{unet_block_deep_forward.6} parent=5 // pred_check
      _
    $region10: #{unet_block_deep_forward.6} parent=5 // pred_check_branch
      %375 = sbr.rel (%p372) target = $region12
    $region11: #{unet_block_deep_forward.6} parent=5 // pred_region
      %s376 = ssub.s32 %s17, 1
      // Predicated region
      $region13: #{unet_block_deep_forward.6} parent=11 // pred_check
        %p377 = pneg %p250
      $region14: #{unet_block_deep_forward.6} parent=11 // pred_check_branch
        %379 = sbr.rel (%p377) target = $region16
      $region15: #{unet_block_deep_forward.6} parent=11 // pred_region
        _
      $region16: #{unet_block_deep_forward.6} parent=11 // pred_fallthru
        _
      // Predicated region
      $region17: #{unet_block_deep_forward.6} parent=11 // pred_check
        %p380 = pneg %p271
      $region18: #{unet_block_deep_forward.6} parent=11 // pred_check_branch
        %382 = sbr.rel (%p380) target = $region20
      $region19: #{unet_block_deep_forward.6} parent=11 // pred_region
        _
      $region20: #{unet_block_deep_forward.6} parent=11 // pred_fallthru
        _
      // Predicated region
      $region21: #{unet_block_deep_forward.6} parent=11 // pred_check
        %p383 = pneg %p292
      $region22: #{unet_block_deep_forward.6} parent=11 // pred_check_branch
        %385 = sbr.rel (%p383) target = $region24
      $region23: #{unet_block_deep_forward.6} parent=11 // pred_region
        _
      $region24: #{unet_block_deep_forward.6} parent=11 // pred_fallthru
        _
      // Predicated region
      $region25: #{unet_block_deep_forward.6} parent=11 // pred_check
        %p386 = pneg %p313
      $region26: #{unet_block_deep_forward.6} parent=11 // pred_check_branch
        %388 = sbr.rel (%p386) target = $region28
      $region27: #{unet_block_deep_forward.6} parent=11 // pred_region
        _
      $region28: #{unet_block_deep_forward.6} parent=11 // pred_fallthru
        _
      // Predicated region
      $region29: #{unet_block_deep_forward.6} parent=11 // pred_check
        %p389 = pneg %p334
      $region30: #{unet_block_deep_forward.6} parent=11 // pred_check_branch
        %391 = sbr.rel (%p389) target = $region32
      $region31: #{unet_block_deep_forward.6} parent=11 // pred_region
        _
      $region32: #{unet_block_deep_forward.6} parent=11 // pred_fallthru
        _
    $region12: #{unet_block_deep_forward.6} parent=5 // pred_fallthru
      _
    %p392 = scmp.lt.s32.totalorder %s17, 4
    // Predicated region
    $region33: #{unet_block_deep_forward.6} parent=5 // pred_check
      %p393 = pneg %p392
    $region34: #{unet_block_deep_forward.6} parent=5 // pred_check_branch
      %395 = sbr.rel (%p393) target = $region36
    $region35: #{unet_block_deep_forward.6} parent=5 // pred_region
      // Predicated region
      $region37: #{unet_block_deep_forward.6} parent=35 // pred_check
        %p396 = pneg %p51
      $region38: #{unet_block_deep_forward.6} parent=35 // pred_check_branch
        %398 = sbr.rel (%p396) target = $region40
      $region39: #{unet_block_deep_forward.6} parent=35 // pred_region
        %s399 = smul.u32 8, %s25
        %p400 = scmp.lt.s32.totalorder %s24, 1
        %s401 = scalar_select %p400, %s24, 1
        %p402 = scmp.lt.s32.totalorder %s399, 15
        %s403 = scalar_select %p402, %s399, 15
        %s404 = smul.addr %s403, 2
        %s405 = smul.addr %s401, 32
        %s406 = sadd.s32 %s404, %s405
        %s407 = smul.addr %s406, 4
        %s408 = scalar_lea.vmem %s0, %s407
        %s409 = smul.u32 8, %s25
      $region40: #{unet_block_deep_forward.6} parent=35 // pred_fallthru
        _
      // Predicated region
      $region41: #{unet_block_deep_forward.6} parent=35 // pred_check
        %p410 = pneg %p87
      $region42: #{unet_block_deep_forward.6} parent=35 // pred_check_branch
        %412 = sbr.rel (%p410) target = $region44
      $region43: #{unet_block_deep_forward.6} parent=35 // pred_region
        %s413 = smul.u32 %s25, 8
        %s414 = ssub.s32 %s413, 1
        %p415 = scmp.gt.s32.totalorder %s414, 0
        %s416 = scalar_select %p415, %s414, 0
        %p417 = scmp.lt.s32.totalorder %s24, 1
        %s418 = scalar_select %p417, %s24, 1
        %p419 = scmp.lt.s32.totalorder %s416, 15
        %s420 = scalar_select %p419, %s416, 15
        %s421 = smul.addr %s420, 2
        %s422 = smul.addr %s418, 32
        %s423 = sadd.s32 %s421, %s422
        %s424 = smul.addr %s423, 4
        %s425 = scalar_lea.vmem %s1, %s424
        %s426 = smul.u32 %s25, 8
        %s427 = ssub.s32 %s426, 1
        %p428 = scmp.gt.s32.totalorder %s427, 0
        %s429 = scalar_select %p428, %s427, 0
      $region44: #{unet_block_deep_forward.6} parent=35 // pred_fallthru
        _
      // Predicated region
      $region45: #{unet_block_deep_forward.6} parent=35 // pred_check
        %p430 = pneg %p123
      $region46: #{unet_block_deep_forward.6} parent=35 // pred_check_branch
        %432 = sbr.rel (%p430) target = $region48
      $region47: #{unet_block_deep_forward.6} parent=35 // pred_region
        %s433 = smul.u32 %s25, 8
        %s434 = sadd.s32 %s433, 8
        %p435 = scmp.lt.s32.totalorder %s434, 15
        %s436 = scalar_select %p435, %s434, 15
        %p437 = scmp.lt.s32.totalorder %s24, 1
        %s438 = scalar_select %p437, %s24, 1
        %p439 = scmp.lt.s32.totalorder %s436, 15
        %s440 = scalar_select %p439, %s436, 15
        %s441 = smul.addr %s440, 2
        %s442 = smul.addr %s438, 32
        %s443 = sadd.s32 %s441, %s442
        %s444 = smul.addr %s443, 4
        %s445 = scalar_lea.vmem %s2, %s444
        %s446 = smul.u32 %s25, 8
        %s447 = sadd.s32 %s446, 8
        %p448 = scmp.lt.s32.totalorder %s447, 15
        %s449 = scalar_select %p448, %s447, 15
      $region48: #{unet_block_deep_forward.6} parent=35 // pred_fallthru
        _
      // Predicated region
      $region49: #{unet_block_deep_forward.6} parent=35 // pred_check
        %p450 = pneg %p151
      $region50: #{unet_block_deep_forward.6} parent=35 // pred_check_branch
        %452 = sbr.rel (%p450) target = $region52
      $region51: #{unet_block_deep_forward.6} parent=35 // pred_region
        %s453 = smul.u32 8, %s25
        %p454 = scmp.lt.s32.totalorder %s24, 1
        %s455 = scalar_select %p454, %s24, 1
        %p456 = scmp.lt.s32.totalorder %s453, 15
        %s457 = scalar_select %p456, %s453, 15
        %s458 = smul.addr %s457, 2
        %s459 = smul.addr %s455, 32
        %s460 = sadd.s32 %s458, %s459
        %s461 = smul.addr %s460, 4
        %s462 = scalar_lea.vmem %s3, %s461
        %s463 = smul.u32 8, %s25
      $region52: #{unet_block_deep_forward.6} parent=35 // pred_fallthru
        _
      // Predicated region
      $region53: #{unet_block_deep_forward.6} parent=35 // pred_check
        %p464 = pneg %p187
      $region54: #{unet_block_deep_forward.6} parent=35 // pred_check_branch
        %466 = sbr.rel (%p464) target = $region56
      $region55: #{unet_block_deep_forward.6} parent=35 // pred_region
        %s467 = smul.u32 %s25, 8
        %s468 = ssub.s32 %s467, 1
        %p469 = scmp.gt.s32.totalorder %s468, 0
        %s470 = scalar_select %p469, %s468, 0
        %p471 = scmp.lt.s32.totalorder %s24, 1
        %s472 = scalar_select %p471, %s24, 1
        %p473 = scmp.lt.s32.totalorder %s470, 15
        %s474 = scalar_select %p473, %s470, 15
        %s475 = smul.addr %s474, 2
        %s476 = smul.addr %s472, 32
        %s477 = sadd.s32 %s475, %s476
        %s478 = smul.addr %s477, 4
        %s479 = scalar_lea.vmem %s4, %s478
        %s480 = smul.u32 %s25, 8
        %s481 = ssub.s32 %s480, 1
        %p482 = scmp.gt.s32.totalorder %s481, 0
        %s483 = scalar_select %p482, %s481, 0
      $region56: #{unet_block_deep_forward.6} parent=35 // pred_fallthru
        _
      // Predicated region
      $region57: #{unet_block_deep_forward.6} parent=35 // pred_check
        %p484 = pneg %p223
      $region58: #{unet_block_deep_forward.6} parent=35 // pred_check_branch
        %486 = sbr.rel (%p484) target = $region60
      $region59: #{unet_block_deep_forward.6} parent=35 // pred_region
        %s487 = smul.u32 %s25, 8
        %s488 = sadd.s32 %s487, 8
        %p489 = scmp.lt.s32.totalorder %s488, 15
        %s490 = scalar_select %p489, %s488, 15
        %p491 = scmp.lt.s32.totalorder %s24, 1
        %s492 = scalar_select %p491, %s24, 1
        %p493 = scmp.lt.s32.totalorder %s490, 15
        %s494 = scalar_select %p493, %s490, 15
        %s495 = smul.addr %s494, 2
        %s496 = smul.addr %s492, 32
        %s497 = sadd.s32 %s495, %s496
        %s498 = smul.addr %s497, 4
        %s499 = scalar_lea.vmem %s5, %s498
        %s500 = smul.u32 %s25, 8
        %s501 = sadd.s32 %s500, 8
        %p502 = scmp.lt.s32.totalorder %s501, 15
        %s503 = scalar_select %p502, %s501, 15
      $region60: #{unet_block_deep_forward.6} parent=35 // pred_fallthru
        _
    $region36: #{unet_block_deep_forward.6} parent=5 // pred_fallthru
      _
    %p504 = scmp.le.s32.totalorder 1, %s17
    %p505 = scmp.lt.s32.totalorder %s17, 5
    %p506 = pnand %p504, %p505
    %p507 = pneg %p506
    // Predicated region
    $region61: #{unet_block_deep_forward.6} parent=5 // pred_check
      _
    $region62: #{unet_block_deep_forward.6} parent=5 // pred_check_branch
      %509 = sbr.rel (%p506) target = $region64
    $region63: #{unet_block_deep_forward.6} parent=5 // pred_region
      %s510 = ssub.s32 %s17, 1
      %s511 = smul.u32 8, %s27
      %p512 = scmp.lt.s32.totalorder %s26, 1
      %s513 = scalar_select %p512, %s26, 1
      %p514 = scmp.lt.s32.totalorder %s511, 15
      %s515 = scalar_select %p514, %s511, 15
      %s516 = smul.addr %s515, 2
      %s517 = smul.addr %s513, 32
      %s518 = sadd.s32 %s516, %s517
      %s519 = smul.addr %s518, 4
      %s520 = scalar_lea.vmem %s0, %s519
      %p521 = pneg %p57
      %p522 = pneg %p54
      %s523 = smul.u32 %s27, 8
      %s524 = ssub.s32 %s523, 1
      %p525 = scmp.gt.s32.totalorder %s524, 0
      %s526 = scalar_select %p525, %s524, 0
      %p527 = scmp.lt.s32.totalorder %s26, 1
      %s528 = scalar_select %p527, %s26, 1
      %p529 = scmp.lt.s32.totalorder %s526, 15
      %s530 = scalar_select %p529, %s526, 15
      %s531 = smul.addr %s530, 2
      %s532 = smul.addr %s528, 32
      %s533 = sadd.s32 %s531, %s532
      %s534 = smul.addr %s533, 4
      %s535 = scalar_lea.vmem %s1, %s534
      %p536 = pneg %p93
      %p537 = pneg %p90
      %s538 = smul.u32 %s27, 8
      %s539 = sadd.s32 %s538, 8
      %p540 = scmp.lt.s32.totalorder %s539, 15
      %s541 = scalar_select %p540, %s539, 15
      %p542 = scmp.lt.s32.totalorder %s26, 1
      %s543 = scalar_select %p542, %s26, 1
      %p544 = scmp.lt.s32.totalorder %s541, 15
      %s545 = scalar_select %p544, %s541, 15
      %s546 = smul.addr %s545, 2
      %s547 = smul.addr %s543, 32
      %s548 = sadd.s32 %s546, %s547
      %s549 = smul.addr %s548, 4
      %s550 = scalar_lea.vmem %s2, %s549
      %p551 = pneg %p129
      %p552 = pneg %p126
      %s553 = smul.u32 8, %s27
      %p554 = scmp.lt.s32.totalorder %s26, 1
      %s555 = scalar_select %p554, %s26, 1
      %p556 = scmp.lt.s32.totalorder %s553, 15
      %s557 = scalar_select %p556, %s553, 15
      %s558 = smul.addr %s557, 2
      %s559 = smul.addr %s555, 32
      %s560 = sadd.s32 %s558, %s559
      %s561 = smul.addr %s560, 4
      %s562 = scalar_lea.vmem %s3, %s561
      %p563 = pneg %p157
      %p564 = pneg %p154
      %s565 = smul.u32 %s27, 8
      %s566 = ssub.s32 %s565, 1
      %p567 = scmp.gt.s32.totalorder %s566, 0
      %s568 = scalar_select %p567, %s566, 0
      %p569 = scmp.lt.s32.totalorder %s26, 1
      %s570 = scalar_select %p569, %s26, 1
      %p571 = scmp.lt.s32.totalorder %s568, 15
      %s572 = scalar_select %p571, %s568, 15
      %s573 = smul.addr %s572, 2
      %s574 = smul.addr %s570, 32
      %s575 = sadd.s32 %s573, %s574
      %s576 = smul.addr %s575, 4
      %s577 = scalar_lea.vmem %s4, %s576
      %p578 = pneg %p193
      %p579 = pneg %p190
      %s580 = smul.u32 %s27, 8
      %s581 = sadd.s32 %s580, 8
      %p582 = scmp.lt.s32.totalorder %s581, 15
      %s583 = scalar_select %p582, %s581, 15
      %p584 = scmp.lt.s32.totalorder %s26, 1
      %s585 = scalar_select %p584, %s26, 1
      %p586 = scmp.lt.s32.totalorder %s583, 15
      %s587 = scalar_select %p586, %s583, 15
      %s588 = smul.addr %s587, 2
      %s589 = smul.addr %s585, 32
      %s590 = sadd.s32 %s588, %s589
      %s591 = smul.addr %s590, 4
      %s592 = scalar_lea.vmem %s5, %s591
      %p593 = pneg %p229
      %p594 = pneg %p226
      %p595 = pneg %p250
      %p596 = pneg %p247
      %p597 = pneg %p271
      %p598 = pneg %p268
      %p599 = pneg %p292
      %p600 = pneg %p289
      %p601 = pneg %p313
      %p602 = pneg %p310
      %p603 = pneg %p334
      %p604 = pneg %p331
      %p605 = pneg %p362
      %p606 = pneg %p359
      %s607 = smul.u32 8, %s27
      %p608 = scmp.lt.s32.totalorder %s26, 1
      %s609 = scalar_select %p608, %s26, 1
      %p610 = scmp.lt.s32.totalorder %s607, 15
      %s611 = scalar_select %p610, %s607, 15
      %s612 = smul.addr %s611, 2
      %s613 = smul.addr %s609, 32
      %s614 = sadd.s32 %s612, %s613
      %s615 = smul.addr %s614, 4
      %s616 = scalar_lea.vmem %s11, %s615
      %s617 = smul.u32 8, %s27
      %p618 = scmp.lt.s32.totalorder %s26, 1
      %s619 = scalar_select %p618, %s26, 1
      %p620 = scmp.lt.s32.totalorder %s617, 15
      %s621 = scalar_select %p620, %s617, 15
      %s622 = smul.addr %s621, 2
      %s623 = smul.addr %s619, 32
      %s624 = sadd.s32 %s622, %s623
      %s625 = smul.addr %s624, 4
      %s626 = scalar_lea.vmem %s0, %s625
      %s627 = smul.u32 8, %s27
      %s628 = smul.u32 %s27, 8
      %s629 = ssub.s32 %s628, 1
      %p630 = scmp.gt.s32.totalorder %s629, 0
      %s631 = scalar_select %p630, %s629, 0
      %p632 = scmp.lt.s32.totalorder %s26, 1
      %s633 = scalar_select %p632, %s26, 1
      %p634 = scmp.lt.s32.totalorder %s631, 15
      %s635 = scalar_select %p634, %s631, 15
      %s636 = smul.addr %s635, 2
      %s637 = smul.addr %s633, 32
      %s638 = sadd.s32 %s636, %s637
      %s639 = smul.addr %s638, 4
      %s640 = scalar_lea.vmem %s1, %s639
      %s641 = smul.u32 %s27, 8
      %s642 = ssub.s32 %s641, 1
      %p643 = scmp.gt.s32.totalorder %s642, 0
      %s644 = scalar_select %p643, %s642, 0
      %s645 = smul.u32 %s27, 8
      %s646 = sadd.s32 %s645, 8
      %p647 = scmp.lt.s32.totalorder %s646, 15
      %s648 = scalar_select %p647, %s646, 15
      %p649 = scmp.lt.s32.totalorder %s26, 1
      %s650 = scalar_select %p649, %s26, 1
      %p651 = scmp.lt.s32.totalorder %s648, 15
      %s652 = scalar_select %p651, %s648, 15
      %s653 = smul.addr %s652, 2
      %s654 = smul.addr %s650, 32
      %s655 = sadd.s32 %s653, %s654
      %s656 = smul.addr %s655, 4
      %s657 = scalar_lea.vmem %s2, %s656
      %s658 = smul.u32 %s27, 8
      %s659 = sadd.s32 %s658, 8
      %p660 = scmp.lt.s32.totalorder %s659, 15
      %s661 = scalar_select %p660, %s659, 15
      %s662 = smul.u32 8, %s27
      %p663 = scmp.lt.s32.totalorder %s26, 1
      %s664 = scalar_select %p663, %s26, 1
      %p665 = scmp.lt.s32.totalorder %s662, 15
      %s666 = scalar_select %p665, %s662, 15
      %s667 = smul.addr %s666, 2
      %s668 = smul.addr %s664, 32
      %s669 = sadd.s32 %s667, %s668
      %s670 = smul.addr %s669, 4
      %s671 = scalar_lea.vmem %s3, %s670
      %s672 = smul.u32 8, %s27
      %s673 = smul.u32 %s27, 8
      %s674 = ssub.s32 %s673, 1
      %p675 = scmp.gt.s32.totalorder %s674, 0
      %s676 = scalar_select %p675, %s674, 0
      %p677 = scmp.lt.s32.totalorder %s26, 1
      %s678 = scalar_select %p677, %s26, 1
      %p679 = scmp.lt.s32.totalorder %s676, 15
      %s680 = scalar_select %p679, %s676, 15
      %s681 = smul.addr %s680, 2
      %s682 = smul.addr %s678, 32
      %s683 = sadd.s32 %s681, %s682
      %s684 = smul.addr %s683, 4
      %s685 = scalar_lea.vmem %s4, %s684
      %s686 = smul.u32 %s27, 8
      %s687 = ssub.s32 %s686, 1
      %p688 = scmp.gt.s32.totalorder %s687, 0
      %s689 = scalar_select %p688, %s687, 0
      %s690 = smul.u32 %s27, 8
      %s691 = sadd.s32 %s690, 8
      %p692 = scmp.lt.s32.totalorder %s691, 15
      %s693 = scalar_select %p692, %s691, 15
      %p694 = scmp.lt.s32.totalorder %s26, 1
      %s695 = scalar_select %p694, %s26, 1
      %p696 = scmp.lt.s32.totalorder %s693, 15
      %s697 = scalar_select %p696, %s693, 15
      %s698 = smul.addr %s697, 2
      %s699 = smul.addr %s695, 32
      %s700 = sadd.s32 %s698, %s699
      %s701 = smul.addr %s700, 4
      %s702 = scalar_lea.vmem %s5, %s701
      %s703 = smul.u32 %s27, 8
      %s704 = sadd.s32 %s703, 8
      %p705 = scmp.lt.s32.totalorder %s704, 15
      %s706 = scalar_select %p705, %s704, 15
      %s707 = smul.u32 8, %s27
      %p708 = scmp.lt.s32.totalorder %s26, 1
      %s709 = scalar_select %p708, %s26, 1
      %p710 = scmp.lt.s32.totalorder %s707, 15
      %s711 = scalar_select %p710, %s707, 15
      %s712 = smul.addr %s711, 2
      %s713 = smul.addr %s709, 32
      %s714 = sadd.s32 %s712, %s713
      %s715 = smul.addr %s714, 4
      %s716 = scalar_lea.vmem %s11, %s715
      %s717 = smul.u32 8, %s27
      %vm719 = vcmask 519168
      %720 = vst.msk [vmem:[#allocation2] sm:$0xf] %vm719, 0
      %721 = vst.msk [vmem:[#allocation2 + $0x10] sm:$0xf] %vm719, 0
      %722 = vst.msk [vmem:[#allocation2 + $0x20] sm:$0xf] %vm719, 0
      %723 = vst.msk [vmem:[#allocation2 + $0x30] sm:$0xf] %vm719, 0
      %724 = vst.msk [vmem:[#allocation2 + $0x40] sm:$0xf] %vm719, 0
      %725 = vst.msk [vmem:[#allocation2 + $0x50] sm:$0xf] %vm719, 0
      %726 = vst.msk [vmem:[#allocation2 + $0x60] sm:$0xf] %vm719, 0
      %727 = vst.msk [vmem:[#allocation2 + $0x70] sm:$0xf] %vm719, 0
      %728 = vst.msk [vmem:[#allocation2 + $0x80] sm:$0xf] %vm719, 0
      %729 = vst.msk [vmem:[#allocation2 + $0x90] sm:$0xf] %vm719, 0
      %vm730 = vcmask 516096
      %vm731 = vsmask.f32 256
      %vm732 = vmand %vm730, %vm731
      %v733 = vld [vmem:[#allocation2 + $0xc] sm:$0x1]
      %v734 = vsel %vm732, 0, %v733
      %735 = vst [vmem:[#allocation2 + $0xc] sm:$0x1] %v734
      %v736 = vld [vmem:[#allocation2 + $0x1c] sm:$0x1]
      %v737 = vsel %vm732, 0, %v736
      %738 = vst [vmem:[#allocation2 + $0x1c] sm:$0x1] %v737
      %v739 = vld [vmem:[#allocation2 + $0x2c] sm:$0x1]
      %v740 = vsel %vm732, 0, %v739
      %741 = vst [vmem:[#allocation2 + $0x2c] sm:$0x1] %v740
      %v742 = vld [vmem:[#allocation2 + $0x3c] sm:$0x1]
      %v743 = vsel %vm732, 0, %v742
      %744 = vst [vmem:[#allocation2 + $0x3c] sm:$0x1] %v743
      %v745 = vld [vmem:[#allocation2 + $0x4c] sm:$0x1]
      %v746 = vsel %vm732, 0, %v745
      %747 = vst [vmem:[#allocation2 + $0x4c] sm:$0x1] %v746
      %v748 = vld [vmem:[#allocation2 + $0x5c] sm:$0x1]
      %v749 = vsel %vm732, 0, %v748
      %750 = vst [vmem:[#allocation2 + $0x5c] sm:$0x1] %v749
      %v751 = vld [vmem:[#allocation2 + $0x6c] sm:$0x1]
      %v752 = vsel %vm732, 0, %v751
      %753 = vst [vmem:[#allocation2 + $0x6c] sm:$0x1] %v752
      %v754 = vld [vmem:[#allocation2 + $0x7c] sm:$0x1]
      %v755 = vsel %vm732, 0, %v754
      %756 = vst [vmem:[#allocation2 + $0x7c] sm:$0x1] %v755
      %v757 = vld [vmem:[#allocation2 + $0x8c] sm:$0x1]
      %v758 = vsel %vm732, 0, %v757
      %759 = vst [vmem:[#allocation2 + $0x8c] sm:$0x1] %v758
      %v760 = vld [vmem:[#allocation2 + $0x9c] sm:$0x1]
      %v761 = vsel %vm732, 0, %v760
      %762 = vst [vmem:[#allocation2 + $0x9c] sm:$0x1] %v761
      %v763 = vld [vmem:[%s626] sm:$0xf]
      %v764 = vld [vmem:[%s626 + $0x4] sm:$0xf]
      %v765 = vld [vmem:[%s626 + $0x8] sm:$0xf]
      %v766 = vld [vmem:[%s626 + $0xc] sm:$0xf]
      %v767 = vld [vmem:[%s626 + $0x10] sm:$0xf]
      %v768 = vld [vmem:[%s626 + $0x14] sm:$0xf]
      %v769 = vld [vmem:[%s626 + $0x18] sm:$0xf]
      %v770 = vld [vmem:[%s626 + $0x1c] sm:$0xf]
      %v771 = vld [vmem:[%s626 + $0x20] sm:$0xf]
      %v772 = vld [vmem:[%s626 + $0x24] sm:$0xf]
      %v773 = vld [vmem:[%s626 + $0x28] sm:$0xf]
      %v774 = vld [vmem:[%s626 + $0x2c] sm:$0xf]
      %v775 = vld [vmem:[%s626 + $0x30] sm:$0xf]
      %v776 = vld [vmem:[%s626 + $0x34] sm:$0xf]
      %v777 = vld [vmem:[%s626 + $0x38] sm:$0xf]
      %v778 = vld [vmem:[%s626 + $0x3c] sm:$0xf]
      %s779 = scalar_lea.vmem [#allocation2], 16
      %vm780 = vcmask 257024
      %781 = vst.msk [vmem:[%s779 + $0x4] sm:$0xf] %vm780, %v763
      %782 = vst.msk [vmem:[%s779 + $0x8] sm:$0xf] %vm780, %v764
      %783 = vst.msk [vmem:[%s779 + $0x14] sm:$0xf] %vm780, %v765
      %784 = vst.msk [vmem:[%s779 + $0x18] sm:$0xf] %vm780, %v766
      %785 = vst.msk [vmem:[%s779 + $0x24] sm:$0xf] %vm780, %v767
      %786 = vst.msk [vmem:[%s779 + $0x28] sm:$0xf] %vm780, %v768
      %787 = vst.msk [vmem:[%s779 + $0x34] sm:$0xf] %vm780, %v769
      %788 = vst.msk [vmem:[%s779 + $0x38] sm:$0xf] %vm780, %v770
      %789 = vst.msk [vmem:[%s779 + $0x44] sm:$0xf] %vm780, %v771
      %790 = vst.msk [vmem:[%s779 + $0x48] sm:$0xf] %vm780, %v772
      %791 = vst.msk [vmem:[%s779 + $0x54] sm:$0xf] %vm780, %v773
      %792 = vst.msk [vmem:[%s779 + $0x58] sm:$0xf] %vm780, %v774
      %793 = vst.msk [vmem:[%s779 + $0x64] sm:$0xf] %vm780, %v775
      %794 = vst.msk [vmem:[%s779 + $0x68] sm:$0xf] %vm780, %v776
      %795 = vst.msk [vmem:[%s779 + $0x74] sm:$0xf] %vm780, %v777
      %796 = vst.msk [vmem:[%s779 + $0x78] sm:$0xf] %vm780, %v778
      %v797 = vld [vmem:[%s640] sm:$0xf]
      %v798 = vld [vmem:[%s640 + $0x4] sm:$0xf]
      %799 = vst.msk [vmem:[#allocation2 + $0x4] sm:$0xf] %vm780, %v797
      %800 = vst.msk [vmem:[#allocation2 + $0x8] sm:$0xf] %vm780, %v798
      %v801 = vld [vmem:[%s657] sm:$0xf]
      %v802 = vld [vmem:[%s657 + $0x4] sm:$0xf]
      %s803 = scalar_lea.vmem [#allocation2], 144
      %804 = vst.msk [vmem:[%s803 + $0x4] sm:$0xf] %vm780, %v801
      %805 = vst.msk [vmem:[%s803 + $0x8] sm:$0xf] %vm780, %v802
      %v806 = vld [vmem:[%s7] sm:$0x1]
      %v807 = vld [vmem:[%s8] sm:$0x1]
      %v808 = vld [vmem:[%s671] sm:$0xf]
      %v809 = vld [vmem:[%s671 + $0x4] sm:$0xf]
      %v810 = vld [vmem:[%s671 + $0x8] sm:$0xf]
      %v811 = vld [vmem:[%s671 + $0xc] sm:$0xf]
      %v812 = vld [vmem:[%s671 + $0x10] sm:$0xf]
      %v813 = vld [vmem:[%s671 + $0x14] sm:$0xf]
      %v814 = vld [vmem:[%s671 + $0x18] sm:$0xf]
      %v815 = vld [vmem:[%s671 + $0x1c] sm:$0xf]
      %v816 = vld [vmem:[%s671 + $0x20] sm:$0xf]
      %v817 = vld [vmem:[%s671 + $0x24] sm:$0xf]
      %v818 = vld [vmem:[%s671 + $0x28] sm:$0xf]
      %v819 = vld [vmem:[%s671 + $0x2c] sm:$0xf]
      %v820 = vld [vmem:[%s671 + $0x30] sm:$0xf]
      %v821 = vld [vmem:[%s671 + $0x34] sm:$0xf]
      %v822 = vld [vmem:[%s671 + $0x38] sm:$0xf]
      %v823 = vld [vmem:[%s671 + $0x3c] sm:$0xf]
      %v824 = vunpack.c.l.bf16 %v808
      %v825 = vunpack.c.l.bf16 %v809
      %v826 = vunpack.c.l.bf16 %v810
      %v827 = vunpack.c.l.bf16 %v811
      %v828 = vunpack.c.l.bf16 %v812
      %v829 = vunpack.c.l.bf16 %v813
      %v830 = vunpack.c.l.bf16 %v814
      %v831 = vunpack.c.l.bf16 %v815
      %v832 = vunpack.c.l.bf16 %v816
      %v833 = vunpack.c.l.bf16 %v817
      %v834 = vunpack.c.l.bf16 %v818
      %v835 = vunpack.c.l.bf16 %v819
      %v836 = vunpack.c.l.bf16 %v820
      %v837 = vunpack.c.l.bf16 %v821
      %v838 = vunpack.c.l.bf16 %v822
      %v839 = vunpack.c.l.bf16 %v823
      %v841 = vperm.slane %v806, 0
      %v843 = vmul.f32 %v824, %v841
      %v844 = vmul.f32 %v825, %v841
      %v845 = vmul.f32 %v826, %v841
      %v846 = vmul.f32 %v827, %v841
      %v847 = vmul.f32 %v828, %v841
      %v848 = vmul.f32 %v829, %v841
      %v849 = vmul.f32 %v830, %v841
      %v850 = vmul.f32 %v831, %v841
      %v851 = vmul.f32 %v832, %v841
      %v852 = vmul.f32 %v833, %v841
      %v853 = vmul.f32 %v834, %v841
      %v854 = vmul.f32 %v835, %v841
      %v855 = vmul.f32 %v836, %v841
      %v856 = vmul.f32 %v837, %v841
      %v857 = vmul.f32 %v838, %v841
      %v858 = vmul.f32 %v839, %v841
      %v860 = vperm.slane %v807, 0
      %v862 = vadd.f32 %v843, %v860
      %v863 = vadd.f32 %v844, %v860
      %v864 = vadd.f32 %v845, %v860
      %v865 = vadd.f32 %v846, %v860
      %v866 = vadd.f32 %v847, %v860
      %v867 = vadd.f32 %v848, %v860
      %v868 = vadd.f32 %v849, %v860
      %v869 = vadd.f32 %v850, %v860
      %v870 = vadd.f32 %v851, %v860
      %v871 = vadd.f32 %v852, %v860
      %v872 = vadd.f32 %v853, %v860
      %v873 = vadd.f32 %v854, %v860
      %v874 = vadd.f32 %v855, %v860
      %v875 = vadd.f32 %v856, %v860
      %v876 = vadd.f32 %v857, %v860
      %v877 = vadd.f32 %v858, %v860
      %v878 = vmax.f32 %v862, 0.0
      %v879 = vmax.f32 %v863, 0.0
      %v880 = vmax.f32 %v864, 0.0
      %v881 = vmax.f32 %v865, 0.0
      %v882 = vmax.f32 %v866, 0.0
      %v883 = vmax.f32 %v867, 0.0
      %v884 = vmax.f32 %v868, 0.0
      %v885 = vmax.f32 %v869, 0.0
      %v886 = vmax.f32 %v870, 0.0
      %v887 = vmax.f32 %v871, 0.0
      %v888 = vmax.f32 %v872, 0.0
      %v889 = vmax.f32 %v873, 0.0
      %v890 = vmax.f32 %v874, 0.0
      %v891 = vmax.f32 %v875, 0.0
      %v892 = vmax.f32 %v876, 0.0
      %v893 = vmax.f32 %v877, 0.0
      %v894 = vpack.c.bf16 %v878, %v878
      %v895 = vpack.c.bf16 %v879, %v879
      %v896 = vpack.c.bf16 %v880, %v880
      %v897 = vpack.c.bf16 %v881, %v881
      %v898 = vpack.c.bf16 %v882, %v882
      %v899 = vpack.c.bf16 %v883, %v883
      %v900 = vpack.c.bf16 %v884, %v884
      %v901 = vpack.c.bf16 %v885, %v885
      %v902 = vpack.c.bf16 %v886, %v886
      %v903 = vpack.c.bf16 %v887, %v887
      %v904 = vpack.c.bf16 %v888, %v888
      %v905 = vpack.c.bf16 %v889, %v889
      %v906 = vpack.c.bf16 %v890, %v890
      %v907 = vpack.c.bf16 %v891, %v891
      %v908 = vpack.c.bf16 %v892, %v892
      %v909 = vpack.c.bf16 %v893, %v893
      %926 = vrot.lane.b32.xlu0 %v894, 32
      %v927 = vpop.permute.xlu0 %926
      %928 = vrot.lane.b32.xlu0 %v895, 32
      %v929 = vpop.permute.xlu0 %928
      %930 = vrot.lane.b32.xlu0 %v896, 32
      %v931 = vpop.permute.xlu0 %930
      %932 = vrot.lane.b32.xlu0 %v897, 32
      %v933 = vpop.permute.xlu0 %932
      %934 = vrot.lane.b32.xlu0 %v898, 32
      %v935 = vpop.permute.xlu0 %934
      %936 = vrot.lane.b32.xlu0 %v899, 32
      %v937 = vpop.permute.xlu0 %936
      %938 = vrot.lane.b32.xlu0 %v900, 32
      %v939 = vpop.permute.xlu0 %938
      %940 = vrot.lane.b32.xlu0 %v901, 32
      %v941 = vpop.permute.xlu0 %940
      %942 = vrot.lane.b32.xlu0 %v902, 32
      %v943 = vpop.permute.xlu0 %942
      %944 = vrot.lane.b32.xlu0 %v903, 32
      %v945 = vpop.permute.xlu0 %944
      %946 = vrot.lane.b32.xlu0 %v904, 32
      %v947 = vpop.permute.xlu0 %946
      %948 = vrot.lane.b32.xlu0 %v905, 32
      %v949 = vpop.permute.xlu0 %948
      %950 = vrot.lane.b32.xlu0 %v906, 32
      %v951 = vpop.permute.xlu0 %950
      %952 = vrot.lane.b32.xlu0 %v907, 32
      %v953 = vpop.permute.xlu0 %952
      %954 = vrot.lane.b32.xlu0 %v908, 32
      %v955 = vpop.permute.xlu0 %954
      %956 = vrot.lane.b32.xlu0 %v909, 32
      %v957 = vpop.permute.xlu0 %956
      %vm974 = vcmask 519424
      %975 = vst.msk [vmem:[%s779 + $0x4] sm:$0xf] %vm974, %v927
      %976 = vst.msk [vmem:[%s779 + $0x8] sm:$0xf] %vm974, %v929
      %977 = vst.msk [vmem:[%s779 + $0x14] sm:$0xf] %vm974, %v931
      %978 = vst.msk [vmem:[%s779 + $0x18] sm:$0xf] %vm974, %v933
      %979 = vst.msk [vmem:[%s779 + $0x24] sm:$0xf] %vm974, %v935
      %980 = vst.msk [vmem:[%s779 + $0x28] sm:$0xf] %vm974, %v937
      %981 = vst.msk [vmem:[%s779 + $0x34] sm:$0xf] %vm974, %v939
      %982 = vst.msk [vmem:[%s779 + $0x38] sm:$0xf] %vm974, %v941
      %983 = vst.msk [vmem:[%s779 + $0x44] sm:$0xf] %vm974, %v943
      %984 = vst.msk [vmem:[%s779 + $0x48] sm:$0xf] %vm974, %v945
      %985 = vst.msk [vmem:[%s779 + $0x54] sm:$0xf] %vm974, %v947
      %986 = vst.msk [vmem:[%s779 + $0x58] sm:$0xf] %vm974, %v949
      %987 = vst.msk [vmem:[%s779 + $0x64] sm:$0xf] %vm974, %v951
      %988 = vst.msk [vmem:[%s779 + $0x68] sm:$0xf] %vm974, %v953
      %989 = vst.msk [vmem:[%s779 + $0x74] sm:$0xf] %vm974, %v955
      %990 = vst.msk [vmem:[%s779 + $0x78] sm:$0xf] %vm974, %v957
      %v991 = vld [vmem:[%s685] sm:$0xf]
      %v992 = vld [vmem:[%s685 + $0x4] sm:$0xf]
      %v993 = vunpack.c.l.bf16 %v991
      %v994 = vunpack.c.l.bf16 %v992
      %v995 = vmul.f32 %v993, %v841
      %v996 = vmul.f32 %v994, %v841
      %v997 = vadd.f32 %v995, %v860
      %v998 = vadd.f32 %v996, %v860
      %v999 = vmax.f32 %v997, 0.0
      %v1000 = vmax.f32 %v998, 0.0
      %v1001 = vpack.c.bf16 %v999, %v999
      %v1002 = vpack.c.bf16 %v1000, %v1000
      %1005 = vrot.lane.b32.xlu0 %v1001, 32
      %v1006 = vpop.permute.xlu0 %1005
      %1007 = vrot.lane.b32.xlu0 %v1002, 32
      %v1008 = vpop.permute.xlu0 %1007
      %1011 = vst.msk [vmem:[#allocation2 + $0x4] sm:$0xf] %vm974, %v1006
      %1012 = vst.msk [vmem:[#allocation2 + $0x8] sm:$0xf] %vm974, %v1008
      %v1013 = vld [vmem:[%s702] sm:$0xf]
      %v1014 = vld [vmem:[%s702 + $0x4] sm:$0xf]
      %v1015 = vunpack.c.l.bf16 %v1013
      %v1016 = vunpack.c.l.bf16 %v1014
      %v1017 = vmul.f32 %v1015, %v841
      %v1018 = vmul.f32 %v1016, %v841
      %v1019 = vadd.f32 %v1017, %v860
      %v1020 = vadd.f32 %v1018, %v860
      %v1021 = vmax.f32 %v1019, 0.0
      %v1022 = vmax.f32 %v1020, 0.0
      %v1023 = vpack.c.bf16 %v1021, %v1021
      %v1024 = vpack.c.bf16 %v1022, %v1022
      %1027 = vrot.lane.b32.xlu0 %v1023, 32
      %v1028 = vpop.permute.xlu0 %1027
      %1029 = vrot.lane.b32.xlu0 %v1024, 32
      %v1030 = vpop.permute.xlu0 %1029
      %1033 = vst.msk [vmem:[%s803 + $0x4] sm:$0xf] %vm974, %v1028
      %1034 = vst.msk [vmem:[%s803 + $0x8] sm:$0xf] %vm974, %v1030
      %p1035 = scmp.eq.s32.totalorder %s27, 0
      // Predicated region
      $region65: #{unet_block_deep_forward.6} parent=63 // pred_check
        %p1036 = pneg %p1035
      $region66: #{unet_block_deep_forward.6} parent=63 // pred_check_branch
        %1038 = sbr.rel (%p1036) target = $region68
      $region67: #{unet_block_deep_forward.6} parent=63 // pred_region
        %1039 = vst.msk [vmem:[#allocation2] sm:$0xf] %vm719, 0
        %1040 = vst.msk [vmem:[#allocation2 + $0x4] sm:$0xf] %vm719, 0
        %1041 = vst.msk [vmem:[#allocation2 + $0x8] sm:$0xf] %vm719, 0
        %v1042 = vld [vmem:[#allocation2 + $0xc] sm:$0x1]
        %v1043 = vsel %vm732, 0, %v1042
        %1044 = vst [vmem:[#allocation2 + $0xc] sm:$0x1] %v1043
      $region68: #{unet_block_deep_forward.6} parent=63 // pred_fallthru
        _
      %p1045 = scmp.eq.s32.totalorder %s27, 1
      // Predicated region
      $region69: #{unet_block_deep_forward.6} parent=63 // pred_check
        %p1046 = pneg %p1045
      $region70: #{unet_block_deep_forward.6} parent=63 // pred_check_branch
        %1048 = sbr.rel (%p1046) target = $region72
      $region71: #{unet_block_deep_forward.6} parent=63 // pred_region
        %1049 = vst.msk [vmem:[%s803] sm:$0xf] %vm719, 0
        %1050 = vst.msk [vmem:[%s803 + $0x4] sm:$0xf] %vm719, 0
        %1051 = vst.msk [vmem:[%s803 + $0x8] sm:$0xf] %vm719, 0
        %v1052 = vld [vmem:[%s803 + $0xc] sm:$0x1]
        %v1053 = vsel %vm732, 0, %v1052
        %1054 = vst [vmem:[%s803 + $0xc] sm:$0x1] %v1053
      $region72: #{unet_block_deep_forward.6} parent=63 // pred_fallthru
        _
      %v1055 = vld [vmem:[#allocation2] sm:$0x8]
      %v1056 = vld [vmem:[#allocation2 + $0x4] sm:$0xf]
      %v1057 = vld [vmem:[#allocation2 + $0x8] sm:$0xf]
      %v1058 = vld [vmem:[#allocation2 + $0x10] sm:$0x8]
      %v1059 = vld [vmem:[#allocation2 + $0x14] sm:$0xf]
      %v1060 = vld [vmem:[#allocation2 + $0x18] sm:$0xf]
      %v1061 = vld [vmem:[#allocation2 + $0x20] sm:$0x8]
      %v1062 = vld [vmem:[#allocation2 + $0x24] sm:$0xf]
      %v1063 = vld [vmem:[#allocation2 + $0x28] sm:$0xf]
      %v1064 = vld [vmem:[#allocation2 + $0x30] sm:$0x8]
      %v1065 = vld [vmem:[#allocation2 + $0x34] sm:$0xf]
      %v1066 = vld [vmem:[#allocation2 + $0x38] sm:$0xf]
      %v1067 = vld [vmem:[#allocation2 + $0x40] sm:$0x8]
      %v1068 = vld [vmem:[#allocation2 + $0x44] sm:$0xf]
      %v1069 = vld [vmem:[#allocation2 + $0x48] sm:$0xf]
      %v1070 = vld [vmem:[#allocation2 + $0x50] sm:$0x8]
      %v1071 = vld [vmem:[#allocation2 + $0x54] sm:$0xf]
      %v1072 = vld [vmem:[#allocation2 + $0x58] sm:$0xf]
      %v1073 = vld [vmem:[#allocation2 + $0x60] sm:$0x8]
      %v1074 = vld [vmem:[#allocation2 + $0x64] sm:$0xf]
      %v1075 = vld [vmem:[#allocation2 + $0x68] sm:$0xf]
      %v1076 = vld [vmem:[#allocation2 + $0x70] sm:$0x8]
      %v1077 = vld [vmem:[#allocation2 + $0x74] sm:$0xf]
      %v1078 = vld [vmem:[#allocation2 + $0x78] sm:$0xf]
      %vm1079 = vsmask.f32 4368
      %vm1080 = vmor %vm731, %vm1079
      %v1082 = vshrl.u32 %v1055, 16
      %v1084 = vrot.slane %v1082, 7
      %v1085 = vrot.slane %v1084, 4
      %v1087 = vshrl.u32 %v1056, 16
      %v1089 = vrot.slane %v1087, 7
      %v1090 = vshll.u32 %v1056, 16
      %v1092 = vor.u32 %v1089, %v1090
      %v1093 = vsel %vm1080, %v1085, %v1092
      %v1094 = vrot.slane %v1089, 4
      %v1096 = vshrl.u32 %v1057, 16
      %v1098 = vrot.slane %v1096, 7
      %v1099 = vshll.u32 %v1057, 16
      %v1101 = vor.u32 %v1098, %v1099
      %v1102 = vsel %vm1080, %v1094, %v1101
      %v1104 = vshrl.u32 %v1058, 16
      %v1106 = vrot.slane %v1104, 7
      %v1107 = vrot.slane %v1106, 4
      %v1109 = vshrl.u32 %v1059, 16
      %v1111 = vrot.slane %v1109, 7
      %v1112 = vshll.u32 %v1059, 16
      %v1114 = vor.u32 %v1111, %v1112
      %v1115 = vsel %vm1080, %v1107, %v1114
      %v1116 = vrot.slane %v1111, 4
      %v1118 = vshrl.u32 %v1060, 16
      %v1120 = vrot.slane %v1118, 7
      %v1121 = vshll.u32 %v1060, 16
      %v1123 = vor.u32 %v1120, %v1121
      %v1124 = vsel %vm1080, %v1116, %v1123
      %v1126 = vshrl.u32 %v1061, 16
      %v1128 = vrot.slane %v1126, 7
      %v1129 = vrot.slane %v1128, 4
      %v1131 = vshrl.u32 %v1062, 16
      %v1133 = vrot.slane %v1131, 7
      %v1134 = vshll.u32 %v1062, 16
      %v1136 = vor.u32 %v1133, %v1134
      %v1137 = vsel %vm1080, %v1129, %v1136
      %v1138 = vrot.slane %v1133, 4
      %v1140 = vshrl.u32 %v1063, 16
      %v1142 = vrot.slane %v1140, 7
      %v1143 = vshll.u32 %v1063, 16
      %v1145 = vor.u32 %v1142, %v1143
      %v1146 = vsel %vm1080, %v1138, %v1145
      %v1148 = vshrl.u32 %v1064, 16
      %v1150 = vrot.slane %v1148, 7
      %v1151 = vrot.slane %v1150, 4
      %v1153 = vshrl.u32 %v1065, 16
      %v1155 = vrot.slane %v1153, 7
      %v1156 = vshll.u32 %v1065, 16
      %v1158 = vor.u32 %v1155, %v1156
      %v1159 = vsel %vm1080, %v1151, %v1158
      %v1160 = vrot.slane %v1155, 4
      %v1162 = vshrl.u32 %v1066, 16
      %v1164 = vrot.slane %v1162, 7
      %v1165 = vshll.u32 %v1066, 16
      %v1167 = vor.u32 %v1164, %v1165
      %v1168 = vsel %vm1080, %v1160, %v1167
      %v1170 = vshrl.u32 %v1067, 16
      %v1172 = vrot.slane %v1170, 7
      %v1173 = vrot.slane %v1172, 4
      %v1175 = vshrl.u32 %v1068, 16
      %v1177 = vrot.slane %v1175, 7
      %v1178 = vshll.u32 %v1068, 16
      %v1180 = vor.u32 %v1177, %v1178
      %v1181 = vsel %vm1080, %v1173, %v1180
      %v1182 = vrot.slane %v1177, 4
      %v1184 = vshrl.u32 %v1069, 16
      %v1186 = vrot.slane %v1184, 7
      %v1187 = vshll.u32 %v1069, 16
      %v1189 = vor.u32 %v1186, %v1187
      %v1190 = vsel %vm1080, %v1182, %v1189
      %v1192 = vshrl.u32 %v1070, 16
      %v1194 = vrot.slane %v1192, 7
      %v1195 = vrot.slane %v1194, 4
      %v1197 = vshrl.u32 %v1071, 16
      %v1199 = vrot.slane %v1197, 7
      %v1200 = vshll.u32 %v1071, 16
      %v1202 = vor.u32 %v1199, %v1200
      %v1203 = vsel %vm1080, %v1195, %v1202
      %v1204 = vrot.slane %v1199, 4
      %v1206 = vshrl.u32 %v1072, 16
      %v1208 = vrot.slane %v1206, 7
      %v1209 = vshll.u32 %v1072, 16
      %v1211 = vor.u32 %v1208, %v1209
      %v1212 = vsel %vm1080, %v1204, %v1211
      %v1214 = vshrl.u32 %v1073, 16
      %v1216 = vrot.slane %v1214, 7
      %v1217 = vrot.slane %v1216, 4
      %v1219 = vshrl.u32 %v1074, 16
      %v1221 = vrot.slane %v1219, 7
      %v1222 = vshll.u32 %v1074, 16
      %v1224 = vor.u32 %v1221, %v1222
      %v1225 = vsel %vm1080, %v1217, %v1224
      %v1226 = vrot.slane %v1221, 4
      %v1228 = vshrl.u32 %v1075, 16
      %v1230 = vrot.slane %v1228, 7
      %v1231 = vshll.u32 %v1075, 16
      %v1233 = vor.u32 %v1230, %v1231
      %v1234 = vsel %vm1080, %v1226, %v1233
      %v1236 = vshrl.u32 %v1076, 16
      %v1238 = vrot.slane %v1236, 7
      %v1239 = vrot.slane %v1238, 4
      %v1241 = vshrl.u32 %v1077, 16
      %v1243 = vrot.slane %v1241, 7
      %v1244 = vshll.u32 %v1077, 16
      %v1246 = vor.u32 %v1243, %v1244
      %v1247 = vsel %vm1080, %v1239, %v1246
      %v1248 = vrot.slane %v1243, 4
      %v1250 = vshrl.u32 %v1078, 16
      %v1252 = vrot.slane %v1250, 7
      %v1253 = vshll.u32 %v1078, 16
      %v1255 = vor.u32 %v1252, %v1253
      %v1256 = vsel %vm1080, %v1248, %v1255
      %v1257 = vld [vmem:[%s6] sm:$0xf]
      %v1258 = vld [vmem:[%s6 + $0x4] sm:$0xf]
      %v1259 = vld [vmem:[%s6 + $0x8] sm:$0xf]
      %v1260 = vld [vmem:[%s6 + $0xc] sm:$0xf]
      %v1261 = vld [vmem:[%s6 + $0x10] sm:$0xf]
      %v1262 = vld [vmem:[%s6 + $0x14] sm:$0xf]
      %v1263 = vld [vmem:[%s6 + $0x18] sm:$0xf]
      %v1264 = vld [vmem:[%s6 + $0x1c] sm:$0xf]
      %s1265 = scalar_lea.vmem %s6, 32
      %v1266 = vld [vmem:[%s1265] sm:$0xf]
      %v1267 = vld [vmem:[%s1265 + $0x4] sm:$0xf]
      %v1268 = vld [vmem:[%s1265 + $0x8] sm:$0xf]
      %v1269 = vld [vmem:[%s1265 + $0xc] sm:$0xf]
      %v1270 = vld [vmem:[%s1265 + $0x10] sm:$0xf]
      %v1271 = vld [vmem:[%s1265 + $0x14] sm:$0xf]
      %v1272 = vld [vmem:[%s1265 + $0x18] sm:$0xf]
      %v1273 = vld [vmem:[%s1265 + $0x1c] sm:$0xf]
      %v1290 = vunpack.c.l.b16 %v1056
      %v1291 = vunpack.c.l.b16 %v1057
      %v1292 = vunpack.c.l.b16 %v1059
      %v1293 = vunpack.c.l.b16 %v1060
      %v1294 = vunpack.c.l.b16 %v1062
      %v1295 = vunpack.c.l.b16 %v1063
      %v1296 = vunpack.c.l.b16 %v1065
      %v1297 = vunpack.c.l.b16 %v1066
      %v1298 = vunpack.c.l.b16 %v1068
      %v1299 = vunpack.c.l.b16 %v1069
      %v1300 = vunpack.c.l.b16 %v1071
      %v1301 = vunpack.c.l.b16 %v1072
      %v1302 = vunpack.c.l.b16 %v1074
      %v1303 = vunpack.c.l.b16 %v1075
      %v1304 = vunpack.c.l.b16 %v1077
      %v1305 = vunpack.c.l.b16 %v1078
      %v1306 = vpack.c.b16 %v1291, %v1290
      %v1307 = vpack.c.b16 %v1293, %v1292
      %v1308 = vpack.c.b16 %v1295, %v1294
      %v1309 = vpack.c.b16 %v1297, %v1296
      %v1310 = vpack.c.b16 %v1299, %v1298
      %v1311 = vpack.c.b16 %v1301, %v1300
      %v1312 = vpack.c.b16 %v1303, %v1302
      %v1313 = vpack.c.b16 %v1305, %v1304
      %v1322 = vunpack.c.l.b16 %v1266
      %v1323 = vunpack.c.l.b16 %v1267
      %v1324 = vunpack.c.l.b16 %v1268
      %v1325 = vunpack.c.l.b16 %v1269
      %v1326 = vunpack.c.l.b16 %v1270
      %v1327 = vunpack.c.l.b16 %v1271
      %v1328 = vunpack.c.l.b16 %v1272
      %v1329 = vunpack.c.l.b16 %v1273
      %v1330 = vpack.c.b16 %v1323, %v1322
      %v1331 = vpack.c.b16 %v1325, %v1324
      %v1332 = vpack.c.b16 %v1327, %v1326
      %v1333 = vpack.c.b16 %v1329, %v1328
      %vm1338 = vcmask 523264
      %v1340 = vsel %vm1338, %v1306, 0
      %v1343 = vsel %vm1338, %v1307, 0
      %v1346 = vsel %vm1338, %v1308, 0
      %v1349 = vsel %vm1338, %v1309, 0
      %v1352 = vsel %vm1338, %v1310, 0
      %v1355 = vsel %vm1338, %v1311, 0
      %v1358 = vsel %vm1338, %v1312, 0
      %v1361 = vsel %vm1338, %v1313, 0
      %1363 = vmatpush.bf16.msra.mxu0 0
      %1364 = vmatpush.bf16.msra.mxu0 0
      %1365 = vmatpush.bf16.msra.mxu0 0
      %1366 = vmatpush.bf16.msra.mxu0 0
      %1367 = vmatpush.bf16.msra.mxu0 %v1333
      %1368 = vmatpush.bf16.msra.mxu0 %v1332
      %1369 = vmatpush.bf16.msra.mxu0 %v1331
      %1370 = vmatpush.bf16.msra.mxu0 %v1330
      %1371 = vmatmul.bf16.gmra.mxu0 %v1340
      %v1372 = vpop.f32.mrf.mxu0
      %v1373 = vadd.f32 0.0, %v1372
      %v1374 = vpop.f32.mrf.mxu0
      %v1375 = vadd.f32 0.0, %v1374
      %1376 = vmatmul.bf16.gmra.mxu0 %v1343
      %v1377 = vpop.f32.mrf.mxu0
      %v1378 = vadd.f32 0.0, %v1377
      %v1379 = vpop.f32.mrf.mxu0
      %v1380 = vadd.f32 0.0, %v1379
      %1381 = vmatmul.bf16.gmra.mxu0 %v1346
      %v1382 = vpop.f32.mrf.mxu0
      %v1383 = vadd.f32 0.0, %v1382
      %v1384 = vpop.f32.mrf.mxu0
      %v1385 = vadd.f32 0.0, %v1384
      %1386 = vmatmul.bf16.gmra.mxu0 %v1349
      %v1387 = vpop.f32.mrf.mxu0
      %v1388 = vadd.f32 0.0, %v1387
      %v1389 = vpop.f32.mrf.mxu0
      %v1390 = vadd.f32 0.0, %v1389
      %1391 = vmatmul.bf16.gmra.mxu0 %v1352
      %v1392 = vpop.f32.mrf.mxu0
      %v1393 = vadd.f32 0.0, %v1392
      %v1394 = vpop.f32.mrf.mxu0
      %v1395 = vadd.f32 0.0, %v1394
      %1396 = vmatmul.bf16.gmra.mxu0 %v1355
      %v1397 = vpop.f32.mrf.mxu0
      %v1398 = vadd.f32 0.0, %v1397
      %v1399 = vpop.f32.mrf.mxu0
      %v1400 = vadd.f32 0.0, %v1399
      %1401 = vmatmul.bf16.gmra.mxu0 %v1358
      %v1402 = vpop.f32.mrf.mxu0
      %v1403 = vadd.f32 0.0, %v1402
      %v1404 = vpop.f32.mrf.mxu0
      %v1405 = vadd.f32 0.0, %v1404
      %1406 = vmatmul.bf16.gmra.mxu0 %v1361
      %v1407 = vpop.f32.mrf.mxu0
      %v1408 = vadd.f32 0.0, %v1407
      %v1409 = vpop.f32.mrf.mxu0
      %v1410 = vadd.f32 0.0, %v1409
      %1411 = vdwg.mxu0
      %v1412 = vunpack.c.l.b16 %v1093
      %v1413 = vunpack.c.l.b16 %v1102
      %v1414 = vunpack.c.l.b16 %v1115
      %v1415 = vunpack.c.l.b16 %v1124
      %v1416 = vunpack.c.l.b16 %v1137
      %v1417 = vunpack.c.l.b16 %v1146
      %v1418 = vunpack.c.l.b16 %v1159
      %v1419 = vunpack.c.l.b16 %v1168
      %v1420 = vunpack.c.l.b16 %v1181
      %v1421 = vunpack.c.l.b16 %v1190
      %v1422 = vunpack.c.l.b16 %v1203
      %v1423 = vunpack.c.l.b16 %v1212
      %v1424 = vunpack.c.l.b16 %v1225
      %v1425 = vunpack.c.l.b16 %v1234
      %v1426 = vunpack.c.l.b16 %v1247
      %v1427 = vunpack.c.l.b16 %v1256
      %v1428 = vpack.c.b16 %v1413, %v1412
      %v1429 = vpack.c.b16 %v1415, %v1414
      %v1430 = vpack.c.b16 %v1417, %v1416
      %v1431 = vpack.c.b16 %v1419, %v1418
      %v1432 = vpack.c.b16 %v1421, %v1420
      %v1433 = vpack.c.b16 %v1423, %v1422
      %v1434 = vpack.c.b16 %v1425, %v1424
      %v1435 = vpack.c.b16 %v1427, %v1426
      %v1444 = vunpack.c.l.b16 %v1257
      %v1445 = vunpack.c.l.b16 %v1258
      %v1446 = vunpack.c.l.b16 %v1259
      %v1447 = vunpack.c.l.b16 %v1260
      %v1448 = vunpack.c.l.b16 %v1261
      %v1449 = vunpack.c.l.b16 %v1262
      %v1450 = vunpack.c.l.b16 %v1263
      %v1451 = vunpack.c.l.b16 %v1264
      %v1452 = vpack.c.b16 %v1445, %v1444
      %v1453 = vpack.c.b16 %v1447, %v1446
      %v1454 = vpack.c.b16 %v1449, %v1448
      %v1455 = vpack.c.b16 %v1451, %v1450
      %v1461 = vsel %vm1338, %v1428, 0
      %v1464 = vsel %vm1338, %v1429, 0
      %v1467 = vsel %vm1338, %v1430, 0
      %v1470 = vsel %vm1338, %v1431, 0
      %v1473 = vsel %vm1338, %v1432, 0
      %v1476 = vsel %vm1338, %v1433, 0
      %v1479 = vsel %vm1338, %v1434, 0
      %v1482 = vsel %vm1338, %v1435, 0
      %1484 = vmatpush.bf16.msra.mxu0 0
      %1485 = vmatpush.bf16.msra.mxu0 0
      %1486 = vmatpush.bf16.msra.mxu0 0
      %1487 = vmatpush.bf16.msra.mxu0 0
      %1488 = vmatpush.bf16.msra.mxu0 %v1455
      %1489 = vmatpush.bf16.msra.mxu0 %v1454
      %1490 = vmatpush.bf16.msra.mxu0 %v1453
      %1491 = vmatpush.bf16.msra.mxu0 %v1452
      %1492 = vmatmul.bf16.gmra.mxu0 %v1461
      %v1493 = vpop.f32.mrf.mxu0
      %v1494 = vadd.f32 %v1373, %v1493
      %v1495 = vpop.f32.mrf.mxu0
      %v1496 = vadd.f32 %v1375, %v1495
      %1497 = vmatmul.bf16.gmra.mxu0 %v1464
      %v1498 = vpop.f32.mrf.mxu0
      %v1499 = vadd.f32 %v1378, %v1498
      %v1500 = vpop.f32.mrf.mxu0
      %v1501 = vadd.f32 %v1380, %v1500
      %1502 = vmatmul.bf16.gmra.mxu0 %v1467
      %v1503 = vpop.f32.mrf.mxu0
      %v1504 = vadd.f32 %v1383, %v1503
      %v1505 = vpop.f32.mrf.mxu0
      %v1506 = vadd.f32 %v1385, %v1505
      %1507 = vmatmul.bf16.gmra.mxu0 %v1470
      %v1508 = vpop.f32.mrf.mxu0
      %v1509 = vadd.f32 %v1388, %v1508
      %v1510 = vpop.f32.mrf.mxu0
      %v1511 = vadd.f32 %v1390, %v1510
      %1512 = vmatmul.bf16.gmra.mxu0 %v1473
      %v1513 = vpop.f32.mrf.mxu0
      %v1514 = vadd.f32 %v1393, %v1513
      %v1515 = vpop.f32.mrf.mxu0
      %v1516 = vadd.f32 %v1395, %v1515
      %1517 = vmatmul.bf16.gmra.mxu0 %v1476
      %v1518 = vpop.f32.mrf.mxu0
      %v1519 = vadd.f32 %v1398, %v1518
      %v1520 = vpop.f32.mrf.mxu0
      %v1521 = vadd.f32 %v1400, %v1520
      %1522 = vmatmul.bf16.gmra.mxu0 %v1479
      %v1523 = vpop.f32.mrf.mxu0
      %v1524 = vadd.f32 %v1403, %v1523
      %v1525 = vpop.f32.mrf.mxu0
      %v1526 = vadd.f32 %v1405, %v1525
      %1527 = vmatmul.bf16.gmra.mxu0 %v1482
      %v1528 = vpop.f32.mrf.mxu0
      %v1529 = vadd.f32 %v1408, %v1528
      %v1530 = vpop.f32.mrf.mxu0
      %v1531 = vadd.f32 %v1410, %v1530
      %1532 = vdwg.mxu0
      %v1533 = vld [vmem:[#allocation2 + $0x4] sm:$0xf]
      %v1534 = vld [vmem:[#allocation2 + $0x8] sm:$0xf]
      %v1535 = vld [vmem:[#allocation2 + $0xc] sm:$0x1]
      %v1536 = vld [vmem:[#allocation2 + $0x14] sm:$0xf]
      %v1537 = vld [vmem:[#allocation2 + $0x18] sm:$0xf]
      %v1538 = vld [vmem:[#allocation2 + $0x1c] sm:$0x1]
      %v1539 = vld [vmem:[#allocation2 + $0x24] sm:$0xf]
      %v1540 = vld [vmem:[#allocation2 + $0x28] sm:$0xf]
      %v1541 = vld [vmem:[#allocation2 + $0x2c] sm:$0x1]
      %v1542 = vld [vmem:[#allocation2 + $0x34] sm:$0xf]
      %v1543 = vld [vmem:[#allocation2 + $0x38] sm:$0xf]
      %v1544 = vld [vmem:[#allocation2 + $0x3c] sm:$0x1]
      %v1545 = vld [vmem:[#allocation2 + $0x44] sm:$0xf]
      %v1546 = vld [vmem:[#allocation2 + $0x48] sm:$0xf]
      %v1547 = vld [vmem:[#allocation2 + $0x4c] sm:$0x1]
      %v1548 = vld [vmem:[#allocation2 + $0x54] sm:$0xf]
      %v1549 = vld [vmem:[#allocation2 + $0x58] sm:$0xf]
      %v1550 = vld [vmem:[#allocation2 + $0x5c] sm:$0x1]
      %v1551 = vld [vmem:[#allocation2 + $0x64] sm:$0xf]
      %v1552 = vld [vmem:[#allocation2 + $0x68] sm:$0xf]
      %v1553 = vld [vmem:[#allocation2 + $0x6c] sm:$0x1]
      %v1554 = vld [vmem:[#allocation2 + $0x74] sm:$0xf]
      %v1555 = vld [vmem:[#allocation2 + $0x78] sm:$0xf]
      %v1556 = vld [vmem:[#allocation2 + $0x7c] sm:$0x1]
      %vm1557 = vsmask.f32 3328
      %vm1558 = vsmask.f32 7440
      %vm1559 = vmor %vm1557, %vm1558
      %v1561 = vshrl.u32 %v1533, 16
      %v1563 = vrot.slane %v1561, 4
      %v1564 = vshll.u32 %v1533, 16
      %v1566 = vrot.slane %v1564, 5
      %v1567 = vor.u32 %v1563, %v1566
      %v1568 = vrot.slane %v1567, 4
      %v1570 = vshll.u32 %v1534, 16
      %v1572 = vrot.slane %v1570, 5
      %v1573 = vsel %vm1559, %v1568, %v1572
      %v1574 = vshrl.u32 %v1534, 16
      %v1576 = vrot.slane %v1574, 4
      %v1577 = vor.u32 %v1576, %v1572
      %v1578 = vrot.slane %v1577, 4
      %v1580 = vshll.u32 %v1535, 16
      %v1582 = vrot.slane %v1580, 5
      %v1583 = vsel %vm1559, %v1578, %v1582
      %v1585 = vshrl.u32 %v1536, 16
      %v1587 = vrot.slane %v1585, 4
      %v1588 = vshll.u32 %v1536, 16
      %v1590 = vrot.slane %v1588, 5
      %v1591 = vor.u32 %v1587, %v1590
      %v1592 = vrot.slane %v1591, 4
      %v1594 = vshll.u32 %v1537, 16
      %v1596 = vrot.slane %v1594, 5
      %v1597 = vsel %vm1559, %v1592, %v1596
      %v1598 = vshrl.u32 %v1537, 16
      %v1600 = vrot.slane %v1598, 4
      %v1601 = vor.u32 %v1600, %v1596
      %v1602 = vrot.slane %v1601, 4
      %v1604 = vshll.u32 %v1538, 16
      %v1606 = vrot.slane %v1604, 5
      %v1607 = vsel %vm1559, %v1602, %v1606
      %v1609 = vshrl.u32 %v1539, 16
      %v1611 = vrot.slane %v1609, 4
      %v1612 = vshll.u32 %v1539, 16
      %v1614 = vrot.slane %v1612, 5
      %v1615 = vor.u32 %v1611, %v1614
      %v1616 = vrot.slane %v1615, 4
      %v1618 = vshll.u32 %v1540, 16
      %v1620 = vrot.slane %v1618, 5
      %v1621 = vsel %vm1559, %v1616, %v1620
      %v1622 = vshrl.u32 %v1540, 16
      %v1624 = vrot.slane %v1622, 4
      %v1625 = vor.u32 %v1624, %v1620
      %v1626 = vrot.slane %v1625, 4
      %v1628 = vshll.u32 %v1541, 16
      %v1630 = vrot.slane %v1628, 5
      %v1631 = vsel %vm1559, %v1626, %v1630
      %v1633 = vshrl.u32 %v1542, 16
      %v1635 = vrot.slane %v1633, 4
      %v1636 = vshll.u32 %v1542, 16
      %v1638 = vrot.slane %v1636, 5
      %v1639 = vor.u32 %v1635, %v1638
      %v1640 = vrot.slane %v1639, 4
      %v1642 = vshll.u32 %v1543, 16
      %v1644 = vrot.slane %v1642, 5
      %v1645 = vsel %vm1559, %v1640, %v1644
      %v1646 = vshrl.u32 %v1543, 16
      %v1648 = vrot.slane %v1646, 4
      %v1649 = vor.u32 %v1648, %v1644
      %v1650 = vrot.slane %v1649, 4
      %v1652 = vshll.u32 %v1544, 16
      %v1654 = vrot.slane %v1652, 5
      %v1655 = vsel %vm1559, %v1650, %v1654
      %v1657 = vshrl.u32 %v1545, 16
      %v1659 = vrot.slane %v1657, 4
      %v1660 = vshll.u32 %v1545, 16
      %v1662 = vrot.slane %v1660, 5
      %v1663 = vor.u32 %v1659, %v1662
      %v1664 = vrot.slane %v1663, 4
      %v1666 = vshll.u32 %v1546, 16
      %v1668 = vrot.slane %v1666, 5
      %v1669 = vsel %vm1559, %v1664, %v1668
      %v1670 = vshrl.u32 %v1546, 16
      %v1672 = vrot.slane %v1670, 4
      %v1673 = vor.u32 %v1672, %v1668
      %v1674 = vrot.slane %v1673, 4
      %v1676 = vshll.u32 %v1547, 16
      %v1678 = vrot.slane %v1676, 5
      %v1679 = vsel %vm1559, %v1674, %v1678
      %v1681 = vshrl.u32 %v1548, 16
      %v1683 = vrot.slane %v1681, 4
      %v1684 = vshll.u32 %v1548, 16
      %v1686 = vrot.slane %v1684, 5
      %v1687 = vor.u32 %v1683, %v1686
      %v1688 = vrot.slane %v1687, 4
      %v1690 = vshll.u32 %v1549, 16
      %v1692 = vrot.slane %v1690, 5
      %v1693 = vsel %vm1559, %v1688, %v1692
      %v1694 = vshrl.u32 %v1549, 16
      %v1696 = vrot.slane %v1694, 4
      %v1697 = vor.u32 %v1696, %v1692
      %v1698 = vrot.slane %v1697, 4
      %v1700 = vshll.u32 %v1550, 16
      %v1702 = vrot.slane %v1700, 5
      %v1703 = vsel %vm1559, %v1698, %v1702
      %v1705 = vshrl.u32 %v1551, 16
      %v1707 = vrot.slane %v1705, 4
      %v1708 = vshll.u32 %v1551, 16
      %v1710 = vrot.slane %v1708, 5
      %v1711 = vor.u32 %v1707, %v1710
      %v1712 = vrot.slane %v1711, 4
      %v1714 = vshll.u32 %v1552, 16
      %v1716 = vrot.slane %v1714, 5
      %v1717 = vsel %vm1559, %v1712, %v1716
      %v1718 = vshrl.u32 %v1552, 16
      %v1720 = vrot.slane %v1718, 4
      %v1721 = vor.u32 %v1720, %v1716
      %v1722 = vrot.slane %v1721, 4
      %v1724 = vshll.u32 %v1553, 16
      %v1726 = vrot.slane %v1724, 5
      %v1727 = vsel %vm1559, %v1722, %v1726
      %v1729 = vshrl.u32 %v1554, 16
      %v1731 = vrot.slane %v1729, 4
      %v1732 = vshll.u32 %v1554, 16
      %v1734 = vrot.slane %v1732, 5
      %v1735 = vor.u32 %v1731, %v1734
      %v1736 = vrot.slane %v1735, 4
      %v1738 = vshll.u32 %v1555, 16
      %v1740 = vrot.slane %v1738, 5
      %v1741 = vsel %vm1559, %v1736, %v1740
      %v1742 = vshrl.u32 %v1555, 16
      %v1744 = vrot.slane %v1742, 4
      %v1745 = vor.u32 %v1744, %v1740
      %v1746 = vrot.slane %v1745, 4
      %v1748 = vshll.u32 %v1556, 16
      %v1750 = vrot.slane %v1748, 5
      %v1751 = vsel %vm1559, %v1746, %v1750
      %s1752 = scalar_lea.vmem %s6, 64
      %v1753 = vld [vmem:[%s1752] sm:$0xf]
      %v1754 = vld [vmem:[%s1752 + $0x4] sm:$0xf]
      %v1755 = vld [vmem:[%s1752 + $0x8] sm:$0xf]
      %v1756 = vld [vmem:[%s1752 + $0xc] sm:$0xf]
      %v1757 = vld [vmem:[%s1752 + $0x10] sm:$0xf]
      %v1758 = vld [vmem:[%s1752 + $0x14] sm:$0xf]
      %v1759 = vld [vmem:[%s1752 + $0x18] sm:$0xf]
      %v1760 = vld [vmem:[%s1752 + $0x1c] sm:$0xf]
      %v1761 = vunpack.c.l.b16 %v1573
      %v1762 = vunpack.c.l.b16 %v1583
      %v1763 = vunpack.c.l.b16 %v1597
      %v1764 = vunpack.c.l.b16 %v1607
      %v1765 = vunpack.c.l.b16 %v1621
      %v1766 = vunpack.c.l.b16 %v1631
      %v1767 = vunpack.c.l.b16 %v1645
      %v1768 = vunpack.c.l.b16 %v1655
      %v1769 = vunpack.c.l.b16 %v1669
      %v1770 = vunpack.c.l.b16 %v1679
      %v1771 = vunpack.c.l.b16 %v1693
      %v1772 = vunpack.c.l.b16 %v1703
      %v1773 = vunpack.c.l.b16 %v1717
      %v1774 = vunpack.c.l.b16 %v1727
      %v1775 = vunpack.c.l.b16 %v1741
      %v1776 = vunpack.c.l.b16 %v1751
      %v1777 = vpack.c.b16 %v1762, %v1761
      %v1778 = vpack.c.b16 %v1764, %v1763
      %v1779 = vpack.c.b16 %v1766, %v1765
      %v1780 = vpack.c.b16 %v1768, %v1767
      %v1781 = vpack.c.b16 %v1770, %v1769
      %v1782 = vpack.c.b16 %v1772, %v1771
      %v1783 = vpack.c.b16 %v1774, %v1773
      %v1784 = vpack.c.b16 %v1776, %v1775
      %v1793 = vunpack.c.l.b16 %v1753
      %v1794 = vunpack.c.l.b16 %v1754
      %v1795 = vunpack.c.l.b16 %v1755
      %v1796 = vunpack.c.l.b16 %v1756
      %v1797 = vunpack.c.l.b16 %v1757
      %v1798 = vunpack.c.l.b16 %v1758
      %v1799 = vunpack.c.l.b16 %v1759
      %v1800 = vunpack.c.l.b16 %v1760
      %v1801 = vpack.c.b16 %v1794, %v1793
      %v1802 = vpack.c.b16 %v1796, %v1795
      %v1803 = vpack.c.b16 %v1798, %v1797
      %v1804 = vpack.c.b16 %v1800, %v1799
      %v1810 = vsel %vm1338, %v1777, 0
      %v1813 = vsel %vm1338, %v1778, 0
      %v1816 = vsel %vm1338, %v1779, 0
      %v1819 = vsel %vm1338, %v1780, 0
      %v1822 = vsel %vm1338, %v1781, 0
      %v1825 = vsel %vm1338, %v1782, 0
      %v1828 = vsel %vm1338, %v1783, 0
      %v1831 = vsel %vm1338, %v1784, 0
      %1833 = vmatpush.bf16.msra.mxu0 0
      %1834 = vmatpush.bf16.msra.mxu0 0
      %1835 = vmatpush.bf16.msra.mxu0 0
      %1836 = vmatpush.bf16.msra.mxu0 0
      %1837 = vmatpush.bf16.msra.mxu0 %v1804
      %1838 = vmatpush.bf16.msra.mxu0 %v1803
      %1839 = vmatpush.bf16.msra.mxu0 %v1802
      %1840 = vmatpush.bf16.msra.mxu0 %v1801
      %1841 = vmatmul.bf16.gmra.mxu0 %v1810
      %v1842 = vpop.f32.mrf.mxu0
      %v1843 = vadd.f32 0.0, %v1842
      %v1844 = vpop.f32.mrf.mxu0
      %v1845 = vadd.f32 0.0, %v1844
      %1846 = vmatmul.bf16.gmra.mxu0 %v1813
      %v1847 = vpop.f32.mrf.mxu0
      %v1848 = vadd.f32 0.0, %v1847
      %v1849 = vpop.f32.mrf.mxu0
      %v1850 = vadd.f32 0.0, %v1849
      %1851 = vmatmul.bf16.gmra.mxu0 %v1816
      %v1852 = vpop.f32.mrf.mxu0
      %v1853 = vadd.f32 0.0, %v1852
      %v1854 = vpop.f32.mrf.mxu0
      %v1855 = vadd.f32 0.0, %v1854
      %1856 = vmatmul.bf16.gmra.mxu0 %v1819
      %v1857 = vpop.f32.mrf.mxu0
      %v1858 = vadd.f32 0.0, %v1857
      %v1859 = vpop.f32.mrf.mxu0
      %v1860 = vadd.f32 0.0, %v1859
      %1861 = vmatmul.bf16.gmra.mxu0 %v1822
      %v1862 = vpop.f32.mrf.mxu0
      %v1863 = vadd.f32 0.0, %v1862
      %v1864 = vpop.f32.mrf.mxu0
      %v1865 = vadd.f32 0.0, %v1864
      %1866 = vmatmul.bf16.gmra.mxu0 %v1825
      %v1867 = vpop.f32.mrf.mxu0
      %v1868 = vadd.f32 0.0, %v1867
      %v1869 = vpop.f32.mrf.mxu0
      %v1870 = vadd.f32 0.0, %v1869
      %1871 = vmatmul.bf16.gmra.mxu0 %v1828
      %v1872 = vpop.f32.mrf.mxu0
      %v1873 = vadd.f32 0.0, %v1872
      %v1874 = vpop.f32.mrf.mxu0
      %v1875 = vadd.f32 0.0, %v1874
      %1876 = vmatmul.bf16.gmra.mxu0 %v1831
      %v1877 = vpop.f32.mrf.mxu0
      %v1878 = vadd.f32 0.0, %v1877
      %v1879 = vpop.f32.mrf.mxu0
      %v1880 = vadd.f32 0.0, %v1879
      %1881 = vdwg.mxu0
      %v1882 = vadd.f32 %v1494, %v1843
      %v1883 = vadd.f32 %v1496, %v1845
      %v1884 = vadd.f32 %v1499, %v1848
      %v1885 = vadd.f32 %v1501, %v1850
      %v1886 = vadd.f32 %v1504, %v1853
      %v1887 = vadd.f32 %v1506, %v1855
      %v1888 = vadd.f32 %v1509, %v1858
      %v1889 = vadd.f32 %v1511, %v1860
      %v1890 = vadd.f32 %v1514, %v1863
      %v1891 = vadd.f32 %v1516, %v1865
      %v1892 = vadd.f32 %v1519, %v1868
      %v1893 = vadd.f32 %v1521, %v1870
      %v1894 = vadd.f32 %v1524, %v1873
      %v1895 = vadd.f32 %v1526, %v1875
      %v1896 = vadd.f32 %v1529, %v1878
      %v1897 = vadd.f32 %v1531, %v1880
      %v1898 = vld [vmem:[%s779] sm:$0x8]
      %v1899 = vld [vmem:[%s779 + $0x4] sm:$0xf]
      %v1900 = vld [vmem:[%s779 + $0x8] sm:$0xf]
      %v1901 = vld [vmem:[%s779 + $0x10] sm:$0x8]
      %v1902 = vld [vmem:[%s779 + $0x14] sm:$0xf]
      %v1903 = vld [vmem:[%s779 + $0x18] sm:$0xf]
      %v1904 = vld [vmem:[%s779 + $0x20] sm:$0x8]
      %v1905 = vld [vmem:[%s779 + $0x24] sm:$0xf]
      %v1906 = vld [vmem:[%s779 + $0x28] sm:$0xf]
      %v1907 = vld [vmem:[%s779 + $0x30] sm:$0x8]
      %v1908 = vld [vmem:[%s779 + $0x34] sm:$0xf]
      %v1909 = vld [vmem:[%s779 + $0x38] sm:$0xf]
      %v1910 = vld [vmem:[%s779 + $0x40] sm:$0x8]
      %v1911 = vld [vmem:[%s779 + $0x44] sm:$0xf]
      %v1912 = vld [vmem:[%s779 + $0x48] sm:$0xf]
      %v1913 = vld [vmem:[%s779 + $0x50] sm:$0x8]
      %v1914 = vld [vmem:[%s779 + $0x54] sm:$0xf]
      %v1915 = vld [vmem:[%s779 + $0x58] sm:$0xf]
      %v1916 = vld [vmem:[%s779 + $0x60] sm:$0x8]
      %v1917 = vld [vmem:[%s779 + $0x64] sm:$0xf]
      %v1918 = vld [vmem:[%s779 + $0x68] sm:$0xf]
      %v1919 = vld [vmem:[%s779 + $0x70] sm:$0x8]
      %v1920 = vld [vmem:[%s779 + $0x74] sm:$0xf]
      %v1921 = vld [vmem:[%s779 + $0x78] sm:$0xf]
      %v1923 = vshrl.u32 %v1898, 16
      %v1925 = vrot.slane %v1923, 7
      %v1926 = vrot.slane %v1925, 4
      %v1928 = vshrl.u32 %v1899, 16
      %v1930 = vrot.slane %v1928, 7
      %v1931 = vshll.u32 %v1899, 16
      %v1933 = vor.u32 %v1930, %v1931
      %v1934 = vsel %vm1080, %v1926, %v1933
      %v1935 = vrot.slane %v1930, 4
      %v1937 = vshrl.u32 %v1900, 16
      %v1939 = vrot.slane %v1937, 7
      %v1940 = vshll.u32 %v1900, 16
      %v1942 = vor.u32 %v1939, %v1940
      %v1943 = vsel %vm1080, %v1935, %v1942
      %v1945 = vshrl.u32 %v1901, 16
      %v1947 = vrot.slane %v1945, 7
      %v1948 = vrot.slane %v1947, 4
      %v1950 = vshrl.u32 %v1902, 16
      %v1952 = vrot.slane %v1950, 7
      %v1953 = vshll.u32 %v1902, 16
      %v1955 = vor.u32 %v1952, %v1953
      %v1956 = vsel %vm1080, %v1948, %v1955
      %v1957 = vrot.slane %v1952, 4
      %v1959 = vshrl.u32 %v1903, 16
      %v1961 = vrot.slane %v1959, 7
      %v1962 = vshll.u32 %v1903, 16
      %v1964 = vor.u32 %v1961, %v1962
      %v1965 = vsel %vm1080, %v1957, %v1964
      %v1967 = vshrl.u32 %v1904, 16
      %v1969 = vrot.slane %v1967, 7
      %v1970 = vrot.slane %v1969, 4
      %v1972 = vshrl.u32 %v1905, 16
      %v1974 = vrot.slane %v1972, 7
      %v1975 = vshll.u32 %v1905, 16
      %v1977 = vor.u32 %v1974, %v1975
      %v1978 = vsel %vm1080, %v1970, %v1977
      %v1979 = vrot.slane %v1974, 4
      %v1981 = vshrl.u32 %v1906, 16
      %v1983 = vrot.slane %v1981, 7
      %v1984 = vshll.u32 %v1906, 16
      %v1986 = vor.u32 %v1983, %v1984
      %v1987 = vsel %vm1080, %v1979, %v1986
      %v1989 = vshrl.u32 %v1907, 16
      %v1991 = vrot.slane %v1989, 7
      %v1992 = vrot.slane %v1991, 4
      %v1994 = vshrl.u32 %v1908, 16
      %v1996 = vrot.slane %v1994, 7
      %v1997 = vshll.u32 %v1908, 16
      %v1999 = vor.u32 %v1996, %v1997
      %v2000 = vsel %vm1080, %v1992, %v1999
      %v2001 = vrot.slane %v1996, 4
      %v2003 = vshrl.u32 %v1909, 16
      %v2005 = vrot.slane %v2003, 7
      %v2006 = vshll.u32 %v1909, 16
      %v2008 = vor.u32 %v2005, %v2006
      %v2009 = vsel %vm1080, %v2001, %v2008
      %v2011 = vshrl.u32 %v1910, 16
      %v2013 = vrot.slane %v2011, 7
      %v2014 = vrot.slane %v2013, 4
      %v2016 = vshrl.u32 %v1911, 16
      %v2018 = vrot.slane %v2016, 7
      %v2019 = vshll.u32 %v1911, 16
      %v2021 = vor.u32 %v2018, %v2019
      %v2022 = vsel %vm1080, %v2014, %v2021
      %v2023 = vrot.slane %v2018, 4
      %v2025 = vshrl.u32 %v1912, 16
      %v2027 = vrot.slane %v2025, 7
      %v2028 = vshll.u32 %v1912, 16
      %v2030 = vor.u32 %v2027, %v2028
      %v2031 = vsel %vm1080, %v2023, %v2030
      %v2033 = vshrl.u32 %v1913, 16
      %v2035 = vrot.slane %v2033, 7
      %v2036 = vrot.slane %v2035, 4
      %v2038 = vshrl.u32 %v1914, 16
      %v2040 = vrot.slane %v2038, 7
      %v2041 = vshll.u32 %v1914, 16
      %v2043 = vor.u32 %v2040, %v2041
      %v2044 = vsel %vm1080, %v2036, %v2043
      %v2045 = vrot.slane %v2040, 4
      %v2047 = vshrl.u32 %v1915, 16
      %v2049 = vrot.slane %v2047, 7
      %v2050 = vshll.u32 %v1915, 16
      %v2052 = vor.u32 %v2049, %v2050
      %v2053 = vsel %vm1080, %v2045, %v2052
      %v2055 = vshrl.u32 %v1916, 16
      %v2057 = vrot.slane %v2055, 7
      %v2058 = vrot.slane %v2057, 4
      %v2060 = vshrl.u32 %v1917, 16
      %v2062 = vrot.slane %v2060, 7
      %v2063 = vshll.u32 %v1917, 16
      %v2065 = vor.u32 %v2062, %v2063
      %v2066 = vsel %vm1080, %v2058, %v2065
      %v2067 = vrot.slane %v2062, 4
      %v2069 = vshrl.u32 %v1918, 16
      %v2071 = vrot.slane %v2069, 7
      %v2072 = vshll.u32 %v1918, 16
      %v2074 = vor.u32 %v2071, %v2072
      %v2075 = vsel %vm1080, %v2067, %v2074
      %v2077 = vshrl.u32 %v1919, 16
      %v2079 = vrot.slane %v2077, 7
      %v2080 = vrot.slane %v2079, 4
      %v2082 = vshrl.u32 %v1920, 16
      %v2084 = vrot.slane %v2082, 7
      %v2085 = vshll.u32 %v1920, 16
      %v2087 = vor.u32 %v2084, %v2085
      %v2088 = vsel %vm1080, %v2080, %v2087
      %v2089 = vrot.slane %v2084, 4
      %v2091 = vshrl.u32 %v1921, 16
      %v2093 = vrot.slane %v2091, 7
      %v2094 = vshll.u32 %v1921, 16
      %v2096 = vor.u32 %v2093, %v2094
      %v2097 = vsel %vm1080, %v2089, %v2096
      %s2098 = scalar_lea.vmem %s6, 96
      %v2099 = vld [vmem:[%s2098] sm:$0xf]
      %v2100 = vld [vmem:[%s2098 + $0x4] sm:$0xf]
      %v2101 = vld [vmem:[%s2098 + $0x8] sm:$0xf]
      %v2102 = vld [vmem:[%s2098 + $0xc] sm:$0xf]
      %v2103 = vld [vmem:[%s2098 + $0x10] sm:$0xf]
      %v2104 = vld [vmem:[%s2098 + $0x14] sm:$0xf]
      %v2105 = vld [vmem:[%s2098 + $0x18] sm:$0xf]
      %v2106 = vld [vmem:[%s2098 + $0x1c] sm:$0xf]
      %v2107 = vunpack.c.l.b16 %v1934
      %v2108 = vunpack.c.l.b16 %v1943
      %v2109 = vunpack.c.l.b16 %v1956
      %v2110 = vunpack.c.l.b16 %v1965
      %v2111 = vunpack.c.l.b16 %v1978
      %v2112 = vunpack.c.l.b16 %v1987
      %v2113 = vunpack.c.l.b16 %v2000
      %v2114 = vunpack.c.l.b16 %v2009
      %v2115 = vunpack.c.l.b16 %v2022
      %v2116 = vunpack.c.l.b16 %v2031
      %v2117 = vunpack.c.l.b16 %v2044
      %v2118 = vunpack.c.l.b16 %v2053
      %v2119 = vunpack.c.l.b16 %v2066
      %v2120 = vunpack.c.l.b16 %v2075
      %v2121 = vunpack.c.l.b16 %v2088
      %v2122 = vunpack.c.l.b16 %v2097
      %v2123 = vpack.c.b16 %v2108, %v2107
      %v2124 = vpack.c.b16 %v2110, %v2109
      %v2125 = vpack.c.b16 %v2112, %v2111
      %v2126 = vpack.c.b16 %v2114, %v2113
      %v2127 = vpack.c.b16 %v2116, %v2115
      %v2128 = vpack.c.b16 %v2118, %v2117
      %v2129 = vpack.c.b16 %v2120, %v2119
      %v2130 = vpack.c.b16 %v2122, %v2121
      %v2139 = vunpack.c.l.b16 %v2099
      %v2140 = vunpack.c.l.b16 %v2100
      %v2141 = vunpack.c.l.b16 %v2101
      %v2142 = vunpack.c.l.b16 %v2102
      %v2143 = vunpack.c.l.b16 %v2103
      %v2144 = vunpack.c.l.b16 %v2104
      %v2145 = vunpack.c.l.b16 %v2105
      %v2146 = vunpack.c.l.b16 %v2106
      %v2147 = vpack.c.b16 %v2140, %v2139
      %v2148 = vpack.c.b16 %v2142, %v2141
      %v2149 = vpack.c.b16 %v2144, %v2143
      %v2150 = vpack.c.b16 %v2146, %v2145
      %v2156 = vsel %vm1338, %v2123, 0
      %v2159 = vsel %vm1338, %v2124, 0
      %v2162 = vsel %vm1338, %v2125, 0
      %v2165 = vsel %vm1338, %v2126, 0
      %v2168 = vsel %vm1338, %v2127, 0
      %v2171 = vsel %vm1338, %v2128, 0
      %v2174 = vsel %vm1338, %v2129, 0
      %v2177 = vsel %vm1338, %v2130, 0
      %2179 = vmatpush.bf16.msra.mxu0 0
      %2180 = vmatpush.bf16.msra.mxu0 0
      %2181 = vmatpush.bf16.msra.mxu0 0
      %2182 = vmatpush.bf16.msra.mxu0 0
      %2183 = vmatpush.bf16.msra.mxu0 %v2150
      %2184 = vmatpush.bf16.msra.mxu0 %v2149
      %2185 = vmatpush.bf16.msra.mxu0 %v2148
      %2186 = vmatpush.bf16.msra.mxu0 %v2147
      %2187 = vmatmul.bf16.gmra.mxu0 %v2156
      %v2188 = vpop.f32.mrf.mxu0
      %v2189 = vadd.f32 0.0, %v2188
      %v2190 = vpop.f32.mrf.mxu0
      %v2191 = vadd.f32 0.0, %v2190
      %2192 = vmatmul.bf16.gmra.mxu0 %v2159
      %v2193 = vpop.f32.mrf.mxu0
      %v2194 = vadd.f32 0.0, %v2193
      %v2195 = vpop.f32.mrf.mxu0
      %v2196 = vadd.f32 0.0, %v2195
      %2197 = vmatmul.bf16.gmra.mxu0 %v2162
      %v2198 = vpop.f32.mrf.mxu0
      %v2199 = vadd.f32 0.0, %v2198
      %v2200 = vpop.f32.mrf.mxu0
      %v2201 = vadd.f32 0.0, %v2200
      %2202 = vmatmul.bf16.gmra.mxu0 %v2165
      %v2203 = vpop.f32.mrf.mxu0
      %v2204 = vadd.f32 0.0, %v2203
      %v2205 = vpop.f32.mrf.mxu0
      %v2206 = vadd.f32 0.0, %v2205
      %2207 = vmatmul.bf16.gmra.mxu0 %v2168
      %v2208 = vpop.f32.mrf.mxu0
      %v2209 = vadd.f32 0.0, %v2208
      %v2210 = vpop.f32.mrf.mxu0
      %v2211 = vadd.f32 0.0, %v2210
      %2212 = vmatmul.bf16.gmra.mxu0 %v2171
      %v2213 = vpop.f32.mrf.mxu0
      %v2214 = vadd.f32 0.0, %v2213
      %v2215 = vpop.f32.mrf.mxu0
      %v2216 = vadd.f32 0.0, %v2215
      %2217 = vmatmul.bf16.gmra.mxu0 %v2174
      %v2218 = vpop.f32.mrf.mxu0
      %v2219 = vadd.f32 0.0, %v2218
      %v2220 = vpop.f32.mrf.mxu0
      %v2221 = vadd.f32 0.0, %v2220
      %2222 = vmatmul.bf16.gmra.mxu0 %v2177
      %v2223 = vpop.f32.mrf.mxu0
      %v2224 = vadd.f32 0.0, %v2223
      %v2225 = vpop.f32.mrf.mxu0
      %v2226 = vadd.f32 0.0, %v2225
      %2227 = vdwg.mxu0
      %v2228 = vadd.f32 %v1882, %v2189
      %v2229 = vadd.f32 %v1883, %v2191
      %v2230 = vadd.f32 %v1884, %v2194
      %v2231 = vadd.f32 %v1885, %v2196
      %v2232 = vadd.f32 %v1886, %v2199
      %v2233 = vadd.f32 %v1887, %v2201
      %v2234 = vadd.f32 %v1888, %v2204
      %v2235 = vadd.f32 %v1889, %v2206
      %v2236 = vadd.f32 %v1890, %v2209
      %v2237 = vadd.f32 %v1891, %v2211
      %v2238 = vadd.f32 %v1892, %v2214
      %v2239 = vadd.f32 %v1893, %v2216
      %v2240 = vadd.f32 %v1894, %v2219
      %v2241 = vadd.f32 %v1895, %v2221
      %v2242 = vadd.f32 %v1896, %v2224
      %v2243 = vadd.f32 %v1897, %v2226
      %s2244 = scalar_lea.vmem %s6, 128
      %v2245 = vld [vmem:[%s2244] sm:$0xf]
      %v2246 = vld [vmem:[%s2244 + $0x4] sm:$0xf]
      %v2247 = vld [vmem:[%s2244 + $0x8] sm:$0xf]
      %v2248 = vld [vmem:[%s2244 + $0xc] sm:$0xf]
      %v2249 = vld [vmem:[%s2244 + $0x10] sm:$0xf]
      %v2250 = vld [vmem:[%s2244 + $0x14] sm:$0xf]
      %v2251 = vld [vmem:[%s2244 + $0x18] sm:$0xf]
      %v2252 = vld [vmem:[%s2244 + $0x1c] sm:$0xf]
      %v2269 = vunpack.c.l.b16 %v1899
      %v2270 = vunpack.c.l.b16 %v1900
      %v2271 = vunpack.c.l.b16 %v1902
      %v2272 = vunpack.c.l.b16 %v1903
      %v2273 = vunpack.c.l.b16 %v1905
      %v2274 = vunpack.c.l.b16 %v1906
      %v2275 = vunpack.c.l.b16 %v1908
      %v2276 = vunpack.c.l.b16 %v1909
      %v2277 = vunpack.c.l.b16 %v1911
      %v2278 = vunpack.c.l.b16 %v1912
      %v2279 = vunpack.c.l.b16 %v1914
      %v2280 = vunpack.c.l.b16 %v1915
      %v2281 = vunpack.c.l.b16 %v1917
      %v2282 = vunpack.c.l.b16 %v1918
      %v2283 = vunpack.c.l.b16 %v1920
      %v2284 = vunpack.c.l.b16 %v1921
      %v2285 = vpack.c.b16 %v2270, %v2269
      %v2286 = vpack.c.b16 %v2272, %v2271
      %v2287 = vpack.c.b16 %v2274, %v2273
      %v2288 = vpack.c.b16 %v2276, %v2275
      %v2289 = vpack.c.b16 %v2278, %v2277
      %v2290 = vpack.c.b16 %v2280, %v2279
      %v2291 = vpack.c.b16 %v2282, %v2281
      %v2292 = vpack.c.b16 %v2284, %v2283
      %v2301 = vunpack.c.l.b16 %v2245
      %v2302 = vunpack.c.l.b16 %v2246
      %v2303 = vunpack.c.l.b16 %v2247
      %v2304 = vunpack.c.l.b16 %v2248
      %v2305 = vunpack.c.l.b16 %v2249
      %v2306 = vunpack.c.l.b16 %v2250
      %v2307 = vunpack.c.l.b16 %v2251
      %v2308 = vunpack.c.l.b16 %v2252
      %v2309 = vpack.c.b16 %v2302, %v2301
      %v2310 = vpack.c.b16 %v2304, %v2303
      %v2311 = vpack.c.b16 %v2306, %v2305
      %v2312 = vpack.c.b16 %v2308, %v2307
      %v2318 = vsel %vm1338, %v2285, 0
      %v2321 = vsel %vm1338, %v2286, 0
      %v2324 = vsel %vm1338, %v2287, 0
      %v2327 = vsel %vm1338, %v2288, 0
      %v2330 = vsel %vm1338, %v2289, 0
      %v2333 = vsel %vm1338, %v2290, 0
      %v2336 = vsel %vm1338, %v2291, 0
      %v2339 = vsel %vm1338, %v2292, 0
      %2341 = vmatpush.bf16.msra.mxu0 0
      %2342 = vmatpush.bf16.msra.mxu0 0
      %2343 = vmatpush.bf16.msra.mxu0 0
      %2344 = vmatpush.bf16.msra.mxu0 0
      %2345 = vmatpush.bf16.msra.mxu0 %v2312
      %2346 = vmatpush.bf16.msra.mxu0 %v2311
      %2347 = vmatpush.bf16.msra.mxu0 %v2310
      %2348 = vmatpush.bf16.msra.mxu0 %v2309
      %2349 = vmatmul.bf16.gmra.mxu0 %v2318
      %v2350 = vpop.f32.mrf.mxu0
      %v2351 = vadd.f32 0.0, %v2350
      %v2352 = vpop.f32.mrf.mxu0
      %v2353 = vadd.f32 0.0, %v2352
      %2354 = vmatmul.bf16.gmra.mxu0 %v2321
      %v2355 = vpop.f32.mrf.mxu0
      %v2356 = vadd.f32 0.0, %v2355
      %v2357 = vpop.f32.mrf.mxu0
      %v2358 = vadd.f32 0.0, %v2357
      %2359 = vmatmul.bf16.gmra.mxu0 %v2324
      %v2360 = vpop.f32.mrf.mxu0
      %v2361 = vadd.f32 0.0, %v2360
      %v2362 = vpop.f32.mrf.mxu0
      %v2363 = vadd.f32 0.0, %v2362
      %2364 = vmatmul.bf16.gmra.mxu0 %v2327
      %v2365 = vpop.f32.mrf.mxu0
      %v2366 = vadd.f32 0.0, %v2365
      %v2367 = vpop.f32.mrf.mxu0
      %v2368 = vadd.f32 0.0, %v2367
      %2369 = vmatmul.bf16.gmra.mxu0 %v2330
      %v2370 = vpop.f32.mrf.mxu0
      %v2371 = vadd.f32 0.0, %v2370
      %v2372 = vpop.f32.mrf.mxu0
      %v2373 = vadd.f32 0.0, %v2372
      %2374 = vmatmul.bf16.gmra.mxu0 %v2333
      %v2375 = vpop.f32.mrf.mxu0
      %v2376 = vadd.f32 0.0, %v2375
      %v2377 = vpop.f32.mrf.mxu0
      %v2378 = vadd.f32 0.0, %v2377
      %2379 = vmatmul.bf16.gmra.mxu0 %v2336
      %v2380 = vpop.f32.mrf.mxu0
      %v2381 = vadd.f32 0.0, %v2380
      %v2382 = vpop.f32.mrf.mxu0
      %v2383 = vadd.f32 0.0, %v2382
      %2384 = vmatmul.bf16.gmra.mxu0 %v2339
      %v2385 = vpop.f32.mrf.mxu0
      %v2386 = vadd.f32 0.0, %v2385
      %v2387 = vpop.f32.mrf.mxu0
      %v2388 = vadd.f32 0.0, %v2387
      %2389 = vdwg.mxu0
      %v2390 = vadd.f32 %v2228, %v2351
      %v2391 = vadd.f32 %v2229, %v2353
      %v2392 = vadd.f32 %v2230, %v2356
      %v2393 = vadd.f32 %v2231, %v2358
      %v2394 = vadd.f32 %v2232, %v2361
      %v2395 = vadd.f32 %v2233, %v2363
      %v2396 = vadd.f32 %v2234, %v2366
      %v2397 = vadd.f32 %v2235, %v2368
      %v2398 = vadd.f32 %v2236, %v2371
      %v2399 = vadd.f32 %v2237, %v2373
      %v2400 = vadd.f32 %v2238, %v2376
      %v2401 = vadd.f32 %v2239, %v2378
      %v2402 = vadd.f32 %v2240, %v2381
      %v2403 = vadd.f32 %v2241, %v2383
      %v2404 = vadd.f32 %v2242, %v2386
      %v2405 = vadd.f32 %v2243, %v2388
      %v2406 = vld [vmem:[%s779 + $0x4] sm:$0xf]
      %v2407 = vld [vmem:[%s779 + $0x8] sm:$0xf]
      %v2408 = vld [vmem:[%s779 + $0xc] sm:$0x1]
      %v2409 = vld [vmem:[%s779 + $0x14] sm:$0xf]
      %v2410 = vld [vmem:[%s779 + $0x18] sm:$0xf]
      %v2411 = vld [vmem:[%s779 + $0x1c] sm:$0x1]
      %v2412 = vld [vmem:[%s779 + $0x24] sm:$0xf]
      %v2413 = vld [vmem:[%s779 + $0x28] sm:$0xf]
      %v2414 = vld [vmem:[%s779 + $0x2c] sm:$0x1]
      %v2415 = vld [vmem:[%s779 + $0x34] sm:$0xf]
      %v2416 = vld [vmem:[%s779 + $0x38] sm:$0xf]
      %v2417 = vld [vmem:[%s779 + $0x3c] sm:$0x1]
      %v2418 = vld [vmem:[%s779 + $0x44] sm:$0xf]
      %v2419 = vld [vmem:[%s779 + $0x48] sm:$0xf]
      %v2420 = vld [vmem:[%s779 + $0x4c] sm:$0x1]
      %v2421 = vld [vmem:[%s779 + $0x54] sm:$0xf]
      %v2422 = vld [vmem:[%s779 + $0x58] sm:$0xf]
      %v2423 = vld [vmem:[%s779 + $0x5c] sm:$0x1]
      %v2424 = vld [vmem:[%s779 + $0x64] sm:$0xf]
      %v2425 = vld [vmem:[%s779 + $0x68] sm:$0xf]
      %v2426 = vld [vmem:[%s779 + $0x6c] sm:$0x1]
      %v2427 = vld [vmem:[%s779 + $0x74] sm:$0xf]
      %v2428 = vld [vmem:[%s779 + $0x78] sm:$0xf]
      %v2429 = vld [vmem:[%s779 + $0x7c] sm:$0x1]
      %v2431 = vshrl.u32 %v2406, 16
      %v2433 = vrot.slane %v2431, 4
      %v2434 = vshll.u32 %v2406, 16
      %v2436 = vrot.slane %v2434, 5
      %v2437 = vor.u32 %v2433, %v2436
      %v2438 = vrot.slane %v2437, 4
      %v2440 = vshll.u32 %v2407, 16
      %v2442 = vrot.slane %v2440, 5
      %v2443 = vsel %vm1559, %v2438, %v2442
      %v2444 = vshrl.u32 %v2407, 16
      %v2446 = vrot.slane %v2444, 4
      %v2447 = vor.u32 %v2446, %v2442
      %v2448 = vrot.slane %v2447, 4
      %v2450 = vshll.u32 %v2408, 16
      %v2452 = vrot.slane %v2450, 5
      %v2453 = vsel %vm1559, %v2448, %v2452
      %v2455 = vshrl.u32 %v2409, 16
      %v2457 = vrot.slane %v2455, 4
      %v2458 = vshll.u32 %v2409, 16
      %v2460 = vrot.slane %v2458, 5
      %v2461 = vor.u32 %v2457, %v2460
      %v2462 = vrot.slane %v2461, 4
      %v2464 = vshll.u32 %v2410, 16
      %v2466 = vrot.slane %v2464, 5
      %v2467 = vsel %vm1559, %v2462, %v2466
      %v2468 = vshrl.u32 %v2410, 16
      %v2470 = vrot.slane %v2468, 4
      %v2471 = vor.u32 %v2470, %v2466
      %v2472 = vrot.slane %v2471, 4
      %v2474 = vshll.u32 %v2411, 16
      %v2476 = vrot.slane %v2474, 5
      %v2477 = vsel %vm1559, %v2472, %v2476
      %v2479 = vshrl.u32 %v2412, 16
      %v2481 = vrot.slane %v2479, 4
      %v2482 = vshll.u32 %v2412, 16
      %v2484 = vrot.slane %v2482, 5
      %v2485 = vor.u32 %v2481, %v2484
      %v2486 = vrot.slane %v2485, 4
      %v2488 = vshll.u32 %v2413, 16
      %v2490 = vrot.slane %v2488, 5
      %v2491 = vsel %vm1559, %v2486, %v2490
      %v2492 = vshrl.u32 %v2413, 16
      %v2494 = vrot.slane %v2492, 4
      %v2495 = vor.u32 %v2494, %v2490
      %v2496 = vrot.slane %v2495, 4
      %v2498 = vshll.u32 %v2414, 16
      %v2500 = vrot.slane %v2498, 5
      %v2501 = vsel %vm1559, %v2496, %v2500
      %v2503 = vshrl.u32 %v2415, 16
      %v2505 = vrot.slane %v2503, 4
      %v2506 = vshll.u32 %v2415, 16
      %v2508 = vrot.slane %v2506, 5
      %v2509 = vor.u32 %v2505, %v2508
      %v2510 = vrot.slane %v2509, 4
      %v2512 = vshll.u32 %v2416, 16
      %v2514 = vrot.slane %v2512, 5
      %v2515 = vsel %vm1559, %v2510, %v2514
      %v2516 = vshrl.u32 %v2416, 16
      %v2518 = vrot.slane %v2516, 4
      %v2519 = vor.u32 %v2518, %v2514
      %v2520 = vrot.slane %v2519, 4
      %v2522 = vshll.u32 %v2417, 16
      %v2524 = vrot.slane %v2522, 5
      %v2525 = vsel %vm1559, %v2520, %v2524
      %v2527 = vshrl.u32 %v2418, 16
      %v2529 = vrot.slane %v2527, 4
      %v2530 = vshll.u32 %v2418, 16
      %v2532 = vrot.slane %v2530, 5
      %v2533 = vor.u32 %v2529, %v2532
      %v2534 = vrot.slane %v2533, 4
      %v2536 = vshll.u32 %v2419, 16
      %v2538 = vrot.slane %v2536, 5
      %v2539 = vsel %vm1559, %v2534, %v2538
      %v2540 = vshrl.u32 %v2419, 16
      %v2542 = vrot.slane %v2540, 4
      %v2543 = vor.u32 %v2542, %v2538
      %v2544 = vrot.slane %v2543, 4
      %v2546 = vshll.u32 %v2420, 16
      %v2548 = vrot.slane %v2546, 5
      %v2549 = vsel %vm1559, %v2544, %v2548
      %v2551 = vshrl.u32 %v2421, 16
      %v2553 = vrot.slane %v2551, 4
      %v2554 = vshll.u32 %v2421, 16
      %v2556 = vrot.slane %v2554, 5
      %v2557 = vor.u32 %v2553, %v2556
      %v2558 = vrot.slane %v2557, 4
      %v2560 = vshll.u32 %v2422, 16
      %v2562 = vrot.slane %v2560, 5
      %v2563 = vsel %vm1559, %v2558, %v2562
      %v2564 = vshrl.u32 %v2422, 16
      %v2566 = vrot.slane %v2564, 4
      %v2567 = vor.u32 %v2566, %v2562
      %v2568 = vrot.slane %v2567, 4
      %v2570 = vshll.u32 %v2423, 16
      %v2572 = vrot.slane %v2570, 5
      %v2573 = vsel %vm1559, %v2568, %v2572
      %v2575 = vshrl.u32 %v2424, 16
      %v2577 = vrot.slane %v2575, 4
      %v2578 = vshll.u32 %v2424, 16
      %v2580 = vrot.slane %v2578, 5
      %v2581 = vor.u32 %v2577, %v2580
      %v2582 = vrot.slane %v2581, 4
      %v2584 = vshll.u32 %v2425, 16
      %v2586 = vrot.slane %v2584, 5
      %v2587 = vsel %vm1559, %v2582, %v2586
      %v2588 = vshrl.u32 %v2425, 16
      %v2590 = vrot.slane %v2588, 4
      %v2591 = vor.u32 %v2590, %v2586
      %v2592 = vrot.slane %v2591, 4
      %v2594 = vshll.u32 %v2426, 16
      %v2596 = vrot.slane %v2594, 5
      %v2597 = vsel %vm1559, %v2592, %v2596
      %v2599 = vshrl.u32 %v2427, 16
      %v2601 = vrot.slane %v2599, 4
      %v2602 = vshll.u32 %v2427, 16
      %v2604 = vrot.slane %v2602, 5
      %v2605 = vor.u32 %v2601, %v2604
      %v2606 = vrot.slane %v2605, 4
      %v2608 = vshll.u32 %v2428, 16
      %v2610 = vrot.slane %v2608, 5
      %v2611 = vsel %vm1559, %v2606, %v2610
      %v2612 = vshrl.u32 %v2428, 16
      %v2614 = vrot.slane %v2612, 4
      %v2615 = vor.u32 %v2614, %v2610
      %v2616 = vrot.slane %v2615, 4
      %v2618 = vshll.u32 %v2429, 16
      %v2620 = vrot.slane %v2618, 5
      %v2621 = vsel %vm1559, %v2616, %v2620
      %s2622 = scalar_lea.vmem %s6, 160
      %v2623 = vld [vmem:[%s2622] sm:$0xf]
      %v2624 = vld [vmem:[%s2622 + $0x4] sm:$0xf]
      %v2625 = vld [vmem:[%s2622 + $0x8] sm:$0xf]
      %v2626 = vld [vmem:[%s2622 + $0xc] sm:$0xf]
      %v2627 = vld [vmem:[%s2622 + $0x10] sm:$0xf]
      %v2628 = vld [vmem:[%s2622 + $0x14] sm:$0xf]
      %v2629 = vld [vmem:[%s2622 + $0x18] sm:$0xf]
      %v2630 = vld [vmem:[%s2622 + $0x1c] sm:$0xf]
      %v2631 = vunpack.c.l.b16 %v2443
      %v2632 = vunpack.c.l.b16 %v2453
      %v2633 = vunpack.c.l.b16 %v2467
      %v2634 = vunpack.c.l.b16 %v2477
      %v2635 = vunpack.c.l.b16 %v2491
      %v2636 = vunpack.c.l.b16 %v2501
      %v2637 = vunpack.c.l.b16 %v2515
      %v2638 = vunpack.c.l.b16 %v2525
      %v2639 = vunpack.c.l.b16 %v2539
      %v2640 = vunpack.c.l.b16 %v2549
      %v2641 = vunpack.c.l.b16 %v2563
      %v2642 = vunpack.c.l.b16 %v2573
      %v2643 = vunpack.c.l.b16 %v2587
      %v2644 = vunpack.c.l.b16 %v2597
      %v2645 = vunpack.c.l.b16 %v2611
      %v2646 = vunpack.c.l.b16 %v2621
      %v2647 = vpack.c.b16 %v2632, %v2631
      %v2648 = vpack.c.b16 %v2634, %v2633
      %v2649 = vpack.c.b16 %v2636, %v2635
      %v2650 = vpack.c.b16 %v2638, %v2637
      %v2651 = vpack.c.b16 %v2640, %v2639
      %v2652 = vpack.c.b16 %v2642, %v2641
      %v2653 = vpack.c.b16 %v2644, %v2643
      %v2654 = vpack.c.b16 %v2646, %v2645
      %v2663 = vunpack.c.l.b16 %v2623
      %v2664 = vunpack.c.l.b16 %v2624
      %v2665 = vunpack.c.l.b16 %v2625
      %v2666 = vunpack.c.l.b16 %v2626
      %v2667 = vunpack.c.l.b16 %v2627
      %v2668 = vunpack.c.l.b16 %v2628
      %v2669 = vunpack.c.l.b16 %v2629
      %v2670 = vunpack.c.l.b16 %v2630
      %v2671 = vpack.c.b16 %v2664, %v2663
      %v2672 = vpack.c.b16 %v2666, %v2665
      %v2673 = vpack.c.b16 %v2668, %v2667
      %v2674 = vpack.c.b16 %v2670, %v2669
      %v2680 = vsel %vm1338, %v2647, 0
      %v2683 = vsel %vm1338, %v2648, 0
      %v2686 = vsel %vm1338, %v2649, 0
      %v2689 = vsel %vm1338, %v2650, 0
      %v2692 = vsel %vm1338, %v2651, 0
      %v2695 = vsel %vm1338, %v2652, 0
      %v2698 = vsel %vm1338, %v2653, 0
      %v2701 = vsel %vm1338, %v2654, 0
      %2703 = vmatpush.bf16.msra.mxu0 0
      %2704 = vmatpush.bf16.msra.mxu0 0
      %2705 = vmatpush.bf16.msra.mxu0 0
      %2706 = vmatpush.bf16.msra.mxu0 0
      %2707 = vmatpush.bf16.msra.mxu0 %v2674
      %2708 = vmatpush.bf16.msra.mxu0 %v2673
      %2709 = vmatpush.bf16.msra.mxu0 %v2672
      %2710 = vmatpush.bf16.msra.mxu0 %v2671
      %2711 = vmatmul.bf16.gmra.mxu0 %v2680
      %v2712 = vpop.f32.mrf.mxu0
      %v2713 = vadd.f32 0.0, %v2712
      %v2714 = vpop.f32.mrf.mxu0
      %v2715 = vadd.f32 0.0, %v2714
      %2716 = vmatmul.bf16.gmra.mxu0 %v2683
      %v2717 = vpop.f32.mrf.mxu0
      %v2718 = vadd.f32 0.0, %v2717
      %v2719 = vpop.f32.mrf.mxu0
      %v2720 = vadd.f32 0.0, %v2719
      %2721 = vmatmul.bf16.gmra.mxu0 %v2686
      %v2722 = vpop.f32.mrf.mxu0
      %v2723 = vadd.f32 0.0, %v2722
      %v2724 = vpop.f32.mrf.mxu0
      %v2725 = vadd.f32 0.0, %v2724
      %2726 = vmatmul.bf16.gmra.mxu0 %v2689
      %v2727 = vpop.f32.mrf.mxu0
      %v2728 = vadd.f32 0.0, %v2727
      %v2729 = vpop.f32.mrf.mxu0
      %v2730 = vadd.f32 0.0, %v2729
      %2731 = vmatmul.bf16.gmra.mxu0 %v2692
      %v2732 = vpop.f32.mrf.mxu0
      %v2733 = vadd.f32 0.0, %v2732
      %v2734 = vpop.f32.mrf.mxu0
      %v2735 = vadd.f32 0.0, %v2734
      %2736 = vmatmul.bf16.gmra.mxu0 %v2695
      %v2737 = vpop.f32.mrf.mxu0
      %v2738 = vadd.f32 0.0, %v2737
      %v2739 = vpop.f32.mrf.mxu0
      %v2740 = vadd.f32 0.0, %v2739
      %2741 = vmatmul.bf16.gmra.mxu0 %v2698
      %v2742 = vpop.f32.mrf.mxu0
      %v2743 = vadd.f32 0.0, %v2742
      %v2744 = vpop.f32.mrf.mxu0
      %v2745 = vadd.f32 0.0, %v2744
      %2746 = vmatmul.bf16.gmra.mxu0 %v2701
      %v2747 = vpop.f32.mrf.mxu0
      %v2748 = vadd.f32 0.0, %v2747
      %v2749 = vpop.f32.mrf.mxu0
      %v2750 = vadd.f32 0.0, %v2749
      %2751 = vdwg.mxu0
      %v2752 = vadd.f32 %v2390, %v2713
      %v2753 = vadd.f32 %v2391, %v2715
      %v2754 = vadd.f32 %v2392, %v2718
      %v2755 = vadd.f32 %v2393, %v2720
      %v2756 = vadd.f32 %v2394, %v2723
      %v2757 = vadd.f32 %v2395, %v2725
      %v2758 = vadd.f32 %v2396, %v2728
      %v2759 = vadd.f32 %v2397, %v2730
      %v2760 = vadd.f32 %v2398, %v2733
      %v2761 = vadd.f32 %v2399, %v2735
      %v2762 = vadd.f32 %v2400, %v2738
      %v2763 = vadd.f32 %v2401, %v2740
      %v2764 = vadd.f32 %v2402, %v2743
      %v2765 = vadd.f32 %v2403, %v2745
      %v2766 = vadd.f32 %v2404, %v2748
      %v2767 = vadd.f32 %v2405, %v2750
      %s2768 = scalar_lea.vmem [#allocation2], 32
      %v2769 = vld [vmem:[%s2768] sm:$0x8]
      %v2770 = vld [vmem:[%s2768 + $0x4] sm:$0xf]
      %v2771 = vld [vmem:[%s2768 + $0x8] sm:$0xf]
      %v2772 = vld [vmem:[%s2768 + $0x10] sm:$0x8]
      %v2773 = vld [vmem:[%s2768 + $0x14] sm:$0xf]
      %v2774 = vld [vmem:[%s2768 + $0x18] sm:$0xf]
      %v2775 = vld [vmem:[%s2768 + $0x20] sm:$0x8]
      %v2776 = vld [vmem:[%s2768 + $0x24] sm:$0xf]
      %v2777 = vld [vmem:[%s2768 + $0x28] sm:$0xf]
      %v2778 = vld [vmem:[%s2768 + $0x30] sm:$0x8]
      %v2779 = vld [vmem:[%s2768 + $0x34] sm:$0xf]
      %v2780 = vld [vmem:[%s2768 + $0x38] sm:$0xf]
      %v2781 = vld [vmem:[%s2768 + $0x40] sm:$0x8]
      %v2782 = vld [vmem:[%s2768 + $0x44] sm:$0xf]
      %v2783 = vld [vmem:[%s2768 + $0x48] sm:$0xf]
      %v2784 = vld [vmem:[%s2768 + $0x50] sm:$0x8]
      %v2785 = vld [vmem:[%s2768 + $0x54] sm:$0xf]
      %v2786 = vld [vmem:[%s2768 + $0x58] sm:$0xf]
      %v2787 = vld [vmem:[%s2768 + $0x60] sm:$0x8]
      %v2788 = vld [vmem:[%s2768 + $0x64] sm:$0xf]
      %v2789 = vld [vmem:[%s2768 + $0x68] sm:$0xf]
      %v2790 = vld [vmem:[%s2768 + $0x70] sm:$0x8]
      %v2791 = vld [vmem:[%s2768 + $0x74] sm:$0xf]
      %v2792 = vld [vmem:[%s2768 + $0x78] sm:$0xf]
      %v2794 = vshrl.u32 %v2769, 16
      %v2796 = vrot.slane %v2794, 7
      %v2797 = vrot.slane %v2796, 4
      %v2799 = vshrl.u32 %v2770, 16
      %v2801 = vrot.slane %v2799, 7
      %v2802 = vshll.u32 %v2770, 16
      %v2804 = vor.u32 %v2801, %v2802
      %v2805 = vsel %vm1080, %v2797, %v2804
      %v2806 = vrot.slane %v2801, 4
      %v2808 = vshrl.u32 %v2771, 16
      %v2810 = vrot.slane %v2808, 7
      %v2811 = vshll.u32 %v2771, 16
      %v2813 = vor.u32 %v2810, %v2811
      %v2814 = vsel %vm1080, %v2806, %v2813
      %v2816 = vshrl.u32 %v2772, 16
      %v2818 = vrot.slane %v2816, 7
      %v2819 = vrot.slane %v2818, 4
      %v2821 = vshrl.u32 %v2773, 16
      %v2823 = vrot.slane %v2821, 7
      %v2824 = vshll.u32 %v2773, 16
      %v2826 = vor.u32 %v2823, %v2824
      %v2827 = vsel %vm1080, %v2819, %v2826
      %v2828 = vrot.slane %v2823, 4
      %v2830 = vshrl.u32 %v2774, 16
      %v2832 = vrot.slane %v2830, 7
      %v2833 = vshll.u32 %v2774, 16
      %v2835 = vor.u32 %v2832, %v2833
      %v2836 = vsel %vm1080, %v2828, %v2835
      %v2838 = vshrl.u32 %v2775, 16
      %v2840 = vrot.slane %v2838, 7
      %v2841 = vrot.slane %v2840, 4
      %v2843 = vshrl.u32 %v2776, 16
      %v2845 = vrot.slane %v2843, 7
      %v2846 = vshll.u32 %v2776, 16
      %v2848 = vor.u32 %v2845, %v2846
      %v2849 = vsel %vm1080, %v2841, %v2848
      %v2850 = vrot.slane %v2845, 4
      %v2852 = vshrl.u32 %v2777, 16
      %v2854 = vrot.slane %v2852, 7
      %v2855 = vshll.u32 %v2777, 16
      %v2857 = vor.u32 %v2854, %v2855
      %v2858 = vsel %vm1080, %v2850, %v2857
      %v2860 = vshrl.u32 %v2778, 16
      %v2862 = vrot.slane %v2860, 7
      %v2863 = vrot.slane %v2862, 4
      %v2865 = vshrl.u32 %v2779, 16
      %v2867 = vrot.slane %v2865, 7
      %v2868 = vshll.u32 %v2779, 16
      %v2870 = vor.u32 %v2867, %v2868
      %v2871 = vsel %vm1080, %v2863, %v2870
      %v2872 = vrot.slane %v2867, 4
      %v2874 = vshrl.u32 %v2780, 16
      %v2876 = vrot.slane %v2874, 7
      %v2877 = vshll.u32 %v2780, 16
      %v2879 = vor.u32 %v2876, %v2877
      %v2880 = vsel %vm1080, %v2872, %v2879
      %v2882 = vshrl.u32 %v2781, 16
      %v2884 = vrot.slane %v2882, 7
      %v2885 = vrot.slane %v2884, 4
      %v2887 = vshrl.u32 %v2782, 16
      %v2889 = vrot.slane %v2887, 7
      %v2890 = vshll.u32 %v2782, 16
      %v2892 = vor.u32 %v2889, %v2890
      %v2893 = vsel %vm1080, %v2885, %v2892
      %v2894 = vrot.slane %v2889, 4
      %v2896 = vshrl.u32 %v2783, 16
      %v2898 = vrot.slane %v2896, 7
      %v2899 = vshll.u32 %v2783, 16
      %v2901 = vor.u32 %v2898, %v2899
      %v2902 = vsel %vm1080, %v2894, %v2901
      %v2904 = vshrl.u32 %v2784, 16
      %v2906 = vrot.slane %v2904, 7
      %v2907 = vrot.slane %v2906, 4
      %v2909 = vshrl.u32 %v2785, 16
      %v2911 = vrot.slane %v2909, 7
      %v2912 = vshll.u32 %v2785, 16
      %v2914 = vor.u32 %v2911, %v2912
      %v2915 = vsel %vm1080, %v2907, %v2914
      %v2916 = vrot.slane %v2911, 4
      %v2918 = vshrl.u32 %v2786, 16
      %v2920 = vrot.slane %v2918, 7
      %v2921 = vshll.u32 %v2786, 16
      %v2923 = vor.u32 %v2920, %v2921
      %v2924 = vsel %vm1080, %v2916, %v2923
      %v2926 = vshrl.u32 %v2787, 16
      %v2928 = vrot.slane %v2926, 7
      %v2929 = vrot.slane %v2928, 4
      %v2931 = vshrl.u32 %v2788, 16
      %v2933 = vrot.slane %v2931, 7
      %v2934 = vshll.u32 %v2788, 16
      %v2936 = vor.u32 %v2933, %v2934
      %v2937 = vsel %vm1080, %v2929, %v2936
      %v2938 = vrot.slane %v2933, 4
      %v2940 = vshrl.u32 %v2789, 16
      %v2942 = vrot.slane %v2940, 7
      %v2943 = vshll.u32 %v2789, 16
      %v2945 = vor.u32 %v2942, %v2943
      %v2946 = vsel %vm1080, %v2938, %v2945
      %v2948 = vshrl.u32 %v2790, 16
      %v2950 = vrot.slane %v2948, 7
      %v2951 = vrot.slane %v2950, 4
      %v2953 = vshrl.u32 %v2791, 16
      %v2955 = vrot.slane %v2953, 7
      %v2956 = vshll.u32 %v2791, 16
      %v2958 = vor.u32 %v2955, %v2956
      %v2959 = vsel %vm1080, %v2951, %v2958
      %v2960 = vrot.slane %v2955, 4
      %v2962 = vshrl.u32 %v2792, 16
      %v2964 = vrot.slane %v2962, 7
      %v2965 = vshll.u32 %v2792, 16
      %v2967 = vor.u32 %v2964, %v2965
      %v2968 = vsel %vm1080, %v2960, %v2967
      %s2969 = scalar_lea.vmem %s6, 192
      %v2970 = vld [vmem:[%s2969] sm:$0xf]
      %v2971 = vld [vmem:[%s2969 + $0x4] sm:$0xf]
      %v2972 = vld [vmem:[%s2969 + $0x8] sm:$0xf]
      %v2973 = vld [vmem:[%s2969 + $0xc] sm:$0xf]
      %v2974 = vld [vmem:[%s2969 + $0x10] sm:$0xf]
      %v2975 = vld [vmem:[%s2969 + $0x14] sm:$0xf]
      %v2976 = vld [vmem:[%s2969 + $0x18] sm:$0xf]
      %v2977 = vld [vmem:[%s2969 + $0x1c] sm:$0xf]
      %v2978 = vunpack.c.l.b16 %v2805
      %v2979 = vunpack.c.l.b16 %v2814
      %v2980 = vunpack.c.l.b16 %v2827
      %v2981 = vunpack.c.l.b16 %v2836
      %v2982 = vunpack.c.l.b16 %v2849
      %v2983 = vunpack.c.l.b16 %v2858
      %v2984 = vunpack.c.l.b16 %v2871
      %v2985 = vunpack.c.l.b16 %v2880
      %v2986 = vunpack.c.l.b16 %v2893
      %v2987 = vunpack.c.l.b16 %v2902
      %v2988 = vunpack.c.l.b16 %v2915
      %v2989 = vunpack.c.l.b16 %v2924
      %v2990 = vunpack.c.l.b16 %v2937
      %v2991 = vunpack.c.l.b16 %v2946
      %v2992 = vunpack.c.l.b16 %v2959
      %v2993 = vunpack.c.l.b16 %v2968
      %v2994 = vpack.c.b16 %v2979, %v2978
      %v2995 = vpack.c.b16 %v2981, %v2980
      %v2996 = vpack.c.b16 %v2983, %v2982
      %v2997 = vpack.c.b16 %v2985, %v2984
      %v2998 = vpack.c.b16 %v2987, %v2986
      %v2999 = vpack.c.b16 %v2989, %v2988
      %v3000 = vpack.c.b16 %v2991, %v2990
      %v3001 = vpack.c.b16 %v2993, %v2992
      %v3010 = vunpack.c.l.b16 %v2970
      %v3011 = vunpack.c.l.b16 %v2971
      %v3012 = vunpack.c.l.b16 %v2972
      %v3013 = vunpack.c.l.b16 %v2973
      %v3014 = vunpack.c.l.b16 %v2974
      %v3015 = vunpack.c.l.b16 %v2975
      %v3016 = vunpack.c.l.b16 %v2976
      %v3017 = vunpack.c.l.b16 %v2977
      %v3018 = vpack.c.b16 %v3011, %v3010
      %v3019 = vpack.c.b16 %v3013, %v3012
      %v3020 = vpack.c.b16 %v3015, %v3014
      %v3021 = vpack.c.b16 %v3017, %v3016
      %v3027 = vsel %vm1338, %v2994, 0
      %v3030 = vsel %vm1338, %v2995, 0
      %v3033 = vsel %vm1338, %v2996, 0
      %v3036 = vsel %vm1338, %v2997, 0
      %v3039 = vsel %vm1338, %v2998, 0
      %v3042 = vsel %vm1338, %v2999, 0
      %v3045 = vsel %vm1338, %v3000, 0
      %v3048 = vsel %vm1338, %v3001, 0
      %3050 = vmatpush.bf16.msra.mxu0 0
      %3051 = vmatpush.bf16.msra.mxu0 0
      %3052 = vmatpush.bf16.msra.mxu0 0
      %3053 = vmatpush.bf16.msra.mxu0 0
      %3054 = vmatpush.bf16.msra.mxu0 %v3021
      %3055 = vmatpush.bf16.msra.mxu0 %v3020
      %3056 = vmatpush.bf16.msra.mxu0 %v3019
      %3057 = vmatpush.bf16.msra.mxu0 %v3018
      %3058 = vmatmul.bf16.gmra.mxu0 %v3027
      %v3059 = vpop.f32.mrf.mxu0
      %v3060 = vadd.f32 0.0, %v3059
      %v3061 = vpop.f32.mrf.mxu0
      %v3062 = vadd.f32 0.0, %v3061
      %3063 = vmatmul.bf16.gmra.mxu0 %v3030
      %v3064 = vpop.f32.mrf.mxu0
      %v3065 = vadd.f32 0.0, %v3064
      %v3066 = vpop.f32.mrf.mxu0
      %v3067 = vadd.f32 0.0, %v3066
      %3068 = vmatmul.bf16.gmra.mxu0 %v3033
      %v3069 = vpop.f32.mrf.mxu0
      %v3070 = vadd.f32 0.0, %v3069
      %v3071 = vpop.f32.mrf.mxu0
      %v3072 = vadd.f32 0.0, %v3071
      %3073 = vmatmul.bf16.gmra.mxu0 %v3036
      %v3074 = vpop.f32.mrf.mxu0
      %v3075 = vadd.f32 0.0, %v3074
      %v3076 = vpop.f32.mrf.mxu0
      %v3077 = vadd.f32 0.0, %v3076
      %3078 = vmatmul.bf16.gmra.mxu0 %v3039
      %v3079 = vpop.f32.mrf.mxu0
      %v3080 = vadd.f32 0.0, %v3079
      %v3081 = vpop.f32.mrf.mxu0
      %v3082 = vadd.f32 0.0, %v3081
      %3083 = vmatmul.bf16.gmra.mxu0 %v3042
      %v3084 = vpop.f32.mrf.mxu0
      %v3085 = vadd.f32 0.0, %v3084
      %v3086 = vpop.f32.mrf.mxu0
      %v3087 = vadd.f32 0.0, %v3086
      %3088 = vmatmul.bf16.gmra.mxu0 %v3045
      %v3089 = vpop.f32.mrf.mxu0
      %v3090 = vadd.f32 0.0, %v3089
      %v3091 = vpop.f32.mrf.mxu0
      %v3092 = vadd.f32 0.0, %v3091
      %3093 = vmatmul.bf16.gmra.mxu0 %v3048
      %v3094 = vpop.f32.mrf.mxu0
      %v3095 = vadd.f32 0.0, %v3094
      %v3096 = vpop.f32.mrf.mxu0
      %v3097 = vadd.f32 0.0, %v3096
      %3098 = vdwg.mxu0
      %v3099 = vadd.f32 %v2752, %v3060
      %v3100 = vadd.f32 %v2753, %v3062
      %v3101 = vadd.f32 %v2754, %v3065
      %v3102 = vadd.f32 %v2755, %v3067
      %v3103 = vadd.f32 %v2756, %v3070
      %v3104 = vadd.f32 %v2757, %v3072
      %v3105 = vadd.f32 %v2758, %v3075
      %v3106 = vadd.f32 %v2759, %v3077
      %v3107 = vadd.f32 %v2760, %v3080
      %v3108 = vadd.f32 %v2761, %v3082
      %v3109 = vadd.f32 %v2762, %v3085
      %v3110 = vadd.f32 %v2763, %v3087
      %v3111 = vadd.f32 %v2764, %v3090
      %v3112 = vadd.f32 %v2765, %v3092
      %v3113 = vadd.f32 %v2766, %v3095
      %v3114 = vadd.f32 %v2767, %v3097
      %s3115 = scalar_lea.vmem %s6, 224
      %v3116 = vld [vmem:[%s3115] sm:$0xf]
      %v3117 = vld [vmem:[%s3115 + $0x4] sm:$0xf]
      %v3118 = vld [vmem:[%s3115 + $0x8] sm:$0xf]
      %v3119 = vld [vmem:[%s3115 + $0xc] sm:$0xf]
      %v3120 = vld [vmem:[%s3115 + $0x10] sm:$0xf]
      %v3121 = vld [vmem:[%s3115 + $0x14] sm:$0xf]
      %v3122 = vld [vmem:[%s3115 + $0x18] sm:$0xf]
      %v3123 = vld [vmem:[%s3115 + $0x1c] sm:$0xf]
      %v3140 = vunpack.c.l.b16 %v2770
      %v3141 = vunpack.c.l.b16 %v2771
      %v3142 = vunpack.c.l.b16 %v2773
      %v3143 = vunpack.c.l.b16 %v2774
      %v3144 = vunpack.c.l.b16 %v2776
      %v3145 = vunpack.c.l.b16 %v2777
      %v3146 = vunpack.c.l.b16 %v2779
      %v3147 = vunpack.c.l.b16 %v2780
      %v3148 = vunpack.c.l.b16 %v2782
      %v3149 = vunpack.c.l.b16 %v2783
      %v3150 = vunpack.c.l.b16 %v2785
      %v3151 = vunpack.c.l.b16 %v2786
      %v3152 = vunpack.c.l.b16 %v2788
      %v3153 = vunpack.c.l.b16 %v2789
      %v3154 = vunpack.c.l.b16 %v2791
      %v3155 = vunpack.c.l.b16 %v2792
      %v3156 = vpack.c.b16 %v3141, %v3140
      %v3157 = vpack.c.b16 %v3143, %v3142
      %v3158 = vpack.c.b16 %v3145, %v3144
      %v3159 = vpack.c.b16 %v3147, %v3146
      %v3160 = vpack.c.b16 %v3149, %v3148
      %v3161 = vpack.c.b16 %v3151, %v3150
      %v3162 = vpack.c.b16 %v3153, %v3152
      %v3163 = vpack.c.b16 %v3155, %v3154
      %v3172 = vunpack.c.l.b16 %v3116
      %v3173 = vunpack.c.l.b16 %v3117
      %v3174 = vunpack.c.l.b16 %v3118
      %v3175 = vunpack.c.l.b16 %v3119
      %v3176 = vunpack.c.l.b16 %v3120
      %v3177 = vunpack.c.l.b16 %v3121
      %v3178 = vunpack.c.l.b16 %v3122
      %v3179 = vunpack.c.l.b16 %v3123
      %v3180 = vpack.c.b16 %v3173, %v3172
      %v3181 = vpack.c.b16 %v3175, %v3174
      %v3182 = vpack.c.b16 %v3177, %v3176
      %v3183 = vpack.c.b16 %v3179, %v3178
      %v3189 = vsel %vm1338, %v3156, 0
      %v3192 = vsel %vm1338, %v3157, 0
      %v3195 = vsel %vm1338, %v3158, 0
      %v3198 = vsel %vm1338, %v3159, 0
      %v3201 = vsel %vm1338, %v3160, 0
      %v3204 = vsel %vm1338, %v3161, 0
      %v3207 = vsel %vm1338, %v3162, 0
      %v3210 = vsel %vm1338, %v3163, 0
      %3212 = vmatpush.bf16.msra.mxu0 0
      %3213 = vmatpush.bf16.msra.mxu0 0
      %3214 = vmatpush.bf16.msra.mxu0 0
      %3215 = vmatpush.bf16.msra.mxu0 0
      %3216 = vmatpush.bf16.msra.mxu0 %v3183
      %3217 = vmatpush.bf16.msra.mxu0 %v3182
      %3218 = vmatpush.bf16.msra.mxu0 %v3181
      %3219 = vmatpush.bf16.msra.mxu0 %v3180
      %3220 = vmatmul.bf16.gmra.mxu0 %v3189
      %v3221 = vpop.f32.mrf.mxu0
      %v3222 = vadd.f32 0.0, %v3221
      %v3223 = vpop.f32.mrf.mxu0
      %v3224 = vadd.f32 0.0, %v3223
      %3225 = vmatmul.bf16.gmra.mxu0 %v3192
      %v3226 = vpop.f32.mrf.mxu0
      %v3227 = vadd.f32 0.0, %v3226
      %v3228 = vpop.f32.mrf.mxu0
      %v3229 = vadd.f32 0.0, %v3228
      %3230 = vmatmul.bf16.gmra.mxu0 %v3195
      %v3231 = vpop.f32.mrf.mxu0
      %v3232 = vadd.f32 0.0, %v3231
      %v3233 = vpop.f32.mrf.mxu0
      %v3234 = vadd.f32 0.0, %v3233
      %3235 = vmatmul.bf16.gmra.mxu0 %v3198
      %v3236 = vpop.f32.mrf.mxu0
      %v3237 = vadd.f32 0.0, %v3236
      %v3238 = vpop.f32.mrf.mxu0
      %v3239 = vadd.f32 0.0, %v3238
      %3240 = vmatmul.bf16.gmra.mxu0 %v3201
      %v3241 = vpop.f32.mrf.mxu0
      %v3242 = vadd.f32 0.0, %v3241
      %v3243 = vpop.f32.mrf.mxu0
      %v3244 = vadd.f32 0.0, %v3243
      %3245 = vmatmul.bf16.gmra.mxu0 %v3204
      %v3246 = vpop.f32.mrf.mxu0
      %v3247 = vadd.f32 0.0, %v3246
      %v3248 = vpop.f32.mrf.mxu0
      %v3249 = vadd.f32 0.0, %v3248
      %3250 = vmatmul.bf16.gmra.mxu0 %v3207
      %v3251 = vpop.f32.mrf.mxu0
      %v3252 = vadd.f32 0.0, %v3251
      %v3253 = vpop.f32.mrf.mxu0
      %v3254 = vadd.f32 0.0, %v3253
      %3255 = vmatmul.bf16.gmra.mxu0 %v3210
      %v3256 = vpop.f32.mrf.mxu0
      %v3257 = vadd.f32 0.0, %v3256
      %v3258 = vpop.f32.mrf.mxu0
      %v3259 = vadd.f32 0.0, %v3258
      %3260 = vdwg.mxu0
      %v3261 = vadd.f32 %v3099, %v3222
      %v3262 = vadd.f32 %v3100, %v3224
      %v3263 = vadd.f32 %v3101, %v3227
      %v3264 = vadd.f32 %v3102, %v3229
      %v3265 = vadd.f32 %v3103, %v3232
      %v3266 = vadd.f32 %v3104, %v3234
      %v3267 = vadd.f32 %v3105, %v3237
      %v3268 = vadd.f32 %v3106, %v3239
      %v3269 = vadd.f32 %v3107, %v3242
      %v3270 = vadd.f32 %v3108, %v3244
      %v3271 = vadd.f32 %v3109, %v3247
      %v3272 = vadd.f32 %v3110, %v3249
      %v3273 = vadd.f32 %v3111, %v3252
      %v3274 = vadd.f32 %v3112, %v3254
      %v3275 = vadd.f32 %v3113, %v3257
      %v3276 = vadd.f32 %v3114, %v3259
      %v3277 = vld [vmem:[%s2768 + $0x4] sm:$0xf]
      %v3278 = vld [vmem:[%s2768 + $0x8] sm:$0xf]
      %v3279 = vld [vmem:[%s2768 + $0xc] sm:$0x1]
      %v3280 = vld [vmem:[%s2768 + $0x14] sm:$0xf]
      %v3281 = vld [vmem:[%s2768 + $0x18] sm:$0xf]
      %v3282 = vld [vmem:[%s2768 + $0x1c] sm:$0x1]
      %v3283 = vld [vmem:[%s2768 + $0x24] sm:$0xf]
      %v3284 = vld [vmem:[%s2768 + $0x28] sm:$0xf]
      %v3285 = vld [vmem:[%s2768 + $0x2c] sm:$0x1]
      %v3286 = vld [vmem:[%s2768 + $0x34] sm:$0xf]
      %v3287 = vld [vmem:[%s2768 + $0x38] sm:$0xf]
      %v3288 = vld [vmem:[%s2768 + $0x3c] sm:$0x1]
      %v3289 = vld [vmem:[%s2768 + $0x44] sm:$0xf]
      %v3290 = vld [vmem:[%s2768 + $0x48] sm:$0xf]
      %v3291 = vld [vmem:[%s2768 + $0x4c] sm:$0x1]
      %v3292 = vld [vmem:[%s2768 + $0x54] sm:$0xf]
      %v3293 = vld [vmem:[%s2768 + $0x58] sm:$0xf]
      %v3294 = vld [vmem:[%s2768 + $0x5c] sm:$0x1]
      %v3295 = vld [vmem:[%s2768 + $0x64] sm:$0xf]
      %v3296 = vld [vmem:[%s2768 + $0x68] sm:$0xf]
      %v3297 = vld [vmem:[%s2768 + $0x6c] sm:$0x1]
      %v3298 = vld [vmem:[%s2768 + $0x74] sm:$0xf]
      %v3299 = vld [vmem:[%s2768 + $0x78] sm:$0xf]
      %v3300 = vld [vmem:[%s2768 + $0x7c] sm:$0x1]
      %v3302 = vshrl.u32 %v3277, 16
      %v3304 = vrot.slane %v3302, 4
      %v3305 = vshll.u32 %v3277, 16
      %v3307 = vrot.slane %v3305, 5
      %v3308 = vor.u32 %v3304, %v3307
      %v3309 = vrot.slane %v3308, 4
      %v3311 = vshll.u32 %v3278, 16
      %v3313 = vrot.slane %v3311, 5
      %v3314 = vsel %vm1559, %v3309, %v3313
      %v3315 = vshrl.u32 %v3278, 16
      %v3317 = vrot.slane %v3315, 4
      %v3318 = vor.u32 %v3317, %v3313
      %v3319 = vrot.slane %v3318, 4
      %v3321 = vshll.u32 %v3279, 16
      %v3323 = vrot.slane %v3321, 5
      %v3324 = vsel %vm1559, %v3319, %v3323
      %v3326 = vshrl.u32 %v3280, 16
      %v3328 = vrot.slane %v3326, 4
      %v3329 = vshll.u32 %v3280, 16
      %v3331 = vrot.slane %v3329, 5
      %v3332 = vor.u32 %v3328, %v3331
      %v3333 = vrot.slane %v3332, 4
      %v3335 = vshll.u32 %v3281, 16
      %v3337 = vrot.slane %v3335, 5
      %v3338 = vsel %vm1559, %v3333, %v3337
      %v3339 = vshrl.u32 %v3281, 16
      %v3341 = vrot.slane %v3339, 4
      %v3342 = vor.u32 %v3341, %v3337
      %v3343 = vrot.slane %v3342, 4
      %v3345 = vshll.u32 %v3282, 16
      %v3347 = vrot.slane %v3345, 5
      %v3348 = vsel %vm1559, %v3343, %v3347
      %v3350 = vshrl.u32 %v3283, 16
      %v3352 = vrot.slane %v3350, 4
      %v3353 = vshll.u32 %v3283, 16
      %v3355 = vrot.slane %v3353, 5
      %v3356 = vor.u32 %v3352, %v3355
      %v3357 = vrot.slane %v3356, 4
      %v3359 = vshll.u32 %v3284, 16
      %v3361 = vrot.slane %v3359, 5
      %v3362 = vsel %vm1559, %v3357, %v3361
      %v3363 = vshrl.u32 %v3284, 16
      %v3365 = vrot.slane %v3363, 4
      %v3366 = vor.u32 %v3365, %v3361
      %v3367 = vrot.slane %v3366, 4
      %v3369 = vshll.u32 %v3285, 16
      %v3371 = vrot.slane %v3369, 5
      %v3372 = vsel %vm1559, %v3367, %v3371
      %v3374 = vshrl.u32 %v3286, 16
      %v3376 = vrot.slane %v3374, 4
      %v3377 = vshll.u32 %v3286, 16
      %v3379 = vrot.slane %v3377, 5
      %v3380 = vor.u32 %v3376, %v3379
      %v3381 = vrot.slane %v3380, 4
      %v3383 = vshll.u32 %v3287, 16
      %v3385 = vrot.slane %v3383, 5
      %v3386 = vsel %vm1559, %v3381, %v3385
      %v3387 = vshrl.u32 %v3287, 16
      %v3389 = vrot.slane %v3387, 4
      %v3390 = vor.u32 %v3389, %v3385
      %v3391 = vrot.slane %v3390, 4
      %v3393 = vshll.u32 %v3288, 16
      %v3395 = vrot.slane %v3393, 5
      %v3396 = vsel %vm1559, %v3391, %v3395
      %v3398 = vshrl.u32 %v3289, 16
      %v3400 = vrot.slane %v3398, 4
      %v3401 = vshll.u32 %v3289, 16
      %v3403 = vrot.slane %v3401, 5
      %v3404 = vor.u32 %v3400, %v3403
      %v3405 = vrot.slane %v3404, 4
      %v3407 = vshll.u32 %v3290, 16
      %v3409 = vrot.slane %v3407, 5
      %v3410 = vsel %vm1559, %v3405, %v3409
      %v3411 = vshrl.u32 %v3290, 16
      %v3413 = vrot.slane %v3411, 4
      %v3414 = vor.u32 %v3413, %v3409
      %v3415 = vrot.slane %v3414, 4
      %v3417 = vshll.u32 %v3291, 16
      %v3419 = vrot.slane %v3417, 5
      %v3420 = vsel %vm1559, %v3415, %v3419
      %v3422 = vshrl.u32 %v3292, 16
      %v3424 = vrot.slane %v3422, 4
      %v3425 = vshll.u32 %v3292, 16
      %v3427 = vrot.slane %v3425, 5
      %v3428 = vor.u32 %v3424, %v3427
      %v3429 = vrot.slane %v3428, 4
      %v3431 = vshll.u32 %v3293, 16
      %v3433 = vrot.slane %v3431, 5
      %v3434 = vsel %vm1559, %v3429, %v3433
      %v3435 = vshrl.u32 %v3293, 16
      %v3437 = vrot.slane %v3435, 4
      %v3438 = vor.u32 %v3437, %v3433
      %v3439 = vrot.slane %v3438, 4
      %v3441 = vshll.u32 %v3294, 16
      %v3443 = vrot.slane %v3441, 5
      %v3444 = vsel %vm1559, %v3439, %v3443
      %v3446 = vshrl.u32 %v3295, 16
      %v3448 = vrot.slane %v3446, 4
      %v3449 = vshll.u32 %v3295, 16
      %v3451 = vrot.slane %v3449, 5
      %v3452 = vor.u32 %v3448, %v3451
      %v3453 = vrot.slane %v3452, 4
      %v3455 = vshll.u32 %v3296, 16
      %v3457 = vrot.slane %v3455, 5
      %v3458 = vsel %vm1559, %v3453, %v3457
      %v3459 = vshrl.u32 %v3296, 16
      %v3461 = vrot.slane %v3459, 4
      %v3462 = vor.u32 %v3461, %v3457
      %v3463 = vrot.slane %v3462, 4
      %v3465 = vshll.u32 %v3297, 16
      %v3467 = vrot.slane %v3465, 5
      %v3468 = vsel %vm1559, %v3463, %v3467
      %v3470 = vshrl.u32 %v3298, 16
      %v3472 = vrot.slane %v3470, 4
      %v3473 = vshll.u32 %v3298, 16
      %v3475 = vrot.slane %v3473, 5
      %v3476 = vor.u32 %v3472, %v3475
      %v3477 = vrot.slane %v3476, 4
      %v3479 = vshll.u32 %v3299, 16
      %v3481 = vrot.slane %v3479, 5
      %v3482 = vsel %vm1559, %v3477, %v3481
      %v3483 = vshrl.u32 %v3299, 16
      %v3485 = vrot.slane %v3483, 4
      %v3486 = vor.u32 %v3485, %v3481
      %v3487 = vrot.slane %v3486, 4
      %v3489 = vshll.u32 %v3300, 16
      %v3491 = vrot.slane %v3489, 5
      %v3492 = vsel %vm1559, %v3487, %v3491
      %s3493 = scalar_lea.vmem %s6, 256
      %v3494 = vld [vmem:[%s3493] sm:$0xf]
      %v3495 = vld [vmem:[%s3493 + $0x4] sm:$0xf]
      %v3496 = vld [vmem:[%s3493 + $0x8] sm:$0xf]
      %v3497 = vld [vmem:[%s3493 + $0xc] sm:$0xf]
      %v3498 = vld [vmem:[%s3493 + $0x10] sm:$0xf]
      %v3499 = vld [vmem:[%s3493 + $0x14] sm:$0xf]
      %v3500 = vld [vmem:[%s3493 + $0x18] sm:$0xf]
      %v3501 = vld [vmem:[%s3493 + $0x1c] sm:$0xf]
      %v3502 = vunpack.c.l.b16 %v3314
      %v3503 = vunpack.c.l.b16 %v3324
      %v3504 = vunpack.c.l.b16 %v3338
      %v3505 = vunpack.c.l.b16 %v3348
      %v3506 = vunpack.c.l.b16 %v3362
      %v3507 = vunpack.c.l.b16 %v3372
      %v3508 = vunpack.c.l.b16 %v3386
      %v3509 = vunpack.c.l.b16 %v3396
      %v3510 = vunpack.c.l.b16 %v3410
      %v3511 = vunpack.c.l.b16 %v3420
      %v3512 = vunpack.c.l.b16 %v3434
      %v3513 = vunpack.c.l.b16 %v3444
      %v3514 = vunpack.c.l.b16 %v3458
      %v3515 = vunpack.c.l.b16 %v3468
      %v3516 = vunpack.c.l.b16 %v3482
      %v3517 = vunpack.c.l.b16 %v3492
      %v3518 = vpack.c.b16 %v3503, %v3502
      %v3519 = vpack.c.b16 %v3505, %v3504
      %v3520 = vpack.c.b16 %v3507, %v3506
      %v3521 = vpack.c.b16 %v3509, %v3508
      %v3522 = vpack.c.b16 %v3511, %v3510
      %v3523 = vpack.c.b16 %v3513, %v3512
      %v3524 = vpack.c.b16 %v3515, %v3514
      %v3525 = vpack.c.b16 %v3517, %v3516
      %v3534 = vunpack.c.l.b16 %v3494
      %v3535 = vunpack.c.l.b16 %v3495
      %v3536 = vunpack.c.l.b16 %v3496
      %v3537 = vunpack.c.l.b16 %v3497
      %v3538 = vunpack.c.l.b16 %v3498
      %v3539 = vunpack.c.l.b16 %v3499
      %v3540 = vunpack.c.l.b16 %v3500
      %v3541 = vunpack.c.l.b16 %v3501
      %v3542 = vpack.c.b16 %v3535, %v3534
      %v3543 = vpack.c.b16 %v3537, %v3536
      %v3544 = vpack.c.b16 %v3539, %v3538
      %v3545 = vpack.c.b16 %v3541, %v3540
      %v3551 = vsel %vm1338, %v3518, 0
      %v3554 = vsel %vm1338, %v3519, 0
      %v3557 = vsel %vm1338, %v3520, 0
      %v3560 = vsel %vm1338, %v3521, 0
      %v3563 = vsel %vm1338, %v3522, 0
      %v3566 = vsel %vm1338, %v3523, 0
      %v3569 = vsel %vm1338, %v3524, 0
      %v3572 = vsel %vm1338, %v3525, 0
      %3574 = vmatpush.bf16.msra.mxu0 0
      %3575 = vmatpush.bf16.msra.mxu0 0
      %3576 = vmatpush.bf16.msra.mxu0 0
      %3577 = vmatpush.bf16.msra.mxu0 0
      %3578 = vmatpush.bf16.msra.mxu0 %v3545
      %3579 = vmatpush.bf16.msra.mxu0 %v3544
      %3580 = vmatpush.bf16.msra.mxu0 %v3543
      %3581 = vmatpush.bf16.msra.mxu0 %v3542
      %3582 = vmatmul.bf16.gmra.mxu0 %v3551
      %v3583 = vpop.f32.mrf.mxu0
      %v3584 = vadd.f32 0.0, %v3583
      %v3585 = vpop.f32.mrf.mxu0
      %v3586 = vadd.f32 0.0, %v3585
      %3587 = vmatmul.bf16.gmra.mxu0 %v3554
      %v3588 = vpop.f32.mrf.mxu0
      %v3589 = vadd.f32 0.0, %v3588
      %v3590 = vpop.f32.mrf.mxu0
      %v3591 = vadd.f32 0.0, %v3590
      %3592 = vmatmul.bf16.gmra.mxu0 %v3557
      %v3593 = vpop.f32.mrf.mxu0
      %v3594 = vadd.f32 0.0, %v3593
      %v3595 = vpop.f32.mrf.mxu0
      %v3596 = vadd.f32 0.0, %v3595
      %3597 = vmatmul.bf16.gmra.mxu0 %v3560
      %v3598 = vpop.f32.mrf.mxu0
      %v3599 = vadd.f32 0.0, %v3598
      %v3600 = vpop.f32.mrf.mxu0
      %v3601 = vadd.f32 0.0, %v3600
      %3602 = vmatmul.bf16.gmra.mxu0 %v3563
      %v3603 = vpop.f32.mrf.mxu0
      %v3604 = vadd.f32 0.0, %v3603
      %v3605 = vpop.f32.mrf.mxu0
      %v3606 = vadd.f32 0.0, %v3605
      %3607 = vmatmul.bf16.gmra.mxu0 %v3566
      %v3608 = vpop.f32.mrf.mxu0
      %v3609 = vadd.f32 0.0, %v3608
      %v3610 = vpop.f32.mrf.mxu0
      %v3611 = vadd.f32 0.0, %v3610
      %3612 = vmatmul.bf16.gmra.mxu0 %v3569
      %v3613 = vpop.f32.mrf.mxu0
      %v3614 = vadd.f32 0.0, %v3613
      %v3615 = vpop.f32.mrf.mxu0
      %v3616 = vadd.f32 0.0, %v3615
      %3617 = vmatmul.bf16.gmra.mxu0 %v3572
      %v3618 = vpop.f32.mrf.mxu0
      %v3619 = vadd.f32 0.0, %v3618
      %v3620 = vpop.f32.mrf.mxu0
      %v3621 = vadd.f32 0.0, %v3620
      %3622 = vdwg.mxu0
      %v3623 = vadd.f32 %v3261, %v3584
      %v3624 = vadd.f32 %v3262, %v3586
      %v3625 = vadd.f32 %v3263, %v3589
      %v3626 = vadd.f32 %v3264, %v3591
      %v3627 = vadd.f32 %v3265, %v3594
      %v3628 = vadd.f32 %v3266, %v3596
      %v3629 = vadd.f32 %v3267, %v3599
      %v3630 = vadd.f32 %v3268, %v3601
      %v3631 = vadd.f32 %v3269, %v3604
      %v3632 = vadd.f32 %v3270, %v3606
      %v3633 = vadd.f32 %v3271, %v3609
      %v3634 = vadd.f32 %v3272, %v3611
      %v3635 = vadd.f32 %v3273, %v3614
      %v3636 = vadd.f32 %v3274, %v3616
      %v3637 = vadd.f32 %v3275, %v3619
      %v3638 = vadd.f32 %v3276, %v3621
      %v3639 = vmax.f32 %v3623, 0.0
      %v3640 = vmax.f32 %v3624, 0.0
      %v3641 = vmax.f32 %v3625, 0.0
      %v3642 = vmax.f32 %v3626, 0.0
      %v3643 = vmax.f32 %v3627, 0.0
      %v3644 = vmax.f32 %v3628, 0.0
      %v3645 = vmax.f32 %v3629, 0.0
      %v3646 = vmax.f32 %v3630, 0.0
      %v3647 = vmax.f32 %v3631, 0.0
      %v3648 = vmax.f32 %v3632, 0.0
      %v3649 = vmax.f32 %v3633, 0.0
      %v3650 = vmax.f32 %v3634, 0.0
      %v3651 = vmax.f32 %v3635, 0.0
      %v3652 = vmax.f32 %v3636, 0.0
      %v3653 = vmax.f32 %v3637, 0.0
      %v3654 = vmax.f32 %v3638, 0.0
      %v3655 = vld [vmem:[%s9] sm:$0x1]
      %v3657 = vperm.slane %v3655, 0
      %v3659 = vmul.f32 %v3639, %v3657
      %v3660 = vmul.f32 %v3640, %v3657
      %v3661 = vmul.f32 %v3641, %v3657
      %v3662 = vmul.f32 %v3642, %v3657
      %v3663 = vmul.f32 %v3643, %v3657
      %v3664 = vmul.f32 %v3644, %v3657
      %v3665 = vmul.f32 %v3645, %v3657
      %v3666 = vmul.f32 %v3646, %v3657
      %v3667 = vmul.f32 %v3647, %v3657
      %v3668 = vmul.f32 %v3648, %v3657
      %v3669 = vmul.f32 %v3649, %v3657
      %v3670 = vmul.f32 %v3650, %v3657
      %v3671 = vmul.f32 %v3651, %v3657
      %v3672 = vmul.f32 %v3652, %v3657
      %v3673 = vmul.f32 %v3653, %v3657
      %v3674 = vmul.f32 %v3654, %v3657
      %v3675 = vld [vmem:[%s10] sm:$0x1]
      %v3677 = vperm.slane %v3675, 0
      %v3679 = vadd.f32 %v3659, %v3677
      %v3680 = vadd.f32 %v3660, %v3677
      %v3681 = vadd.f32 %v3661, %v3677
      %v3682 = vadd.f32 %v3662, %v3677
      %v3683 = vadd.f32 %v3663, %v3677
      %v3684 = vadd.f32 %v3664, %v3677
      %v3685 = vadd.f32 %v3665, %v3677
      %v3686 = vadd.f32 %v3666, %v3677
      %v3687 = vadd.f32 %v3667, %v3677
      %v3688 = vadd.f32 %v3668, %v3677
      %v3689 = vadd.f32 %v3669, %v3677
      %v3690 = vadd.f32 %v3670, %v3677
      %v3691 = vadd.f32 %v3671, %v3677
      %v3692 = vadd.f32 %v3672, %v3677
      %v3693 = vadd.f32 %v3673, %v3677
      %v3694 = vadd.f32 %v3674, %v3677
      %v3695 = vpack.c.bf16 %v3679, %v3679
      %v3696 = vpack.c.bf16 %v3680, %v3680
      %v3697 = vpack.c.bf16 %v3681, %v3681
      %v3698 = vpack.c.bf16 %v3682, %v3682
      %v3699 = vpack.c.bf16 %v3683, %v3683
      %v3700 = vpack.c.bf16 %v3684, %v3684
      %v3701 = vpack.c.bf16 %v3685, %v3685
      %v3702 = vpack.c.bf16 %v3686, %v3686
      %v3703 = vpack.c.bf16 %v3687, %v3687
      %v3704 = vpack.c.bf16 %v3688, %v3688
      %v3705 = vpack.c.bf16 %v3689, %v3689
      %v3706 = vpack.c.bf16 %v3690, %v3690
      %v3707 = vpack.c.bf16 %v3691, %v3691
      %v3708 = vpack.c.bf16 %v3692, %v3692
      %v3709 = vpack.c.bf16 %v3693, %v3693
      %v3710 = vpack.c.bf16 %v3694, %v3694
      %3711 = vst [vmem:[%s716] sm:$0xf] %v3695
      %3712 = vst [vmem:[%s716 + $0x4] sm:$0xf] %v3696
      %3713 = vst [vmem:[%s716 + $0x8] sm:$0xf] %v3697
      %3714 = vst [vmem:[%s716 + $0xc] sm:$0xf] %v3698
      %3715 = vst [vmem:[%s716 + $0x10] sm:$0xf] %v3699
      %3716 = vst [vmem:[%s716 + $0x14] sm:$0xf] %v3700
      %3717 = vst [vmem:[%s716 + $0x18] sm:$0xf] %v3701
      %3718 = vst [vmem:[%s716 + $0x1c] sm:$0xf] %v3702
      %3719 = vst [vmem:[%s716 + $0x20] sm:$0xf] %v3703
      %3720 = vst [vmem:[%s716 + $0x24] sm:$0xf] %v3704
      %3721 = vst [vmem:[%s716 + $0x28] sm:$0xf] %v3705
      %3722 = vst [vmem:[%s716 + $0x2c] sm:$0xf] %v3706
      %3723 = vst [vmem:[%s716 + $0x30] sm:$0xf] %v3707
      %3724 = vst [vmem:[%s716 + $0x34] sm:$0xf] %v3708
      %3725 = vst [vmem:[%s716 + $0x38] sm:$0xf] %v3709
      %3726 = vst [vmem:[%s716 + $0x3c] sm:$0xf] %v3710
      %s3727 = smul.u32 8, %s27
      %p3728 = scmp.lt.s32.totalorder %s26, 1
      %s3729 = scalar_select %p3728, %s26, 1
      %p3730 = scmp.lt.s32.totalorder %s3727, 15
      %s3731 = scalar_select %p3730, %s3727, 15
      %s3732 = smul.addr %s3731, 2
      %s3733 = smul.addr %s3729, 32
      %s3734 = sadd.s32 %s3732, %s3733
      %s3735 = smul.addr %s3734, 4
      %s3736 = scalar_lea.vmem %s11, %s3735
      // Predicated region
      $region73: #{unet_block_deep_forward.6} parent=63 // pred_check
        %p3737 = pneg %p359
      $region74: #{unet_block_deep_forward.6} parent=63 // pred_check_branch
        %3739 = sbr.rel (%p3737) target = $region76
      $region75: #{unet_block_deep_forward.6} parent=63 // pred_region
        %s3740 = smul.u32 8, %s27
      $region76: #{unet_block_deep_forward.6} parent=63 // pred_fallthru
        _
    $region64: #{unet_block_deep_forward.6} parent=5 // pred_fallthru
      _
    %p3741 = scmp.le.s32.totalorder 2, %s17
    // Predicated region
    $region77: #{unet_block_deep_forward.6} parent=5 // pred_check
      %p3742 = pneg %p3741
    $region78: #{unet_block_deep_forward.6} parent=5 // pred_check_branch
      %3744 = sbr.rel (%p3742) target = $region80
    $region79: #{unet_block_deep_forward.6} parent=5 // pred_region
      %s3745 = ssub.s32 %s17, 2
      // Predicated region
      $region81: #{unet_block_deep_forward.6} parent=79 // pred_check
        %p3746 = pneg %p365
      $region82: #{unet_block_deep_forward.6} parent=79 // pred_check_branch
        %3748 = sbr.rel (%p3746) target = $region84
      $region83: #{unet_block_deep_forward.6} parent=79 // pred_region
        %s3749 = smul.u32 8, %s29
        %p3750 = scmp.lt.s32.totalorder %s28, 1
        %s3751 = scalar_select %p3750, %s28, 1
        %p3752 = scmp.lt.s32.totalorder %s3749, 15
        %s3753 = scalar_select %p3752, %s3749, 15
        %s3754 = smul.addr %s3753, 2
        %s3755 = smul.addr %s3751, 32
        %s3756 = sadd.s32 %s3754, %s3755
        %s3757 = smul.addr %s3756, 4
        %s3758 = scalar_lea.vmem %s11, %s3757
      $region84: #{unet_block_deep_forward.6} parent=79 // pred_fallthru
        _
    $region80: #{unet_block_deep_forward.6} parent=5 // pred_fallthru
      _
  $region6: #{unet_block_deep_forward.6} parent=0 // loop_footer
    %s21 = sadd.s32 1, %s17
  $region7: #{unet_block_deep_forward.6} parent=0 // loop_footer_branch
    %16 = sbr.rel target = $region3
  $region8: #{unet_block_deep_forward.6} parent=0 // loop_exit
    _

</llo_original>
